<compile_context>
chip_gen: v7x
topology: tpu7x:2x2x1
jax: 0.10.0
libtpu: 0.0.40
codegen_flags: <defaults>
</compile_context>

<pallas_src>
import functools

import jax
import jax.numpy as jnp
from jax import lax
from jax.experimental import pallas as pl
from jax.experimental.pallas import tpu as pltpu


def _round_up(v, m):
    return (v + m - 1) // m * m


def _lstm_fc_kernel(num_layers, hidden_pad, time_tile, batch_pad, out_pad, unroll,
                    *refs):
    """refs = [x, W_ih0, W_hh0, b0, (W_cat_l, b_l) * (L-1), W_fc, b_fc,
               out, h_scr, c_scr, xproj_scr, hbuf_scr]"""
    L, Hp, TT, Bp, Op = num_layers, hidden_pad, time_tile, batch_pad, out_pad

    idx = 0
    x_ref = refs[idx]; idx += 1
    wx0_ref = refs[idx]; wh0_ref = refs[idx + 1]; b0_ref = refs[idx + 2]; idx += 3
    deep_refs = []
    for _ in range(L - 1):
        deep_refs.append((refs[idx], refs[idx + 1]))
        idx += 2
    wf_ref = refs[idx]; bf_ref = refs[idx + 1]; idx += 2
    out_ref = refs[idx]; idx += 1
    h_scr, c_scr, xproj_scr, hbuf_scr = refs[idx:idx + 4]

    mdt = wx0_ref.dtype  # matmul operand dtype (bf16 fast path, f32 exact path)

    t = pl.program_id(0)

    @pl.when(t == 0)
    def _init():
        h_scr[...] = jnp.zeros(h_scr.shape, h_scr.dtype)
        c_scr[...] = jnp.zeros(c_scr.shape, c_scr.dtype)

    # ---- prologue: layer-0 input projection (+ bias) for the whole chunk ---
    # (TT, Bp, D) -> (TT*Bp, D) @ (D, 4Hp) + b0 -> stored as (TT, Bp, 4Hp) f32
    x_chunk = x_ref[...]
    d_in = x_chunk.shape[-1]
    xflat = x_chunk.reshape(TT * Bp, d_in).astype(mdt)
    xproj = jnp.dot(xflat, wx0_ref[...], preferred_element_type=jnp.float32)
    xproj = xproj + b0_ref[...]          # single broadcast/add per chunk
    xproj_scr[...] = xproj.reshape(TT, Bp, 4 * Hp)

    # Hoist deeper-layer bias broadcasts out of the time loop (loop-invariant).
    deep_biases = [jnp.broadcast_to(bl_ref[...], (Bp, 4 * Hp))
                   for (_, bl_ref) in deep_refs]

    def gate_update(gates, c_prev):
        i_g = jax.nn.sigmoid(gates[:, 0 * Hp:1 * Hp])
        f_g = jax.nn.sigmoid(gates[:, 1 * Hp:2 * Hp])
        g_g = jnp.tanh(gates[:, 2 * Hp:3 * Hp])
        o_g = jax.nn.sigmoid(gates[:, 3 * Hp:4 * Hp])
        c_new = f_g * c_prev + i_g * g_g
        h_new = o_g * jnp.tanh(c_new)
        return h_new, c_new

    # ---- sequential time loop over the chunk (state in VMEM scratch) -------
    def step(tl, carry):
        # layer 0: precomputed (x @ W_ih + b) + recurrent matmul
        h0 = h_scr[0]
        gates = (xproj_scr[tl]
                 + jnp.dot(h0.astype(mdt), wh0_ref[...],
                           preferred_element_type=jnp.float32))
        h_new, c_new = gate_update(gates, c_scr[0])
        h_scr[0] = h_new
        c_scr[0] = c_new
        x_in = h_new

        # deeper layers: one fused [h_below | h_prev] @ [W_ih; W_hh] matmul
        for l in range(1, L):
            wcat_ref, _ = deep_refs[l - 1]
            h_prev = h_scr[l]
            cat = jnp.concatenate([x_in.astype(mdt), h_prev.astype(mdt)], axis=-1)
            gates = (jnp.dot(cat, wcat_ref[...],
                             preferred_element_type=jnp.float32)
                     + deep_biases[l - 1])
            h_new, c_new = gate_update(gates, c_scr[l])
            h_scr[l] = h_new
            c_scr[l] = c_new
            x_in = h_new

        hbuf_scr[tl] = x_in  # top-layer hidden for this step (f32)
        return carry

    lax.fori_loop(0, TT, step, 0, unroll=unroll)

    # ---- epilogue: batched FC head over the whole chunk, lane-dense store --
    hflat = hbuf_scr[...].reshape(TT * Bp, Hp).astype(mdt)
    fc = jnp.dot(hflat, wf_ref[...], preferred_element_type=jnp.float32)
    out_ref[...] = (fc + bf_ref[...]).reshape(TT, Bp, Op)


def personal_vad_et_forward(x, params, *, num_layers, hidden_dim, out_dim,
                            time_chunk=128, weight_dtype=jnp.bfloat16):
    """x: (B, T, input_dim) float32 (batch_first, like the PyTorch module).

    params: per layer l: 'W_ih_l{l}': (4H, in_l), 'W_hh_l{l}': (4H, H),
            'b_ih_l{l}': (4H,), 'b_hh_l{l}': (4H,)
            plus 'fc_w': (out_dim, H), 'fc_b': (out_dim,)  (PyTorch layout).
    Returns (B, T, out_dim) float32.
    """
    B, T, D = x.shape
    H = hidden_dim
    L = num_layers

    Hp = _round_up(H, 128)            # hidden padded to full lanes
    Op = _round_up(out_dim, 128)      # FC output padded to full lanes
    Bp = _round_up(max(B, 8), 8)      # batch padded to full sublanes
    TT = _round_up(max(1, min(time_chunk, T)), 8)  # time steps per grid step
    Tp = _round_up(T, TT)
    G4 = 4 * Hp

    # --- stage the input: time-major, batch/time zero-padded. Padded rows /
    #     steps are behaviour preserving (they never feed real outputs). ---
    x_tm = jnp.zeros((Tp, Bp, D), jnp.float32)
    x_tm = x_tm.at[:T, :B, :].set(jnp.transpose(x, (1, 0, 2)).astype(jnp.float32))

    def gate_scatter_cols(w_t):
        # (rows, 4H) -> (rows, 4Hp): gate k's H columns land at lane k*Hp.
        rows = w_t.shape[0]
        out = jnp.zeros((rows, G4), jnp.float32)
        for k in range(4):
            out = out.at[:, k * Hp:k * Hp + H].set(w_t[:, k * H:(k + 1) * H])
        return out

    def scatter_bias(b_vec):
        out = jnp.zeros((1, G4), jnp.float32)
        for k in range(4):
            out = out.at[0, k * Hp:k * Hp + H].set(b_vec[k * H:(k + 1) * H])
        return out

    weight_args = []
    weight_specs = []

    def add_weight(w):
        weight_args.append(w)
        weight_specs.append(pl.BlockSpec(w.shape, lambda t: (0, 0)))

    # layer 0: separate input / recurrent matrices (input projection batched
    # over the whole chunk in the kernel prologue)
    W_ih0 = gate_scatter_cols(
        jnp.transpose(params["W_ih_l0"]).astype(jnp.float32))             # (D, 4Hp)
    W_hh0 = jnp.zeros((Hp, G4), jnp.float32).at[:H, :].set(
        gate_scatter_cols(jnp.transpose(params["W_hh_l0"]).astype(jnp.float32)))
    b0 = scatter_bias((params["b_ih_l0"] + params["b_hh_l0"]).astype(jnp.float32))
    add_weight(W_ih0.astype(weight_dtype))
    add_weight(W_hh0.astype(weight_dtype))
    add_weight(b0)                                                         # f32 bias

    # layers 1..L-1: fused [h_below | h_prev] matrix of shape (2*Hp, 4Hp)
    for l in range(1, L):
        W_ih_t = gate_scatter_cols(
            jnp.transpose(params[f"W_ih_l{l}"]).astype(jnp.float32))       # (H, 4Hp)
        W_hh_t = gate_scatter_cols(
            jnp.transpose(params[f"W_hh_l{l}"]).astype(jnp.float32))       # (H, 4Hp)
        W_cat = jnp.zeros((2 * Hp, G4), jnp.float32)
        W_cat = W_cat.at[:H, :].set(W_ih_t)
        W_cat = W_cat.at[Hp:Hp + H, :].set(W_hh_t)
        bl = scatter_bias(
            (params[f"b_ih_l{l}"] + params[f"b_hh_l{l}"]).astype(jnp.float32))
        add_weight(W_cat.astype(weight_dtype))
        add_weight(bl)

    # FC head padded to a lane-dense (Hp, Op) / (1, Op)
    W_fc = jnp.zeros((Hp, Op), jnp.float32).at[:H, :out_dim].set(
        jnp.transpose(params["fc_w"]).astype(jnp.float32))
    b_fc = jnp.zeros((1, Op), jnp.float32).at[0, :out_dim].set(
        params["fc_b"].astype(jnp.float32))
    add_weight(W_fc.astype(weight_dtype))
    add_weight(b_fc)

    # Full unroll for short chunks (LLO scheduler visibility); rolled loop for
    # long chunks to keep code size bounded.
    unroll = bool(TT <= 32)
    kernel = functools.partial(_lstm_fc_kernel, L, Hp, TT, Bp, Op, unroll)

    # VMEM budget (generous, never below the default) and a cost estimate.
    weight_bytes = sum(int(w.size) * w.dtype.itemsize for w in weight_args)
    block_bytes = TT * Bp * (D + Op) * 4
    scratch_bytes = (2 * L * Bp * Hp + TT * Bp * (G4 + Hp)) * 4
    vmem_limit = max(32 * 1024 * 1024,
                     2 * block_bytes + 2 * weight_bytes + scratch_bytes + (16 << 20))

    lstm_flops = (2 * Bp * Tp * (D + Hp) * G4
                  + 2 * Bp * Tp * (2 * Hp) * G4 * max(L - 1, 0))
    fc_flops = 2 * Bp * Tp * Hp * Op
    cost = pl.CostEstimate(
        flops=int(lstm_flops + fc_flops),
        transcendentals=int(Tp * L * Bp * 5 * Hp),
        bytes_accessed=int(x_tm.size * 4 + Tp * Bp * Op * 4 + weight_bytes),
    )

    out_tm = pl.pallas_call(
        kernel,
        out_shape=jax.ShapeDtypeStruct((Tp, Bp, Op), jnp.float32),
        grid_spec=pltpu.PrefetchScalarGridSpec(
            num_scalar_prefetch=0,
            grid=(Tp // TT,),
            in_specs=[pl.BlockSpec((TT, Bp, D), lambda t: (t, 0, 0))] + weight_specs,
            out_specs=pl.BlockSpec((TT, Bp, Op), lambda t: (t, 0, 0)),
            scratch_shapes=[
                pltpu.VMEM((L, Bp, Hp), jnp.float32),   # hidden state per layer
                pltpu.VMEM((L, Bp, Hp), jnp.float32),   # cell state per layer
                pltpu.VMEM((TT, Bp, G4), jnp.float32),  # layer-0 x@W_ih+b for chunk
                pltpu.VMEM((TT, Bp, Hp), jnp.float32),  # top-layer h per step
            ],
        ),
        compiler_params=pltpu.CompilerParams(
            dimension_semantics=("arbitrary",),          # time is sequential
            vmem_limit_bytes=int(vmem_limit),
        ),
        cost_estimate=cost,
    )(x_tm, *weight_args)

    # strip padding; the remaining transpose touches only (T, B, out_dim) data.
    return jnp.transpose(out_tm[:T, :B, :out_dim], (1, 0, 2))


# ----------------------------- reference (pure JAX) -----------------------------
def _reference_forward(x, params, *, num_layers, hidden_dim, out_dim):
    B, T, D = x.shape
    H = hidden_dim
    inp = x.astype(jnp.float32)
    for l in range(num_layers):
        W_ih = params[f"W_ih_l{l}"].astype(jnp.float32)
        W_hh = params[f"W_hh_l{l}"].astype(jnp.float32)
        b = (params[f"b_ih_l{l}"] + params[f"b_hh_l{l}"]).astype(jnp.float32)

        def step(carry, x_t):
            h, c = carry
            gates = x_t @ W_ih.T + h @ W_hh.T + b
            i = jax.nn.sigmoid(gates[:, 0 * H:1 * H])
            f = jax.nn.sigmoid(gates[:, 1 * H:2 * H])
            g = jnp.tanh(gates[:, 2 * H:3 * H])
            o = jax.nn.sigmoid(gates[:, 3 * H:4 * H])
            c = f * c + i * g
            h = o * jnp.tanh(c)
            return (h, c), h

        init = (jnp.zeros((B, H), jnp.float32), jnp.zeros((B, H), jnp.float32))
        _, hs = lax.scan(step, init, jnp.transpose(inp, (1, 0, 2)))
        inp = jnp.transpose(hs, (1, 0, 2))
    return inp @ params["fc_w"].T.astype(jnp.float32) + params["fc_b"].astype(jnp.float32)


# ----------------------------- parameter init -----------------------------
def _init_params(key, input_dim, hidden_dim, num_layers, out_dim):
    """Deterministic init matching PyTorch's U(-1/sqrt(H), 1/sqrt(H)) shapes."""
    H = hidden_dim
    bound = 1.0 / jnp.sqrt(jnp.asarray(H, jnp.float32))
    params = {}
    for l in range(num_layers):
        in_l = input_dim if l == 0 else H
        key, k1, k2, k3, k4 = jax.random.split(key, 5)
        params[f"W_ih_l{l}"] = jax.random.uniform(k1, (4 * H, in_l), jnp.float32, -bound, bound)
        params[f"W_hh_l{l}"] = jax.random.uniform(k2, (4 * H, H), jnp.float32, -bound, bound)
        params[f"b_ih_l{l}"] = jax.random.uniform(k3, (4 * H,), jnp.float32, -bound, bound)
        params[f"b_hh_l{l}"] = jax.random.uniform(k4, (4 * H,), jnp.float32, -bound, bound)
    key, k5, k6 = jax.random.split(key, 3)
    params["fc_w"] = jax.random.uniform(k5, (out_dim, H), jnp.float32, -bound, bound)
    params["fc_b"] = jax.random.uniform(k6, (out_dim,), jnp.float32, -bound, bound)
    return params


if __name__ == "__main__":
    # Small shapes consistent with personal_vad_et(input_dim, hidden_dim, num_layers, out_dim).
    # T=20 with time_chunk=8 exercises multi-chunk state carry plus time/batch/
    # hidden/output padding paths.
    B, T = 2, 20
    input_dim, hidden_dim, num_layers, out_dim = 16, 32, 2, 3

    key = jax.random.PRNGKey(0)
    key, kx = jax.random.split(key)
    x = jax.random.normal(kx, (B, T, input_dim), jnp.float32)
    params = _init_params(key, input_dim, hidden_dim, num_layers, out_dim)

    ref = _reference_forward(
        x, params, num_layers=num_layers, hidden_dim=hidden_dim, out_dim=out_dim)

    # exact-math path (f32 matmul operands)
    out_f32 = personal_vad_et_forward(
        x, params, num_layers=num_layers, hidden_dim=hidden_dim, out_dim=out_dim,
        time_chunk=8, weight_dtype=jnp.float32)
    out_f32 = jax.block_until_ready(out_f32)
    assert out_f32.shape == (B, T, out_dim)
    assert jnp.allclose(out_f32, ref, rtol=5e-3, atol=5e-3), \
        "f32 kernel mismatch vs pure-JAX reference"

    # fast path (bf16 matmul operands, f32 state / accumulation)
    out_bf16 = personal_vad_et_forward(
        x, params, num_layers=num_layers, hidden_dim=hidden_dim, out_dim=out_dim,
        time_chunk=8, weight_dtype=jnp.bfloat16)
    out_bf16 = jax.block_until_ready(out_bf16)
    assert out_bf16.shape == (B, T, out_dim)
    assert jnp.allclose(out_bf16, ref, rtol=3e-2, atol=3e-2), \
        "bf16 kernel mismatch vs pure-JAX reference"

    print("KERNEL_OK")
</pallas_src>

<mosaic_0001>
module attributes {stable_mosaic.version = 11 : i64} {
  func.func @_lstm_fc_kernel(%arg0: i32, %arg1: memref<8x8x16xf32, #tpu.memory_space<vmem>>, %arg2: memref<16x512xf32, #tpu.memory_space<vmem>>, %arg3: memref<128x512xf32, #tpu.memory_space<vmem>>, %arg4: memref<1x512xf32, #tpu.memory_space<vmem>>, %arg5: memref<256x512xf32, #tpu.memory_space<vmem>>, %arg6: memref<1x512xf32, #tpu.memory_space<vmem>>, %arg7: memref<128x128xf32, #tpu.memory_space<vmem>>, %arg8: memref<1x128xf32, #tpu.memory_space<vmem>>, %arg9: memref<8x8x128xf32, #tpu.memory_space<vmem>>, %arg10: memref<2x8x128xf32, #tpu.memory_space<vmem>>, %arg11: memref<2x8x128xf32, #tpu.memory_space<vmem>>, %arg12: memref<8x8x512xf32, #tpu.memory_space<vmem>>, %arg13: memref<8x8x128xf32, #tpu.memory_space<vmem>>) attributes {dimension_semantics = [#tpu.dimension_semantics<arbitrary>], iteration_bounds = array<i64: 3>, scalar_prefetch = 0 : i64, scratch_operands = 4 : i64, tpu.core_type = #tpu.core_type<tc>, window_params = [{transform_indices = @transform_0, window_bounds = array<i64: 8, 8, 16>}, {pipeline_mode = #tpu.pipeline_mode<synchronous>, transform_indices = @transform_1, window_bounds = array<i64: 16, 512>}, {pipeline_mode = #tpu.pipeline_mode<synchronous>, transform_indices = @transform_2, window_bounds = array<i64: 128, 512>}, {pipeline_mode = #tpu.pipeline_mode<synchronous>, transform_indices = @transform_3, window_bounds = array<i64: 1, 512>}, {pipeline_mode = #tpu.pipeline_mode<synchronous>, transform_indices = @transform_4, window_bounds = array<i64: 256, 512>}, {pipeline_mode = #tpu.pipeline_mode<synchronous>, transform_indices = @transform_5, window_bounds = array<i64: 1, 512>}, {pipeline_mode = #tpu.pipeline_mode<synchronous>, transform_indices = @transform_6, window_bounds = array<i64: 128, 128>}, {pipeline_mode = #tpu.pipeline_mode<synchronous>, transform_indices = @transform_7, window_bounds = array<i64: 1, 128>}, {transform_indices = @transform_8, window_bounds = array<i64: 8, 8, 128>}]} {
    %c0_i32 = arith.constant 0 : i32
    %0 = arith.cmpi eq, %arg0, %c0_i32 : i32
    %1 = arith.extui %0 : i1 to i32
    %c0_i32_0 = arith.constant 0 : i32
    %2 = arith.cmpi ne, %1, %c0_i32_0 : i32
    scf.if %2 {
      %cst_343 = arith.constant 0.000000e+00 : f32
      %696 = vector.broadcast %cst_343 : f32 to vector<2x8x128xf32>
      %c0_344 = arith.constant 0 : index
      %c0_345 = arith.constant 0 : index
      %c0_346 = arith.constant 0 : index
      %697 = vector.load %arg10[%c0_344, %c0_345, %c0_346] : memref<2x8x128xf32, #tpu.memory_space<vmem>>, vector<2x8x128xf32>
      tpu.vector_store %arg10[%c0_344, %c0_345, %c0_346], %696 {strides = array<i32>} : memref<2x8x128xf32, #tpu.memory_space<vmem>>, vector<2x8x128xf32>,
      %cst_347 = arith.constant 0.000000e+00 : f32
      %698 = vector.broadcast %cst_347 : f32 to vector<2x8x128xf32>
      %c0_348 = arith.constant 0 : index
      %c0_349 = arith.constant 0 : index
      %c0_350 = arith.constant 0 : index
      %699 = vector.load %arg11[%c0_348, %c0_349, %c0_350] : memref<2x8x128xf32, #tpu.memory_space<vmem>>, vector<2x8x128xf32>
      tpu.vector_store %arg11[%c0_348, %c0_349, %c0_350], %698 {strides = array<i32>} : memref<2x8x128xf32, #tpu.memory_space<vmem>>, vector<2x8x128xf32>,
    } else {
    }
    %c0 = arith.constant 0 : index
    %c0_1 = arith.constant 0 : index
    %c0_2 = arith.constant 0 : index
    %3 = vector.load %arg1[%c0, %c0_1, %c0_2] : memref<8x8x16xf32, #tpu.memory_space<vmem>>, vector<8x8x16xf32>
    %4 = vector.shape_cast %3 : vector<8x8x16xf32> to vector<64x16xf32>
    %c0_3 = arith.constant 0 : index
    %c0_4 = arith.constant 0 : index
    %5 = vector.load %arg2[%c0_3, %c0_4] : memref<16x512xf32, #tpu.memory_space<vmem>>, vector<16x512xf32>
    %cst = arith.constant dense<0.000000e+00> : vector<64x512xf32>
    %6 = tpu.matmul %4, %5, %cst {dimension_numbers = #tpu.dot_dimension_numbers<[1], [0], [0], [1], [0, 0, 1, 1], [], []>} : vector<64x16xf32>, vector<16x512xf32>, vector<64x512xf32> -> vector<64x512xf32>
    %c0_5 = arith.constant 0 : index
    %c0_6 = arith.constant 0 : index
    %7 = vector.load %arg4[%c0_5, %c0_6] : memref<1x512xf32, #tpu.memory_space<vmem>>, vector<1x512xf32>
    %8 = vector.broadcast %7 : vector<1x512xf32> to vector<64x512xf32>
    %9 = arith.addf %6, %8 : vector<64x512xf32>
    %10 = vector.shape_cast %9 : vector<64x512xf32> to vector<8x8x512xf32>
    %c0_7 = arith.constant 0 : index
    %c0_8 = arith.constant 0 : index
    %c0_9 = arith.constant 0 : index
    %11 = vector.load %arg12[%c0_7, %c0_8, %c0_9] : memref<8x8x512xf32, #tpu.memory_space<vmem>>, vector<8x8x512xf32>
    tpu.vector_store %arg12[%c0_7, %c0_8, %c0_9], %10 {strides = array<i32>} : memref<8x8x512xf32, #tpu.memory_space<vmem>>, vector<8x8x512xf32>,
    %c0_10 = arith.constant 0 : index
    %c0_11 = arith.constant 0 : index
    %12 = vector.load %arg6[%c0_10, %c0_11] : memref<1x512xf32, #tpu.memory_space<vmem>>, vector<1x512xf32>
    %13 = vector.shape_cast %12 : vector<1x512xf32> to vector<1x512xf32>
    %14 = vector.broadcast %13 : vector<1x512xf32> to vector<8x512xf32>
    %c0_i32_12 = arith.constant 0 : i32
    %c0_13 = arith.constant 0 : index
    %c0_14 = arith.constant 0 : index
    %c0_15 = arith.constant 0 : index
    %15 = vector.load %arg10[%c0_13, %c0_14, %c0_15] : memref<2x8x128xf32, #tpu.memory_space<vmem>>, vector<1x8x128xf32>
    %16 = vector.shape_cast %15 : vector<1x8x128xf32> to vector<8x128xf32>
    %17 = arith.index_cast %c0_i32_12 : i32 to index
    %c0_16 = arith.constant 0 : index
    %c0_17 = arith.constant 0 : index
    %18 = vector.load %arg12[%17, %c0_16, %c0_17] : memref<8x8x512xf32, #tpu.memory_space<vmem>>, vector<1x8x512xf32>
    %19 = vector.shape_cast %18 : vector<1x8x512xf32> to vector<8x512xf32>
    %c0_18 = arith.constant 0 : index
    %c0_19 = arith.constant 0 : index
    %20 = vector.load %arg3[%c0_18, %c0_19] : memref<128x512xf32, #tpu.memory_space<vmem>>, vector<128x512xf32>
    %cst_20 = arith.constant dense<0.000000e+00> : vector<8x512xf32>
    %21 = tpu.matmul %16, %20, %cst_20 {dimension_numbers = #tpu.dot_dimension_numbers<[1], [0], [0], [1], [0, 0, 1, 1], [], []>} : vector<8x128xf32>, vector<128x512xf32>, vector<8x512xf32> -> vector<8x512xf32>
    %22 = arith.addf %19, %21 : vector<8x512xf32>
    %c0_21 = arith.constant 0 : index
    %c0_22 = arith.constant 0 : index
    %c0_23 = arith.constant 0 : index
    %23 = vector.load %arg11[%c0_21, %c0_22, %c0_23] : memref<2x8x128xf32, #tpu.memory_space<vmem>>, vector<1x8x128xf32>
    %24 = vector.shape_cast %23 : vector<1x8x128xf32> to vector<8x128xf32>
    %25 = vector.extract_strided_slice %22 {offsets = [0, 0], sizes = [8, 128], strides = [1, 1]} : vector<8x512xf32> to vector<8x128xf32>
    %26 = arith.negf %25 : vector<8x128xf32>
    %27 = math.exp %26 : vector<8x128xf32>
    %cst_24 = arith.constant 1.000000e+00 : f32
    %28 = vector.broadcast %cst_24 : f32 to vector<8x128xf32>
    %29 = arith.addf %28, %27 : vector<8x128xf32>
    %30 = arith.divf %28, %29 : vector<8x128xf32>
    %31 = vector.extract_strided_slice %22 {offsets = [0, 128], sizes = [8, 128], strides = [1, 1]} : vector<8x512xf32> to vector<8x128xf32>
    %32 = arith.negf %31 : vector<8x128xf32>
    %33 = math.exp %32 : vector<8x128xf32>
    %cst_25 = arith.constant 1.000000e+00 : f32
    %34 = vector.broadcast %cst_25 : f32 to vector<8x128xf32>
    %35 = arith.addf %34, %33 : vector<8x128xf32>
    %36 = arith.divf %34, %35 : vector<8x128xf32>
    %37 = vector.extract_strided_slice %22 {offsets = [0, 256], sizes = [8, 128], strides = [1, 1]} : vector<8x512xf32> to vector<8x128xf32>
    %38 = math.tanh %37 : vector<8x128xf32>
    %39 = vector.extract_strided_slice %22 {offsets = [0, 384], sizes = [8, 128], strides = [1, 1]} : vector<8x512xf32> to vector<8x128xf32>
    %40 = arith.negf %39 : vector<8x128xf32>
    %41 = math.exp %40 : vector<8x128xf32>
    %cst_26 = arith.constant 1.000000e+00 : f32
    %42 = vector.broadcast %cst_26 : f32 to vector<8x128xf32>
    %43 = arith.addf %42, %41 : vector<8x128xf32>
    %44 = arith.divf %42, %43 : vector<8x128xf32>
    %45 = arith.mulf %36, %24 : vector<8x128xf32>
    %46 = arith.mulf %30, %38 : vector<8x128xf32>
    %47 = arith.addf %45, %46 : vector<8x128xf32>
    %48 = math.tanh %47 : vector<8x128xf32>
    %49 = arith.mulf %44, %48 : vector<8x128xf32>
    %c0_27 = arith.constant 0 : index
    %c0_28 = arith.constant 0 : index
    %c0_29 = arith.constant 0 : index
    %50 = vector.load %arg10[%c0_27, %c0_28, %c0_29] : memref<2x8x128xf32, #tpu.memory_space<vmem>>, vector<1x8x128xf32>
    %51 = vector.shape_cast %50 : vector<1x8x128xf32> to vector<8x128xf32>
    %52 = vector.shape_cast %49 : vector<8x128xf32> to vector<1x8x128xf32>
    tpu.vector_store %arg10[%c0_27, %c0_28, %c0_29], %52 {strides = array<i32>} : memref<2x8x128xf32, #tpu.memory_space<vmem>>, vector<1x8x128xf32>,
    %c0_30 = arith.constant 0 : index
    %c0_31 = arith.constant 0 : index
    %c0_32 = arith.constant 0 : index
    %53 = vector.load %arg11[%c0_30, %c0_31, %c0_32] : memref<2x8x128xf32, #tpu.memory_space<vmem>>, vector<1x8x128xf32>
    %54 = vector.shape_cast %53 : vector<1x8x128xf32> to vector<8x128xf32>
    %55 = vector.shape_cast %47 : vector<8x128xf32> to vector<1x8x128xf32>
    tpu.vector_store %arg11[%c0_30, %c0_31, %c0_32], %55 {strides = array<i32>} : memref<2x8x128xf32, #tpu.memory_space<vmem>>, vector<1x8x128xf32>,
    %c1 = arith.constant 1 : index
    %c0_33 = arith.constant 0 : index
    %c0_34 = arith.constant 0 : index
    %56 = vector.load %arg10[%c1, %c0_33, %c0_34] : memref<2x8x128xf32, #tpu.memory_space<vmem>>, vector<1x8x128xf32>
    %57 = vector.shape_cast %56 : vector<1x8x128xf32> to vector<8x128xf32>
    %58 = tpu.concatenate %49, %57 in 1 : vector<8x128xf32>, vector<8x128xf32> -> vector<8x256xf32>
    %c0_35 = arith.constant 0 : index
    %c0_36 = arith.constant 0 : index
    %59 = vector.load %arg5[%c0_35, %c0_36] : memref<256x512xf32, #tpu.memory_space<vmem>>, vector<256x512xf32>
    %cst_37 = arith.constant dense<0.000000e+00> : vector<8x512xf32>
    %60 = tpu.matmul %58, %59, %cst_37 {dimension_numbers = #tpu.dot_dimension_numbers<[1], [0], [0], [1], [0, 0, 1, 1], [], []>} : vector<8x256xf32>, vector<256x512xf32>, vector<8x512xf32> -> vector<8x512xf32>
    %61 = arith.addf %60, %14 : vector<8x512xf32>
    %c1_38 = arith.constant 1 : index
    %c0_39 = arith.constant 0 : index
    %c0_40 = arith.constant 0 : index
    %62 = vector.load %arg11[%c1_38, %c0_39, %c0_40] : memref<2x8x128xf32, #tpu.memory_space<vmem>>, vector<1x8x128xf32>
    %63 = vector.shape_cast %62 : vector<1x8x128xf32> to vector<8x128xf32>
    %64 = vector.extract_strided_slice %61 {offsets = [0, 0], sizes = [8, 128], strides = [1, 1]} : vector<8x512xf32> to vector<8x128xf32>
    %65 = arith.negf %64 : vector<8x128xf32>
    %66 = math.exp %65 : vector<8x128xf32>
    %cst_41 = arith.constant 1.000000e+00 : f32
    %67 = vector.broadcast %cst_41 : f32 to vector<8x128xf32>
    %68 = arith.addf %67, %66 : vector<8x128xf32>
    %69 = arith.divf %67, %68 : vector<8x128xf32>
    %70 = vector.extract_strided_slice %61 {offsets = [0, 128], sizes = [8, 128], strides = [1, 1]} : vector<8x512xf32> to vector<8x128xf32>
    %71 = arith.negf %70 : vector<8x128xf32>
    %72 = math.exp %71 : vector<8x128xf32>
    %cst_42 = arith.constant 1.000000e+00 : f32
    %73 = vector.broadcast %cst_42 : f32 to vector<8x128xf32>
    %74 = arith.addf %73, %72 : vector<8x128xf32>
    %75 = arith.divf %73, %74 : vector<8x128xf32>
    %76 = vector.extract_strided_slice %61 {offsets = [0, 256], sizes = [8, 128], strides = [1, 1]} : vector<8x512xf32> to vector<8x128xf32>
    %77 = math.tanh %76 : vector<8x128xf32>
    %78 = vector.extract_strided_slice %61 {offsets = [0, 384], sizes = [8, 128], strides = [1, 1]} : vector<8x512xf32> to vector<8x128xf32>
    %79 = arith.negf %78 : vector<8x128xf32>
    %80 = math.exp %79 : vector<8x128xf32>
    %cst_43 = arith.constant 1.000000e+00 : f32
    %81 = vector.broadcast %cst_43 : f32 to vector<8x128xf32>
    %82 = arith.addf %81, %80 : vector<8x128xf32>
    %83 = arith.divf %81, %82 : vector<8x128xf32>
    %84 = arith.mulf %75, %63 : vector<8x128xf32>
    %85 = arith.mulf %69, %77 : vector<8x128xf32>
    %86 = arith.addf %84, %85 : vector<8x128xf32>
    %87 = math.tanh %86 : vector<8x128xf32>
    %88 = arith.mulf %83, %87 : vector<8x128xf32>
    %c1_44 = arith.constant 1 : index
    %c0_45 = arith.constant 0 : index
    %c0_46 = arith.constant 0 : index
    %89 = vector.load %arg10[%c1_44, %c0_45, %c0_46] : memref<2x8x128xf32, #tpu.memory_space<vmem>>, vector<1x8x128xf32>
    %90 = vector.shape_cast %89 : vector<1x8x128xf32> to vector<8x128xf32>
    %91 = vector.shape_cast %88 : vector<8x128xf32> to vector<1x8x128xf32>
    tpu.vector_store %arg10[%c1_44, %c0_45, %c0_46], %91 {strides = array<i32>} : memref<2x8x128xf32, #tpu.memory_space<vmem>>, vector<1x8x128xf32>,
    %c1_47 = arith.constant 1 : index
    %c0_48 = arith.constant 0 : index
    %c0_49 = arith.constant 0 : index
    %92 = vector.load %arg11[%c1_47, %c0_48, %c0_49] : memref<2x8x128xf32, #tpu.memory_space<vmem>>, vector<1x8x128xf32>
    %93 = vector.shape_cast %92 : vector<1x8x128xf32> to vector<8x128xf32>
    %94 = vector.shape_cast %86 : vector<8x128xf32> to vector<1x8x128xf32>
    tpu.vector_store %arg11[%c1_47, %c0_48, %c0_49], %94 {strides = array<i32>} : memref<2x8x128xf32, #tpu.memory_space<vmem>>, vector<1x8x128xf32>,
    %95 = arith.index_cast %c0_i32_12 : i32 to index
    %c0_50 = arith.constant 0 : index
    %c0_51 = arith.constant 0 : index
    %96 = vector.load %arg13[%95, %c0_50, %c0_51] : memref<8x8x128xf32, #tpu.memory_space<vmem>>, vector<1x8x128xf32>
    %97 = vector.shape_cast %96 : vector<1x8x128xf32> to vector<8x128xf32>
    %98 = vector.shape_cast %88 : vector<8x128xf32> to vector<1x8x128xf32>
    tpu.vector_store %arg13[%95, %c0_50, %c0_51], %98 {strides = array<i32>} : memref<8x8x128xf32, #tpu.memory_space<vmem>>, vector<1x8x128xf32>,
    %c1_i32 = arith.constant 1 : i32
    %c0_52 = arith.constant 0 : index
    %c0_53 = arith.constant 0 : index
    %c0_54 = arith.constant 0 : index
    %99 = vector.load %arg10[%c0_52, %c0_53, %c0_54] : memref<2x8x128xf32, #tpu.memory_space<vmem>>, vector<1x8x128xf32>
    %100 = vector.shape_cast %99 : vector<1x8x128xf32> to vector<8x128xf32>
    %101 = arith.index_cast %c1_i32 : i32 to index
    %c0_55 = arith.constant 0 : index
    %c0_56 = arith.constant 0 : index
    %102 = vector.load %arg12[%101, %c0_55, %c0_56] : memref<8x8x512xf32, #tpu.memory_space<vmem>>, vector<1x8x512xf32>
    %103 = vector.shape_cast %102 : vector<1x8x512xf32> to vector<8x512xf32>
    %c0_57 = arith.constant 0 : index
    %c0_58 = arith.constant 0 : index
    %104 = vector.load %arg3[%c0_57, %c0_58] : memref<128x512xf32, #tpu.memory_space<vmem>>, vector<128x512xf32>
    %cst_59 = arith.constant dense<0.000000e+00> : vector<8x512xf32>
    %105 = tpu.matmul %100, %104, %cst_59 {dimension_numbers = #tpu.dot_dimension_numbers<[1], [0], [0], [1], [0, 0, 1, 1], [], []>} : vector<8x128xf32>, vector<128x512xf32>, vector<8x512xf32> -> vector<8x512xf32>
    %106 = arith.addf %103, %105 : vector<8x512xf32>
    %c0_60 = arith.constant 0 : index
    %c0_61 = arith.constant 0 : index
    %c0_62 = arith.constant 0 : index
    %107 = vector.load %arg11[%c0_60, %c0_61, %c0_62] : memref<2x8x128xf32, #tpu.memory_space<vmem>>, vector<1x8x128xf32>
    %108 = vector.shape_cast %107 : vector<1x8x128xf32> to vector<8x128xf32>
    %109 = vector.extract_strided_slice %106 {offsets = [0, 0], sizes = [8, 128], strides = [1, 1]} : vector<8x512xf32> to vector<8x128xf32>
    %110 = arith.negf %109 : vector<8x128xf32>
    %111 = math.exp %110 : vector<8x128xf32>
    %cst_63 = arith.constant 1.000000e+00 : f32
    %112 = vector.broadcast %cst_63 : f32 to vector<8x128xf32>
    %113 = arith.addf %112, %111 : vector<8x128xf32>
    %114 = arith.divf %112, %113 : vector<8x128xf32>
    %115 = vector.extract_strided_slice %106 {offsets = [0, 128], sizes = [8, 128], strides = [1, 1]} : vector<8x512xf32> to vector<8x128xf32>
    %116 = arith.negf %115 : vector<8x128xf32>
    %117 = math.exp %116 : vector<8x128xf32>
    %cst_64 = arith.constant 1.000000e+00 : f32
    %118 = vector.broadcast %cst_64 : f32 to vector<8x128xf32>
    %119 = arith.addf %118, %117 : vector<8x128xf32>
    %120 = arith.divf %118, %119 : vector<8x128xf32>
    %121 = vector.extract_strided_slice %106 {offsets = [0, 256], sizes = [8, 128], strides = [1, 1]} : vector<8x512xf32> to vector<8x128xf32>
    %122 = math.tanh %121 : vector<8x128xf32>
    %123 = vector.extract_strided_slice %106 {offsets = [0, 384], sizes = [8, 128], strides = [1, 1]} : vector<8x512xf32> to vector<8x128xf32>
    %124 = arith.negf %123 : vector<8x128xf32>
    %125 = math.exp %124 : vector<8x128xf32>
    %cst_65 = arith.constant 1.000000e+00 : f32
    %126 = vector.broadcast %cst_65 : f32 to vector<8x128xf32>
    %127 = arith.addf %126, %125 : vector<8x128xf32>
    %128 = arith.divf %126, %127 : vector<8x128xf32>
    %129 = arith.mulf %120, %108 : vector<8x128xf32>
    %130 = arith.mulf %114, %122 : vector<8x128xf32>
    %131 = arith.addf %129, %130 : vector<8x128xf32>
    %132 = math.tanh %131 : vector<8x128xf32>
    %133 = arith.mulf %128, %132 : vector<8x128xf32>
    %c0_66 = arith.constant 0 : index
    %c0_67 = arith.constant 0 : index
    %c0_68 = arith.constant 0 : index
    %134 = vector.load %arg10[%c0_66, %c0_67, %c0_68] : memref<2x8x128xf32, #tpu.memory_space<vmem>>, vector<1x8x128xf32>
    %135 = vector.shape_cast %134 : vector<1x8x128xf32> to vector<8x128xf32>
    %136 = vector.shape_cast %133 : vector<8x128xf32> to vector<1x8x128xf32>
    tpu.vector_store %arg10[%c0_66, %c0_67, %c0_68], %136 {strides = array<i32>} : memref<2x8x128xf32, #tpu.memory_space<vmem>>, vector<1x8x128xf32>,
    %c0_69 = arith.constant 0 : index
    %c0_70 = arith.constant 0 : index
    %c0_71 = arith.constant 0 : index
    %137 = vector.load %arg11[%c0_69, %c0_70, %c0_71] : memref<2x8x128xf32, #tpu.memory_space<vmem>>, vector<1x8x128xf32>
    %138 = vector.shape_cast %137 : vector<1x8x128xf32> to vector<8x128xf32>
    %139 = vector.shape_cast %131 : vector<8x128xf32> to vector<1x8x128xf32>
    tpu.vector_store %arg11[%c0_69, %c0_70, %c0_71], %139 {strides = array<i32>} : memref<2x8x128xf32, #tpu.memory_space<vmem>>, vector<1x8x128xf32>,
    %c1_72 = arith.constant 1 : index
    %c0_73 = arith.constant 0 : index
    %c0_74 = arith.constant 0 : index
    %140 = vector.load %arg10[%c1_72, %c0_73, %c0_74] : memref<2x8x128xf32, #tpu.memory_space<vmem>>, vector<1x8x128xf32>
    %141 = vector.shape_cast %140 : vector<1x8x128xf32> to vector<8x128xf32>
    %142 = tpu.concatenate %133, %141 in 1 : vector<8x128xf32>, vector<8x128xf32> -> vector<8x256xf32>
    %c0_75 = arith.constant 0 : index
    %c0_76 = arith.constant 0 : index
    %143 = vector.load %arg5[%c0_75, %c0_76] : memref<256x512xf32, #tpu.memory_space<vmem>>, vector<256x512xf32>
    %cst_77 = arith.constant dense<0.000000e+00> : vector<8x512xf32>
    %144 = tpu.matmul %142, %143, %cst_77 {dimension_numbers = #tpu.dot_dimension_numbers<[1], [0], [0], [1], [0, 0, 1, 1], [], []>} : vector<8x256xf32>, vector<256x512xf32>, vector<8x512xf32> -> vector<8x512xf32>
    %145 = arith.addf %144, %14 : vector<8x512xf32>
    %c1_78 = arith.constant 1 : index
    %c0_79 = arith.constant 0 : index
    %c0_80 = arith.constant 0 : index
    %146 = vector.load %arg11[%c1_78, %c0_79, %c0_80] : memref<2x8x128xf32, #tpu.memory_space<vmem>>, vector<1x8x128xf32>
    %147 = vector.shape_cast %146 : vector<1x8x128xf32> to vector<8x128xf32>
    %148 = vector.extract_strided_slice %145 {offsets = [0, 0], sizes = [8, 128], strides = [1, 1]} : vector<8x512xf32> to vector<8x128xf32>
    %149 = arith.negf %148 : vector<8x128xf32>
    %150 = math.exp %149 : vector<8x128xf32>
    %cst_81 = arith.constant 1.000000e+00 : f32
    %151 = vector.broadcast %cst_81 : f32 to vector<8x128xf32>
    %152 = arith.addf %151, %150 : vector<8x128xf32>
    %153 = arith.divf %151, %152 : vector<8x128xf32>
    %154 = vector.extract_strided_slice %145 {offsets = [0, 128], sizes = [8, 128], strides = [1, 1]} : vector<8x512xf32> to vector<8x128xf32>
    %155 = arith.negf %154 : vector<8x128xf32>
    %156 = math.exp %155 : vector<8x128xf32>
    %cst_82 = arith.constant 1.000000e+00 : f32
    %157 = vector.broadcast %cst_82 : f32 to vector<8x128xf32>
    %158 = arith.addf %157, %156 : vector<8x128xf32>
    %159 = arith.divf %157, %158 : vector<8x128xf32>
    %160 = vector.extract_strided_slice %145 {offsets = [0, 256], sizes = [8, 128], strides = [1, 1]} : vector<8x512xf32> to vector<8x128xf32>
    %161 = math.tanh %160 : vector<8x128xf32>
    %162 = vector.extract_strided_slice %145 {offsets = [0, 384], sizes = [8, 128], strides = [1, 1]} : vector<8x512xf32> to vector<8x128xf32>
    %163 = arith.negf %162 : vector<8x128xf32>
    %164 = math.exp %163 : vector<8x128xf32>
    %cst_83 = arith.constant 1.000000e+00 : f32
    %165 = vector.broadcast %cst_83 : f32 to vector<8x128xf32>
    %166 = arith.addf %165, %164 : vector<8x128xf32>
    %167 = arith.divf %165, %166 : vector<8x128xf32>
    %168 = arith.mulf %159, %147 : vector<8x128xf32>
    %169 = arith.mulf %153, %161 : vector<8x128xf32>
    %170 = arith.addf %168, %169 : vector<8x128xf32>
    %171 = math.tanh %170 : vector<8x128xf32>
    %172 = arith.mulf %167, %171 : vector<8x128xf32>
    %c1_84 = arith.constant 1 : index
    %c0_85 = arith.constant 0 : index
    %c0_86 = arith.constant 0 : index
    %173 = vector.load %arg10[%c1_84, %c0_85, %c0_86] : memref<2x8x128xf32, #tpu.memory_space<vmem>>, vector<1x8x128xf32>
    %174 = vector.shape_cast %173 : vector<1x8x128xf32> to vector<8x128xf32>
    %175 = vector.shape_cast %172 : vector<8x128xf32> to vector<1x8x128xf32>
    tpu.vector_store %arg10[%c1_84, %c0_85, %c0_86], %175 {strides = array<i32>} : memref<2x8x128xf32, #tpu.memory_space<vmem>>, vector<1x8x128xf32>,
    %c1_87 = arith.constant 1 : index
    %c0_88 = arith.constant 0 : index
    %c0_89 = arith.constant 0 : index
    %176 = vector.load %arg11[%c1_87, %c0_88, %c0_89] : memref<2x8x128xf32, #tpu.memory_space<vmem>>, vector<1x8x128xf32>
    %177 = vector.shape_cast %176 : vector<1x8x128xf32> to vector<8x128xf32>
    %178 = vector.shape_cast %170 : vector<8x128xf32> to vector<1x8x128xf32>
    tpu.vector_store %arg11[%c1_87, %c0_88, %c0_89], %178 {strides = array<i32>} : memref<2x8x128xf32, #tpu.memory_space<vmem>>, vector<1x8x128xf32>,
    %179 = arith.index_cast %c1_i32 : i32 to index
    %c0_90 = arith.constant 0 : index
    %c0_91 = arith.constant 0 : index
    %180 = vector.load %arg13[%179, %c0_90, %c0_91] : memref<8x8x128xf32, #tpu.memory_space<vmem>>, vector<1x8x128xf32>
    %181 = vector.shape_cast %180 : vector<1x8x128xf32> to vector<8x128xf32>
    %182 = vector.shape_cast %172 : vector<8x128xf32> to vector<1x8x128xf32>
    tpu.vector_store %arg13[%179, %c0_90, %c0_91], %182 {strides = array<i32>} : memref<8x8x128xf32, #tpu.memory_space<vmem>>, vector<1x8x128xf32>,
    %c2_i32 = arith.constant 2 : i32
    %c0_92 = arith.constant 0 : index
    %c0_93 = arith.constant 0 : index
    %c0_94 = arith.constant 0 : index
    %183 = vector.load %arg10[%c0_92, %c0_93, %c0_94] : memref<2x8x128xf32, #tpu.memory_space<vmem>>, vector<1x8x128xf32>
    %184 = vector.shape_cast %183 : vector<1x8x128xf32> to vector<8x128xf32>
    %185 = arith.index_cast %c2_i32 : i32 to index
    %c0_95 = arith.constant 0 : index
    %c0_96 = arith.constant 0 : index
    %186 = vector.load %arg12[%185, %c0_95, %c0_96] : memref<8x8x512xf32, #tpu.memory_space<vmem>>, vector<1x8x512xf32>
    %187 = vector.shape_cast %186 : vector<1x8x512xf32> to vector<8x512xf32>
    %c0_97 = arith.constant 0 : index
    %c0_98 = arith.constant 0 : index
    %188 = vector.load %arg3[%c0_97, %c0_98] : memref<128x512xf32, #tpu.memory_space<vmem>>, vector<128x512xf32>
    %cst_99 = arith.constant dense<0.000000e+00> : vector<8x512xf32>
    %189 = tpu.matmul %184, %188, %cst_99 {dimension_numbers = #tpu.dot_dimension_numbers<[1], [0], [0], [1], [0, 0, 1, 1], [], []>} : vector<8x128xf32>, vector<128x512xf32>, vector<8x512xf32> -> vector<8x512xf32>
    %190 = arith.addf %187, %189 : vector<8x512xf32>
    %c0_100 = arith.constant 0 : index
    %c0_101 = arith.constant 0 : index
    %c0_102 = arith.constant 0 : index
    %191 = vector.load %arg11[%c0_100, %c0_101, %c0_102] : memref<2x8x128xf32, #tpu.memory_space<vmem>>, vector<1x8x128xf32>
    %192 = vector.shape_cast %191 : vector<1x8x128xf32> to vector<8x128xf32>
    %193 = vector.extract_strided_slice %190 {offsets = [0, 0], sizes = [8, 128], strides = [1, 1]} : vector<8x512xf32> to vector<8x128xf32>
    %194 = arith.negf %193 : vector<8x128xf32>
    %195 = math.exp %194 : vector<8x128xf32>
    %cst_103 = arith.constant 1.000000e+00 : f32
    %196 = vector.broadcast %cst_103 : f32 to vector<8x128xf32>
    %197 = arith.addf %196, %195 : vector<8x128xf32>
    %198 = arith.divf %196, %197 : vector<8x128xf32>
    %199 = vector.extract_strided_slice %190 {offsets = [0, 128], sizes = [8, 128], strides = [1, 1]} : vector<8x512xf32> to vector<8x128xf32>
    %200 = arith.negf %199 : vector<8x128xf32>
    %201 = math.exp %200 : vector<8x128xf32>
    %cst_104 = arith.constant 1.000000e+00 : f32
    %202 = vector.broadcast %cst_104 : f32 to vector<8x128xf32>
    %203 = arith.addf %202, %201 : vector<8x128xf32>
    %204 = arith.divf %202, %203 : vector<8x128xf32>
    %205 = vector.extract_strided_slice %190 {offsets = [0, 256], sizes = [8, 128], strides = [1, 1]} : vector<8x512xf32> to vector<8x128xf32>
    %206 = math.tanh %205 : vector<8x128xf32>
    %207 = vector.extract_strided_slice %190 {offsets = [0, 384], sizes = [8, 128], strides = [1, 1]} : vector<8x512xf32> to vector<8x128xf32>
    %208 = arith.negf %207 : vector<8x128xf32>
    %209 = math.exp %208 : vector<8x128xf32>
    %cst_105 = arith.constant 1.000000e+00 : f32
    %210 = vector.broadcast %cst_105 : f32 to vector<8x128xf32>
    %211 = arith.addf %210, %209 : vector<8x128xf32>
    %212 = arith.divf %210, %211 : vector<8x128xf32>
    %213 = arith.mulf %204, %192 : vector<8x128xf32>
    %214 = arith.mulf %198, %206 : vector<8x128xf32>
    %215 = arith.addf %213, %214 : vector<8x128xf32>
    %216 = math.tanh %215 : vector<8x128xf32>
    %217 = arith.mulf %212, %216 : vector<8x128xf32>
    %c0_106 = arith.constant 0 : index
    %c0_107 = arith.constant 0 : index
    %c0_108 = arith.constant 0 : index
    %218 = vector.load %arg10[%c0_106, %c0_107, %c0_108] : memref<2x8x128xf32, #tpu.memory_space<vmem>>, vector<1x8x128xf32>
    %219 = vector.shape_cast %218 : vector<1x8x128xf32> to vector<8x128xf32>
    %220 = vector.shape_cast %217 : vector<8x128xf32> to vector<1x8x128xf32>
    tpu.vector_store %arg10[%c0_106, %c0_107, %c0_108], %220 {strides = array<i32>} : memref<2x8x128xf32, #tpu.memory_space<vmem>>, vector<1x8x128xf32>,
    %c0_109 = arith.constant 0 : index
    %c0_110 = arith.constant 0 : index
    %c0_111 = arith.constant 0 : index
    %221 = vector.load %arg11[%c0_109, %c0_110, %c0_111] : memref<2x8x128xf32, #tpu.memory_space<vmem>>, vector<1x8x128xf32>
    %222 = vector.shape_cast %221 : vector<1x8x128xf32> to vector<8x128xf32>
    %223 = vector.shape_cast %215 : vector<8x128xf32> to vector<1x8x128xf32>
    tpu.vector_store %arg11[%c0_109, %c0_110, %c0_111], %223 {strides = array<i32>} : memref<2x8x128xf32, #tpu.memory_space<vmem>>, vector<1x8x128xf32>,
    %c1_112 = arith.constant 1 : index
    %c0_113 = arith.constant 0 : index
    %c0_114 = arith.constant 0 : index
    %224 = vector.load %arg10[%c1_112, %c0_113, %c0_114] : memref<2x8x128xf32, #tpu.memory_space<vmem>>, vector<1x8x128xf32>
    %225 = vector.shape_cast %224 : vector<1x8x128xf32> to vector<8x128xf32>
    %226 = tpu.concatenate %217, %225 in 1 : vector<8x128xf32>, vector<8x128xf32> -> vector<8x256xf32>
    %c0_115 = arith.constant 0 : index
    %c0_116 = arith.constant 0 : index
    %227 = vector.load %arg5[%c0_115, %c0_116] : memref<256x512xf32, #tpu.memory_space<vmem>>, vector<256x512xf32>
    %cst_117 = arith.constant dense<0.000000e+00> : vector<8x512xf32>
    %228 = tpu.matmul %226, %227, %cst_117 {dimension_numbers = #tpu.dot_dimension_numbers<[1], [0], [0], [1], [0, 0, 1, 1], [], []>} : vector<8x256xf32>, vector<256x512xf32>, vector<8x512xf32> -> vector<8x512xf32>
    %229 = arith.addf %228, %14 : vector<8x512xf32>
    %c1_118 = arith.constant 1 : index
    %c0_119 = arith.constant 0 : index
    %c0_120 = arith.constant 0 : index
    %230 = vector.load %arg11[%c1_118, %c0_119, %c0_120] : memref<2x8x128xf32, #tpu.memory_space<vmem>>, vector<1x8x128xf32>
    %231 = vector.shape_cast %230 : vector<1x8x128xf32> to vector<8x128xf32>
    %232 = vector.extract_strided_slice %229 {offsets = [0, 0], sizes = [8, 128], strides = [1, 1]} : vector<8x512xf32> to vector<8x128xf32>
    %233 = arith.negf %232 : vector<8x128xf32>
    %234 = math.exp %233 : vector<8x128xf32>
    %cst_121 = arith.constant 1.000000e+00 : f32
    %235 = vector.broadcast %cst_121 : f32 to vector<8x128xf32>
    %236 = arith.addf %235, %234 : vector<8x128xf32>
    %237 = arith.divf %235, %236 : vector<8x128xf32>
    %238 = vector.extract_strided_slice %229 {offsets = [0, 128], sizes = [8, 128], strides = [1, 1]} : vector<8x512xf32> to vector<8x128xf32>
    %239 = arith.negf %238 : vector<8x128xf32>
    %240 = math.exp %239 : vector<8x128xf32>
    %cst_122 = arith.constant 1.000000e+00 : f32
    %241 = vector.broadcast %cst_122 : f32 to vector<8x128xf32>
    %242 = arith.addf %241, %240 : vector<8x128xf32>
    %243 = arith.divf %241, %242 : vector<8x128xf32>
    %244 = vector.extract_strided_slice %229 {offsets = [0, 256], sizes = [8, 128], strides = [1, 1]} : vector<8x512xf32> to vector<8x128xf32>
    %245 = math.tanh %244 : vector<8x128xf32>
    %246 = vector.extract_strided_slice %229 {offsets = [0, 384], sizes = [8, 128], strides = [1, 1]} : vector<8x512xf32> to vector<8x128xf32>
    %247 = arith.negf %246 : vector<8x128xf32>
    %248 = math.exp %247 : vector<8x128xf32>
    %cst_123 = arith.constant 1.000000e+00 : f32
    %249 = vector.broadcast %cst_123 : f32 to vector<8x128xf32>
    %250 = arith.addf %249, %248 : vector<8x128xf32>
    %251 = arith.divf %249, %250 : vector<8x128xf32>
    %252 = arith.mulf %243, %231 : vector<8x128xf32>
    %253 = arith.mulf %237, %245 : vector<8x128xf32>
    %254 = arith.addf %252, %253 : vector<8x128xf32>
    %255 = math.tanh %254 : vector<8x128xf32>
    %256 = arith.mulf %251, %255 : vector<8x128xf32>
    %c1_124 = arith.constant 1 : index
    %c0_125 = arith.constant 0 : index
    %c0_126 = arith.constant 0 : index
    %257 = vector.load %arg10[%c1_124, %c0_125, %c0_126] : memref<2x8x128xf32, #tpu.memory_space<vmem>>, vector<1x8x128xf32>
    %258 = vector.shape_cast %257 : vector<1x8x128xf32> to vector<8x128xf32>
    %259 = vector.shape_cast %256 : vector<8x128xf32> to vector<1x8x128xf32>
    tpu.vector_store %arg10[%c1_124, %c0_125, %c0_126], %259 {strides = array<i32>} : memref<2x8x128xf32, #tpu.memory_space<vmem>>, vector<1x8x128xf32>,
    %c1_127 = arith.constant 1 : index
    %c0_128 = arith.constant 0 : index
    %c0_129 = arith.constant 0 : index
    %260 = vector.load %arg11[%c1_127, %c0_128, %c0_129] : memref<2x8x128xf32, #tpu.memory_space<vmem>>, vector<1x8x128xf32>
    %261 = vector.shape_cast %260 : vector<1x8x128xf32> to vector<8x128xf32>
    %262 = vector.shape_cast %254 : vector<8x128xf32> to vector<1x8x128xf32>
    tpu.vector_store %arg11[%c1_127, %c0_128, %c0_129], %262 {strides = array<i32>} : memref<2x8x128xf32, #tpu.memory_space<vmem>>, vector<1x8x128xf32>,
    %263 = arith.index_cast %c2_i32 : i32 to index
    %c0_130 = arith.constant 0 : index
    %c0_131 = arith.constant 0 : index
    %264 = vector.load %arg13[%263, %c0_130, %c0_131] : memref<8x8x128xf32, #tpu.memory_space<vmem>>, vector<1x8x128xf32>
    %265 = vector.shape_cast %264 : vector<1x8x128xf32> to vector<8x128xf32>
    %266 = vector.shape_cast %256 : vector<8x128xf32> to vector<1x8x128xf32>
    tpu.vector_store %arg13[%263, %c0_130, %c0_131], %266 {strides = array<i32>} : memref<8x8x128xf32, #tpu.memory_space<vmem>>, vector<1x8x128xf32>,
    %c3_i32 = arith.constant 3 : i32
    %c0_132 = arith.constant 0 : index
    %c0_133 = arith.constant 0 : index
    %c0_134 = arith.constant 0 : index
    %267 = vector.load %arg10[%c0_132, %c0_133, %c0_134] : memref<2x8x128xf32, #tpu.memory_space<vmem>>, vector<1x8x128xf32>
    %268 = vector.shape_cast %267 : vector<1x8x128xf32> to vector<8x128xf32>
    %269 = arith.index_cast %c3_i32 : i32 to index
    %c0_135 = arith.constant 0 : index
    %c0_136 = arith.constant 0 : index
    %270 = vector.load %arg12[%269, %c0_135, %c0_136] : memref<8x8x512xf32, #tpu.memory_space<vmem>>, vector<1x8x512xf32>
    %271 = vector.shape_cast %270 : vector<1x8x512xf32> to vector<8x512xf32>
    %c0_137 = arith.constant 0 : index
    %c0_138 = arith.constant 0 : index
    %272 = vector.load %arg3[%c0_137, %c0_138] : memref<128x512xf32, #tpu.memory_space<vmem>>, vector<128x512xf32>
    %cst_139 = arith.constant dense<0.000000e+00> : vector<8x512xf32>
    %273 = tpu.matmul %268, %272, %cst_139 {dimension_numbers = #tpu.dot_dimension_numbers<[1], [0], [0], [1], [0, 0, 1, 1], [], []>} : vector<8x128xf32>, vector<128x512xf32>, vector<8x512xf32> -> vector<8x512xf32>
    %274 = arith.addf %271, %273 : vector<8x512xf32>
    %c0_140 = arith.constant 0 : index
    %c0_141 = arith.constant 0 : index
    %c0_142 = arith.constant 0 : index
    %275 = vector.load %arg11[%c0_140, %c0_141, %c0_142] : memref<2x8x128xf32, #tpu.memory_space<vmem>>, vector<1x8x128xf32>
    %276 = vector.shape_cast %275 : vector<1x8x128xf32> to vector<8x128xf32>
    %277 = vector.extract_strided_slice %274 {offsets = [0, 0], sizes = [8, 128], strides = [1, 1]} : vector<8x512xf32> to vector<8x128xf32>
    %278 = arith.negf %277 : vector<8x128xf32>
    %279 = math.exp %278 : vector<8x128xf32>
    %cst_143 = arith.constant 1.000000e+00 : f32
    %280 = vector.broadcast %cst_143 : f32 to vector<8x128xf32>
    %281 = arith.addf %280, %279 : vector<8x128xf32>
    %282 = arith.divf %280, %281 : vector<8x128xf32>
    %283 = vector.extract_strided_slice %274 {offsets = [0, 128], sizes = [8, 128], strides = [1, 1]} : vector<8x512xf32> to vector<8x128xf32>
    %284 = arith.negf %283 : vector<8x128xf32>
    %285 = math.exp %284 : vector<8x128xf32>
    %cst_144 = arith.constant 1.000000e+00 : f32
    %286 = vector.broadcast %cst_144 : f32 to vector<8x128xf32>
    %287 = arith.addf %286, %285 : vector<8x128xf32>
    %288 = arith.divf %286, %287 : vector<8x128xf32>
    %289 = vector.extract_strided_slice %274 {offsets = [0, 256], sizes = [8, 128], strides = [1, 1]} : vector<8x512xf32> to vector<8x128xf32>
    %290 = math.tanh %289 : vector<8x128xf32>
    %291 = vector.extract_strided_slice %274 {offsets = [0, 384], sizes = [8, 128], strides = [1, 1]} : vector<8x512xf32> to vector<8x128xf32>
    %292 = arith.negf %291 : vector<8x128xf32>
    %293 = math.exp %292 : vector<8x128xf32>
    %cst_145 = arith.constant 1.000000e+00 : f32
    %294 = vector.broadcast %cst_145 : f32 to vector<8x128xf32>
    %295 = arith.addf %294, %293 : vector<8x128xf32>
    %296 = arith.divf %294, %295 : vector<8x128xf32>
    %297 = arith.mulf %288, %276 : vector<8x128xf32>
    %298 = arith.mulf %282, %290 : vector<8x128xf32>
    %299 = arith.addf %297, %298 : vector<8x128xf32>
    %300 = math.tanh %299 : vector<8x128xf32>
    %301 = arith.mulf %296, %300 : vector<8x128xf32>
    %c0_146 = arith.constant 0 : index
    %c0_147 = arith.constant 0 : index
    %c0_148 = arith.constant 0 : index
    %302 = vector.load %arg10[%c0_146, %c0_147, %c0_148] : memref<2x8x128xf32, #tpu.memory_space<vmem>>, vector<1x8x128xf32>
    %303 = vector.shape_cast %302 : vector<1x8x128xf32> to vector<8x128xf32>
    %304 = vector.shape_cast %301 : vector<8x128xf32> to vector<1x8x128xf32>
    tpu.vector_store %arg10[%c0_146, %c0_147, %c0_148], %304 {strides = array<i32>} : memref<2x8x128xf32, #tpu.memory_space<vmem>>, vector<1x8x128xf32>,
    %c0_149 = arith.constant 0 : index
    %c0_150 = arith.constant 0 : index
    %c0_151 = arith.constant 0 : index
    %305 = vector.load %arg11[%c0_149, %c0_150, %c0_151] : memref<2x8x128xf32, #tpu.memory_space<vmem>>, vector<1x8x128xf32>
    %306 = vector.shape_cast %305 : vector<1x8x128xf32> to vector<8x128xf32>
    %307 = vector.shape_cast %299 : vector<8x128xf32> to vector<1x8x128xf32>
    tpu.vector_store %arg11[%c0_149, %c0_150, %c0_151], %307 {strides = array<i32>} : memref<2x8x128xf32, #tpu.memory_space<vmem>>, vector<1x8x128xf32>,
    %c1_152 = arith.constant 1 : index
    %c0_153 = arith.constant 0 : index
    %c0_154 = arith.constant 0 : index
    %308 = vector.load %arg10[%c1_152, %c0_153, %c0_154] : memref<2x8x128xf32, #tpu.memory_space<vmem>>, vector<1x8x128xf32>
    %309 = vector.shape_cast %308 : vector<1x8x128xf32> to vector<8x128xf32>
    %310 = tpu.concatenate %301, %309 in 1 : vector<8x128xf32>, vector<8x128xf32> -> vector<8x256xf32>
    %c0_155 = arith.constant 0 : index
    %c0_156 = arith.constant 0 : index
    %311 = vector.load %arg5[%c0_155, %c0_156] : memref<256x512xf32, #tpu.memory_space<vmem>>, vector<256x512xf32>
    %cst_157 = arith.constant dense<0.000000e+00> : vector<8x512xf32>
    %312 = tpu.matmul %310, %311, %cst_157 {dimension_numbers = #tpu.dot_dimension_numbers<[1], [0], [0], [1], [0, 0, 1, 1], [], []>} : vector<8x256xf32>, vector<256x512xf32>, vector<8x512xf32> -> vector<8x512xf32>
    %313 = arith.addf %312, %14 : vector<8x512xf32>
    %c1_158 = arith.constant 1 : index
    %c0_159 = arith.constant 0 : index
    %c0_160 = arith.constant 0 : index
    %314 = vector.load %arg11[%c1_158, %c0_159, %c0_160] : memref<2x8x128xf32, #tpu.memory_space<vmem>>, vector<1x8x128xf32>
    %315 = vector.shape_cast %314 : vector<1x8x128xf32> to vector<8x128xf32>
    %316 = vector.extract_strided_slice %313 {offsets = [0, 0], sizes = [8, 128], strides = [1, 1]} : vector<8x512xf32> to vector<8x128xf32>
    %317 = arith.negf %316 : vector<8x128xf32>
    %318 = math.exp %317 : vector<8x128xf32>
    %cst_161 = arith.constant 1.000000e+00 : f32
    %319 = vector.broadcast %cst_161 : f32 to vector<8x128xf32>
    %320 = arith.addf %319, %318 : vector<8x128xf32>
    %321 = arith.divf %319, %320 : vector<8x128xf32>
    %322 = vector.extract_strided_slice %313 {offsets = [0, 128], sizes = [8, 128], strides = [1, 1]} : vector<8x512xf32> to vector<8x128xf32>
    %323 = arith.negf %322 : vector<8x128xf32>
    %324 = math.exp %323 : vector<8x128xf32>
    %cst_162 = arith.constant 1.000000e+00 : f32
    %325 = vector.broadcast %cst_162 : f32 to vector<8x128xf32>
    %326 = arith.addf %325, %324 : vector<8x128xf32>
    %327 = arith.divf %325, %326 : vector<8x128xf32>
    %328 = vector.extract_strided_slice %313 {offsets = [0, 256], sizes = [8, 128], strides = [1, 1]} : vector<8x512xf32> to vector<8x128xf32>
    %329 = math.tanh %328 : vector<8x128xf32>
    %330 = vector.extract_strided_slice %313 {offsets = [0, 384], sizes = [8, 128], strides = [1, 1]} : vector<8x512xf32> to vector<8x128xf32>
    %331 = arith.negf %330 : vector<8x128xf32>
    %332 = math.exp %331 : vector<8x128xf32>
    %cst_163 = arith.constant 1.000000e+00 : f32
    %333 = vector.broadcast %cst_163 : f32 to vector<8x128xf32>
    %334 = arith.addf %333, %332 : vector<8x128xf32>
    %335 = arith.divf %333, %334 : vector<8x128xf32>
    %336 = arith.mulf %327, %315 : vector<8x128xf32>
    %337 = arith.mulf %321, %329 : vector<8x128xf32>
    %338 = arith.addf %336, %337 : vector<8x128xf32>
    %339 = math.tanh %338 : vector<8x128xf32>
    %340 = arith.mulf %335, %339 : vector<8x128xf32>
    %c1_164 = arith.constant 1 : index
    %c0_165 = arith.constant 0 : index
    %c0_166 = arith.constant 0 : index
    %341 = vector.load %arg10[%c1_164, %c0_165, %c0_166] : memref<2x8x128xf32, #tpu.memory_space<vmem>>, vector<1x8x128xf32>
    %342 = vector.shape_cast %341 : vector<1x8x128xf32> to vector<8x128xf32>
    %343 = vector.shape_cast %340 : vector<8x128xf32> to vector<1x8x128xf32>
    tpu.vector_store %arg10[%c1_164, %c0_165, %c0_166], %343 {strides = array<i32>} : memref<2x8x128xf32, #tpu.memory_space<vmem>>, vector<1x8x128xf32>,
    %c1_167 = arith.constant 1 : index
    %c0_168 = arith.constant 0 : index
    %c0_169 = arith.constant 0 : index
    %344 = vector.load %arg11[%c1_167, %c0_168, %c0_169] : memref<2x8x128xf32, #tpu.memory_space<vmem>>, vector<1x8x128xf32>
    %345 = vector.shape_cast %344 : vector<1x8x128xf32> to vector<8x128xf32>
    %346 = vector.shape_cast %338 : vector<8x128xf32> to vector<1x8x128xf32>
    tpu.vector_store %arg11[%c1_167, %c0_168, %c0_169], %346 {strides = array<i32>} : memref<2x8x128xf32, #tpu.memory_space<vmem>>, vector<1x8x128xf32>,
    %347 = arith.index_cast %c3_i32 : i32 to index
    %c0_170 = arith.constant 0 : index
    %c0_171 = arith.constant 0 : index
    %348 = vector.load %arg13[%347, %c0_170, %c0_171] : memref<8x8x128xf32, #tpu.memory_space<vmem>>, vector<1x8x128xf32>
    %349 = vector.shape_cast %348 : vector<1x8x128xf32> to vector<8x128xf32>
    %350 = vector.shape_cast %340 : vector<8x128xf32> to vector<1x8x128xf32>
    tpu.vector_store %arg13[%347, %c0_170, %c0_171], %350 {strides = array<i32>} : memref<8x8x128xf32, #tpu.memory_space<vmem>>, vector<1x8x128xf32>,
    %c4_i32 = arith.constant 4 : i32
    %c0_172 = arith.constant 0 : index
    %c0_173 = arith.constant 0 : index
    %c0_174 = arith.constant 0 : index
    %351 = vector.load %arg10[%c0_172, %c0_173, %c0_174] : memref<2x8x128xf32, #tpu.memory_space<vmem>>, vector<1x8x128xf32>
    %352 = vector.shape_cast %351 : vector<1x8x128xf32> to vector<8x128xf32>
    %353 = arith.index_cast %c4_i32 : i32 to index
    %c0_175 = arith.constant 0 : index
    %c0_176 = arith.constant 0 : index
    %354 = vector.load %arg12[%353, %c0_175, %c0_176] : memref<8x8x512xf32, #tpu.memory_space<vmem>>, vector<1x8x512xf32>
    %355 = vector.shape_cast %354 : vector<1x8x512xf32> to vector<8x512xf32>
    %c0_177 = arith.constant 0 : index
    %c0_178 = arith.constant 0 : index
    %356 = vector.load %arg3[%c0_177, %c0_178] : memref<128x512xf32, #tpu.memory_space<vmem>>, vector<128x512xf32>
    %cst_179 = arith.constant dense<0.000000e+00> : vector<8x512xf32>
    %357 = tpu.matmul %352, %356, %cst_179 {dimension_numbers = #tpu.dot_dimension_numbers<[1], [0], [0], [1], [0, 0, 1, 1], [], []>} : vector<8x128xf32>, vector<128x512xf32>, vector<8x512xf32> -> vector<8x512xf32>
    %358 = arith.addf %355, %357 : vector<8x512xf32>
    %c0_180 = arith.constant 0 : index
    %c0_181 = arith.constant 0 : index
    %c0_182 = arith.constant 0 : index
    %359 = vector.load %arg11[%c0_180, %c0_181, %c0_182] : memref<2x8x128xf32, #tpu.memory_space<vmem>>, vector<1x8x128xf32>
    %360 = vector.shape_cast %359 : vector<1x8x128xf32> to vector<8x128xf32>
    %361 = vector.extract_strided_slice %358 {offsets = [0, 0], sizes = [8, 128], strides = [1, 1]} : vector<8x512xf32> to vector<8x128xf32>
    %362 = arith.negf %361 : vector<8x128xf32>
    %363 = math.exp %362 : vector<8x128xf32>
    %cst_183 = arith.constant 1.000000e+00 : f32
    %364 = vector.broadcast %cst_183 : f32 to vector<8x128xf32>
    %365 = arith.addf %364, %363 : vector<8x128xf32>
    %366 = arith.divf %364, %365 : vector<8x128xf32>
    %367 = vector.extract_strided_slice %358 {offsets = [0, 128], sizes = [8, 128], strides = [1, 1]} : vector<8x512xf32> to vector<8x128xf32>
    %368 = arith.negf %367 : vector<8x128xf32>
    %369 = math.exp %368 : vector<8x128xf32>
    %cst_184 = arith.constant 1.000000e+00 : f32
    %370 = vector.broadcast %cst_184 : f32 to vector<8x128xf32>
    %371 = arith.addf %370, %369 : vector<8x128xf32>
    %372 = arith.divf %370, %371 : vector<8x128xf32>
    %373 = vector.extract_strided_slice %358 {offsets = [0, 256], sizes = [8, 128], strides = [1, 1]} : vector<8x512xf32> to vector<8x128xf32>
    %374 = math.tanh %373 : vector<8x128xf32>
    %375 = vector.extract_strided_slice %358 {offsets = [0, 384], sizes = [8, 128], strides = [1, 1]} : vector<8x512xf32> to vector<8x128xf32>
    %376 = arith.negf %375 : vector<8x128xf32>
    %377 = math.exp %376 : vector<8x128xf32>
    %cst_185 = arith.constant 1.000000e+00 : f32
    %378 = vector.broadcast %cst_185 : f32 to vector<8x128xf32>
    %379 = arith.addf %378, %377 : vector<8x128xf32>
    %380 = arith.divf %378, %379 : vector<8x128xf32>
    %381 = arith.mulf %372, %360 : vector<8x128xf32>
    %382 = arith.mulf %366, %374 : vector<8x128xf32>
    %383 = arith.addf %381, %382 : vector<8x128xf32>
    %384 = math.tanh %383 : vector<8x128xf32>
    %385 = arith.mulf %380, %384 : vector<8x128xf32>
    %c0_186 = arith.constant 0 : index
    %c0_187 = arith.constant 0 : index
    %c0_188 = arith.constant 0 : index
    %386 = vector.load %arg10[%c0_186, %c0_187, %c0_188] : memref<2x8x128xf32, #tpu.memory_space<vmem>>, vector<1x8x128xf32>
    %387 = vector.shape_cast %386 : vector<1x8x128xf32> to vector<8x128xf32>
    %388 = vector.shape_cast %385 : vector<8x128xf32> to vector<1x8x128xf32>
    tpu.vector_store %arg10[%c0_186, %c0_187, %c0_188], %388 {strides = array<i32>} : memref<2x8x128xf32, #tpu.memory_space<vmem>>, vector<1x8x128xf32>,
    %c0_189 = arith.constant 0 : index
    %c0_190 = arith.constant 0 : index
    %c0_191 = arith.constant 0 : index
    %389 = vector.load %arg11[%c0_189, %c0_190, %c0_191] : memref<2x8x128xf32, #tpu.memory_space<vmem>>, vector<1x8x128xf32>
    %390 = vector.shape_cast %389 : vector<1x8x128xf32> to vector<8x128xf32>
    %391 = vector.shape_cast %383 : vector<8x128xf32> to vector<1x8x128xf32>
    tpu.vector_store %arg11[%c0_189, %c0_190, %c0_191], %391 {strides = array<i32>} : memref<2x8x128xf32, #tpu.memory_space<vmem>>, vector<1x8x128xf32>,
    %c1_192 = arith.constant 1 : index
    %c0_193 = arith.constant 0 : index
    %c0_194 = arith.constant 0 : index
    %392 = vector.load %arg10[%c1_192, %c0_193, %c0_194] : memref<2x8x128xf32, #tpu.memory_space<vmem>>, vector<1x8x128xf32>
    %393 = vector.shape_cast %392 : vector<1x8x128xf32> to vector<8x128xf32>
    %394 = tpu.concatenate %385, %393 in 1 : vector<8x128xf32>, vector<8x128xf32> -> vector<8x256xf32>
    %c0_195 = arith.constant 0 : index
    %c0_196 = arith.constant 0 : index
    %395 = vector.load %arg5[%c0_195, %c0_196] : memref<256x512xf32, #tpu.memory_space<vmem>>, vector<256x512xf32>
    %cst_197 = arith.constant dense<0.000000e+00> : vector<8x512xf32>
    %396 = tpu.matmul %394, %395, %cst_197 {dimension_numbers = #tpu.dot_dimension_numbers<[1], [0], [0], [1], [0, 0, 1, 1], [], []>} : vector<8x256xf32>, vector<256x512xf32>, vector<8x512xf32> -> vector<8x512xf32>
    %397 = arith.addf %396, %14 : vector<8x512xf32>
    %c1_198 = arith.constant 1 : index
    %c0_199 = arith.constant 0 : index
    %c0_200 = arith.constant 0 : index
    %398 = vector.load %arg11[%c1_198, %c0_199, %c0_200] : memref<2x8x128xf32, #tpu.memory_space<vmem>>, vector<1x8x128xf32>
    %399 = vector.shape_cast %398 : vector<1x8x128xf32> to vector<8x128xf32>
    %400 = vector.extract_strided_slice %397 {offsets = [0, 0], sizes = [8, 128], strides = [1, 1]} : vector<8x512xf32> to vector<8x128xf32>
    %401 = arith.negf %400 : vector<8x128xf32>
    %402 = math.exp %401 : vector<8x128xf32>
    %cst_201 = arith.constant 1.000000e+00 : f32
    %403 = vector.broadcast %cst_201 : f32 to vector<8x128xf32>
    %404 = arith.addf %403, %402 : vector<8x128xf32>
    %405 = arith.divf %403, %404 : vector<8x128xf32>
    %406 = vector.extract_strided_slice %397 {offsets = [0, 128], sizes = [8, 128], strides = [1, 1]} : vector<8x512xf32> to vector<8x128xf32>
    %407 = arith.negf %406 : vector<8x128xf32>
    %408 = math.exp %407 : vector<8x128xf32>
    %cst_202 = arith.constant 1.000000e+00 : f32
    %409 = vector.broadcast %cst_202 : f32 to vector<8x128xf32>
    %410 = arith.addf %409, %408 : vector<8x128xf32>
    %411 = arith.divf %409, %410 : vector<8x128xf32>
    %412 = vector.extract_strided_slice %397 {offsets = [0, 256], sizes = [8, 128], strides = [1, 1]} : vector<8x512xf32> to vector<8x128xf32>
    %413 = math.tanh %412 : vector<8x128xf32>
    %414 = vector.extract_strided_slice %397 {offsets = [0, 384], sizes = [8, 128], strides = [1, 1]} : vector<8x512xf32> to vector<8x128xf32>
    %415 = arith.negf %414 : vector<8x128xf32>
    %416 = math.exp %415 : vector<8x128xf32>
    %cst_203 = arith.constant 1.000000e+00 : f32
    %417 = vector.broadcast %cst_203 : f32 to vector<8x128xf32>
    %418 = arith.addf %417, %416 : vector<8x128xf32>
    %419 = arith.divf %417, %418 : vector<8x128xf32>
    %420 = arith.mulf %411, %399 : vector<8x128xf32>
    %421 = arith.mulf %405, %413 : vector<8x128xf32>
    %422 = arith.addf %420, %421 : vector<8x128xf32>
    %423 = math.tanh %422 : vector<8x128xf32>
    %424 = arith.mulf %419, %423 : vector<8x128xf32>
    %c1_204 = arith.constant 1 : index
    %c0_205 = arith.constant 0 : index
    %c0_206 = arith.constant 0 : index
    %425 = vector.load %arg10[%c1_204, %c0_205, %c0_206] : memref<2x8x128xf32, #tpu.memory_space<vmem>>, vector<1x8x128xf32>
    %426 = vector.shape_cast %425 : vector<1x8x128xf32> to vector<8x128xf32>
    %427 = vector.shape_cast %424 : vector<8x128xf32> to vector<1x8x128xf32>
    tpu.vector_store %arg10[%c1_204, %c0_205, %c0_206], %427 {strides = array<i32>} : memref<2x8x128xf32, #tpu.memory_space<vmem>>, vector<1x8x128xf32>,
    %c1_207 = arith.constant 1 : index
    %c0_208 = arith.constant 0 : index
    %c0_209 = arith.constant 0 : index
    %428 = vector.load %arg11[%c1_207, %c0_208, %c0_209] : memref<2x8x128xf32, #tpu.memory_space<vmem>>, vector<1x8x128xf32>
    %429 = vector.shape_cast %428 : vector<1x8x128xf32> to vector<8x128xf32>
    %430 = vector.shape_cast %422 : vector<8x128xf32> to vector<1x8x128xf32>
    tpu.vector_store %arg11[%c1_207, %c0_208, %c0_209], %430 {strides = array<i32>} : memref<2x8x128xf32, #tpu.memory_space<vmem>>, vector<1x8x128xf32>,
    %431 = arith.index_cast %c4_i32 : i32 to index
    %c0_210 = arith.constant 0 : index
    %c0_211 = arith.constant 0 : index
    %432 = vector.load %arg13[%431, %c0_210, %c0_211] : memref<8x8x128xf32, #tpu.memory_space<vmem>>, vector<1x8x128xf32>
    %433 = vector.shape_cast %432 : vector<1x8x128xf32> to vector<8x128xf32>
    %434 = vector.shape_cast %424 : vector<8x128xf32> to vector<1x8x128xf32>
    tpu.vector_store %arg13[%431, %c0_210, %c0_211], %434 {strides = array<i32>} : memref<8x8x128xf32, #tpu.memory_space<vmem>>, vector<1x8x128xf32>,
    %c5_i32 = arith.constant 5 : i32
    %c0_212 = arith.constant 0 : index
    %c0_213 = arith.constant 0 : index
    %c0_214 = arith.constant 0 : index
    %435 = vector.load %arg10[%c0_212, %c0_213, %c0_214] : memref<2x8x128xf32, #tpu.memory_space<vmem>>, vector<1x8x128xf32>
    %436 = vector.shape_cast %435 : vector<1x8x128xf32> to vector<8x128xf32>
    %437 = arith.index_cast %c5_i32 : i32 to index
    %c0_215 = arith.constant 0 : index
    %c0_216 = arith.constant 0 : index
    %438 = vector.load %arg12[%437, %c0_215, %c0_216] : memref<8x8x512xf32, #tpu.memory_space<vmem>>, vector<1x8x512xf32>
    %439 = vector.shape_cast %438 : vector<1x8x512xf32> to vector<8x512xf32>
    %c0_217 = arith.constant 0 : index
    %c0_218 = arith.constant 0 : index
    %440 = vector.load %arg3[%c0_217, %c0_218] : memref<128x512xf32, #tpu.memory_space<vmem>>, vector<128x512xf32>
    %cst_219 = arith.constant dense<0.000000e+00> : vector<8x512xf32>
    %441 = tpu.matmul %436, %440, %cst_219 {dimension_numbers = #tpu.dot_dimension_numbers<[1], [0], [0], [1], [0, 0, 1, 1], [], []>} : vector<8x128xf32>, vector<128x512xf32>, vector<8x512xf32> -> vector<8x512xf32>
    %442 = arith.addf %439, %441 : vector<8x512xf32>
    %c0_220 = arith.constant 0 : index
    %c0_221 = arith.constant 0 : index
    %c0_222 = arith.constant 0 : index
    %443 = vector.load %arg11[%c0_220, %c0_221, %c0_222] : memref<2x8x128xf32, #tpu.memory_space<vmem>>, vector<1x8x128xf32>
    %444 = vector.shape_cast %443 : vector<1x8x128xf32> to vector<8x128xf32>
    %445 = vector.extract_strided_slice %442 {offsets = [0, 0], sizes = [8, 128], strides = [1, 1]} : vector<8x512xf32> to vector<8x128xf32>
    %446 = arith.negf %445 : vector<8x128xf32>
    %447 = math.exp %446 : vector<8x128xf32>
    %cst_223 = arith.constant 1.000000e+00 : f32
    %448 = vector.broadcast %cst_223 : f32 to vector<8x128xf32>
    %449 = arith.addf %448, %447 : vector<8x128xf32>
    %450 = arith.divf %448, %449 : vector<8x128xf32>
    %451 = vector.extract_strided_slice %442 {offsets = [0, 128], sizes = [8, 128], strides = [1, 1]} : vector<8x512xf32> to vector<8x128xf32>
    %452 = arith.negf %451 : vector<8x128xf32>
    %453 = math.exp %452 : vector<8x128xf32>
    %cst_224 = arith.constant 1.000000e+00 : f32
    %454 = vector.broadcast %cst_224 : f32 to vector<8x128xf32>
    %455 = arith.addf %454, %453 : vector<8x128xf32>
    %456 = arith.divf %454, %455 : vector<8x128xf32>
    %457 = vector.extract_strided_slice %442 {offsets = [0, 256], sizes = [8, 128], strides = [1, 1]} : vector<8x512xf32> to vector<8x128xf32>
    %458 = math.tanh %457 : vector<8x128xf32>
    %459 = vector.extract_strided_slice %442 {offsets = [0, 384], sizes = [8, 128], strides = [1, 1]} : vector<8x512xf32> to vector<8x128xf32>
    %460 = arith.negf %459 : vector<8x128xf32>
    %461 = math.exp %460 : vector<8x128xf32>
    %cst_225 = arith.constant 1.000000e+00 : f32
    %462 = vector.broadcast %cst_225 : f32 to vector<8x128xf32>
    %463 = arith.addf %462, %461 : vector<8x128xf32>
    %464 = arith.divf %462, %463 : vector<8x128xf32>
    %465 = arith.mulf %456, %444 : vector<8x128xf32>
    %466 = arith.mulf %450, %458 : vector<8x128xf32>
    %467 = arith.addf %465, %466 : vector<8x128xf32>
    %468 = math.tanh %467 : vector<8x128xf32>
    %469 = arith.mulf %464, %468 : vector<8x128xf32>
    %c0_226 = arith.constant 0 : index
    %c0_227 = arith.constant 0 : index
    %c0_228 = arith.constant 0 : index
    %470 = vector.load %arg10[%c0_226, %c0_227, %c0_228] : memref<2x8x128xf32, #tpu.memory_space<vmem>>, vector<1x8x128xf32>
    %471 = vector.shape_cast %470 : vector<1x8x128xf32> to vector<8x128xf32>
    %472 = vector.shape_cast %469 : vector<8x128xf32> to vector<1x8x128xf32>
    tpu.vector_store %arg10[%c0_226, %c0_227, %c0_228], %472 {strides = array<i32>} : memref<2x8x128xf32, #tpu.memory_space<vmem>>, vector<1x8x128xf32>,
    %c0_229 = arith.constant 0 : index
    %c0_230 = arith.constant 0 : index
    %c0_231 = arith.constant 0 : index
    %473 = vector.load %arg11[%c0_229, %c0_230, %c0_231] : memref<2x8x128xf32, #tpu.memory_space<vmem>>, vector<1x8x128xf32>
    %474 = vector.shape_cast %473 : vector<1x8x128xf32> to vector<8x128xf32>
    %475 = vector.shape_cast %467 : vector<8x128xf32> to vector<1x8x128xf32>
    tpu.vector_store %arg11[%c0_229, %c0_230, %c0_231], %475 {strides = array<i32>} : memref<2x8x128xf32, #tpu.memory_space<vmem>>, vector<1x8x128xf32>,
    %c1_232 = arith.constant 1 : index
    %c0_233 = arith.constant 0 : index
    %c0_234 = arith.constant 0 : index
    %476 = vector.load %arg10[%c1_232, %c0_233, %c0_234] : memref<2x8x128xf32, #tpu.memory_space<vmem>>, vector<1x8x128xf32>
    %477 = vector.shape_cast %476 : vector<1x8x128xf32> to vector<8x128xf32>
    %478 = tpu.concatenate %469, %477 in 1 : vector<8x128xf32>, vector<8x128xf32> -> vector<8x256xf32>
    %c0_235 = arith.constant 0 : index
    %c0_236 = arith.constant 0 : index
    %479 = vector.load %arg5[%c0_235, %c0_236] : memref<256x512xf32, #tpu.memory_space<vmem>>, vector<256x512xf32>
    %cst_237 = arith.constant dense<0.000000e+00> : vector<8x512xf32>
    %480 = tpu.matmul %478, %479, %cst_237 {dimension_numbers = #tpu.dot_dimension_numbers<[1], [0], [0], [1], [0, 0, 1, 1], [], []>} : vector<8x256xf32>, vector<256x512xf32>, vector<8x512xf32> -> vector<8x512xf32>
    %481 = arith.addf %480, %14 : vector<8x512xf32>
    %c1_238 = arith.constant 1 : index
    %c0_239 = arith.constant 0 : index
    %c0_240 = arith.constant 0 : index
    %482 = vector.load %arg11[%c1_238, %c0_239, %c0_240] : memref<2x8x128xf32, #tpu.memory_space<vmem>>, vector<1x8x128xf32>
    %483 = vector.shape_cast %482 : vector<1x8x128xf32> to vector<8x128xf32>
    %484 = vector.extract_strided_slice %481 {offsets = [0, 0], sizes = [8, 128], strides = [1, 1]} : vector<8x512xf32> to vector<8x128xf32>
    %485 = arith.negf %484 : vector<8x128xf32>
    %486 = math.exp %485 : vector<8x128xf32>
    %cst_241 = arith.constant 1.000000e+00 : f32
    %487 = vector.broadcast %cst_241 : f32 to vector<8x128xf32>
    %488 = arith.addf %487, %486 : vector<8x128xf32>
    %489 = arith.divf %487, %488 : vector<8x128xf32>
    %490 = vector.extract_strided_slice %481 {offsets = [0, 128], sizes = [8, 128], strides = [1, 1]} : vector<8x512xf32> to vector<8x128xf32>
    %491 = arith.negf %490 : vector<8x128xf32>
    %492 = math.exp %491 : vector<8x128xf32>
    %cst_242 = arith.constant 1.000000e+00 : f32
    %493 = vector.broadcast %cst_242 : f32 to vector<8x128xf32>
    %494 = arith.addf %493, %492 : vector<8x128xf32>
    %495 = arith.divf %493, %494 : vector<8x128xf32>
    %496 = vector.extract_strided_slice %481 {offsets = [0, 256], sizes = [8, 128], strides = [1, 1]} : vector<8x512xf32> to vector<8x128xf32>
    %497 = math.tanh %496 : vector<8x128xf32>
    %498 = vector.extract_strided_slice %481 {offsets = [0, 384], sizes = [8, 128], strides = [1, 1]} : vector<8x512xf32> to vector<8x128xf32>
    %499 = arith.negf %498 : vector<8x128xf32>
    %500 = math.exp %499 : vector<8x128xf32>
    %cst_243 = arith.constant 1.000000e+00 : f32
    %501 = vector.broadcast %cst_243 : f32 to vector<8x128xf32>
    %502 = arith.addf %501, %500 : vector<8x128xf32>
    %503 = arith.divf %501, %502 : vector<8x128xf32>
    %504 = arith.mulf %495, %483 : vector<8x128xf32>
    %505 = arith.mulf %489, %497 : vector<8x128xf32>
    %506 = arith.addf %504, %505 : vector<8x128xf32>
    %507 = math.tanh %506 : vector<8x128xf32>
    %508 = arith.mulf %503, %507 : vector<8x128xf32>
    %c1_244 = arith.constant 1 : index
    %c0_245 = arith.constant 0 : index
    %c0_246 = arith.constant 0 : index
    %509 = vector.load %arg10[%c1_244, %c0_245, %c0_246] : memref<2x8x128xf32, #tpu.memory_space<vmem>>, vector<1x8x128xf32>
    %510 = vector.shape_cast %509 : vector<1x8x128xf32> to vector<8x128xf32>
    %511 = vector.shape_cast %508 : vector<8x128xf32> to vector<1x8x128xf32>
    tpu.vector_store %arg10[%c1_244, %c0_245, %c0_246], %511 {strides = array<i32>} : memref<2x8x128xf32, #tpu.memory_space<vmem>>, vector<1x8x128xf32>,
    %c1_247 = arith.constant 1 : index
    %c0_248 = arith.constant 0 : index
    %c0_249 = arith.constant 0 : index
    %512 = vector.load %arg11[%c1_247, %c0_248, %c0_249] : memref<2x8x128xf32, #tpu.memory_space<vmem>>, vector<1x8x128xf32>
    %513 = vector.shape_cast %512 : vector<1x8x128xf32> to vector<8x128xf32>
    %514 = vector.shape_cast %506 : vector<8x128xf32> to vector<1x8x128xf32>
    tpu.vector_store %arg11[%c1_247, %c0_248, %c0_249], %514 {strides = array<i32>} : memref<2x8x128xf32, #tpu.memory_space<vmem>>, vector<1x8x128xf32>,
    %515 = arith.index_cast %c5_i32 : i32 to index
    %c0_250 = arith.constant 0 : index
    %c0_251 = arith.constant 0 : index
    %516 = vector.load %arg13[%515, %c0_250, %c0_251] : memref<8x8x128xf32, #tpu.memory_space<vmem>>, vector<1x8x128xf32>
    %517 = vector.shape_cast %516 : vector<1x8x128xf32> to vector<8x128xf32>
    %518 = vector.shape_cast %508 : vector<8x128xf32> to vector<1x8x128xf32>
    tpu.vector_store %arg13[%515, %c0_250, %c0_251], %518 {strides = array<i32>} : memref<8x8x128xf32, #tpu.memory_space<vmem>>, vector<1x8x128xf32>,
    %c6_i32 = arith.constant 6 : i32
    %c0_252 = arith.constant 0 : index
    %c0_253 = arith.constant 0 : index
    %c0_254 = arith.constant 0 : index
    %519 = vector.load %arg10[%c0_252, %c0_253, %c0_254] : memref<2x8x128xf32, #tpu.memory_space<vmem>>, vector<1x8x128xf32>
    %520 = vector.shape_cast %519 : vector<1x8x128xf32> to vector<8x128xf32>
    %521 = arith.index_cast %c6_i32 : i32 to index
    %c0_255 = arith.constant 0 : index
    %c0_256 = arith.constant 0 : index
    %522 = vector.load %arg12[%521, %c0_255, %c0_256] : memref<8x8x512xf32, #tpu.memory_space<vmem>>, vector<1x8x512xf32>
    %523 = vector.shape_cast %522 : vector<1x8x512xf32> to vector<8x512xf32>
    %c0_257 = arith.constant 0 : index
    %c0_258 = arith.constant 0 : index
    %524 = vector.load %arg3[%c0_257, %c0_258] : memref<128x512xf32, #tpu.memory_space<vmem>>, vector<128x512xf32>
    %cst_259 = arith.constant dense<0.000000e+00> : vector<8x512xf32>
    %525 = tpu.matmul %520, %524, %cst_259 {dimension_numbers = #tpu.dot_dimension_numbers<[1], [0], [0], [1], [0, 0, 1, 1], [], []>} : vector<8x128xf32>, vector<128x512xf32>, vector<8x512xf32> -> vector<8x512xf32>
    %526 = arith.addf %523, %525 : vector<8x512xf32>
    %c0_260 = arith.constant 0 : index
    %c0_261 = arith.constant 0 : index
    %c0_262 = arith.constant 0 : index
    %527 = vector.load %arg11[%c0_260, %c0_261, %c0_262] : memref<2x8x128xf32, #tpu.memory_space<vmem>>, vector<1x8x128xf32>
    %528 = vector.shape_cast %527 : vector<1x8x128xf32> to vector<8x128xf32>
    %529 = vector.extract_strided_slice %526 {offsets = [0, 0], sizes = [8, 128], strides = [1, 1]} : vector<8x512xf32> to vector<8x128xf32>
    %530 = arith.negf %529 : vector<8x128xf32>
    %531 = math.exp %530 : vector<8x128xf32>
    %cst_263 = arith.constant 1.000000e+00 : f32
    %532 = vector.broadcast %cst_263 : f32 to vector<8x128xf32>
    %533 = arith.addf %532, %531 : vector<8x128xf32>
    %534 = arith.divf %532, %533 : vector<8x128xf32>
    %535 = vector.extract_strided_slice %526 {offsets = [0, 128], sizes = [8, 128], strides = [1, 1]} : vector<8x512xf32> to vector<8x128xf32>
    %536 = arith.negf %535 : vector<8x128xf32>
    %537 = math.exp %536 : vector<8x128xf32>
    %cst_264 = arith.constant 1.000000e+00 : f32
    %538 = vector.broadcast %cst_264 : f32 to vector<8x128xf32>
    %539 = arith.addf %538, %537 : vector<8x128xf32>
    %540 = arith.divf %538, %539 : vector<8x128xf32>
    %541 = vector.extract_strided_slice %526 {offsets = [0, 256], sizes = [8, 128], strides = [1, 1]} : vector<8x512xf32> to vector<8x128xf32>
    %542 = math.tanh %541 : vector<8x128xf32>
    %543 = vector.extract_strided_slice %526 {offsets = [0, 384], sizes = [8, 128], strides = [1, 1]} : vector<8x512xf32> to vector<8x128xf32>
    %544 = arith.negf %543 : vector<8x128xf32>
    %545 = math.exp %544 : vector<8x128xf32>
    %cst_265 = arith.constant 1.000000e+00 : f32
    %546 = vector.broadcast %cst_265 : f32 to vector<8x128xf32>
    %547 = arith.addf %546, %545 : vector<8x128xf32>
    %548 = arith.divf %546, %547 : vector<8x128xf32>
    %549 = arith.mulf %540, %528 : vector<8x128xf32>
    %550 = arith.mulf %534, %542 : vector<8x128xf32>
    %551 = arith.addf %549, %550 : vector<8x128xf32>
    %552 = math.tanh %551 : vector<8x128xf32>
    %553 = arith.mulf %548, %552 : vector<8x128xf32>
    %c0_266 = arith.constant 0 : index
    %c0_267 = arith.constant 0 : index
    %c0_268 = arith.constant 0 : index
    %554 = vector.load %arg10[%c0_266, %c0_267, %c0_268] : memref<2x8x128xf32, #tpu.memory_space<vmem>>, vector<1x8x128xf32>
    %555 = vector.shape_cast %554 : vector<1x8x128xf32> to vector<8x128xf32>
    %556 = vector.shape_cast %553 : vector<8x128xf32> to vector<1x8x128xf32>
    tpu.vector_store %arg10[%c0_266, %c0_267, %c0_268], %556 {strides = array<i32>} : memref<2x8x128xf32, #tpu.memory_space<vmem>>, vector<1x8x128xf32>,
    %c0_269 = arith.constant 0 : index
    %c0_270 = arith.constant 0 : index
    %c0_271 = arith.constant 0 : index
    %557 = vector.load %arg11[%c0_269, %c0_270, %c0_271] : memref<2x8x128xf32, #tpu.memory_space<vmem>>, vector<1x8x128xf32>
    %558 = vector.shape_cast %557 : vector<1x8x128xf32> to vector<8x128xf32>
    %559 = vector.shape_cast %551 : vector<8x128xf32> to vector<1x8x128xf32>
    tpu.vector_store %arg11[%c0_269, %c0_270, %c0_271], %559 {strides = array<i32>} : memref<2x8x128xf32, #tpu.memory_space<vmem>>, vector<1x8x128xf32>,
    %c1_272 = arith.constant 1 : index
    %c0_273 = arith.constant 0 : index
    %c0_274 = arith.constant 0 : index
    %560 = vector.load %arg10[%c1_272, %c0_273, %c0_274] : memref<2x8x128xf32, #tpu.memory_space<vmem>>, vector<1x8x128xf32>
    %561 = vector.shape_cast %560 : vector<1x8x128xf32> to vector<8x128xf32>
    %562 = tpu.concatenate %553, %561 in 1 : vector<8x128xf32>, vector<8x128xf32> -> vector<8x256xf32>
    %c0_275 = arith.constant 0 : index
    %c0_276 = arith.constant 0 : index
    %563 = vector.load %arg5[%c0_275, %c0_276] : memref<256x512xf32, #tpu.memory_space<vmem>>, vector<256x512xf32>
    %cst_277 = arith.constant dense<0.000000e+00> : vector<8x512xf32>
    %564 = tpu.matmul %562, %563, %cst_277 {dimension_numbers = #tpu.dot_dimension_numbers<[1], [0], [0], [1], [0, 0, 1, 1], [], []>} : vector<8x256xf32>, vector<256x512xf32>, vector<8x512xf32> -> vector<8x512xf32>
    %565 = arith.addf %564, %14 : vector<8x512xf32>
    %c1_278 = arith.constant 1 : index
    %c0_279 = arith.constant 0 : index
    %c0_280 = arith.constant 0 : index
    %566 = vector.load %arg11[%c1_278, %c0_279, %c0_280] : memref<2x8x128xf32, #tpu.memory_space<vmem>>, vector<1x8x128xf32>
    %567 = vector.shape_cast %566 : vector<1x8x128xf32> to vector<8x128xf32>
    %568 = vector.extract_strided_slice %565 {offsets = [0, 0], sizes = [8, 128], strides = [1, 1]} : vector<8x512xf32> to vector<8x128xf32>
    %569 = arith.negf %568 : vector<8x128xf32>
    %570 = math.exp %569 : vector<8x128xf32>
    %cst_281 = arith.constant 1.000000e+00 : f32
    %571 = vector.broadcast %cst_281 : f32 to vector<8x128xf32>
    %572 = arith.addf %571, %570 : vector<8x128xf32>
    %573 = arith.divf %571, %572 : vector<8x128xf32>
    %574 = vector.extract_strided_slice %565 {offsets = [0, 128], sizes = [8, 128], strides = [1, 1]} : vector<8x512xf32> to vector<8x128xf32>
    %575 = arith.negf %574 : vector<8x128xf32>
    %576 = math.exp %575 : vector<8x128xf32>
    %cst_282 = arith.constant 1.000000e+00 : f32
    %577 = vector.broadcast %cst_282 : f32 to vector<8x128xf32>
    %578 = arith.addf %577, %576 : vector<8x128xf32>
    %579 = arith.divf %577, %578 : vector<8x128xf32>
    %580 = vector.extract_strided_slice %565 {offsets = [0, 256], sizes = [8, 128], strides = [1, 1]} : vector<8x512xf32> to vector<8x128xf32>
    %581 = math.tanh %580 : vector<8x128xf32>
    %582 = vector.extract_strided_slice %565 {offsets = [0, 384], sizes = [8, 128], strides = [1, 1]} : vector<8x512xf32> to vector<8x128xf32>
    %583 = arith.negf %582 : vector<8x128xf32>
    %584 = math.exp %583 : vector<8x128xf32>
    %cst_283 = arith.constant 1.000000e+00 : f32
    %585 = vector.broadcast %cst_283 : f32 to vector<8x128xf32>
    %586 = arith.addf %585, %584 : vector<8x128xf32>
    %587 = arith.divf %585, %586 : vector<8x128xf32>
    %588 = arith.mulf %579, %567 : vector<8x128xf32>
    %589 = arith.mulf %573, %581 : vector<8x128xf32>
    %590 = arith.addf %588, %589 : vector<8x128xf32>
    %591 = math.tanh %590 : vector<8x128xf32>
    %592 = arith.mulf %587, %591 : vector<8x128xf32>
    %c1_284 = arith.constant 1 : index
    %c0_285 = arith.constant 0 : index
    %c0_286 = arith.constant 0 : index
    %593 = vector.load %arg10[%c1_284, %c0_285, %c0_286] : memref<2x8x128xf32, #tpu.memory_space<vmem>>, vector<1x8x128xf32>
    %594 = vector.shape_cast %593 : vector<1x8x128xf32> to vector<8x128xf32>
    %595 = vector.shape_cast %592 : vector<8x128xf32> to vector<1x8x128xf32>
    tpu.vector_store %arg10[%c1_284, %c0_285, %c0_286], %595 {strides = array<i32>} : memref<2x8x128xf32, #tpu.memory_space<vmem>>, vector<1x8x128xf32>,
    %c1_287 = arith.constant 1 : index
    %c0_288 = arith.constant 0 : index
    %c0_289 = arith.constant 0 : index
    %596 = vector.load %arg11[%c1_287, %c0_288, %c0_289] : memref<2x8x128xf32, #tpu.memory_space<vmem>>, vector<1x8x128xf32>
    %597 = vector.shape_cast %596 : vector<1x8x128xf32> to vector<8x128xf32>
    %598 = vector.shape_cast %590 : vector<8x128xf32> to vector<1x8x128xf32>
    tpu.vector_store %arg11[%c1_287, %c0_288, %c0_289], %598 {strides = array<i32>} : memref<2x8x128xf32, #tpu.memory_space<vmem>>, vector<1x8x128xf32>,
    %599 = arith.index_cast %c6_i32 : i32 to index
    %c0_290 = arith.constant 0 : index
    %c0_291 = arith.constant 0 : index
    %600 = vector.load %arg13[%599, %c0_290, %c0_291] : memref<8x8x128xf32, #tpu.memory_space<vmem>>, vector<1x8x128xf32>
    %601 = vector.shape_cast %600 : vector<1x8x128xf32> to vector<8x128xf32>
    %602 = vector.shape_cast %592 : vector<8x128xf32> to vector<1x8x128xf32>
    tpu.vector_store %arg13[%599, %c0_290, %c0_291], %602 {strides = array<i32>} : memref<8x8x128xf32, #tpu.memory_space<vmem>>, vector<1x8x128xf32>,
    %c7_i32 = arith.constant 7 : i32
    %c0_292 = arith.constant 0 : index
    %c0_293 = arith.constant 0 : index
    %c0_294 = arith.constant 0 : index
    %603 = vector.load %arg10[%c0_292, %c0_293, %c0_294] : memref<2x8x128xf32, #tpu.memory_space<vmem>>, vector<1x8x128xf32>
    %604 = vector.shape_cast %603 : vector<1x8x128xf32> to vector<8x128xf32>
    %605 = arith.index_cast %c7_i32 : i32 to index
    %c0_295 = arith.constant 0 : index
    %c0_296 = arith.constant 0 : index
    %606 = vector.load %arg12[%605, %c0_295, %c0_296] : memref<8x8x512xf32, #tpu.memory_space<vmem>>, vector<1x8x512xf32>
    %607 = vector.shape_cast %606 : vector<1x8x512xf32> to vector<8x512xf32>
    %c0_297 = arith.constant 0 : index
    %c0_298 = arith.constant 0 : index
    %608 = vector.load %arg3[%c0_297, %c0_298] : memref<128x512xf32, #tpu.memory_space<vmem>>, vector<128x512xf32>
    %cst_299 = arith.constant dense<0.000000e+00> : vector<8x512xf32>
    %609 = tpu.matmul %604, %608, %cst_299 {dimension_numbers = #tpu.dot_dimension_numbers<[1], [0], [0], [1], [0, 0, 1, 1], [], []>} : vector<8x128xf32>, vector<128x512xf32>, vector<8x512xf32> -> vector<8x512xf32>
    %610 = arith.addf %607, %609 : vector<8x512xf32>
    %c0_300 = arith.constant 0 : index
    %c0_301 = arith.constant 0 : index
    %c0_302 = arith.constant 0 : index
    %611 = vector.load %arg11[%c0_300, %c0_301, %c0_302] : memref<2x8x128xf32, #tpu.memory_space<vmem>>, vector<1x8x128xf32>
    %612 = vector.shape_cast %611 : vector<1x8x128xf32> to vector<8x128xf32>
    %613 = vector.extract_strided_slice %610 {offsets = [0, 0], sizes = [8, 128], strides = [1, 1]} : vector<8x512xf32> to vector<8x128xf32>
    %614 = arith.negf %613 : vector<8x128xf32>
    %615 = math.exp %614 : vector<8x128xf32>
    %cst_303 = arith.constant 1.000000e+00 : f32
    %616 = vector.broadcast %cst_303 : f32 to vector<8x128xf32>
    %617 = arith.addf %616, %615 : vector<8x128xf32>
    %618 = arith.divf %616, %617 : vector<8x128xf32>
    %619 = vector.extract_strided_slice %610 {offsets = [0, 128], sizes = [8, 128], strides = [1, 1]} : vector<8x512xf32> to vector<8x128xf32>
    %620 = arith.negf %619 : vector<8x128xf32>
    %621 = math.exp %620 : vector<8x128xf32>
    %cst_304 = arith.constant 1.000000e+00 : f32
    %622 = vector.broadcast %cst_304 : f32 to vector<8x128xf32>
    %623 = arith.addf %622, %621 : vector<8x128xf32>
    %624 = arith.divf %622, %623 : vector<8x128xf32>
    %625 = vector.extract_strided_slice %610 {offsets = [0, 256], sizes = [8, 128], strides = [1, 1]} : vector<8x512xf32> to vector<8x128xf32>
    %626 = math.tanh %625 : vector<8x128xf32>
    %627 = vector.extract_strided_slice %610 {offsets = [0, 384], sizes = [8, 128], strides = [1, 1]} : vector<8x512xf32> to vector<8x128xf32>
    %628 = arith.negf %627 : vector<8x128xf32>
    %629 = math.exp %628 : vector<8x128xf32>
    %cst_305 = arith.constant 1.000000e+00 : f32
    %630 = vector.broadcast %cst_305 : f32 to vector<8x128xf32>
    %631 = arith.addf %630, %629 : vector<8x128xf32>
    %632 = arith.divf %630, %631 : vector<8x128xf32>
    %633 = arith.mulf %624, %612 : vector<8x128xf32>
    %634 = arith.mulf %618, %626 : vector<8x128xf32>
    %635 = arith.addf %633, %634 : vector<8x128xf32>
    %636 = math.tanh %635 : vector<8x128xf32>
    %637 = arith.mulf %632, %636 : vector<8x128xf32>
    %c0_306 = arith.constant 0 : index
    %c0_307 = arith.constant 0 : index
    %c0_308 = arith.constant 0 : index
    %638 = vector.load %arg10[%c0_306, %c0_307, %c0_308] : memref<2x8x128xf32, #tpu.memory_space<vmem>>, vector<1x8x128xf32>
    %639 = vector.shape_cast %638 : vector<1x8x128xf32> to vector<8x128xf32>
    %640 = vector.shape_cast %637 : vector<8x128xf32> to vector<1x8x128xf32>
    tpu.vector_store %arg10[%c0_306, %c0_307, %c0_308], %640 {strides = array<i32>} : memref<2x8x128xf32, #tpu.memory_space<vmem>>, vector<1x8x128xf32>,
    %c0_309 = arith.constant 0 : index
    %c0_310 = arith.constant 0 : index
    %c0_311 = arith.constant 0 : index
    %641 = vector.load %arg11[%c0_309, %c0_310, %c0_311] : memref<2x8x128xf32, #tpu.memory_space<vmem>>, vector<1x8x128xf32>
    %642 = vector.shape_cast %641 : vector<1x8x128xf32> to vector<8x128xf32>
    %643 = vector.shape_cast %635 : vector<8x128xf32> to vector<1x8x128xf32>
    tpu.vector_store %arg11[%c0_309, %c0_310, %c0_311], %643 {strides = array<i32>} : memref<2x8x128xf32, #tpu.memory_space<vmem>>, vector<1x8x128xf32>,
    %c1_312 = arith.constant 1 : index
    %c0_313 = arith.constant 0 : index
    %c0_314 = arith.constant 0 : index
    %644 = vector.load %arg10[%c1_312, %c0_313, %c0_314] : memref<2x8x128xf32, #tpu.memory_space<vmem>>, vector<1x8x128xf32>
    %645 = vector.shape_cast %644 : vector<1x8x128xf32> to vector<8x128xf32>
    %646 = tpu.concatenate %637, %645 in 1 : vector<8x128xf32>, vector<8x128xf32> -> vector<8x256xf32>
    %c0_315 = arith.constant 0 : index
    %c0_316 = arith.constant 0 : index
    %647 = vector.load %arg5[%c0_315, %c0_316] : memref<256x512xf32, #tpu.memory_space<vmem>>, vector<256x512xf32>
    %cst_317 = arith.constant dense<0.000000e+00> : vector<8x512xf32>
    %648 = tpu.matmul %646, %647, %cst_317 {dimension_numbers = #tpu.dot_dimension_numbers<[1], [0], [0], [1], [0, 0, 1, 1], [], []>} : vector<8x256xf32>, vector<256x512xf32>, vector<8x512xf32> -> vector<8x512xf32>
    %649 = arith.addf %648, %14 : vector<8x512xf32>
    %c1_318 = arith.constant 1 : index
    %c0_319 = arith.constant 0 : index
    %c0_320 = arith.constant 0 : index
    %650 = vector.load %arg11[%c1_318, %c0_319, %c0_320] : memref<2x8x128xf32, #tpu.memory_space<vmem>>, vector<1x8x128xf32>
    %651 = vector.shape_cast %650 : vector<1x8x128xf32> to vector<8x128xf32>
    %652 = vector.extract_strided_slice %649 {offsets = [0, 0], sizes = [8, 128], strides = [1, 1]} : vector<8x512xf32> to vector<8x128xf32>
    %653 = arith.negf %652 : vector<8x128xf32>
    %654 = math.exp %653 : vector<8x128xf32>
    %cst_321 = arith.constant 1.000000e+00 : f32
    %655 = vector.broadcast %cst_321 : f32 to vector<8x128xf32>
    %656 = arith.addf %655, %654 : vector<8x128xf32>
    %657 = arith.divf %655, %656 : vector<8x128xf32>
    %658 = vector.extract_strided_slice %649 {offsets = [0, 128], sizes = [8, 128], strides = [1, 1]} : vector<8x512xf32> to vector<8x128xf32>
    %659 = arith.negf %658 : vector<8x128xf32>
    %660 = math.exp %659 : vector<8x128xf32>
    %cst_322 = arith.constant 1.000000e+00 : f32
    %661 = vector.broadcast %cst_322 : f32 to vector<8x128xf32>
    %662 = arith.addf %661, %660 : vector<8x128xf32>
    %663 = arith.divf %661, %662 : vector<8x128xf32>
    %664 = vector.extract_strided_slice %649 {offsets = [0, 256], sizes = [8, 128], strides = [1, 1]} : vector<8x512xf32> to vector<8x128xf32>
    %665 = math.tanh %664 : vector<8x128xf32>
    %666 = vector.extract_strided_slice %649 {offsets = [0, 384], sizes = [8, 128], strides = [1, 1]} : vector<8x512xf32> to vector<8x128xf32>
    %667 = arith.negf %666 : vector<8x128xf32>
    %668 = math.exp %667 : vector<8x128xf32>
    %cst_323 = arith.constant 1.000000e+00 : f32
    %669 = vector.broadcast %cst_323 : f32 to vector<8x128xf32>
    %670 = arith.addf %669, %668 : vector<8x128xf32>
    %671 = arith.divf %669, %670 : vector<8x128xf32>
    %672 = arith.mulf %663, %651 : vector<8x128xf32>
    %673 = arith.mulf %657, %665 : vector<8x128xf32>
    %674 = arith.addf %672, %673 : vector<8x128xf32>
    %675 = math.tanh %674 : vector<8x128xf32>
    %676 = arith.mulf %671, %675 : vector<8x128xf32>
    %c1_324 = arith.constant 1 : index
    %c0_325 = arith.constant 0 : index
    %c0_326 = arith.constant 0 : index
    %677 = vector.load %arg10[%c1_324, %c0_325, %c0_326] : memref<2x8x128xf32, #tpu.memory_space<vmem>>, vector<1x8x128xf32>
    %678 = vector.shape_cast %677 : vector<1x8x128xf32> to vector<8x128xf32>
    %679 = vector.shape_cast %676 : vector<8x128xf32> to vector<1x8x128xf32>
    tpu.vector_store %arg10[%c1_324, %c0_325, %c0_326], %679 {strides = array<i32>} : memref<2x8x128xf32, #tpu.memory_space<vmem>>, vector<1x8x128xf32>,
    %c1_327 = arith.constant 1 : index
    %c0_328 = arith.constant 0 : index
    %c0_329 = arith.constant 0 : index
    %680 = vector.load %arg11[%c1_327, %c0_328, %c0_329] : memref<2x8x128xf32, #tpu.memory_space<vmem>>, vector<1x8x128xf32>
    %681 = vector.shape_cast %680 : vector<1x8x128xf32> to vector<8x128xf32>
    %682 = vector.shape_cast %674 : vector<8x128xf32> to vector<1x8x128xf32>
    tpu.vector_store %arg11[%c1_327, %c0_328, %c0_329], %682 {strides = array<i32>} : memref<2x8x128xf32, #tpu.memory_space<vmem>>, vector<1x8x128xf32>,
    %683 = arith.index_cast %c7_i32 : i32 to index
    %c0_330 = arith.constant 0 : index
    %c0_331 = arith.constant 0 : index
    %684 = vector.load %arg13[%683, %c0_330, %c0_331] : memref<8x8x128xf32, #tpu.memory_space<vmem>>, vector<1x8x128xf32>
    %685 = vector.shape_cast %684 : vector<1x8x128xf32> to vector<8x128xf32>
    %686 = vector.shape_cast %676 : vector<8x128xf32> to vector<1x8x128xf32>
    tpu.vector_store %arg13[%683, %c0_330, %c0_331], %686 {strides = array<i32>} : memref<8x8x128xf32, #tpu.memory_space<vmem>>, vector<1x8x128xf32>,
    %c8_i32 = arith.constant 8 : i32
    %c0_332 = arith.constant 0 : index
    %c0_333 = arith.constant 0 : index
    %c0_334 = arith.constant 0 : index
    %687 = vector.load %arg13[%c0_332, %c0_333, %c0_334] : memref<8x8x128xf32, #tpu.memory_space<vmem>>, vector<8x8x128xf32>
    %688 = vector.shape_cast %687 : vector<8x8x128xf32> to vector<64x128xf32>
    %c0_335 = arith.constant 0 : index
    %c0_336 = arith.constant 0 : index
    %689 = vector.load %arg7[%c0_335, %c0_336] : memref<128x128xf32, #tpu.memory_space<vmem>>, vector<128x128xf32>
    %cst_337 = arith.constant dense<0.000000e+00> : vector<64x128xf32>
    %690 = tpu.matmul %688, %689, %cst_337 {dimension_numbers = #tpu.dot_dimension_numbers<[1], [0], [0], [1], [0, 0, 1, 1], [], []>} : vector<64x128xf32>, vector<128x128xf32>, vector<64x128xf32> -> vector<64x128xf32>
    %c0_338 = arith.constant 0 : index
    %c0_339 = arith.constant 0 : index
    %691 = vector.load %arg8[%c0_338, %c0_339] : memref<1x128xf32, #tpu.memory_space<vmem>>, vector<1x128xf32>
    %692 = vector.broadcast %691 : vector<1x128xf32> to vector<64x128xf32>
    %693 = arith.addf %690, %692 : vector<64x128xf32>
    %694 = vector.shape_cast %693 : vector<64x128xf32> to vector<8x8x128xf32>
    %c0_340 = arith.constant 0 : index
    %c0_341 = arith.constant 0 : index
    %c0_342 = arith.constant 0 : index
    %695 = vector.load %arg9[%c0_340, %c0_341, %c0_342] : memref<8x8x128xf32, #tpu.memory_space<vmem>>, vector<8x8x128xf32>
    tpu.vector_store %arg9[%c0_340, %c0_341, %c0_342], %694 {strides = array<i32>} : memref<8x8x128xf32, #tpu.memory_space<vmem>>, vector<8x8x128xf32>,
    return
  }
  func.func @transform_0(%arg0: i32) -> (i32, i32, i32) {
    %c0_i32 = arith.constant 0 : i32
    %c0_i32_0 = arith.constant 0 : i32
    %c0_i32_1 = arith.constant 0 : i32
    return %arg0, %c0_i32, %c0_i32_0 : i32, i32, i32
  }
  func.func @transform_1(%arg0: i32) -> (i32, i32) {
    %c0_i32 = arith.constant 0 : i32
    %c0_i32_0 = arith.constant 0 : i32
    %c0_i32_1 = arith.constant 0 : i32
    return %c0_i32, %c0_i32_0 : i32, i32
  }
  func.func @transform_2(%arg0: i32) -> (i32, i32) {
    %c0_i32 = arith.constant 0 : i32
    %c0_i32_0 = arith.constant 0 : i32
    %c0_i32_1 = arith.constant 0 : i32
    return %c0_i32, %c0_i32_0 : i32, i32
  }
  func.func @transform_3(%arg0: i32) -> (i32, i32) {
    %c0_i32 = arith.constant 0 : i32
    %c0_i32_0 = arith.constant 0 : i32
    %c0_i32_1 = arith.constant 0 : i32
    return %c0_i32, %c0_i32_0 : i32, i32
  }
  func.func @transform_4(%arg0: i32) -> (i32, i32) {
    %c0_i32 = arith.constant 0 : i32
    %c0_i32_0 = arith.constant 0 : i32
    %c0_i32_1 = arith.constant 0 : i32
    return %c0_i32, %c0_i32_0 : i32, i32
  }
  func.func @transform_5(%arg0: i32) -> (i32, i32) {
    %c0_i32 = arith.constant 0 : i32
    %c0_i32_0 = arith.constant 0 : i32
    %c0_i32_1 = arith.constant 0 : i32
    return %c0_i32, %c0_i32_0 : i32, i32
  }
  func.func @transform_6(%arg0: i32) -> (i32, i32) {
    %c0_i32 = arith.constant 0 : i32
    %c0_i32_0 = arith.constant 0 : i32
    %c0_i32_1 = arith.constant 0 : i32
    return %c0_i32, %c0_i32_0 : i32, i32
  }
  func.func @transform_7(%arg0: i32) -> (i32, i32) {
    %c0_i32 = arith.constant 0 : i32
    %c0_i32_0 = arith.constant 0 : i32
    %c0_i32_1 = arith.constant 0 : i32
    return %c0_i32, %c0_i32_0 : i32, i32
  }
  func.func @transform_8(%arg0: i32) -> (i32, i32, i32) {
    %c0_i32 = arith.constant 0 : i32
    %c0_i32_0 = arith.constant 0 : i32
    %c0_i32_1 = arith.constant 0 : i32
    return %arg0, %c0_i32, %c0_i32_0 : i32, i32, i32
  }
}

</mosaic_0001>

<llo_original>
// kernel: tpu_custom_call.1
$region0: #{tpu_custom_call.1}
  #allocation0 [shape = 'u32[]', space=smem, size = 0x4, offset = 0x4, fixed_abs, tag = 'smem constant byte address 0x4 - core index']
  #allocation1 [shape = 'u32[144,128]{1,0:T(1,128)}', space=vmem, size = 0x12000, scoped, tag = 'internal scratch']
  #allocation2 [shape = 'f32[2,8,128]{2,1,0:T(8,128)}', space=vmem, size = 0x2000, scoped, tag = 'scratch operand']
  #allocation3 [shape = 'f32[2,8,128]{2,1,0:T(8,128)}', space=vmem, size = 0x2000, scoped, tag = 'scratch operand']
  #allocation4 [shape = 'f32[8,8,512]{2,1,0:T(8,128)}', space=vmem, size = 0x20000, scoped, tag = 'scratch operand']
  #allocation5 [shape = 'f32[8,8,128]{2,1,0:T(8,128)}', space=vmem, size = 0x8000, scoped, tag = 'scratch operand']
  %s0 = inlined_call_operand.vmem [shape: f32[24,8,16], index: 0, kind: input, shape index: {}]
  %s1 = inlined_call_operand.vmem [shape: f32[16,512], index: 1, kind: input, shape index: {}]
  %s2 = inlined_call_operand.hbm [shape: f32[128,512], index: 2, kind: input, shape index: {}]
  %s3 = inlined_call_operand.vmem [shape: f32[1,512], index: 3, kind: input, shape index: {}]
  %s4 = inlined_call_operand.hbm [shape: f32[256,512], index: 4, kind: input, shape index: {}]
  %s5 = inlined_call_operand.vmem [shape: f32[1,512], index: 5, kind: input, shape index: {}]
  %s6 = inlined_call_operand.vmem [shape: f32[128,128], index: 6, kind: input, shape index: {}]
  %s7 = inlined_call_operand.vmem [shape: f32[1,128], index: 7, kind: input, shape index: {}]
  %s8 = inlined_call_operand.hbm [shape: f32[24,8,128], index: 8, kind: output, shape index: {}]
  %s9 = sld [smem:[#allocation0]]
  $region77: #{tpu_custom_call.1} parent=0
    _
  %s11 = ssub.s32 1, %s9
  %s12 = scalar_select 0, %s11, %s9
  $region1: #{tpu_custom_call.1} parent=0
    #allocation6 [shape = 'u8[262144]{0}', space=vmem, size = 0x40000, scoped, tag = 'input window, operand 2, single buffered']
    #allocation7 [shape = 's32[2]{0}', space=sflag, size = 0x8, scoped, tag = 'scoped memory for tpu_custom_call.1']
    #allocation8 [shape = 's32[2]{0}', space=sflag, size = 0x8, scoped, tag = 'scoped memory for tpu_custom_call.1']
    #allocation9 [shape = 'u8[524288]{0}', space=vmem, size = 0x80000, scoped, tag = 'input window, operand 4, single buffered']
    #allocation10 [shape = 's32[1]{0}', space=sflag, size = 0x4, scoped, tag = 'scoped memory for tpu_custom_call.1']
    #allocation11 [shape = 'u8[65536]{0}', space=vmem, size = 0x10000, scoped, tag = 'output window, operand 0']
    %13 = vsyncpa [#allocation7], 0
    %14 = vsyncpa [#allocation10], 0
    %15 = vsyncpa [#allocation8], 0
    %s16 = scalar_lea.sflag [#allocation8], 1
    %17 = vsyncpa %s16, 0
    loop: start=0, step=1, limit=5
    $region2: #{tpu_custom_call.1} parent=1 // loop_pre_header
      _
    $region3: #{tpu_custom_call.1} parent=1 // loop_header
      %s19 = sphi 0, %s23
      %p20 = scmp.ge.s32.totalorder %s19, 5
      %s29 = sphi 0, %s31
      %s32 = sphi 0, %s29
      %s33 = sphi 0, %s32
      %s49 = sphi 0, %s33
      %s53 = sphi 0, %s53
      %s55 = sphi 0, %s53
      %s56 = sphi 0, %s55
      %s70 = sphi 0, %s56
      %s74 = sphi 0, %s74
      %s76 = sphi 0, %s74
      %s77 = sphi 0, %s76
      %s91 = sphi 0, %s77
      %s95 = sphi 0, %s95
      %s97 = sphi 0, %s95
      %s98 = sphi 0, %s97
      %s112 = sphi 0, %s98
      %s116 = sphi 0, %s116
      %s118 = sphi 0, %s116
      %s119 = sphi 0, %s118
      %s133 = sphi 0, %s119
      %s137 = sphi 0, %s137
      %s139 = sphi 0, %s137
      %s140 = sphi 0, %s139
      %s154 = sphi 0, %s140
      %s158 = sphi 0, %s158
      %s160 = sphi 0, %s158
      %s161 = sphi 0, %s160
      %s175 = sphi 0, %s161
      %s179 = sphi 0, %s179
      %s181 = sphi 0, %s179
      %s182 = sphi 0, %s181
      %s196 = sphi 0, %s182
      %s202 = sphi 0, %s204
      %s205 = sphi 0, %s202
      %s206 = sphi 0, %s205
      %s222 = sphi 0, %s206
    $region4: #{tpu_custom_call.1} parent=1 // loop_header_branch
      %22 = sbr.rel (%p20) target = $region8
    $region5: #{tpu_custom_call.1} parent=1 // loop_body
      %s24 = ssub.s32 %s19, 1
      %s25 = ssub.s32 %s19, 2
      %s26 = sadd.s32 %s19, 1
      %s27 = ssub.s32 %s19, %s26
      %p28 = scmp.eq.s32.totalorder %s27, 0
      %s30 = sadd.s32 %s29, 1
      %s31 = scalar_select %p28, %s29, %s30
      %p34 = pneg %p28
      %p35 = scmp.eq.s32.totalorder %s19, 2
      %p36 = por %p34, %p35
      %p37 = scmp.ne.s32.totalorder %s29, %s32
      %p38 = scmp.eq.s32.totalorder %s19, 0
      %p39 = por %p37, %p38
      %p40 = scmp.ne.s32.totalorder %s29, %s32
      %p41 = scmp.eq.s32.totalorder %s24, 2
      %p42 = por %p40, %p41
      %p43 = scmp.ne.s32.totalorder %s32, %s33
      %p44 = scmp.eq.s32.totalorder %s24, 0
      %p45 = por %p43, %p44
      %p46 = scmp.ne.s32.totalorder %s32, %s33
      %p47 = scmp.eq.s32.totalorder %s25, 2
      %p48 = por %p46, %p47
      %p50 = scmp.ne.s32.totalorder %s33, %s49
      %p51 = scmp.eq.s32.totalorder %s25, 0
      %p52 = por %p50, %p51
      %s54 = sadd.s32 %s53, 1
      %p57 = scmp.eq.s32.totalorder %s19, 2
      %p58 = scmp.ne.s32.totalorder %s53, %s55
      %p59 = scmp.eq.s32.totalorder %s19, 0
      %p60 = por %p58, %p59
      %p61 = scmp.ne.s32.totalorder %s53, %s55
      %p62 = scmp.eq.s32.totalorder %s24, 2
      %p63 = por %p61, %p62
      %p64 = scmp.ne.s32.totalorder %s55, %s56
      %p65 = scmp.eq.s32.totalorder %s24, 0
      %p66 = por %p64, %p65
      %p67 = scmp.ne.s32.totalorder %s55, %s56
      %p68 = scmp.eq.s32.totalorder %s25, 2
      %p69 = por %p67, %p68
      %p71 = scmp.ne.s32.totalorder %s56, %s70
      %p72 = scmp.eq.s32.totalorder %s25, 0
      %p73 = por %p71, %p72
      %s75 = sadd.s32 %s74, 1
      %p78 = scmp.eq.s32.totalorder %s19, 2
      %p79 = scmp.ne.s32.totalorder %s74, %s76
      %p80 = scmp.eq.s32.totalorder %s19, 0
      %p81 = por %p79, %p80
      %p82 = scmp.ne.s32.totalorder %s74, %s76
      %p83 = scmp.eq.s32.totalorder %s24, 2
      %p84 = por %p82, %p83
      %p85 = scmp.ne.s32.totalorder %s76, %s77
      %p86 = scmp.eq.s32.totalorder %s24, 0
      %p87 = por %p85, %p86
      %p88 = scmp.ne.s32.totalorder %s76, %s77
      %p89 = scmp.eq.s32.totalorder %s25, 2
      %p90 = por %p88, %p89
      %p92 = scmp.ne.s32.totalorder %s77, %s91
      %p93 = scmp.eq.s32.totalorder %s25, 0
      %p94 = por %p92, %p93
      %s96 = sadd.s32 %s95, 1
      %p99 = scmp.eq.s32.totalorder %s19, 2
      %p100 = scmp.ne.s32.totalorder %s95, %s97
      %p101 = scmp.eq.s32.totalorder %s19, 0
      %p102 = por %p100, %p101
      %p103 = scmp.ne.s32.totalorder %s95, %s97
      %p104 = scmp.eq.s32.totalorder %s24, 2
      %p105 = por %p103, %p104
      %p106 = scmp.ne.s32.totalorder %s97, %s98
      %p107 = scmp.eq.s32.totalorder %s24, 0
      %p108 = por %p106, %p107
      %p109 = scmp.ne.s32.totalorder %s97, %s98
      %p110 = scmp.eq.s32.totalorder %s25, 2
      %p111 = por %p109, %p110
      %p113 = scmp.ne.s32.totalorder %s98, %s112
      %p114 = scmp.eq.s32.totalorder %s25, 0
      %p115 = por %p113, %p114
      %s117 = sadd.s32 %s116, 1
      %p120 = scmp.eq.s32.totalorder %s19, 2
      %p121 = scmp.ne.s32.totalorder %s116, %s118
      %p122 = scmp.eq.s32.totalorder %s19, 0
      %p123 = por %p121, %p122
      %p124 = scmp.ne.s32.totalorder %s116, %s118
      %p125 = scmp.eq.s32.totalorder %s24, 2
      %p126 = por %p124, %p125
      %p127 = scmp.ne.s32.totalorder %s118, %s119
      %p128 = scmp.eq.s32.totalorder %s24, 0
      %p129 = por %p127, %p128
      %p130 = scmp.ne.s32.totalorder %s118, %s119
      %p131 = scmp.eq.s32.totalorder %s25, 2
      %p132 = por %p130, %p131
      %p134 = scmp.ne.s32.totalorder %s119, %s133
      %p135 = scmp.eq.s32.totalorder %s25, 0
      %p136 = por %p134, %p135
      %s138 = sadd.s32 %s137, 1
      %p141 = scmp.eq.s32.totalorder %s19, 2
      %p142 = scmp.ne.s32.totalorder %s137, %s139
      %p143 = scmp.eq.s32.totalorder %s19, 0
      %p144 = por %p142, %p143
      %p145 = scmp.ne.s32.totalorder %s137, %s139
      %p146 = scmp.eq.s32.totalorder %s24, 2
      %p147 = por %p145, %p146
      %p148 = scmp.ne.s32.totalorder %s139, %s140
      %p149 = scmp.eq.s32.totalorder %s24, 0
      %p150 = por %p148, %p149
      %p151 = scmp.ne.s32.totalorder %s139, %s140
      %p152 = scmp.eq.s32.totalorder %s25, 2
      %p153 = por %p151, %p152
      %p155 = scmp.ne.s32.totalorder %s140, %s154
      %p156 = scmp.eq.s32.totalorder %s25, 0
      %p157 = por %p155, %p156
      %s159 = sadd.s32 %s158, 1
      %p162 = scmp.eq.s32.totalorder %s19, 2
      %p163 = scmp.ne.s32.totalorder %s158, %s160
      %p164 = scmp.eq.s32.totalorder %s19, 0
      %p165 = por %p163, %p164
      %p166 = scmp.ne.s32.totalorder %s158, %s160
      %p167 = scmp.eq.s32.totalorder %s24, 2
      %p168 = por %p166, %p167
      %p169 = scmp.ne.s32.totalorder %s160, %s161
      %p170 = scmp.eq.s32.totalorder %s24, 0
      %p171 = por %p169, %p170
      %p172 = scmp.ne.s32.totalorder %s160, %s161
      %p173 = scmp.eq.s32.totalorder %s25, 2
      %p174 = por %p172, %p173
      %p176 = scmp.ne.s32.totalorder %s161, %s175
      %p177 = scmp.eq.s32.totalorder %s25, 0
      %p178 = por %p176, %p177
      %s180 = sadd.s32 %s179, 1
      %p183 = scmp.eq.s32.totalorder %s19, 2
      %p184 = scmp.ne.s32.totalorder %s179, %s181
      %p185 = scmp.eq.s32.totalorder %s19, 0
      %p186 = por %p184, %p185
      %p187 = scmp.ne.s32.totalorder %s179, %s181
      %p188 = scmp.eq.s32.totalorder %s24, 2
      %p189 = por %p187, %p188
      %p190 = scmp.ne.s32.totalorder %s181, %s182
      %p191 = scmp.eq.s32.totalorder %s24, 0
      %p192 = por %p190, %p191
      %p193 = scmp.ne.s32.totalorder %s181, %s182
      %p194 = scmp.eq.s32.totalorder %s25, 2
      %p195 = por %p193, %p194
      %p197 = scmp.ne.s32.totalorder %s182, %s196
      %p198 = scmp.eq.s32.totalorder %s25, 0
      %p199 = por %p197, %p198
      %s200 = ssub.s32 %s19, %s26
      %p201 = scmp.eq.s32.totalorder %s200, 0
      %s203 = sadd.s32 %s202, 1
      %s204 = scalar_select %p201, %s202, %s203
      %p207 = pneg %p201
      %p208 = scmp.eq.s32.totalorder %s19, 2
      %p209 = por %p207, %p208
      %p210 = scmp.ne.s32.totalorder %s202, %s205
      %p211 = scmp.eq.s32.totalorder %s19, 0
      %p212 = por %p210, %p211
      %p213 = scmp.ne.s32.totalorder %s202, %s205
      %p214 = scmp.eq.s32.totalorder %s24, 2
      %p215 = por %p213, %p214
      %p216 = scmp.ne.s32.totalorder %s205, %s206
      %p217 = scmp.eq.s32.totalorder %s24, 0
      %p218 = por %p216, %p217
      %p219 = scmp.ne.s32.totalorder %s205, %s206
      %p220 = scmp.eq.s32.totalorder %s25, 2
      %p221 = por %p219, %p220
      %p223 = scmp.ne.s32.totalorder %s206, %s222
      %p224 = scmp.eq.s32.totalorder %s25, 0
      %p225 = por %p223, %p224
      %p226 = scmp.le.s32.totalorder 1, %s19
      %p227 = scmp.lt.s32.totalorder %s19, 4
      %p228 = pnand %p226, %p227
      %p229 = pneg %p228
      // Predicated region
      $region9: #{tpu_custom_call.1} parent=5 // pred_check
        _
      $region10: #{tpu_custom_call.1} parent=5 // pred_check_branch
        %231 = sbr.rel (%p228) target = $region12
      $region11: #{tpu_custom_call.1} parent=5 // pred_region
        %s232 = ssub.s32 %s19, 1
        // Predicated region
        $region13: #{tpu_custom_call.1} parent=11 // pred_check
          %p233 = pneg %p66
        $region14: #{tpu_custom_call.1} parent=11 // pred_check_branch
          %235 = sbr.rel (%p233) target = $region16
        $region15: #{tpu_custom_call.1} parent=11 // pred_region
          _
        $region16: #{tpu_custom_call.1} parent=11 // pred_fallthru
          _
        // Predicated region
        $region17: #{tpu_custom_call.1} parent=11 // pred_check
          %p236 = pneg %p87
        $region18: #{tpu_custom_call.1} parent=11 // pred_check_branch
          %238 = sbr.rel (%p236) target = $region20
        $region19: #{tpu_custom_call.1} parent=11 // pred_region
          %s240 = ssub.s32 8192, 8192
          %241 = vsyncadd [#allocation7], %s240
          %s242 = sshll.u32 [#allocation6], 4
          %s243 = int_to_ptr.vmem [resolvable:$true] %s242
          %248 = dma.hbm_to_vmem [thread:$0]  %s2, 8192, %s243, [#allocation7], 512, 512, 32
        $region20: #{tpu_custom_call.1} parent=11 // pred_fallthru
          _
        // Predicated region
        $region21: #{tpu_custom_call.1} parent=11 // pred_check
          %p249 = pneg %p108
        $region22: #{tpu_custom_call.1} parent=11 // pred_check_branch
          %251 = sbr.rel (%p249) target = $region24
        $region23: #{tpu_custom_call.1} parent=11 // pred_region
          _
        $region24: #{tpu_custom_call.1} parent=11 // pred_fallthru
          _
        // Predicated region
        $region25: #{tpu_custom_call.1} parent=11 // pred_check
          %p252 = pneg %p129
        $region26: #{tpu_custom_call.1} parent=11 // pred_check_branch
          %254 = sbr.rel (%p252) target = $region28
        $region27: #{tpu_custom_call.1} parent=11 // pred_region
          %s256 = ssub.s32 16384, 16384
          %257 = vsyncadd [#allocation10], %s256
          %s258 = sshll.u32 [#allocation9], 4
          %s259 = int_to_ptr.vmem [resolvable:$true] %s258
          %264 = dma.hbm_to_vmem [thread:$0]  %s4, 16384, %s259, [#allocation10], 512, 512, 32
        $region28: #{tpu_custom_call.1} parent=11 // pred_fallthru
          _
        // Predicated region
        $region29: #{tpu_custom_call.1} parent=11 // pred_check
          %p265 = pneg %p150
        $region30: #{tpu_custom_call.1} parent=11 // pred_check_branch
          %267 = sbr.rel (%p265) target = $region32
        $region31: #{tpu_custom_call.1} parent=11 // pred_region
          _
        $region32: #{tpu_custom_call.1} parent=11 // pred_fallthru
          _
        // Predicated region
        $region33: #{tpu_custom_call.1} parent=11 // pred_check
          %p268 = pneg %p171
        $region34: #{tpu_custom_call.1} parent=11 // pred_check_branch
          %270 = sbr.rel (%p268) target = $region36
        $region35: #{tpu_custom_call.1} parent=11 // pred_region
          _
        $region36: #{tpu_custom_call.1} parent=11 // pred_fallthru
          _
        // Predicated region
        $region37: #{tpu_custom_call.1} parent=11 // pred_check
          %p271 = pneg %p192
        $region38: #{tpu_custom_call.1} parent=11 // pred_check_branch
          %273 = sbr.rel (%p271) target = $region40
        $region39: #{tpu_custom_call.1} parent=11 // pred_region
          _
        $region40: #{tpu_custom_call.1} parent=11 // pred_fallthru
          _
      $region12: #{tpu_custom_call.1} parent=5 // pred_fallthru
        _
      %p274 = scmp.lt.s32.totalorder %s19, 3
      // Predicated region
      $region41: #{tpu_custom_call.1} parent=5 // pred_check
        %p275 = pneg %p274
      $region42: #{tpu_custom_call.1} parent=5 // pred_check_branch
        %277 = sbr.rel (%p275) target = $region44
      $region43: #{tpu_custom_call.1} parent=5 // pred_region
        // Predicated region
        $region45: #{tpu_custom_call.1} parent=43 // pred_check
          %p278 = pneg %p39
        $region46: #{tpu_custom_call.1} parent=43 // pred_check_branch
          %280 = sbr.rel (%p278) target = $region48
        $region47: #{tpu_custom_call.1} parent=43 // pred_region
          %s281 = smul.u32 8, %s19
          %p282 = scmp.lt.s32.totalorder %s281, 23
          %s283 = scalar_select %p282, %s281, 23
          %s284 = smul.addr %s283, 8
          %s285 = scalar_lea.vmem %s0, %s284
          %s286 = smul.u32 8, %s19
        $region48: #{tpu_custom_call.1} parent=43 // pred_fallthru
          _
      $region44: #{tpu_custom_call.1} parent=5 // pred_fallthru
        _
      %p287 = scmp.le.s32.totalorder 1, %s19
      %p288 = scmp.lt.s32.totalorder %s19, 4
      %p289 = pnand %p287, %p288
      %p290 = pneg %p289
      // Predicated region
      $region49: #{tpu_custom_call.1} parent=5 // pred_check
        _
      $region50: #{tpu_custom_call.1} parent=5 // pred_check_branch
        %292 = sbr.rel (%p289) target = $region52
      $region51: #{tpu_custom_call.1} parent=5 // pred_region
        %s293 = ssub.s32 %s19, 1
        // Predicated region
        $region53: #{tpu_custom_call.1} parent=51 // pred_check
          %p294 = pneg %p87
        $region54: #{tpu_custom_call.1} parent=51 // pred_check_branch
          %296 = sbr.rel (%p294) target = $region56
        $region55: #{tpu_custom_call.1} parent=51 // pred_region
          %297 = dma.done [#allocation7], 8192
        $region56: #{tpu_custom_call.1} parent=51 // pred_fallthru
          _
        // Predicated region
        $region57: #{tpu_custom_call.1} parent=51 // pred_check
          %p298 = pneg %p129
        $region58: #{tpu_custom_call.1} parent=51 // pred_check_branch
          %300 = sbr.rel (%p298) target = $region60
        $region59: #{tpu_custom_call.1} parent=51 // pred_region
          %301 = dma.done [#allocation10], 16384
        $region60: #{tpu_custom_call.1} parent=51 // pred_fallthru
          _
        %s302 = smul.u32 8, %s24
        %p303 = scmp.lt.s32.totalorder %s302, 23
        %s304 = scalar_select %p303, %s302, 23
        %s305 = smul.addr %s304, 8
        %s306 = scalar_lea.vmem %s0, %s305
        %p307 = pneg %p45
        %p308 = pneg %p42
        %p309 = pneg %p66
        %p310 = pneg %p63
        %p311 = pneg %p87
        %p312 = pneg %p84
        %p313 = pneg %p108
        %p314 = pneg %p105
        %p315 = pneg %p129
        %p316 = pneg %p126
        %p317 = pneg %p150
        %p318 = pneg %p147
        %p319 = pneg %p171
        %p320 = pneg %p168
        %p321 = pneg %p192
        %p322 = pneg %p189
        %p323 = pneg %p218
        %p324 = pneg %p215
        %s325 = sand.u32 %s205, 1
        %s326 = scalar_lea.sflag [#allocation8], %s325
        %s327 = sand.u32 %s205, 1
        %s328 = smul.addr %s327, 64
        %s329 = scalar_lea.vmem [#allocation11], %s328
        %s330 = smul.u32 8, %s24
        %p331 = scmp.lt.s32.totalorder %s330, 23
        %s332 = scalar_select %p331, %s330, 23
        %s333 = smul.addr %s332, 8
        %s334 = scalar_lea.vmem %s0, %s333
        %s335 = smul.u32 8, %s24
        %s336 = smul.u32 8, %s24
        %p337 = scmp.eq.s32.totalorder %s24, 0
        // Predicated region
        $region61: #{tpu_custom_call.1} parent=51 // pred_check
          %p338 = pneg %p337
        $region62: #{tpu_custom_call.1} parent=51 // pred_check_branch
          %340 = sbr.rel (%p338) target = $region64
        $region63: #{tpu_custom_call.1} parent=51 // pred_region
          %341 = vst [vmem:[#allocation2] sm:$0xff] 0.0
          %342 = vst [vmem:[#allocation2 + $0x8] sm:$0xff] 0.0
          %343 = vst [vmem:[#allocation3] sm:$0xff] 0.0
          %344 = vst [vmem:[#allocation3 + $0x8] sm:$0xff] 0.0
        $region64: #{tpu_custom_call.1} parent=51 // pred_fallthru
          _
        %v345 = vld [vmem:[%s334] sm:$0xff]
        %v346 = vld [vmem:[%s334 + $0x8] sm:$0xff]
        %v347 = vld [vmem:[%s334 + $0x10] sm:$0xff]
        %v348 = vld [vmem:[%s334 + $0x18] sm:$0xff]
        %v349 = vld [vmem:[%s334 + $0x20] sm:$0xff]
        %v350 = vld [vmem:[%s334 + $0x28] sm:$0xff]
        %v351 = vld [vmem:[%s334 + $0x30] sm:$0xff]
        %v352 = vld [vmem:[%s334 + $0x38] sm:$0xff]
        %v353 = vld [vmem:[%s1] sm:$0xff]
        %v354 = vld [vmem:[%s1 + $0x8] sm:$0xff]
        %v355 = vld [vmem:[%s1 + $0x10] sm:$0xff]
        %v356 = vld [vmem:[%s1 + $0x18] sm:$0xff]
        %v357 = vld [vmem:[%s1 + $0x20] sm:$0xff]
        %v358 = vld [vmem:[%s1 + $0x28] sm:$0xff]
        %v359 = vld [vmem:[%s1 + $0x30] sm:$0xff]
        %v360 = vld [vmem:[%s1 + $0x38] sm:$0xff]
        %v361 = vld [vmem:[%s3] sm:$0xf]
        %v363 = vlaneseq
        %v364 = vshrl.u32 %v363, 7
        %v365 = vsub.s32 0, %v364
        %v366 = vrot.slane %v361, %v365
        %v367 = vlaneseq
        %v368 = vshrl.u32 %v367, 7
        %v369 = vsub.s32 1, %v368
        %v370 = vrot.slane %v361, %v369
        %v371 = vlaneseq
        %v372 = vshrl.u32 %v371, 7
        %v373 = vsub.s32 2, %v372
        %v374 = vrot.slane %v361, %v373
        %v375 = vlaneseq
        %v376 = vshrl.u32 %v375, 7
        %v377 = vsub.s32 3, %v376
        %v378 = vrot.slane %v361, %v377
        %vm383 = vcmask 130048
        %v385 = vsel %vm383, %v345, 0
        %v388 = vsel %vm383, %v346, 0
        %v391 = vsel %vm383, %v347, 0
        %v394 = vsel %vm383, %v348, 0
        %v397 = vsel %vm383, %v349, 0
        %v400 = vsel %vm383, %v350, 0
        %v403 = vsel %vm383, %v351, 0
        %v406 = vsel %vm383, %v352, 0
        %408 = vmatprep.subr.mxu0 %v354
        %409 = vmatpush1.msra.mxu0 %v353
        %410 = vmatprep.subr.mxu0 %v358
        %411 = vmatpush1.msra.mxu0 %v357
        %412 = vmatprep.subr.mxu0 0.0
        %413 = vmatpush1.msra.mxu0 0.0
        %414 = vmatprep.subr.mxu0 0.0
        %415 = vmatpush1.msra.mxu0 0.0
        %416 = vmatprep.subr.mxu0 0.0
        %417 = vmatpush1.msra.mxu0 0.0
        %418 = vmatprep.subr.mxu0 0.0
        %419 = vmatpush1.msra.mxu0 0.0
        %420 = vmatprep.subr.mxu0 0.0
        %421 = vmatpush1.msra.mxu0 0.0
        %422 = vmatprep.subr.mxu0 0.0
        %423 = vmatpush1.msra.mxu0 0.0
        %424 = vmatprep.subr.mxu0 0.0
        %425 = vmatpush1.msra.mxu0 0.0
        %426 = vmatprep.subr.mxu0 0.0
        %427 = vmatpush1.msra.mxu0 0.0
        %428 = vmatprep.subr.mxu0 0.0
        %429 = vmatpush1.msra.mxu0 0.0
        %430 = vmatprep.subr.mxu0 0.0
        %431 = vmatpush1.msra.mxu0 0.0
        %432 = vmatprep.subr.mxu0 0.0
        %433 = vmatpush1.msra.mxu0 0.0
        %434 = vmatprep.subr.mxu0 0.0
        %435 = vmatpush1.msra.mxu0 0.0
        %436 = vmatprep.subr.mxu0 0.0
        %437 = vmatpush1.msra.mxu0 0.0
        %438 = vmatprep.subr.mxu0 0.0
        %439 = vmatpush1.msra.mxu0 0.0
        %440 = vmatprep.subr.mxu0 0.0
        %441 = vmatpush1.msra.mxu0 0.0
        %442 = vmatprep.subr.mxu0 0.0
        %443 = vmatpush1.msra.mxu0 0.0
        %444 = vmatprep.subr.mxu0 0.0
        %445 = vmatpush1.msra.mxu0 0.0
        %446 = vmatprep.subr.mxu0 0.0
        %447 = vmatpush1.msra.mxu0 0.0
        %448 = vmatprep.subr.mxu0 0.0
        %449 = vmatpush1.msra.mxu0 0.0
        %450 = vmatprep.subr.mxu0 0.0
        %451 = vmatpush1.msra.mxu0 0.0
        %452 = vmatprep.subr.mxu0 0.0
        %453 = vmatpush1.msra.mxu0 0.0
        %454 = vmatprep.subr.mxu0 0.0
        %455 = vmatpush1.msra.mxu0 0.0
        %456 = vmatprep.subr.mxu0 0.0
        %457 = vmatpush1.msra.mxu0 0.0
        %458 = vmatprep.subr.mxu0 0.0
        %459 = vmatpush1.msra.mxu0 0.0
        %460 = vmatprep.subr.mxu0 0.0
        %461 = vmatpush1.msra.mxu0 0.0
        %462 = vmatprep.subr.mxu0 0.0
        %463 = vmatpush1.msra.mxu0 0.0
        %464 = vmatprep.subr.mxu0 0.0
        %465 = vmatpush1.msra.mxu0 0.0
        %466 = vmatprep.subr.mxu0 0.0
        %467 = vmatpush1.msra.mxu0 0.0
        %468 = vmatprep.subr.mxu0 0.0
        %469 = vmatpush1.msra.mxu0 0.0
        %470 = vmatprep.subr.mxu0 0.0
        %471 = vmatpush1.msra.mxu0 0.0
        %472 = vmatprep.mubr.f32.mxu0 0.0
        %473 = vmatmul.mubr.f32.gmra.mrb[0].mxu0 %v385
        %v474 = vpop.f32.mrb[0].mxu0
        %v475 = vadd.f32 %v366, %v474
        %v476 = vpop.f32.mrb[0].mxu0
        %v477 = vadd.f32 %v370, %v476
        %478 = vmatprep.mubr.f32.mxu0 0.0
        %479 = vmatmul.mubr.f32.gmra.mrb[0].mxu0 %v388
        %v480 = vpop.f32.mrb[0].mxu0
        %v481 = vadd.f32 %v366, %v480
        %v482 = vpop.f32.mrb[0].mxu0
        %v483 = vadd.f32 %v370, %v482
        %484 = vmatprep.mubr.f32.mxu0 0.0
        %485 = vmatmul.mubr.f32.gmra.mrb[0].mxu0 %v391
        %v486 = vpop.f32.mrb[0].mxu0
        %v487 = vadd.f32 %v366, %v486
        %v488 = vpop.f32.mrb[0].mxu0
        %v489 = vadd.f32 %v370, %v488
        %490 = vmatprep.mubr.f32.mxu0 0.0
        %491 = vmatmul.mubr.f32.gmra.mrb[0].mxu0 %v394
        %v492 = vpop.f32.mrb[0].mxu0
        %v493 = vadd.f32 %v366, %v492
        %v494 = vpop.f32.mrb[0].mxu0
        %v495 = vadd.f32 %v370, %v494
        %496 = vmatprep.mubr.f32.mxu0 0.0
        %497 = vmatmul.mubr.f32.gmra.mrb[0].mxu0 %v397
        %v498 = vpop.f32.mrb[0].mxu0
        %v499 = vadd.f32 %v366, %v498
        %v500 = vpop.f32.mrb[0].mxu0
        %v501 = vadd.f32 %v370, %v500
        %502 = vmatprep.mubr.f32.mxu0 0.0
        %503 = vmatmul.mubr.f32.gmra.mrb[0].mxu0 %v400
        %v504 = vpop.f32.mrb[0].mxu0
        %v505 = vadd.f32 %v366, %v504
        %v506 = vpop.f32.mrb[0].mxu0
        %v507 = vadd.f32 %v370, %v506
        %508 = vmatprep.mubr.f32.mxu0 0.0
        %509 = vmatmul.mubr.f32.gmra.mrb[0].mxu0 %v403
        %v510 = vpop.f32.mrb[0].mxu0
        %v511 = vadd.f32 %v366, %v510
        %v512 = vpop.f32.mrb[0].mxu0
        %v513 = vadd.f32 %v370, %v512
        %514 = vmatprep.mubr.f32.mxu0 0.0
        %515 = vmatmul.mubr.f32.gmra.mrb[0].mxu0 %v406
        %v516 = vpop.f32.mrb[0].mxu0
        %v517 = vadd.f32 %v366, %v516
        %v518 = vpop.f32.mrb[0].mxu0
        %v519 = vadd.f32 %v370, %v518
        %520 = vdwg.mxu0
        %521 = vmatprep.subr.mxu0 %v356
        %522 = vmatpush1.msra.mxu0 %v355
        %523 = vmatprep.subr.mxu0 %v360
        %524 = vmatpush1.msra.mxu0 %v359
        %525 = vmatprep.subr.mxu0 0.0
        %526 = vmatpush1.msra.mxu0 0.0
        %527 = vmatprep.subr.mxu0 0.0
        %528 = vmatpush1.msra.mxu0 0.0
        %529 = vmatprep.subr.mxu0 0.0
        %530 = vmatpush1.msra.mxu0 0.0
        %531 = vmatprep.subr.mxu0 0.0
        %532 = vmatpush1.msra.mxu0 0.0
        %533 = vmatprep.subr.mxu0 0.0
        %534 = vmatpush1.msra.mxu0 0.0
        %535 = vmatprep.subr.mxu0 0.0
        %536 = vmatpush1.msra.mxu0 0.0
        %537 = vmatprep.subr.mxu0 0.0
        %538 = vmatpush1.msra.mxu0 0.0
        %539 = vmatprep.subr.mxu0 0.0
        %540 = vmatpush1.msra.mxu0 0.0
        %541 = vmatprep.subr.mxu0 0.0
        %542 = vmatpush1.msra.mxu0 0.0
        %543 = vmatprep.subr.mxu0 0.0
        %544 = vmatpush1.msra.mxu0 0.0
        %545 = vmatprep.subr.mxu0 0.0
        %546 = vmatpush1.msra.mxu0 0.0
        %547 = vmatprep.subr.mxu0 0.0
        %548 = vmatpush1.msra.mxu0 0.0
        %549 = vmatprep.subr.mxu0 0.0
        %550 = vmatpush1.msra.mxu0 0.0
        %551 = vmatprep.subr.mxu0 0.0
        %552 = vmatpush1.msra.mxu0 0.0
        %553 = vmatprep.subr.mxu0 0.0
        %554 = vmatpush1.msra.mxu0 0.0
        %555 = vmatprep.subr.mxu0 0.0
        %556 = vmatpush1.msra.mxu0 0.0
        %557 = vmatprep.subr.mxu0 0.0
        %558 = vmatpush1.msra.mxu0 0.0
        %559 = vmatprep.subr.mxu0 0.0
        %560 = vmatpush1.msra.mxu0 0.0
        %561 = vmatprep.subr.mxu0 0.0
        %562 = vmatpush1.msra.mxu0 0.0
        %563 = vmatprep.subr.mxu0 0.0
        %564 = vmatpush1.msra.mxu0 0.0
        %565 = vmatprep.subr.mxu0 0.0
        %566 = vmatpush1.msra.mxu0 0.0
        %567 = vmatprep.subr.mxu0 0.0
        %568 = vmatpush1.msra.mxu0 0.0
        %569 = vmatprep.subr.mxu0 0.0
        %570 = vmatpush1.msra.mxu0 0.0
        %571 = vmatprep.subr.mxu0 0.0
        %572 = vmatpush1.msra.mxu0 0.0
        %573 = vmatprep.subr.mxu0 0.0
        %574 = vmatpush1.msra.mxu0 0.0
        %575 = vmatprep.subr.mxu0 0.0
        %576 = vmatpush1.msra.mxu0 0.0
        %577 = vmatprep.subr.mxu0 0.0
        %578 = vmatpush1.msra.mxu0 0.0
        %579 = vmatprep.subr.mxu0 0.0
        %580 = vmatpush1.msra.mxu0 0.0
        %581 = vmatprep.subr.mxu0 0.0
        %582 = vmatpush1.msra.mxu0 0.0
        %583 = vmatprep.subr.mxu0 0.0
        %584 = vmatpush1.msra.mxu0 0.0
        %585 = vmatprep.mubr.f32.mxu0 0.0
        %586 = vmatmul.mubr.f32.gmra.mrb[0].mxu0 %v385
        %v587 = vpop.f32.mrb[0].mxu0
        %v588 = vadd.f32 %v374, %v587
        %v589 = vpop.f32.mrb[0].mxu0
        %v590 = vadd.f32 %v378, %v589
        %591 = vmatprep.mubr.f32.mxu0 0.0
        %592 = vmatmul.mubr.f32.gmra.mrb[0].mxu0 %v388
        %v593 = vpop.f32.mrb[0].mxu0
        %v594 = vadd.f32 %v374, %v593
        %v595 = vpop.f32.mrb[0].mxu0
        %v596 = vadd.f32 %v378, %v595
        %597 = vmatprep.mubr.f32.mxu0 0.0
        %598 = vmatmul.mubr.f32.gmra.mrb[0].mxu0 %v391
        %v599 = vpop.f32.mrb[0].mxu0
        %v600 = vadd.f32 %v374, %v599
        %v601 = vpop.f32.mrb[0].mxu0
        %v602 = vadd.f32 %v378, %v601
        %603 = vmatprep.mubr.f32.mxu0 0.0
        %604 = vmatmul.mubr.f32.gmra.mrb[0].mxu0 %v394
        %v605 = vpop.f32.mrb[0].mxu0
        %v606 = vadd.f32 %v374, %v605
        %v607 = vpop.f32.mrb[0].mxu0
        %v608 = vadd.f32 %v378, %v607
        %609 = vmatprep.mubr.f32.mxu0 0.0
        %610 = vmatmul.mubr.f32.gmra.mrb[0].mxu0 %v397
        %v611 = vpop.f32.mrb[0].mxu0
        %v612 = vadd.f32 %v374, %v611
        %v613 = vpop.f32.mrb[0].mxu0
        %v614 = vadd.f32 %v378, %v613
        %615 = vmatprep.mubr.f32.mxu0 0.0
        %616 = vmatmul.mubr.f32.gmra.mrb[0].mxu0 %v400
        %v617 = vpop.f32.mrb[0].mxu0
        %v618 = vadd.f32 %v374, %v617
        %v619 = vpop.f32.mrb[0].mxu0
        %v620 = vadd.f32 %v378, %v619
        %621 = vmatprep.mubr.f32.mxu0 0.0
        %622 = vmatmul.mubr.f32.gmra.mrb[0].mxu0 %v403
        %v623 = vpop.f32.mrb[0].mxu0
        %v624 = vadd.f32 %v374, %v623
        %v625 = vpop.f32.mrb[0].mxu0
        %v626 = vadd.f32 %v378, %v625
        %627 = vmatprep.mubr.f32.mxu0 0.0
        %628 = vmatmul.mubr.f32.gmra.mrb[0].mxu0 %v406
        %v629 = vpop.f32.mrb[0].mxu0
        %v630 = vadd.f32 %v374, %v629
        %v631 = vpop.f32.mrb[0].mxu0
        %v632 = vadd.f32 %v378, %v631
        %633 = vdwg.mxu0
        %634 = vst [vmem:[#allocation4] sm:$0xff] %v475
        %635 = vst [vmem:[#allocation4 + $0x8] sm:$0xff] %v477
        %636 = vst [vmem:[#allocation4 + $0x10] sm:$0xff] %v588
        %637 = vst [vmem:[#allocation4 + $0x18] sm:$0xff] %v590
        %638 = vst [vmem:[#allocation4 + $0x20] sm:$0xff] %v481
        %639 = vst [vmem:[#allocation4 + $0x28] sm:$0xff] %v483
        %640 = vst [vmem:[#allocation4 + $0x30] sm:$0xff] %v594
        %641 = vst [vmem:[#allocation4 + $0x38] sm:$0xff] %v596
        %642 = vst [vmem:[#allocation4 + $0x40] sm:$0xff] %v487
        %643 = vst [vmem:[#allocation4 + $0x48] sm:$0xff] %v489
        %644 = vst [vmem:[#allocation4 + $0x50] sm:$0xff] %v600
        %645 = vst [vmem:[#allocation4 + $0x58] sm:$0xff] %v602
        %646 = vst [vmem:[#allocation4 + $0x60] sm:$0xff] %v493
        %647 = vst [vmem:[#allocation4 + $0x68] sm:$0xff] %v495
        %648 = vst [vmem:[#allocation4 + $0x70] sm:$0xff] %v606
        %649 = vst [vmem:[#allocation4 + $0x78] sm:$0xff] %v608
        %650 = vst [vmem:[#allocation4 + $0x80] sm:$0xff] %v499
        %651 = vst [vmem:[#allocation4 + $0x88] sm:$0xff] %v501
        %652 = vst [vmem:[#allocation4 + $0x90] sm:$0xff] %v612
        %653 = vst [vmem:[#allocation4 + $0x98] sm:$0xff] %v614
        %654 = vst [vmem:[#allocation4 + $0xa0] sm:$0xff] %v505
        %655 = vst [vmem:[#allocation4 + $0xa8] sm:$0xff] %v507
        %656 = vst [vmem:[#allocation4 + $0xb0] sm:$0xff] %v618
        %657 = vst [vmem:[#allocation4 + $0xb8] sm:$0xff] %v620
        %658 = vst [vmem:[#allocation4 + $0xc0] sm:$0xff] %v511
        %659 = vst [vmem:[#allocation4 + $0xc8] sm:$0xff] %v513
        %660 = vst [vmem:[#allocation4 + $0xd0] sm:$0xff] %v624
        %661 = vst [vmem:[#allocation4 + $0xd8] sm:$0xff] %v626
        %662 = vst [vmem:[#allocation4 + $0xe0] sm:$0xff] %v517
        %663 = vst [vmem:[#allocation4 + $0xe8] sm:$0xff] %v519
        %664 = vst [vmem:[#allocation4 + $0xf0] sm:$0xff] %v630
        %665 = vst [vmem:[#allocation4 + $0xf8] sm:$0xff] %v632
        %v666 = vld [vmem:[%s5] sm:$0xf]
        %v668 = vlaneseq
        %v669 = vshrl.u32 %v668, 7
        %v670 = vsub.s32 0, %v669
        %v671 = vrot.slane %v666, %v670
        %v672 = vlaneseq
        %v673 = vshrl.u32 %v672, 7
        %v674 = vsub.s32 1, %v673
        %v675 = vrot.slane %v666, %v674
        %v676 = vlaneseq
        %v677 = vshrl.u32 %v676, 7
        %v678 = vsub.s32 2, %v677
        %v679 = vrot.slane %v666, %v678
        %v680 = vlaneseq
        %v681 = vshrl.u32 %v680, 7
        %v682 = vsub.s32 3, %v681
        %v683 = vrot.slane %v666, %v682
        %v688 = vld [vmem:[#allocation2] sm:$0xff]
        %v689 = vld [vmem:[#allocation4] sm:$0xff]
        %v690 = vld [vmem:[#allocation4 + $0x8] sm:$0xff]
        %v691 = vld [vmem:[#allocation4 + $0x10] sm:$0xff]
        %v692 = vld [vmem:[#allocation4 + $0x18] sm:$0xff]
        %v693 = vld [vmem:[#allocation6] sm:$0xff]
        %v694 = vld [vmem:[#allocation6 + $0x8] sm:$0xff]
        %v695 = vld [vmem:[#allocation6 + $0x10] sm:$0xff]
        %v696 = vld [vmem:[#allocation6 + $0x18] sm:$0xff]
        %v697 = vld [vmem:[#allocation6 + $0x20] sm:$0xff]
        %v698 = vld [vmem:[#allocation6 + $0x28] sm:$0xff]
        %v699 = vld [vmem:[#allocation6 + $0x30] sm:$0xff]
        %v700 = vld [vmem:[#allocation6 + $0x38] sm:$0xff]
        %v701 = vld [vmem:[#allocation6 + $0x40] sm:$0xff]
        %v702 = vld [vmem:[#allocation6 + $0x48] sm:$0xff]
        %v703 = vld [vmem:[#allocation6 + $0x50] sm:$0xff]
        %v704 = vld [vmem:[#allocation6 + $0x58] sm:$0xff]
        %v705 = vld [vmem:[#allocation6 + $0x60] sm:$0xff]
        %v706 = vld [vmem:[#allocation6 + $0x68] sm:$0xff]
        %v707 = vld [vmem:[#allocation6 + $0x70] sm:$0xff]
        %v708 = vld [vmem:[#allocation6 + $0x78] sm:$0xff]
        %v709 = vld [vmem:[#allocation6 + $0x80] sm:$0xff]
        %v710 = vld [vmem:[#allocation6 + $0x88] sm:$0xff]
        %v711 = vld [vmem:[#allocation6 + $0x90] sm:$0xff]
        %v712 = vld [vmem:[#allocation6 + $0x98] sm:$0xff]
        %v713 = vld [vmem:[#allocation6 + $0xa0] sm:$0xff]
        %v714 = vld [vmem:[#allocation6 + $0xa8] sm:$0xff]
        %v715 = vld [vmem:[#allocation6 + $0xb0] sm:$0xff]
        %v716 = vld [vmem:[#allocation6 + $0xb8] sm:$0xff]
        %v717 = vld [vmem:[#allocation6 + $0xc0] sm:$0xff]
        %v718 = vld [vmem:[#allocation6 + $0xc8] sm:$0xff]
        %v719 = vld [vmem:[#allocation6 + $0xd0] sm:$0xff]
        %v720 = vld [vmem:[#allocation6 + $0xd8] sm:$0xff]
        %v721 = vld [vmem:[#allocation6 + $0xe0] sm:$0xff]
        %v722 = vld [vmem:[#allocation6 + $0xe8] sm:$0xff]
        %v723 = vld [vmem:[#allocation6 + $0xf0] sm:$0xff]
        %v724 = vld [vmem:[#allocation6 + $0xf8] sm:$0xff]
        %v725 = vld [vmem:[#allocation6 + $0x100] sm:$0xff]
        %v726 = vld [vmem:[#allocation6 + $0x108] sm:$0xff]
        %v727 = vld [vmem:[#allocation6 + $0x110] sm:$0xff]
        %v728 = vld [vmem:[#allocation6 + $0x118] sm:$0xff]
        %v729 = vld [vmem:[#allocation6 + $0x120] sm:$0xff]
        %v730 = vld [vmem:[#allocation6 + $0x128] sm:$0xff]
        %v731 = vld [vmem:[#allocation6 + $0x130] sm:$0xff]
        %v732 = vld [vmem:[#allocation6 + $0x138] sm:$0xff]
        %v733 = vld [vmem:[#allocation6 + $0x140] sm:$0xff]
        %v734 = vld [vmem:[#allocation6 + $0x148] sm:$0xff]
        %v735 = vld [vmem:[#allocation6 + $0x150] sm:$0xff]
        %v736 = vld [vmem:[#allocation6 + $0x158] sm:$0xff]
        %v737 = vld [vmem:[#allocation6 + $0x160] sm:$0xff]
        %v738 = vld [vmem:[#allocation6 + $0x168] sm:$0xff]
        %v739 = vld [vmem:[#allocation6 + $0x170] sm:$0xff]
        %v740 = vld [vmem:[#allocation6 + $0x178] sm:$0xff]
        %v741 = vld [vmem:[#allocation6 + $0x180] sm:$0xff]
        %v742 = vld [vmem:[#allocation6 + $0x188] sm:$0xff]
        %v743 = vld [vmem:[#allocation6 + $0x190] sm:$0xff]
        %v744 = vld [vmem:[#allocation6 + $0x198] sm:$0xff]
        %v745 = vld [vmem:[#allocation6 + $0x1a0] sm:$0xff]
        %v746 = vld [vmem:[#allocation6 + $0x1a8] sm:$0xff]
        %v747 = vld [vmem:[#allocation6 + $0x1b0] sm:$0xff]
        %v748 = vld [vmem:[#allocation6 + $0x1b8] sm:$0xff]
        %v749 = vld [vmem:[#allocation6 + $0x1c0] sm:$0xff]
        %v750 = vld [vmem:[#allocation6 + $0x1c8] sm:$0xff]
        %v751 = vld [vmem:[#allocation6 + $0x1d0] sm:$0xff]
        %v752 = vld [vmem:[#allocation6 + $0x1d8] sm:$0xff]
        %v753 = vld [vmem:[#allocation6 + $0x1e0] sm:$0xff]
        %v754 = vld [vmem:[#allocation6 + $0x1e8] sm:$0xff]
        %v755 = vld [vmem:[#allocation6 + $0x1f0] sm:$0xff]
        %v756 = vld [vmem:[#allocation6 + $0x1f8] sm:$0xff]
        %757 = vmatprep.subr.mxu0 %v694
        %758 = vmatpush1.msra.mxu0 %v693
        %759 = vmatprep.subr.mxu0 %v698
        %760 = vmatpush1.msra.mxu0 %v697
        %761 = vmatprep.subr.mxu0 %v702
        %762 = vmatpush1.msra.mxu0 %v701
        %763 = vmatprep.subr.mxu0 %v706
        %764 = vmatpush1.msra.mxu0 %v705
        %765 = vmatprep.subr.mxu0 %v710
        %766 = vmatpush1.msra.mxu0 %v709
        %767 = vmatprep.subr.mxu0 %v714
        %768 = vmatpush1.msra.mxu0 %v713
        %769 = vmatprep.subr.mxu0 %v718
        %770 = vmatpush1.msra.mxu0 %v717
        %771 = vmatprep.subr.mxu0 %v722
        %772 = vmatpush1.msra.mxu0 %v721
        %773 = vmatprep.subr.mxu0 %v726
        %774 = vmatpush1.msra.mxu0 %v725
        %775 = vmatprep.subr.mxu0 %v730
        %776 = vmatpush1.msra.mxu0 %v729
        %777 = vmatprep.subr.mxu0 %v734
        %778 = vmatpush1.msra.mxu0 %v733
        %779 = vmatprep.subr.mxu0 %v738
        %780 = vmatpush1.msra.mxu0 %v737
        %781 = vmatprep.subr.mxu0 %v742
        %782 = vmatpush1.msra.mxu0 %v741
        %783 = vmatprep.subr.mxu0 %v746
        %784 = vmatpush1.msra.mxu0 %v745
        %785 = vmatprep.subr.mxu0 %v750
        %786 = vmatpush1.msra.mxu0 %v749
        %787 = vmatprep.subr.mxu0 %v754
        %788 = vmatpush1.msra.mxu0 %v753
        %789 = vmatprep.subr.mxu0 0.0
        %790 = vmatpush1.msra.mxu0 0.0
        %791 = vmatprep.subr.mxu0 0.0
        %792 = vmatpush1.msra.mxu0 0.0
        %793 = vmatprep.subr.mxu0 0.0
        %794 = vmatpush1.msra.mxu0 0.0
        %795 = vmatprep.subr.mxu0 0.0
        %796 = vmatpush1.msra.mxu0 0.0
        %797 = vmatprep.subr.mxu0 0.0
        %798 = vmatpush1.msra.mxu0 0.0
        %799 = vmatprep.subr.mxu0 0.0
        %800 = vmatpush1.msra.mxu0 0.0
        %801 = vmatprep.subr.mxu0 0.0
        %802 = vmatpush1.msra.mxu0 0.0
        %803 = vmatprep.subr.mxu0 0.0
        %804 = vmatpush1.msra.mxu0 0.0
        %805 = vmatprep.subr.mxu0 0.0
        %806 = vmatpush1.msra.mxu0 0.0
        %807 = vmatprep.subr.mxu0 0.0
        %808 = vmatpush1.msra.mxu0 0.0
        %809 = vmatprep.subr.mxu0 0.0
        %810 = vmatpush1.msra.mxu0 0.0
        %811 = vmatprep.subr.mxu0 0.0
        %812 = vmatpush1.msra.mxu0 0.0
        %813 = vmatprep.subr.mxu0 0.0
        %814 = vmatpush1.msra.mxu0 0.0
        %815 = vmatprep.subr.mxu0 0.0
        %816 = vmatpush1.msra.mxu0 0.0
        %817 = vmatprep.subr.mxu0 0.0
        %818 = vmatpush1.msra.mxu0 0.0
        %819 = vmatprep.subr.mxu0 0.0
        %820 = vmatpush1.msra.mxu0 0.0
        %821 = vmatprep.mubr.f32.mxu0 0.0
        %822 = vmatmul.mubr.f32.gmra.mrb[0].mxu0 %v688
        %v823 = vpop.f32.mrb[0].mxu0
        %v824 = vadd.f32 0.0, %v823
        %v825 = vpop.f32.mrb[0].mxu0
        %v826 = vadd.f32 0.0, %v825
        %827 = vdwg.mxu0
        %828 = vmatprep.subr.mxu0 %v696
        %829 = vmatpush1.msra.mxu0 %v695
        %830 = vmatprep.subr.mxu0 %v700
        %831 = vmatpush1.msra.mxu0 %v699
        %832 = vmatprep.subr.mxu0 %v704
        %833 = vmatpush1.msra.mxu0 %v703
        %834 = vmatprep.subr.mxu0 %v708
        %835 = vmatpush1.msra.mxu0 %v707
        %836 = vmatprep.subr.mxu0 %v712
        %837 = vmatpush1.msra.mxu0 %v711
        %838 = vmatprep.subr.mxu0 %v716
        %839 = vmatpush1.msra.mxu0 %v715
        %840 = vmatprep.subr.mxu0 %v720
        %841 = vmatpush1.msra.mxu0 %v719
        %842 = vmatprep.subr.mxu0 %v724
        %843 = vmatpush1.msra.mxu0 %v723
        %844 = vmatprep.subr.mxu0 %v728
        %845 = vmatpush1.msra.mxu0 %v727
        %846 = vmatprep.subr.mxu0 %v732
        %847 = vmatpush1.msra.mxu0 %v731
        %848 = vmatprep.subr.mxu0 %v736
        %849 = vmatpush1.msra.mxu0 %v735
        %850 = vmatprep.subr.mxu0 %v740
        %851 = vmatpush1.msra.mxu0 %v739
        %852 = vmatprep.subr.mxu0 %v744
        %853 = vmatpush1.msra.mxu0 %v743
        %854 = vmatprep.subr.mxu0 %v748
        %855 = vmatpush1.msra.mxu0 %v747
        %856 = vmatprep.subr.mxu0 %v752
        %857 = vmatpush1.msra.mxu0 %v751
        %858 = vmatprep.subr.mxu0 %v756
        %859 = vmatpush1.msra.mxu0 %v755
        %860 = vmatprep.subr.mxu0 0.0
        %861 = vmatpush1.msra.mxu0 0.0
        %862 = vmatprep.subr.mxu0 0.0
        %863 = vmatpush1.msra.mxu0 0.0
        %864 = vmatprep.subr.mxu0 0.0
        %865 = vmatpush1.msra.mxu0 0.0
        %866 = vmatprep.subr.mxu0 0.0
        %867 = vmatpush1.msra.mxu0 0.0
        %868 = vmatprep.subr.mxu0 0.0
        %869 = vmatpush1.msra.mxu0 0.0
        %870 = vmatprep.subr.mxu0 0.0
        %871 = vmatpush1.msra.mxu0 0.0
        %872 = vmatprep.subr.mxu0 0.0
        %873 = vmatpush1.msra.mxu0 0.0
        %874 = vmatprep.subr.mxu0 0.0
        %875 = vmatpush1.msra.mxu0 0.0
        %876 = vmatprep.subr.mxu0 0.0
        %877 = vmatpush1.msra.mxu0 0.0
        %878 = vmatprep.subr.mxu0 0.0
        %879 = vmatpush1.msra.mxu0 0.0
        %880 = vmatprep.subr.mxu0 0.0
        %881 = vmatpush1.msra.mxu0 0.0
        %882 = vmatprep.subr.mxu0 0.0
        %883 = vmatpush1.msra.mxu0 0.0
        %884 = vmatprep.subr.mxu0 0.0
        %885 = vmatpush1.msra.mxu0 0.0
        %886 = vmatprep.subr.mxu0 0.0
        %887 = vmatpush1.msra.mxu0 0.0
        %888 = vmatprep.subr.mxu0 0.0
        %889 = vmatpush1.msra.mxu0 0.0
        %890 = vmatprep.subr.mxu0 0.0
        %891 = vmatpush1.msra.mxu0 0.0
        %892 = vmatprep.mubr.f32.mxu0 0.0
        %893 = vmatmul.mubr.f32.gmra.mrb[0].mxu0 %v688
        %v894 = vpop.f32.mrb[0].mxu0
        %v895 = vadd.f32 0.0, %v894
        %v896 = vpop.f32.mrb[0].mxu0
        %v897 = vadd.f32 0.0, %v896
        %898 = vdwg.mxu0
        %v899 = vadd.f32 %v689, %v824
        %v900 = vadd.f32 %v690, %v826
        %v901 = vadd.f32 %v691, %v895
        %v902 = vadd.f32 %v692, %v897
        %v903 = vld [vmem:[#allocation3] sm:$0xff]
        %v904 = vxor.u32 %v899, 2147483648
        %v905 = vmul.f32 %v904, 1.442695
        %v906 = vpow.pop %v905
        %v907 = vadd.f32 %v906, 1.0
        %v908 = vrcp.pop %v907
        %v909 = vmul.f32 1.0, %v908
        %v910 = vxor.u32 %v900, 2147483648
        %v911 = vmul.f32 %v910, 1.442695
        %v912 = vpow.pop %v911
        %v913 = vadd.f32 %v912, 1.0
        %v914 = vrcp.pop %v913
        %v915 = vmul.f32 1.0, %v914
        %v916 = vtanh.pop %v901
        %v917 = vxor.u32 %v902, 2147483648
        %v918 = vmul.f32 %v917, 1.442695
        %v919 = vpow.pop %v918
        %v920 = vadd.f32 %v919, 1.0
        %v921 = vrcp.pop %v920
        %v922 = vmul.f32 1.0, %v921
        %v923 = vmul.f32 %v915, %v903
        %v924 = vmul.f32 %v909, %v916
        %v925 = vadd.f32 %v923, %v924
        %v926 = vtanh.pop %v925
        %v927 = vmul.f32 %v922, %v926
        %928 = vst [vmem:[#allocation2] sm:$0xff] %v927
        %929 = vst [vmem:[#allocation3] sm:$0xff] %v925
        %s930 = scalar_lea.vmem [#allocation2], 8
        %v931 = vld [vmem:[%s930] sm:$0xff]
        %v932 = vld [vmem:[#allocation9] sm:$0xff]
        %v933 = vld [vmem:[#allocation9 + $0x8] sm:$0xff]
        %v934 = vld [vmem:[#allocation9 + $0x10] sm:$0xff]
        %v935 = vld [vmem:[#allocation9 + $0x18] sm:$0xff]
        %v936 = vld [vmem:[#allocation9 + $0x20] sm:$0xff]
        %v937 = vld [vmem:[#allocation9 + $0x28] sm:$0xff]
        %v938 = vld [vmem:[#allocation9 + $0x30] sm:$0xff]
        %v939 = vld [vmem:[#allocation9 + $0x38] sm:$0xff]
        %v940 = vld [vmem:[#allocation9 + $0x40] sm:$0xff]
        %v941 = vld [vmem:[#allocation9 + $0x48] sm:$0xff]
        %v942 = vld [vmem:[#allocation9 + $0x50] sm:$0xff]
        %v943 = vld [vmem:[#allocation9 + $0x58] sm:$0xff]
        %v944 = vld [vmem:[#allocation9 + $0x60] sm:$0xff]
        %v945 = vld [vmem:[#allocation9 + $0x68] sm:$0xff]
        %v946 = vld [vmem:[#allocation9 + $0x70] sm:$0xff]
        %v947 = vld [vmem:[#allocation9 + $0x78] sm:$0xff]
        %v948 = vld [vmem:[#allocation9 + $0x80] sm:$0xff]
        %v949 = vld [vmem:[#allocation9 + $0x88] sm:$0xff]
        %v950 = vld [vmem:[#allocation9 + $0x90] sm:$0xff]
        %v951 = vld [vmem:[#allocation9 + $0x98] sm:$0xff]
        %v952 = vld [vmem:[#allocation9 + $0xa0] sm:$0xff]
        %v953 = vld [vmem:[#allocation9 + $0xa8] sm:$0xff]
        %v954 = vld [vmem:[#allocation9 + $0xb0] sm:$0xff]
        %v955 = vld [vmem:[#allocation9 + $0xb8] sm:$0xff]
        %v956 = vld [vmem:[#allocation9 + $0xc0] sm:$0xff]
        %v957 = vld [vmem:[#allocation9 + $0xc8] sm:$0xff]
        %v958 = vld [vmem:[#allocation9 + $0xd0] sm:$0xff]
        %v959 = vld [vmem:[#allocation9 + $0xd8] sm:$0xff]
        %v960 = vld [vmem:[#allocation9 + $0xe0] sm:$0xff]
        %v961 = vld [vmem:[#allocation9 + $0xe8] sm:$0xff]
        %v962 = vld [vmem:[#allocation9 + $0xf0] sm:$0xff]
        %v963 = vld [vmem:[#allocation9 + $0xf8] sm:$0xff]
        %v964 = vld [vmem:[#allocation9 + $0x100] sm:$0xff]
        %v965 = vld [vmem:[#allocation9 + $0x108] sm:$0xff]
        %v966 = vld [vmem:[#allocation9 + $0x110] sm:$0xff]
        %v967 = vld [vmem:[#allocation9 + $0x118] sm:$0xff]
        %v968 = vld [vmem:[#allocation9 + $0x120] sm:$0xff]
        %v969 = vld [vmem:[#allocation9 + $0x128] sm:$0xff]
        %v970 = vld [vmem:[#allocation9 + $0x130] sm:$0xff]
        %v971 = vld [vmem:[#allocation9 + $0x138] sm:$0xff]
        %v972 = vld [vmem:[#allocation9 + $0x140] sm:$0xff]
        %v973 = vld [vmem:[#allocation9 + $0x148] sm:$0xff]
        %v974 = vld [vmem:[#allocation9 + $0x150] sm:$0xff]
        %v975 = vld [vmem:[#allocation9 + $0x158] sm:$0xff]
        %v976 = vld [vmem:[#allocation9 + $0x160] sm:$0xff]
        %v977 = vld [vmem:[#allocation9 + $0x168] sm:$0xff]
        %v978 = vld [vmem:[#allocation9 + $0x170] sm:$0xff]
        %v979 = vld [vmem:[#allocation9 + $0x178] sm:$0xff]
        %v980 = vld [vmem:[#allocation9 + $0x180] sm:$0xff]
        %v981 = vld [vmem:[#allocation9 + $0x188] sm:$0xff]
        %v982 = vld [vmem:[#allocation9 + $0x190] sm:$0xff]
        %v983 = vld [vmem:[#allocation9 + $0x198] sm:$0xff]
        %v984 = vld [vmem:[#allocation9 + $0x1a0] sm:$0xff]
        %v985 = vld [vmem:[#allocation9 + $0x1a8] sm:$0xff]
        %v986 = vld [vmem:[#allocation9 + $0x1b0] sm:$0xff]
        %v987 = vld [vmem:[#allocation9 + $0x1b8] sm:$0xff]
        %v988 = vld [vmem:[#allocation9 + $0x1c0] sm:$0xff]
        %v989 = vld [vmem:[#allocation9 + $0x1c8] sm:$0xff]
        %v990 = vld [vmem:[#allocation9 + $0x1d0] sm:$0xff]
        %v991 = vld [vmem:[#allocation9 + $0x1d8] sm:$0xff]
        %v992 = vld [vmem:[#allocation9 + $0x1e0] sm:$0xff]
        %v993 = vld [vmem:[#allocation9 + $0x1e8] sm:$0xff]
        %v994 = vld [vmem:[#allocation9 + $0x1f0] sm:$0xff]
        %v995 = vld [vmem:[#allocation9 + $0x1f8] sm:$0xff]
        %v996 = vld [vmem:[#allocation9 + $0x200] sm:$0xff]
        %v997 = vld [vmem:[#allocation9 + $0x208] sm:$0xff]
        %v998 = vld [vmem:[#allocation9 + $0x210] sm:$0xff]
        %v999 = vld [vmem:[#allocation9 + $0x218] sm:$0xff]
        %v1000 = vld [vmem:[#allocation9 + $0x220] sm:$0xff]
        %v1001 = vld [vmem:[#allocation9 + $0x228] sm:$0xff]
        %v1002 = vld [vmem:[#allocation9 + $0x230] sm:$0xff]
        %v1003 = vld [vmem:[#allocation9 + $0x238] sm:$0xff]
        %v1004 = vld [vmem:[#allocation9 + $0x240] sm:$0xff]
        %v1005 = vld [vmem:[#allocation9 + $0x248] sm:$0xff]
        %v1006 = vld [vmem:[#allocation9 + $0x250] sm:$0xff]
        %v1007 = vld [vmem:[#allocation9 + $0x258] sm:$0xff]
        %v1008 = vld [vmem:[#allocation9 + $0x260] sm:$0xff]
        %v1009 = vld [vmem:[#allocation9 + $0x268] sm:$0xff]
        %v1010 = vld [vmem:[#allocation9 + $0x270] sm:$0xff]
        %v1011 = vld [vmem:[#allocation9 + $0x278] sm:$0xff]
        %v1012 = vld [vmem:[#allocation9 + $0x280] sm:$0xff]
        %v1013 = vld [vmem:[#allocation9 + $0x288] sm:$0xff]
        %v1014 = vld [vmem:[#allocation9 + $0x290] sm:$0xff]
        %v1015 = vld [vmem:[#allocation9 + $0x298] sm:$0xff]
        %v1016 = vld [vmem:[#allocation9 + $0x2a0] sm:$0xff]
        %v1017 = vld [vmem:[#allocation9 + $0x2a8] sm:$0xff]
        %v1018 = vld [vmem:[#allocation9 + $0x2b0] sm:$0xff]
        %v1019 = vld [vmem:[#allocation9 + $0x2b8] sm:$0xff]
        %v1020 = vld [vmem:[#allocation9 + $0x2c0] sm:$0xff]
        %v1021 = vld [vmem:[#allocation9 + $0x2c8] sm:$0xff]
        %v1022 = vld [vmem:[#allocation9 + $0x2d0] sm:$0xff]
        %v1023 = vld [vmem:[#allocation9 + $0x2d8] sm:$0xff]
        %v1024 = vld [vmem:[#allocation9 + $0x2e0] sm:$0xff]
        %v1025 = vld [vmem:[#allocation9 + $0x2e8] sm:$0xff]
        %v1026 = vld [vmem:[#allocation9 + $0x2f0] sm:$0xff]
        %v1027 = vld [vmem:[#allocation9 + $0x2f8] sm:$0xff]
        %v1028 = vld [vmem:[#allocation9 + $0x300] sm:$0xff]
        %v1029 = vld [vmem:[#allocation9 + $0x308] sm:$0xff]
        %v1030 = vld [vmem:[#allocation9 + $0x310] sm:$0xff]
        %v1031 = vld [vmem:[#allocation9 + $0x318] sm:$0xff]
        %v1032 = vld [vmem:[#allocation9 + $0x320] sm:$0xff]
        %v1033 = vld [vmem:[#allocation9 + $0x328] sm:$0xff]
        %v1034 = vld [vmem:[#allocation9 + $0x330] sm:$0xff]
        %v1035 = vld [vmem:[#allocation9 + $0x338] sm:$0xff]
        %v1036 = vld [vmem:[#allocation9 + $0x340] sm:$0xff]
        %v1037 = vld [vmem:[#allocation9 + $0x348] sm:$0xff]
        %v1038 = vld [vmem:[#allocation9 + $0x350] sm:$0xff]
        %v1039 = vld [vmem:[#allocation9 + $0x358] sm:$0xff]
        %v1040 = vld [vmem:[#allocation9 + $0x360] sm:$0xff]
        %v1041 = vld [vmem:[#allocation9 + $0x368] sm:$0xff]
        %v1042 = vld [vmem:[#allocation9 + $0x370] sm:$0xff]
        %v1043 = vld [vmem:[#allocation9 + $0x378] sm:$0xff]
        %v1044 = vld [vmem:[#allocation9 + $0x380] sm:$0xff]
        %v1045 = vld [vmem:[#allocation9 + $0x388] sm:$0xff]
        %v1046 = vld [vmem:[#allocation9 + $0x390] sm:$0xff]
        %v1047 = vld [vmem:[#allocation9 + $0x398] sm:$0xff]
        %v1048 = vld [vmem:[#allocation9 + $0x3a0] sm:$0xff]
        %v1049 = vld [vmem:[#allocation9 + $0x3a8] sm:$0xff]
        %v1050 = vld [vmem:[#allocation9 + $0x3b0] sm:$0xff]
        %v1051 = vld [vmem:[#allocation9 + $0x3b8] sm:$0xff]
        %v1052 = vld [vmem:[#allocation9 + $0x3c0] sm:$0xff]
        %v1053 = vld [vmem:[#allocation9 + $0x3c8] sm:$0xff]
        %v1054 = vld [vmem:[#allocation9 + $0x3d0] sm:$0xff]
        %v1055 = vld [vmem:[#allocation9 + $0x3d8] sm:$0xff]
        %v1056 = vld [vmem:[#allocation9 + $0x3e0] sm:$0xff]
        %v1057 = vld [vmem:[#allocation9 + $0x3e8] sm:$0xff]
        %v1058 = vld [vmem:[#allocation9 + $0x3f0] sm:$0xff]
        %v1059 = vld [vmem:[#allocation9 + $0x3f8] sm:$0xff]
        %1060 = vmatprep.subr.mxu0 %v933
        %1061 = vmatpush1.msra.mxu0 %v932
        %1062 = vmatprep.subr.mxu0 %v937
        %1063 = vmatpush1.msra.mxu0 %v936
        %1064 = vmatprep.subr.mxu0 %v941
        %1065 = vmatpush1.msra.mxu0 %v940
        %1066 = vmatprep.subr.mxu0 %v945
        %1067 = vmatpush1.msra.mxu0 %v944
        %1068 = vmatprep.subr.mxu0 %v949
        %1069 = vmatpush1.msra.mxu0 %v948
        %1070 = vmatprep.subr.mxu0 %v953
        %1071 = vmatpush1.msra.mxu0 %v952
        %1072 = vmatprep.subr.mxu0 %v957
        %1073 = vmatpush1.msra.mxu0 %v956
        %1074 = vmatprep.subr.mxu0 %v961
        %1075 = vmatpush1.msra.mxu0 %v960
        %1076 = vmatprep.subr.mxu0 %v965
        %1077 = vmatpush1.msra.mxu0 %v964
        %1078 = vmatprep.subr.mxu0 %v969
        %1079 = vmatpush1.msra.mxu0 %v968
        %1080 = vmatprep.subr.mxu0 %v973
        %1081 = vmatpush1.msra.mxu0 %v972
        %1082 = vmatprep.subr.mxu0 %v977
        %1083 = vmatpush1.msra.mxu0 %v976
        %1084 = vmatprep.subr.mxu0 %v981
        %1085 = vmatpush1.msra.mxu0 %v980
        %1086 = vmatprep.subr.mxu0 %v985
        %1087 = vmatpush1.msra.mxu0 %v984
        %1088 = vmatprep.subr.mxu0 %v989
        %1089 = vmatpush1.msra.mxu0 %v988
        %1090 = vmatprep.subr.mxu0 %v993
        %1091 = vmatpush1.msra.mxu0 %v992
        %1092 = vmatprep.subr.mxu0 %v997
        %1093 = vmatpush1.msra.mxu0 %v996
        %1094 = vmatprep.subr.mxu0 %v1001
        %1095 = vmatpush1.msra.mxu0 %v1000
        %1096 = vmatprep.subr.mxu0 %v1005
        %1097 = vmatpush1.msra.mxu0 %v1004
        %1098 = vmatprep.subr.mxu0 %v1009
        %1099 = vmatpush1.msra.mxu0 %v1008
        %1100 = vmatprep.subr.mxu0 %v1013
        %1101 = vmatpush1.msra.mxu0 %v1012
        %1102 = vmatprep.subr.mxu0 %v1017
        %1103 = vmatpush1.msra.mxu0 %v1016
        %1104 = vmatprep.subr.mxu0 %v1021
        %1105 = vmatpush1.msra.mxu0 %v1020
        %1106 = vmatprep.subr.mxu0 %v1025
        %1107 = vmatpush1.msra.mxu0 %v1024
        %1108 = vmatprep.subr.mxu0 %v1029
        %1109 = vmatpush1.msra.mxu0 %v1028
        %1110 = vmatprep.subr.mxu0 %v1033
        %1111 = vmatpush1.msra.mxu0 %v1032
        %1112 = vmatprep.subr.mxu0 %v1037
        %1113 = vmatpush1.msra.mxu0 %v1036
        %1114 = vmatprep.subr.mxu0 %v1041
        %1115 = vmatpush1.msra.mxu0 %v1040
        %1116 = vmatprep.subr.mxu0 %v1045
        %1117 = vmatpush1.msra.mxu0 %v1044
        %1118 = vmatprep.subr.mxu0 %v1049
        %1119 = vmatpush1.msra.mxu0 %v1048
        %1120 = vmatprep.subr.mxu0 %v1053
        %1121 = vmatpush1.msra.mxu0 %v1052
        %1122 = vmatprep.subr.mxu0 %v1057
        %1123 = vmatpush1.msra.mxu0 %v1056
        %1124 = vmatprep.mubr.f32.mxu0 %v931
        %1125 = vmatmul.mubr.f32.gmra.mrb[0].mxu0 %v927
        %v1126 = vpop.f32.mrb[0].mxu0
        %v1127 = vadd.f32 %v671, %v1126
        %v1128 = vpop.f32.mrb[0].mxu0
        %v1129 = vadd.f32 %v675, %v1128
        %1130 = vdwg.mxu0
        %1131 = vmatprep.subr.mxu0 %v935
        %1132 = vmatpush1.msra.mxu0 %v934
        %1133 = vmatprep.subr.mxu0 %v939
        %1134 = vmatpush1.msra.mxu0 %v938
        %1135 = vmatprep.subr.mxu0 %v943
        %1136 = vmatpush1.msra.mxu0 %v942
        %1137 = vmatprep.subr.mxu0 %v947
        %1138 = vmatpush1.msra.mxu0 %v946
        %1139 = vmatprep.subr.mxu0 %v951
        %1140 = vmatpush1.msra.mxu0 %v950
        %1141 = vmatprep.subr.mxu0 %v955
        %1142 = vmatpush1.msra.mxu0 %v954
        %1143 = vmatprep.subr.mxu0 %v959
        %1144 = vmatpush1.msra.mxu0 %v958
        %1145 = vmatprep.subr.mxu0 %v963
        %1146 = vmatpush1.msra.mxu0 %v962
        %1147 = vmatprep.subr.mxu0 %v967
        %1148 = vmatpush1.msra.mxu0 %v966
        %1149 = vmatprep.subr.mxu0 %v971
        %1150 = vmatpush1.msra.mxu0 %v970
        %1151 = vmatprep.subr.mxu0 %v975
        %1152 = vmatpush1.msra.mxu0 %v974
        %1153 = vmatprep.subr.mxu0 %v979
        %1154 = vmatpush1.msra.mxu0 %v978
        %1155 = vmatprep.subr.mxu0 %v983
        %1156 = vmatpush1.msra.mxu0 %v982
        %1157 = vmatprep.subr.mxu0 %v987
        %1158 = vmatpush1.msra.mxu0 %v986
        %1159 = vmatprep.subr.mxu0 %v991
        %1160 = vmatpush1.msra.mxu0 %v990
        %1161 = vmatprep.subr.mxu0 %v995
        %1162 = vmatpush1.msra.mxu0 %v994
        %1163 = vmatprep.subr.mxu0 %v999
        %1164 = vmatpush1.msra.mxu0 %v998
        %1165 = vmatprep.subr.mxu0 %v1003
        %1166 = vmatpush1.msra.mxu0 %v1002
        %1167 = vmatprep.subr.mxu0 %v1007
        %1168 = vmatpush1.msra.mxu0 %v1006
        %1169 = vmatprep.subr.mxu0 %v1011
        %1170 = vmatpush1.msra.mxu0 %v1010
        %1171 = vmatprep.subr.mxu0 %v1015
        %1172 = vmatpush1.msra.mxu0 %v1014
        %1173 = vmatprep.subr.mxu0 %v1019
        %1174 = vmatpush1.msra.mxu0 %v1018
        %1175 = vmatprep.subr.mxu0 %v1023
        %1176 = vmatpush1.msra.mxu0 %v1022
        %1177 = vmatprep.subr.mxu0 %v1027
        %1178 = vmatpush1.msra.mxu0 %v1026
        %1179 = vmatprep.subr.mxu0 %v1031
        %1180 = vmatpush1.msra.mxu0 %v1030
        %1181 = vmatprep.subr.mxu0 %v1035
        %1182 = vmatpush1.msra.mxu0 %v1034
        %1183 = vmatprep.subr.mxu0 %v1039
        %1184 = vmatpush1.msra.mxu0 %v1038
        %1185 = vmatprep.subr.mxu0 %v1043
        %1186 = vmatpush1.msra.mxu0 %v1042
        %1187 = vmatprep.subr.mxu0 %v1047
        %1188 = vmatpush1.msra.mxu0 %v1046
        %1189 = vmatprep.subr.mxu0 %v1051
        %1190 = vmatpush1.msra.mxu0 %v1050
        %1191 = vmatprep.subr.mxu0 %v1055
        %1192 = vmatpush1.msra.mxu0 %v1054
        %1193 = vmatprep.subr.mxu0 %v1059
        %1194 = vmatpush1.msra.mxu0 %v1058
        %1195 = vmatprep.mubr.f32.mxu0 %v931
        %1196 = vmatmul.mubr.f32.gmra.mrb[0].mxu0 %v927
        %v1197 = vpop.f32.mrb[0].mxu0
        %v1198 = vadd.f32 %v679, %v1197
        %v1199 = vpop.f32.mrb[0].mxu0
        %v1200 = vadd.f32 %v683, %v1199
        %1201 = vdwg.mxu0
        %s1202 = scalar_lea.vmem [#allocation3], 8
        %v1203 = vld [vmem:[%s1202] sm:$0xff]
        %v1204 = vxor.u32 %v1127, 2147483648
        %v1205 = vmul.f32 %v1204, 1.442695
        %v1206 = vpow.pop %v1205
        %v1207 = vadd.f32 %v1206, 1.0
        %v1208 = vrcp.pop %v1207
        %v1209 = vmul.f32 1.0, %v1208
        %v1210 = vxor.u32 %v1129, 2147483648
        %v1211 = vmul.f32 %v1210, 1.442695
        %v1212 = vpow.pop %v1211
        %v1213 = vadd.f32 %v1212, 1.0
        %v1214 = vrcp.pop %v1213
        %v1215 = vmul.f32 1.0, %v1214
        %v1216 = vtanh.pop %v1198
        %v1217 = vxor.u32 %v1200, 2147483648
        %v1218 = vmul.f32 %v1217, 1.442695
        %v1219 = vpow.pop %v1218
        %v1220 = vadd.f32 %v1219, 1.0
        %v1221 = vrcp.pop %v1220
        %v1222 = vmul.f32 1.0, %v1221
        %v1223 = vmul.f32 %v1215, %v1203
        %v1224 = vmul.f32 %v1209, %v1216
        %v1225 = vadd.f32 %v1223, %v1224
        %v1226 = vtanh.pop %v1225
        %v1227 = vmul.f32 %v1222, %v1226
        %1228 = vst [vmem:[%s930] sm:$0xff] %v1227
        %1229 = vst [vmem:[%s1202] sm:$0xff] %v1225
        %1230 = vst [vmem:[#allocation5] sm:$0xff] %v1227
        %v1231 = vld [vmem:[#allocation2] sm:$0xff]
        %s1232 = scalar_lea.vmem [#allocation4], 32
        %v1233 = vld [vmem:[%s1232] sm:$0xff]
        %v1234 = vld [vmem:[%s1232 + $0x8] sm:$0xff]
        %v1235 = vld [vmem:[%s1232 + $0x10] sm:$0xff]
        %v1236 = vld [vmem:[%s1232 + $0x18] sm:$0xff]
        %v1237 = vld [vmem:[#allocation6] sm:$0xff]
        %v1238 = vld [vmem:[#allocation6 + $0x8] sm:$0xff]
        %v1239 = vld [vmem:[#allocation6 + $0x10] sm:$0xff]
        %v1240 = vld [vmem:[#allocation6 + $0x18] sm:$0xff]
        %v1241 = vld [vmem:[#allocation6 + $0x20] sm:$0xff]
        %v1242 = vld [vmem:[#allocation6 + $0x28] sm:$0xff]
        %v1243 = vld [vmem:[#allocation6 + $0x30] sm:$0xff]
        %v1244 = vld [vmem:[#allocation6 + $0x38] sm:$0xff]
        %v1245 = vld [vmem:[#allocation6 + $0x40] sm:$0xff]
        %v1246 = vld [vmem:[#allocation6 + $0x48] sm:$0xff]
        %v1247 = vld [vmem:[#allocation6 + $0x50] sm:$0xff]
        %v1248 = vld [vmem:[#allocation6 + $0x58] sm:$0xff]
        %v1249 = vld [vmem:[#allocation6 + $0x60] sm:$0xff]
        %v1250 = vld [vmem:[#allocation6 + $0x68] sm:$0xff]
        %v1251 = vld [vmem:[#allocation6 + $0x70] sm:$0xff]
        %v1252 = vld [vmem:[#allocation6 + $0x78] sm:$0xff]
        %v1253 = vld [vmem:[#allocation6 + $0x80] sm:$0xff]
        %v1254 = vld [vmem:[#allocation6 + $0x88] sm:$0xff]
        %v1255 = vld [vmem:[#allocation6 + $0x90] sm:$0xff]
        %v1256 = vld [vmem:[#allocation6 + $0x98] sm:$0xff]
        %v1257 = vld [vmem:[#allocation6 + $0xa0] sm:$0xff]
        %v1258 = vld [vmem:[#allocation6 + $0xa8] sm:$0xff]
        %v1259 = vld [vmem:[#allocation6 + $0xb0] sm:$0xff]
        %v1260 = vld [vmem:[#allocation6 + $0xb8] sm:$0xff]
        %v1261 = vld [vmem:[#allocation6 + $0xc0] sm:$0xff]
        %v1262 = vld [vmem:[#allocation6 + $0xc8] sm:$0xff]
        %v1263 = vld [vmem:[#allocation6 + $0xd0] sm:$0xff]
        %v1264 = vld [vmem:[#allocation6 + $0xd8] sm:$0xff]
        %v1265 = vld [vmem:[#allocation6 + $0xe0] sm:$0xff]
        %v1266 = vld [vmem:[#allocation6 + $0xe8] sm:$0xff]
        %v1267 = vld [vmem:[#allocation6 + $0xf0] sm:$0xff]
        %v1268 = vld [vmem:[#allocation6 + $0xf8] sm:$0xff]
        %v1269 = vld [vmem:[#allocation6 + $0x100] sm:$0xff]
        %v1270 = vld [vmem:[#allocation6 + $0x108] sm:$0xff]
        %v1271 = vld [vmem:[#allocation6 + $0x110] sm:$0xff]
        %v1272 = vld [vmem:[#allocation6 + $0x118] sm:$0xff]
        %v1273 = vld [vmem:[#allocation6 + $0x120] sm:$0xff]
        %v1274 = vld [vmem:[#allocation6 + $0x128] sm:$0xff]
        %v1275 = vld [vmem:[#allocation6 + $0x130] sm:$0xff]
        %v1276 = vld [vmem:[#allocation6 + $0x138] sm:$0xff]
        %v1277 = vld [vmem:[#allocation6 + $0x140] sm:$0xff]
        %v1278 = vld [vmem:[#allocation6 + $0x148] sm:$0xff]
        %v1279 = vld [vmem:[#allocation6 + $0x150] sm:$0xff]
        %v1280 = vld [vmem:[#allocation6 + $0x158] sm:$0xff]
        %v1281 = vld [vmem:[#allocation6 + $0x160] sm:$0xff]
        %v1282 = vld [vmem:[#allocation6 + $0x168] sm:$0xff]
        %v1283 = vld [vmem:[#allocation6 + $0x170] sm:$0xff]
        %v1284 = vld [vmem:[#allocation6 + $0x178] sm:$0xff]
        %v1285 = vld [vmem:[#allocation6 + $0x180] sm:$0xff]
        %v1286 = vld [vmem:[#allocation6 + $0x188] sm:$0xff]
        %v1287 = vld [vmem:[#allocation6 + $0x190] sm:$0xff]
        %v1288 = vld [vmem:[#allocation6 + $0x198] sm:$0xff]
        %v1289 = vld [vmem:[#allocation6 + $0x1a0] sm:$0xff]
        %v1290 = vld [vmem:[#allocation6 + $0x1a8] sm:$0xff]
        %v1291 = vld [vmem:[#allocation6 + $0x1b0] sm:$0xff]
        %v1292 = vld [vmem:[#allocation6 + $0x1b8] sm:$0xff]
        %v1293 = vld [vmem:[#allocation6 + $0x1c0] sm:$0xff]
        %v1294 = vld [vmem:[#allocation6 + $0x1c8] sm:$0xff]
        %v1295 = vld [vmem:[#allocation6 + $0x1d0] sm:$0xff]
        %v1296 = vld [vmem:[#allocation6 + $0x1d8] sm:$0xff]
        %v1297 = vld [vmem:[#allocation6 + $0x1e0] sm:$0xff]
        %v1298 = vld [vmem:[#allocation6 + $0x1e8] sm:$0xff]
        %v1299 = vld [vmem:[#allocation6 + $0x1f0] sm:$0xff]
        %v1300 = vld [vmem:[#allocation6 + $0x1f8] sm:$0xff]
        %1301 = vmatprep.subr.mxu0 %v1238
        %1302 = vmatpush1.msra.mxu0 %v1237
        %1303 = vmatprep.subr.mxu0 %v1242
        %1304 = vmatpush1.msra.mxu0 %v1241
        %1305 = vmatprep.subr.mxu0 %v1246
        %1306 = vmatpush1.msra.mxu0 %v1245
        %1307 = vmatprep.subr.mxu0 %v1250
        %1308 = vmatpush1.msra.mxu0 %v1249
        %1309 = vmatprep.subr.mxu0 %v1254
        %1310 = vmatpush1.msra.mxu0 %v1253
        %1311 = vmatprep.subr.mxu0 %v1258
        %1312 = vmatpush1.msra.mxu0 %v1257
        %1313 = vmatprep.subr.mxu0 %v1262
        %1314 = vmatpush1.msra.mxu0 %v1261
        %1315 = vmatprep.subr.mxu0 %v1266
        %1316 = vmatpush1.msra.mxu0 %v1265
        %1317 = vmatprep.subr.mxu0 %v1270
        %1318 = vmatpush1.msra.mxu0 %v1269
        %1319 = vmatprep.subr.mxu0 %v1274
        %1320 = vmatpush1.msra.mxu0 %v1273
        %1321 = vmatprep.subr.mxu0 %v1278
        %1322 = vmatpush1.msra.mxu0 %v1277
        %1323 = vmatprep.subr.mxu0 %v1282
        %1324 = vmatpush1.msra.mxu0 %v1281
        %1325 = vmatprep.subr.mxu0 %v1286
        %1326 = vmatpush1.msra.mxu0 %v1285
        %1327 = vmatprep.subr.mxu0 %v1290
        %1328 = vmatpush1.msra.mxu0 %v1289
        %1329 = vmatprep.subr.mxu0 %v1294
        %1330 = vmatpush1.msra.mxu0 %v1293
        %1331 = vmatprep.subr.mxu0 %v1298
        %1332 = vmatpush1.msra.mxu0 %v1297
        %1333 = vmatprep.subr.mxu0 0.0
        %1334 = vmatpush1.msra.mxu0 0.0
        %1335 = vmatprep.subr.mxu0 0.0
        %1336 = vmatpush1.msra.mxu0 0.0
        %1337 = vmatprep.subr.mxu0 0.0
        %1338 = vmatpush1.msra.mxu0 0.0
        %1339 = vmatprep.subr.mxu0 0.0
        %1340 = vmatpush1.msra.mxu0 0.0
        %1341 = vmatprep.subr.mxu0 0.0
        %1342 = vmatpush1.msra.mxu0 0.0
        %1343 = vmatprep.subr.mxu0 0.0
        %1344 = vmatpush1.msra.mxu0 0.0
        %1345 = vmatprep.subr.mxu0 0.0
        %1346 = vmatpush1.msra.mxu0 0.0
        %1347 = vmatprep.subr.mxu0 0.0
        %1348 = vmatpush1.msra.mxu0 0.0
        %1349 = vmatprep.subr.mxu0 0.0
        %1350 = vmatpush1.msra.mxu0 0.0
        %1351 = vmatprep.subr.mxu0 0.0
        %1352 = vmatpush1.msra.mxu0 0.0
        %1353 = vmatprep.subr.mxu0 0.0
        %1354 = vmatpush1.msra.mxu0 0.0
        %1355 = vmatprep.subr.mxu0 0.0
        %1356 = vmatpush1.msra.mxu0 0.0
        %1357 = vmatprep.subr.mxu0 0.0
        %1358 = vmatpush1.msra.mxu0 0.0
        %1359 = vmatprep.subr.mxu0 0.0
        %1360 = vmatpush1.msra.mxu0 0.0
        %1361 = vmatprep.subr.mxu0 0.0
        %1362 = vmatpush1.msra.mxu0 0.0
        %1363 = vmatprep.subr.mxu0 0.0
        %1364 = vmatpush1.msra.mxu0 0.0
        %1365 = vmatprep.mubr.f32.mxu0 0.0
        %1366 = vmatmul.mubr.f32.gmra.mrb[0].mxu0 %v1231
        %v1367 = vpop.f32.mrb[0].mxu0
        %v1368 = vadd.f32 0.0, %v1367
        %v1369 = vpop.f32.mrb[0].mxu0
        %v1370 = vadd.f32 0.0, %v1369
        %1371 = vdwg.mxu0
        %1372 = vmatprep.subr.mxu0 %v1240
        %1373 = vmatpush1.msra.mxu0 %v1239
        %1374 = vmatprep.subr.mxu0 %v1244
        %1375 = vmatpush1.msra.mxu0 %v1243
        %1376 = vmatprep.subr.mxu0 %v1248
        %1377 = vmatpush1.msra.mxu0 %v1247
        %1378 = vmatprep.subr.mxu0 %v1252
        %1379 = vmatpush1.msra.mxu0 %v1251
        %1380 = vmatprep.subr.mxu0 %v1256
        %1381 = vmatpush1.msra.mxu0 %v1255
        %1382 = vmatprep.subr.mxu0 %v1260
        %1383 = vmatpush1.msra.mxu0 %v1259
        %1384 = vmatprep.subr.mxu0 %v1264
        %1385 = vmatpush1.msra.mxu0 %v1263
        %1386 = vmatprep.subr.mxu0 %v1268
        %1387 = vmatpush1.msra.mxu0 %v1267
        %1388 = vmatprep.subr.mxu0 %v1272
        %1389 = vmatpush1.msra.mxu0 %v1271
        %1390 = vmatprep.subr.mxu0 %v1276
        %1391 = vmatpush1.msra.mxu0 %v1275
        %1392 = vmatprep.subr.mxu0 %v1280
        %1393 = vmatpush1.msra.mxu0 %v1279
        %1394 = vmatprep.subr.mxu0 %v1284
        %1395 = vmatpush1.msra.mxu0 %v1283
        %1396 = vmatprep.subr.mxu0 %v1288
        %1397 = vmatpush1.msra.mxu0 %v1287
        %1398 = vmatprep.subr.mxu0 %v1292
        %1399 = vmatpush1.msra.mxu0 %v1291
        %1400 = vmatprep.subr.mxu0 %v1296
        %1401 = vmatpush1.msra.mxu0 %v1295
        %1402 = vmatprep.subr.mxu0 %v1300
        %1403 = vmatpush1.msra.mxu0 %v1299
        %1404 = vmatprep.subr.mxu0 0.0
        %1405 = vmatpush1.msra.mxu0 0.0
        %1406 = vmatprep.subr.mxu0 0.0
        %1407 = vmatpush1.msra.mxu0 0.0
        %1408 = vmatprep.subr.mxu0 0.0
        %1409 = vmatpush1.msra.mxu0 0.0
        %1410 = vmatprep.subr.mxu0 0.0
        %1411 = vmatpush1.msra.mxu0 0.0
        %1412 = vmatprep.subr.mxu0 0.0
        %1413 = vmatpush1.msra.mxu0 0.0
        %1414 = vmatprep.subr.mxu0 0.0
        %1415 = vmatpush1.msra.mxu0 0.0
        %1416 = vmatprep.subr.mxu0 0.0
        %1417 = vmatpush1.msra.mxu0 0.0
        %1418 = vmatprep.subr.mxu0 0.0
        %1419 = vmatpush1.msra.mxu0 0.0
        %1420 = vmatprep.subr.mxu0 0.0
        %1421 = vmatpush1.msra.mxu0 0.0
        %1422 = vmatprep.subr.mxu0 0.0
        %1423 = vmatpush1.msra.mxu0 0.0
        %1424 = vmatprep.subr.mxu0 0.0
        %1425 = vmatpush1.msra.mxu0 0.0
        %1426 = vmatprep.subr.mxu0 0.0
        %1427 = vmatpush1.msra.mxu0 0.0
        %1428 = vmatprep.subr.mxu0 0.0
        %1429 = vmatpush1.msra.mxu0 0.0
        %1430 = vmatprep.subr.mxu0 0.0
        %1431 = vmatpush1.msra.mxu0 0.0
        %1432 = vmatprep.subr.mxu0 0.0
        %1433 = vmatpush1.msra.mxu0 0.0
        %1434 = vmatprep.subr.mxu0 0.0
        %1435 = vmatpush1.msra.mxu0 0.0
        %1436 = vmatprep.mubr.f32.mxu0 0.0
        %1437 = vmatmul.mubr.f32.gmra.mrb[0].mxu0 %v1231
        %v1438 = vpop.f32.mrb[0].mxu0
        %v1439 = vadd.f32 0.0, %v1438
        %v1440 = vpop.f32.mrb[0].mxu0
        %v1441 = vadd.f32 0.0, %v1440
        %1442 = vdwg.mxu0
        %v1443 = vadd.f32 %v1233, %v1368
        %v1444 = vadd.f32 %v1234, %v1370
        %v1445 = vadd.f32 %v1235, %v1439
        %v1446 = vadd.f32 %v1236, %v1441
        %v1447 = vld [vmem:[#allocation3] sm:$0xff]
        %v1448 = vxor.u32 %v1443, 2147483648
        %v1449 = vmul.f32 %v1448, 1.442695
        %v1450 = vpow.pop %v1449
        %v1451 = vadd.f32 %v1450, 1.0
        %v1452 = vrcp.pop %v1451
        %v1453 = vmul.f32 1.0, %v1452
        %v1454 = vxor.u32 %v1444, 2147483648
        %v1455 = vmul.f32 %v1454, 1.442695
        %v1456 = vpow.pop %v1455
        %v1457 = vadd.f32 %v1456, 1.0
        %v1458 = vrcp.pop %v1457
        %v1459 = vmul.f32 1.0, %v1458
        %v1460 = vtanh.pop %v1445
        %v1461 = vxor.u32 %v1446, 2147483648
        %v1462 = vmul.f32 %v1461, 1.442695
        %v1463 = vpow.pop %v1462
        %v1464 = vadd.f32 %v1463, 1.0
        %v1465 = vrcp.pop %v1464
        %v1466 = vmul.f32 1.0, %v1465
        %v1467 = vmul.f32 %v1459, %v1447
        %v1468 = vmul.f32 %v1453, %v1460
        %v1469 = vadd.f32 %v1467, %v1468
        %v1470 = vtanh.pop %v1469
        %v1471 = vmul.f32 %v1466, %v1470
        %1472 = vst [vmem:[#allocation2] sm:$0xff] %v1471
        %1473 = vst [vmem:[#allocation3] sm:$0xff] %v1469
        %v1474 = vld [vmem:[%s930] sm:$0xff]
        %v1475 = vld [vmem:[#allocation9] sm:$0xff]
        %v1476 = vld [vmem:[#allocation9 + $0x8] sm:$0xff]
        %v1477 = vld [vmem:[#allocation9 + $0x10] sm:$0xff]
        %v1478 = vld [vmem:[#allocation9 + $0x18] sm:$0xff]
        %v1479 = vld [vmem:[#allocation9 + $0x20] sm:$0xff]
        %v1480 = vld [vmem:[#allocation9 + $0x28] sm:$0xff]
        %v1481 = vld [vmem:[#allocation9 + $0x30] sm:$0xff]
        %v1482 = vld [vmem:[#allocation9 + $0x38] sm:$0xff]
        %v1483 = vld [vmem:[#allocation9 + $0x40] sm:$0xff]
        %v1484 = vld [vmem:[#allocation9 + $0x48] sm:$0xff]
        %v1485 = vld [vmem:[#allocation9 + $0x50] sm:$0xff]
        %v1486 = vld [vmem:[#allocation9 + $0x58] sm:$0xff]
        %v1487 = vld [vmem:[#allocation9 + $0x60] sm:$0xff]
        %v1488 = vld [vmem:[#allocation9 + $0x68] sm:$0xff]
        %v1489 = vld [vmem:[#allocation9 + $0x70] sm:$0xff]
        %v1490 = vld [vmem:[#allocation9 + $0x78] sm:$0xff]
        %v1491 = vld [vmem:[#allocation9 + $0x80] sm:$0xff]
        %v1492 = vld [vmem:[#allocation9 + $0x88] sm:$0xff]
        %v1493 = vld [vmem:[#allocation9 + $0x90] sm:$0xff]
        %v1494 = vld [vmem:[#allocation9 + $0x98] sm:$0xff]
        %v1495 = vld [vmem:[#allocation9 + $0xa0] sm:$0xff]
        %v1496 = vld [vmem:[#allocation9 + $0xa8] sm:$0xff]
        %v1497 = vld [vmem:[#allocation9 + $0xb0] sm:$0xff]
        %v1498 = vld [vmem:[#allocation9 + $0xb8] sm:$0xff]
        %v1499 = vld [vmem:[#allocation9 + $0xc0] sm:$0xff]
        %v1500 = vld [vmem:[#allocation9 + $0xc8] sm:$0xff]
        %v1501 = vld [vmem:[#allocation9 + $0xd0] sm:$0xff]
        %v1502 = vld [vmem:[#allocation9 + $0xd8] sm:$0xff]
        %v1503 = vld [vmem:[#allocation9 + $0xe0] sm:$0xff]
        %v1504 = vld [vmem:[#allocation9 + $0xe8] sm:$0xff]
        %v1505 = vld [vmem:[#allocation9 + $0xf0] sm:$0xff]
        %v1506 = vld [vmem:[#allocation9 + $0xf8] sm:$0xff]
        %v1507 = vld [vmem:[#allocation9 + $0x100] sm:$0xff]
        %v1508 = vld [vmem:[#allocation9 + $0x108] sm:$0xff]
        %v1509 = vld [vmem:[#allocation9 + $0x110] sm:$0xff]
        %v1510 = vld [vmem:[#allocation9 + $0x118] sm:$0xff]
        %v1511 = vld [vmem:[#allocation9 + $0x120] sm:$0xff]
        %v1512 = vld [vmem:[#allocation9 + $0x128] sm:$0xff]
        %v1513 = vld [vmem:[#allocation9 + $0x130] sm:$0xff]
        %v1514 = vld [vmem:[#allocation9 + $0x138] sm:$0xff]
        %v1515 = vld [vmem:[#allocation9 + $0x140] sm:$0xff]
        %v1516 = vld [vmem:[#allocation9 + $0x148] sm:$0xff]
        %v1517 = vld [vmem:[#allocation9 + $0x150] sm:$0xff]
        %v1518 = vld [vmem:[#allocation9 + $0x158] sm:$0xff]
        %v1519 = vld [vmem:[#allocation9 + $0x160] sm:$0xff]
        %v1520 = vld [vmem:[#allocation9 + $0x168] sm:$0xff]
        %v1521 = vld [vmem:[#allocation9 + $0x170] sm:$0xff]
        %v1522 = vld [vmem:[#allocation9 + $0x178] sm:$0xff]
        %v1523 = vld [vmem:[#allocation9 + $0x180] sm:$0xff]
        %v1524 = vld [vmem:[#allocation9 + $0x188] sm:$0xff]
        %v1525 = vld [vmem:[#allocation9 + $0x190] sm:$0xff]
        %v1526 = vld [vmem:[#allocation9 + $0x198] sm:$0xff]
        %v1527 = vld [vmem:[#allocation9 + $0x1a0] sm:$0xff]
        %v1528 = vld [vmem:[#allocation9 + $0x1a8] sm:$0xff]
        %v1529 = vld [vmem:[#allocation9 + $0x1b0] sm:$0xff]
        %v1530 = vld [vmem:[#allocation9 + $0x1b8] sm:$0xff]
        %v1531 = vld [vmem:[#allocation9 + $0x1c0] sm:$0xff]
        %v1532 = vld [vmem:[#allocation9 + $0x1c8] sm:$0xff]
        %v1533 = vld [vmem:[#allocation9 + $0x1d0] sm:$0xff]
        %v1534 = vld [vmem:[#allocation9 + $0x1d8] sm:$0xff]
        %v1535 = vld [vmem:[#allocation9 + $0x1e0] sm:$0xff]
        %v1536 = vld [vmem:[#allocation9 + $0x1e8] sm:$0xff]
        %v1537 = vld [vmem:[#allocation9 + $0x1f0] sm:$0xff]
        %v1538 = vld [vmem:[#allocation9 + $0x1f8] sm:$0xff]
        %v1539 = vld [vmem:[#allocation9 + $0x200] sm:$0xff]
        %v1540 = vld [vmem:[#allocation9 + $0x208] sm:$0xff]
        %v1541 = vld [vmem:[#allocation9 + $0x210] sm:$0xff]
        %v1542 = vld [vmem:[#allocation9 + $0x218] sm:$0xff]
        %v1543 = vld [vmem:[#allocation9 + $0x220] sm:$0xff]
        %v1544 = vld [vmem:[#allocation9 + $0x228] sm:$0xff]
        %v1545 = vld [vmem:[#allocation9 + $0x230] sm:$0xff]
        %v1546 = vld [vmem:[#allocation9 + $0x238] sm:$0xff]
        %v1547 = vld [vmem:[#allocation9 + $0x240] sm:$0xff]
        %v1548 = vld [vmem:[#allocation9 + $0x248] sm:$0xff]
        %v1549 = vld [vmem:[#allocation9 + $0x250] sm:$0xff]
        %v1550 = vld [vmem:[#allocation9 + $0x258] sm:$0xff]
        %v1551 = vld [vmem:[#allocation9 + $0x260] sm:$0xff]
        %v1552 = vld [vmem:[#allocation9 + $0x268] sm:$0xff]
        %v1553 = vld [vmem:[#allocation9 + $0x270] sm:$0xff]
        %v1554 = vld [vmem:[#allocation9 + $0x278] sm:$0xff]
        %v1555 = vld [vmem:[#allocation9 + $0x280] sm:$0xff]
        %v1556 = vld [vmem:[#allocation9 + $0x288] sm:$0xff]
        %v1557 = vld [vmem:[#allocation9 + $0x290] sm:$0xff]
        %v1558 = vld [vmem:[#allocation9 + $0x298] sm:$0xff]
        %v1559 = vld [vmem:[#allocation9 + $0x2a0] sm:$0xff]
        %v1560 = vld [vmem:[#allocation9 + $0x2a8] sm:$0xff]
        %v1561 = vld [vmem:[#allocation9 + $0x2b0] sm:$0xff]
        %v1562 = vld [vmem:[#allocation9 + $0x2b8] sm:$0xff]
        %v1563 = vld [vmem:[#allocation9 + $0x2c0] sm:$0xff]
        %v1564 = vld [vmem:[#allocation9 + $0x2c8] sm:$0xff]
        %v1565 = vld [vmem:[#allocation9 + $0x2d0] sm:$0xff]
        %v1566 = vld [vmem:[#allocation9 + $0x2d8] sm:$0xff]
        %v1567 = vld [vmem:[#allocation9 + $0x2e0] sm:$0xff]
        %v1568 = vld [vmem:[#allocation9 + $0x2e8] sm:$0xff]
        %v1569 = vld [vmem:[#allocation9 + $0x2f0] sm:$0xff]
        %v1570 = vld [vmem:[#allocation9 + $0x2f8] sm:$0xff]
        %v1571 = vld [vmem:[#allocation9 + $0x300] sm:$0xff]
        %v1572 = vld [vmem:[#allocation9 + $0x308] sm:$0xff]
        %v1573 = vld [vmem:[#allocation9 + $0x310] sm:$0xff]
        %v1574 = vld [vmem:[#allocation9 + $0x318] sm:$0xff]
        %v1575 = vld [vmem:[#allocation9 + $0x320] sm:$0xff]
        %v1576 = vld [vmem:[#allocation9 + $0x328] sm:$0xff]
        %v1577 = vld [vmem:[#allocation9 + $0x330] sm:$0xff]
        %v1578 = vld [vmem:[#allocation9 + $0x338] sm:$0xff]
        %v1579 = vld [vmem:[#allocation9 + $0x340] sm:$0xff]
        %v1580 = vld [vmem:[#allocation9 + $0x348] sm:$0xff]
        %v1581 = vld [vmem:[#allocation9 + $0x350] sm:$0xff]
        %v1582 = vld [vmem:[#allocation9 + $0x358] sm:$0xff]
        %v1583 = vld [vmem:[#allocation9 + $0x360] sm:$0xff]
        %v1584 = vld [vmem:[#allocation9 + $0x368] sm:$0xff]
        %v1585 = vld [vmem:[#allocation9 + $0x370] sm:$0xff]
        %v1586 = vld [vmem:[#allocation9 + $0x378] sm:$0xff]
        %v1587 = vld [vmem:[#allocation9 + $0x380] sm:$0xff]
        %v1588 = vld [vmem:[#allocation9 + $0x388] sm:$0xff]
        %v1589 = vld [vmem:[#allocation9 + $0x390] sm:$0xff]
        %v1590 = vld [vmem:[#allocation9 + $0x398] sm:$0xff]
        %v1591 = vld [vmem:[#allocation9 + $0x3a0] sm:$0xff]
        %v1592 = vld [vmem:[#allocation9 + $0x3a8] sm:$0xff]
        %v1593 = vld [vmem:[#allocation9 + $0x3b0] sm:$0xff]
        %v1594 = vld [vmem:[#allocation9 + $0x3b8] sm:$0xff]
        %v1595 = vld [vmem:[#allocation9 + $0x3c0] sm:$0xff]
        %v1596 = vld [vmem:[#allocation9 + $0x3c8] sm:$0xff]
        %v1597 = vld [vmem:[#allocation9 + $0x3d0] sm:$0xff]
        %v1598 = vld [vmem:[#allocation9 + $0x3d8] sm:$0xff]
        %v1599 = vld [vmem:[#allocation9 + $0x3e0] sm:$0xff]
        %v1600 = vld [vmem:[#allocation9 + $0x3e8] sm:$0xff]
        %v1601 = vld [vmem:[#allocation9 + $0x3f0] sm:$0xff]
        %v1602 = vld [vmem:[#allocation9 + $0x3f8] sm:$0xff]
        %1603 = vmatprep.subr.mxu0 %v1476
        %1604 = vmatpush1.msra.mxu0 %v1475
        %1605 = vmatprep.subr.mxu0 %v1480
        %1606 = vmatpush1.msra.mxu0 %v1479
        %1607 = vmatprep.subr.mxu0 %v1484
        %1608 = vmatpush1.msra.mxu0 %v1483
        %1609 = vmatprep.subr.mxu0 %v1488
        %1610 = vmatpush1.msra.mxu0 %v1487
        %1611 = vmatprep.subr.mxu0 %v1492
        %1612 = vmatpush1.msra.mxu0 %v1491
        %1613 = vmatprep.subr.mxu0 %v1496
        %1614 = vmatpush1.msra.mxu0 %v1495
        %1615 = vmatprep.subr.mxu0 %v1500
        %1616 = vmatpush1.msra.mxu0 %v1499
        %1617 = vmatprep.subr.mxu0 %v1504
        %1618 = vmatpush1.msra.mxu0 %v1503
        %1619 = vmatprep.subr.mxu0 %v1508
        %1620 = vmatpush1.msra.mxu0 %v1507
        %1621 = vmatprep.subr.mxu0 %v1512
        %1622 = vmatpush1.msra.mxu0 %v1511
        %1623 = vmatprep.subr.mxu0 %v1516
        %1624 = vmatpush1.msra.mxu0 %v1515
        %1625 = vmatprep.subr.mxu0 %v1520
        %1626 = vmatpush1.msra.mxu0 %v1519
        %1627 = vmatprep.subr.mxu0 %v1524
        %1628 = vmatpush1.msra.mxu0 %v1523
        %1629 = vmatprep.subr.mxu0 %v1528
        %1630 = vmatpush1.msra.mxu0 %v1527
        %1631 = vmatprep.subr.mxu0 %v1532
        %1632 = vmatpush1.msra.mxu0 %v1531
        %1633 = vmatprep.subr.mxu0 %v1536
        %1634 = vmatpush1.msra.mxu0 %v1535
        %1635 = vmatprep.subr.mxu0 %v1540
        %1636 = vmatpush1.msra.mxu0 %v1539
        %1637 = vmatprep.subr.mxu0 %v1544
        %1638 = vmatpush1.msra.mxu0 %v1543
        %1639 = vmatprep.subr.mxu0 %v1548
        %1640 = vmatpush1.msra.mxu0 %v1547
        %1641 = vmatprep.subr.mxu0 %v1552
        %1642 = vmatpush1.msra.mxu0 %v1551
        %1643 = vmatprep.subr.mxu0 %v1556
        %1644 = vmatpush1.msra.mxu0 %v1555
        %1645 = vmatprep.subr.mxu0 %v1560
        %1646 = vmatpush1.msra.mxu0 %v1559
        %1647 = vmatprep.subr.mxu0 %v1564
        %1648 = vmatpush1.msra.mxu0 %v1563
        %1649 = vmatprep.subr.mxu0 %v1568
        %1650 = vmatpush1.msra.mxu0 %v1567
        %1651 = vmatprep.subr.mxu0 %v1572
        %1652 = vmatpush1.msra.mxu0 %v1571
        %1653 = vmatprep.subr.mxu0 %v1576
        %1654 = vmatpush1.msra.mxu0 %v1575
        %1655 = vmatprep.subr.mxu0 %v1580
        %1656 = vmatpush1.msra.mxu0 %v1579
        %1657 = vmatprep.subr.mxu0 %v1584
        %1658 = vmatpush1.msra.mxu0 %v1583
        %1659 = vmatprep.subr.mxu0 %v1588
        %1660 = vmatpush1.msra.mxu0 %v1587
        %1661 = vmatprep.subr.mxu0 %v1592
        %1662 = vmatpush1.msra.mxu0 %v1591
        %1663 = vmatprep.subr.mxu0 %v1596
        %1664 = vmatpush1.msra.mxu0 %v1595
        %1665 = vmatprep.subr.mxu0 %v1600
        %1666 = vmatpush1.msra.mxu0 %v1599
        %1667 = vmatprep.mubr.f32.mxu0 %v1474
        %1668 = vmatmul.mubr.f32.gmra.mrb[0].mxu0 %v1471
        %v1669 = vpop.f32.mrb[0].mxu0
        %v1670 = vadd.f32 %v671, %v1669
        %v1671 = vpop.f32.mrb[0].mxu0
        %v1672 = vadd.f32 %v675, %v1671
        %1673 = vdwg.mxu0
        %1674 = vmatprep.subr.mxu0 %v1478
        %1675 = vmatpush1.msra.mxu0 %v1477
        %1676 = vmatprep.subr.mxu0 %v1482
        %1677 = vmatpush1.msra.mxu0 %v1481
        %1678 = vmatprep.subr.mxu0 %v1486
        %1679 = vmatpush1.msra.mxu0 %v1485
        %1680 = vmatprep.subr.mxu0 %v1490
        %1681 = vmatpush1.msra.mxu0 %v1489
        %1682 = vmatprep.subr.mxu0 %v1494
        %1683 = vmatpush1.msra.mxu0 %v1493
        %1684 = vmatprep.subr.mxu0 %v1498
        %1685 = vmatpush1.msra.mxu0 %v1497
        %1686 = vmatprep.subr.mxu0 %v1502
        %1687 = vmatpush1.msra.mxu0 %v1501
        %1688 = vmatprep.subr.mxu0 %v1506
        %1689 = vmatpush1.msra.mxu0 %v1505
        %1690 = vmatprep.subr.mxu0 %v1510
        %1691 = vmatpush1.msra.mxu0 %v1509
        %1692 = vmatprep.subr.mxu0 %v1514
        %1693 = vmatpush1.msra.mxu0 %v1513
        %1694 = vmatprep.subr.mxu0 %v1518
        %1695 = vmatpush1.msra.mxu0 %v1517
        %1696 = vmatprep.subr.mxu0 %v1522
        %1697 = vmatpush1.msra.mxu0 %v1521
        %1698 = vmatprep.subr.mxu0 %v1526
        %1699 = vmatpush1.msra.mxu0 %v1525
        %1700 = vmatprep.subr.mxu0 %v1530
        %1701 = vmatpush1.msra.mxu0 %v1529
        %1702 = vmatprep.subr.mxu0 %v1534
        %1703 = vmatpush1.msra.mxu0 %v1533
        %1704 = vmatprep.subr.mxu0 %v1538
        %1705 = vmatpush1.msra.mxu0 %v1537
        %1706 = vmatprep.subr.mxu0 %v1542
        %1707 = vmatpush1.msra.mxu0 %v1541
        %1708 = vmatprep.subr.mxu0 %v1546
        %1709 = vmatpush1.msra.mxu0 %v1545
        %1710 = vmatprep.subr.mxu0 %v1550
        %1711 = vmatpush1.msra.mxu0 %v1549
        %1712 = vmatprep.subr.mxu0 %v1554
        %1713 = vmatpush1.msra.mxu0 %v1553
        %1714 = vmatprep.subr.mxu0 %v1558
        %1715 = vmatpush1.msra.mxu0 %v1557
        %1716 = vmatprep.subr.mxu0 %v1562
        %1717 = vmatpush1.msra.mxu0 %v1561
        %1718 = vmatprep.subr.mxu0 %v1566
        %1719 = vmatpush1.msra.mxu0 %v1565
        %1720 = vmatprep.subr.mxu0 %v1570
        %1721 = vmatpush1.msra.mxu0 %v1569
        %1722 = vmatprep.subr.mxu0 %v1574
        %1723 = vmatpush1.msra.mxu0 %v1573
        %1724 = vmatprep.subr.mxu0 %v1578
        %1725 = vmatpush1.msra.mxu0 %v1577
        %1726 = vmatprep.subr.mxu0 %v1582
        %1727 = vmatpush1.msra.mxu0 %v1581
        %1728 = vmatprep.subr.mxu0 %v1586
        %1729 = vmatpush1.msra.mxu0 %v1585
        %1730 = vmatprep.subr.mxu0 %v1590
        %1731 = vmatpush1.msra.mxu0 %v1589
        %1732 = vmatprep.subr.mxu0 %v1594
        %1733 = vmatpush1.msra.mxu0 %v1593
        %1734 = vmatprep.subr.mxu0 %v1598
        %1735 = vmatpush1.msra.mxu0 %v1597
        %1736 = vmatprep.subr.mxu0 %v1602
        %1737 = vmatpush1.msra.mxu0 %v1601
        %1738 = vmatprep.mubr.f32.mxu0 %v1474
        %1739 = vmatmul.mubr.f32.gmra.mrb[0].mxu0 %v1471
        %v1740 = vpop.f32.mrb[0].mxu0
        %v1741 = vadd.f32 %v679, %v1740
        %v1742 = vpop.f32.mrb[0].mxu0
        %v1743 = vadd.f32 %v683, %v1742
        %1744 = vdwg.mxu0
        %v1745 = vld [vmem:[%s1202] sm:$0xff]
        %v1746 = vxor.u32 %v1670, 2147483648
        %v1747 = vmul.f32 %v1746, 1.442695
        %v1748 = vpow.pop %v1747
        %v1749 = vadd.f32 %v1748, 1.0
        %v1750 = vrcp.pop %v1749
        %v1751 = vmul.f32 1.0, %v1750
        %v1752 = vxor.u32 %v1672, 2147483648
        %v1753 = vmul.f32 %v1752, 1.442695
        %v1754 = vpow.pop %v1753
        %v1755 = vadd.f32 %v1754, 1.0
        %v1756 = vrcp.pop %v1755
        %v1757 = vmul.f32 1.0, %v1756
        %v1758 = vtanh.pop %v1741
        %v1759 = vxor.u32 %v1743, 2147483648
        %v1760 = vmul.f32 %v1759, 1.442695
        %v1761 = vpow.pop %v1760
        %v1762 = vadd.f32 %v1761, 1.0
        %v1763 = vrcp.pop %v1762
        %v1764 = vmul.f32 1.0, %v1763
        %v1765 = vmul.f32 %v1757, %v1745
        %v1766 = vmul.f32 %v1751, %v1758
        %v1767 = vadd.f32 %v1765, %v1766
        %v1768 = vtanh.pop %v1767
        %v1769 = vmul.f32 %v1764, %v1768
        %1770 = vst [vmem:[%s930] sm:$0xff] %v1769
        %1771 = vst [vmem:[%s1202] sm:$0xff] %v1767
        %s1772 = scalar_lea.vmem [#allocation5], 8
        %1773 = vst [vmem:[%s1772] sm:$0xff] %v1769
        %v1774 = vld [vmem:[#allocation2] sm:$0xff]
        %s1775 = scalar_lea.vmem [#allocation4], 64
        %v1776 = vld [vmem:[%s1775] sm:$0xff]
        %v1777 = vld [vmem:[%s1775 + $0x8] sm:$0xff]
        %v1778 = vld [vmem:[%s1775 + $0x10] sm:$0xff]
        %v1779 = vld [vmem:[%s1775 + $0x18] sm:$0xff]
        %v1780 = vld [vmem:[#allocation6] sm:$0xff]
        %v1781 = vld [vmem:[#allocation6 + $0x8] sm:$0xff]
        %v1782 = vld [vmem:[#allocation6 + $0x10] sm:$0xff]
        %v1783 = vld [vmem:[#allocation6 + $0x18] sm:$0xff]
        %v1784 = vld [vmem:[#allocation6 + $0x20] sm:$0xff]
        %v1785 = vld [vmem:[#allocation6 + $0x28] sm:$0xff]
        %v1786 = vld [vmem:[#allocation6 + $0x30] sm:$0xff]
        %v1787 = vld [vmem:[#allocation6 + $0x38] sm:$0xff]
        %v1788 = vld [vmem:[#allocation6 + $0x40] sm:$0xff]
        %v1789 = vld [vmem:[#allocation6 + $0x48] sm:$0xff]
        %v1790 = vld [vmem:[#allocation6 + $0x50] sm:$0xff]
        %v1791 = vld [vmem:[#allocation6 + $0x58] sm:$0xff]
        %v1792 = vld [vmem:[#allocation6 + $0x60] sm:$0xff]
        %v1793 = vld [vmem:[#allocation6 + $0x68] sm:$0xff]
        %v1794 = vld [vmem:[#allocation6 + $0x70] sm:$0xff]
        %v1795 = vld [vmem:[#allocation6 + $0x78] sm:$0xff]
        %v1796 = vld [vmem:[#allocation6 + $0x80] sm:$0xff]
        %v1797 = vld [vmem:[#allocation6 + $0x88] sm:$0xff]
        %v1798 = vld [vmem:[#allocation6 + $0x90] sm:$0xff]
        %v1799 = vld [vmem:[#allocation6 + $0x98] sm:$0xff]
        %v1800 = vld [vmem:[#allocation6 + $0xa0] sm:$0xff]
        %v1801 = vld [vmem:[#allocation6 + $0xa8] sm:$0xff]
        %v1802 = vld [vmem:[#allocation6 + $0xb0] sm:$0xff]
        %v1803 = vld [vmem:[#allocation6 + $0xb8] sm:$0xff]
        %v1804 = vld [vmem:[#allocation6 + $0xc0] sm:$0xff]
        %v1805 = vld [vmem:[#allocation6 + $0xc8] sm:$0xff]
        %v1806 = vld [vmem:[#allocation6 + $0xd0] sm:$0xff]
        %v1807 = vld [vmem:[#allocation6 + $0xd8] sm:$0xff]
        %v1808 = vld [vmem:[#allocation6 + $0xe0] sm:$0xff]
        %v1809 = vld [vmem:[#allocation6 + $0xe8] sm:$0xff]
        %v1810 = vld [vmem:[#allocation6 + $0xf0] sm:$0xff]
        %v1811 = vld [vmem:[#allocation6 + $0xf8] sm:$0xff]
        %v1812 = vld [vmem:[#allocation6 + $0x100] sm:$0xff]
        %v1813 = vld [vmem:[#allocation6 + $0x108] sm:$0xff]
        %v1814 = vld [vmem:[#allocation6 + $0x110] sm:$0xff]
        %v1815 = vld [vmem:[#allocation6 + $0x118] sm:$0xff]
        %v1816 = vld [vmem:[#allocation6 + $0x120] sm:$0xff]
        %v1817 = vld [vmem:[#allocation6 + $0x128] sm:$0xff]
        %v1818 = vld [vmem:[#allocation6 + $0x130] sm:$0xff]
        %v1819 = vld [vmem:[#allocation6 + $0x138] sm:$0xff]
        %v1820 = vld [vmem:[#allocation6 + $0x140] sm:$0xff]
        %v1821 = vld [vmem:[#allocation6 + $0x148] sm:$0xff]
        %v1822 = vld [vmem:[#allocation6 + $0x150] sm:$0xff]
        %v1823 = vld [vmem:[#allocation6 + $0x158] sm:$0xff]
        %v1824 = vld [vmem:[#allocation6 + $0x160] sm:$0xff]
        %v1825 = vld [vmem:[#allocation6 + $0x168] sm:$0xff]
        %v1826 = vld [vmem:[#allocation6 + $0x170] sm:$0xff]
        %v1827 = vld [vmem:[#allocation6 + $0x178] sm:$0xff]
        %v1828 = vld [vmem:[#allocation6 + $0x180] sm:$0xff]
        %v1829 = vld [vmem:[#allocation6 + $0x188] sm:$0xff]
        %v1830 = vld [vmem:[#allocation6 + $0x190] sm:$0xff]
        %v1831 = vld [vmem:[#allocation6 + $0x198] sm:$0xff]
        %v1832 = vld [vmem:[#allocation6 + $0x1a0] sm:$0xff]
        %v1833 = vld [vmem:[#allocation6 + $0x1a8] sm:$0xff]
        %v1834 = vld [vmem:[#allocation6 + $0x1b0] sm:$0xff]
        %v1835 = vld [vmem:[#allocation6 + $0x1b8] sm:$0xff]
        %v1836 = vld [vmem:[#allocation6 + $0x1c0] sm:$0xff]
        %v1837 = vld [vmem:[#allocation6 + $0x1c8] sm:$0xff]
        %v1838 = vld [vmem:[#allocation6 + $0x1d0] sm:$0xff]
        %v1839 = vld [vmem:[#allocation6 + $0x1d8] sm:$0xff]
        %v1840 = vld [vmem:[#allocation6 + $0x1e0] sm:$0xff]
        %v1841 = vld [vmem:[#allocation6 + $0x1e8] sm:$0xff]
        %v1842 = vld [vmem:[#allocation6 + $0x1f0] sm:$0xff]
        %v1843 = vld [vmem:[#allocation6 + $0x1f8] sm:$0xff]
        %1844 = vmatprep.subr.mxu0 %v1781
        %1845 = vmatpush1.msra.mxu0 %v1780
        %1846 = vmatprep.subr.mxu0 %v1785
        %1847 = vmatpush1.msra.mxu0 %v1784
        %1848 = vmatprep.subr.mxu0 %v1789
        %1849 = vmatpush1.msra.mxu0 %v1788
        %1850 = vmatprep.subr.mxu0 %v1793
        %1851 = vmatpush1.msra.mxu0 %v1792
        %1852 = vmatprep.subr.mxu0 %v1797
        %1853 = vmatpush1.msra.mxu0 %v1796
        %1854 = vmatprep.subr.mxu0 %v1801
        %1855 = vmatpush1.msra.mxu0 %v1800
        %1856 = vmatprep.subr.mxu0 %v1805
        %1857 = vmatpush1.msra.mxu0 %v1804
        %1858 = vmatprep.subr.mxu0 %v1809
        %1859 = vmatpush1.msra.mxu0 %v1808
        %1860 = vmatprep.subr.mxu0 %v1813
        %1861 = vmatpush1.msra.mxu0 %v1812
        %1862 = vmatprep.subr.mxu0 %v1817
        %1863 = vmatpush1.msra.mxu0 %v1816
        %1864 = vmatprep.subr.mxu0 %v1821
        %1865 = vmatpush1.msra.mxu0 %v1820
        %1866 = vmatprep.subr.mxu0 %v1825
        %1867 = vmatpush1.msra.mxu0 %v1824
        %1868 = vmatprep.subr.mxu0 %v1829
        %1869 = vmatpush1.msra.mxu0 %v1828
        %1870 = vmatprep.subr.mxu0 %v1833
        %1871 = vmatpush1.msra.mxu0 %v1832
        %1872 = vmatprep.subr.mxu0 %v1837
        %1873 = vmatpush1.msra.mxu0 %v1836
        %1874 = vmatprep.subr.mxu0 %v1841
        %1875 = vmatpush1.msra.mxu0 %v1840
        %1876 = vmatprep.subr.mxu0 0.0
        %1877 = vmatpush1.msra.mxu0 0.0
        %1878 = vmatprep.subr.mxu0 0.0
        %1879 = vmatpush1.msra.mxu0 0.0
        %1880 = vmatprep.subr.mxu0 0.0
        %1881 = vmatpush1.msra.mxu0 0.0
        %1882 = vmatprep.subr.mxu0 0.0
        %1883 = vmatpush1.msra.mxu0 0.0
        %1884 = vmatprep.subr.mxu0 0.0
        %1885 = vmatpush1.msra.mxu0 0.0
        %1886 = vmatprep.subr.mxu0 0.0
        %1887 = vmatpush1.msra.mxu0 0.0
        %1888 = vmatprep.subr.mxu0 0.0
        %1889 = vmatpush1.msra.mxu0 0.0
        %1890 = vmatprep.subr.mxu0 0.0
        %1891 = vmatpush1.msra.mxu0 0.0
        %1892 = vmatprep.subr.mxu0 0.0
        %1893 = vmatpush1.msra.mxu0 0.0
        %1894 = vmatprep.subr.mxu0 0.0
        %1895 = vmatpush1.msra.mxu0 0.0
        %1896 = vmatprep.subr.mxu0 0.0
        %1897 = vmatpush1.msra.mxu0 0.0
        %1898 = vmatprep.subr.mxu0 0.0
        %1899 = vmatpush1.msra.mxu0 0.0
        %1900 = vmatprep.subr.mxu0 0.0
        %1901 = vmatpush1.msra.mxu0 0.0
        %1902 = vmatprep.subr.mxu0 0.0
        %1903 = vmatpush1.msra.mxu0 0.0
        %1904 = vmatprep.subr.mxu0 0.0
        %1905 = vmatpush1.msra.mxu0 0.0
        %1906 = vmatprep.subr.mxu0 0.0
        %1907 = vmatpush1.msra.mxu0 0.0
        %1908 = vmatprep.mubr.f32.mxu0 0.0
        %1909 = vmatmul.mubr.f32.gmra.mrb[0].mxu0 %v1774
        %v1910 = vpop.f32.mrb[0].mxu0
        %v1911 = vadd.f32 0.0, %v1910
        %v1912 = vpop.f32.mrb[0].mxu0
        %v1913 = vadd.f32 0.0, %v1912
        %1914 = vdwg.mxu0
        %1915 = vmatprep.subr.mxu0 %v1783
        %1916 = vmatpush1.msra.mxu0 %v1782
        %1917 = vmatprep.subr.mxu0 %v1787
        %1918 = vmatpush1.msra.mxu0 %v1786
        %1919 = vmatprep.subr.mxu0 %v1791
        %1920 = vmatpush1.msra.mxu0 %v1790
        %1921 = vmatprep.subr.mxu0 %v1795
        %1922 = vmatpush1.msra.mxu0 %v1794
        %1923 = vmatprep.subr.mxu0 %v1799
        %1924 = vmatpush1.msra.mxu0 %v1798
        %1925 = vmatprep.subr.mxu0 %v1803
        %1926 = vmatpush1.msra.mxu0 %v1802
        %1927 = vmatprep.subr.mxu0 %v1807
        %1928 = vmatpush1.msra.mxu0 %v1806
        %1929 = vmatprep.subr.mxu0 %v1811
        %1930 = vmatpush1.msra.mxu0 %v1810
        %1931 = vmatprep.subr.mxu0 %v1815
        %1932 = vmatpush1.msra.mxu0 %v1814
        %1933 = vmatprep.subr.mxu0 %v1819
        %1934 = vmatpush1.msra.mxu0 %v1818
        %1935 = vmatprep.subr.mxu0 %v1823
        %1936 = vmatpush1.msra.mxu0 %v1822
        %1937 = vmatprep.subr.mxu0 %v1827
        %1938 = vmatpush1.msra.mxu0 %v1826
        %1939 = vmatprep.subr.mxu0 %v1831
        %1940 = vmatpush1.msra.mxu0 %v1830
        %1941 = vmatprep.subr.mxu0 %v1835
        %1942 = vmatpush1.msra.mxu0 %v1834
        %1943 = vmatprep.subr.mxu0 %v1839
        %1944 = vmatpush1.msra.mxu0 %v1838
        %1945 = vmatprep.subr.mxu0 %v1843
        %1946 = vmatpush1.msra.mxu0 %v1842
        %1947 = vmatprep.subr.mxu0 0.0
        %1948 = vmatpush1.msra.mxu0 0.0
        %1949 = vmatprep.subr.mxu0 0.0
        %1950 = vmatpush1.msra.mxu0 0.0
        %1951 = vmatprep.subr.mxu0 0.0
        %1952 = vmatpush1.msra.mxu0 0.0
        %1953 = vmatprep.subr.mxu0 0.0
        %1954 = vmatpush1.msra.mxu0 0.0
        %1955 = vmatprep.subr.mxu0 0.0
        %1956 = vmatpush1.msra.mxu0 0.0
        %1957 = vmatprep.subr.mxu0 0.0
        %1958 = vmatpush1.msra.mxu0 0.0
        %1959 = vmatprep.subr.mxu0 0.0
        %1960 = vmatpush1.msra.mxu0 0.0
        %1961 = vmatprep.subr.mxu0 0.0
        %1962 = vmatpush1.msra.mxu0 0.0
        %1963 = vmatprep.subr.mxu0 0.0
        %1964 = vmatpush1.msra.mxu0 0.0
        %1965 = vmatprep.subr.mxu0 0.0
        %1966 = vmatpush1.msra.mxu0 0.0
        %1967 = vmatprep.subr.mxu0 0.0
        %1968 = vmatpush1.msra.mxu0 0.0
        %1969 = vmatprep.subr.mxu0 0.0
        %1970 = vmatpush1.msra.mxu0 0.0
        %1971 = vmatprep.subr.mxu0 0.0
        %1972 = vmatpush1.msra.mxu0 0.0
        %1973 = vmatprep.subr.mxu0 0.0
        %1974 = vmatpush1.msra.mxu0 0.0
        %1975 = vmatprep.subr.mxu0 0.0
        %1976 = vmatpush1.msra.mxu0 0.0
        %1977 = vmatprep.subr.mxu0 0.0
        %1978 = vmatpush1.msra.mxu0 0.0
        %1979 = vmatprep.mubr.f32.mxu0 0.0
        %1980 = vmatmul.mubr.f32.gmra.mrb[0].mxu0 %v1774
        %v1981 = vpop.f32.mrb[0].mxu0
        %v1982 = vadd.f32 0.0, %v1981
        %v1983 = vpop.f32.mrb[0].mxu0
        %v1984 = vadd.f32 0.0, %v1983
        %1985 = vdwg.mxu0
        %v1986 = vadd.f32 %v1776, %v1911
        %v1987 = vadd.f32 %v1777, %v1913
        %v1988 = vadd.f32 %v1778, %v1982
        %v1989 = vadd.f32 %v1779, %v1984
        %v1990 = vld [vmem:[#allocation3] sm:$0xff]
        %v1991 = vxor.u32 %v1986, 2147483648
        %v1992 = vmul.f32 %v1991, 1.442695
        %v1993 = vpow.pop %v1992
        %v1994 = vadd.f32 %v1993, 1.0
        %v1995 = vrcp.pop %v1994
        %v1996 = vmul.f32 1.0, %v1995
        %v1997 = vxor.u32 %v1987, 2147483648
        %v1998 = vmul.f32 %v1997, 1.442695
        %v1999 = vpow.pop %v1998
        %v2000 = vadd.f32 %v1999, 1.0
        %v2001 = vrcp.pop %v2000
        %v2002 = vmul.f32 1.0, %v2001
        %v2003 = vtanh.pop %v1988
        %v2004 = vxor.u32 %v1989, 2147483648
        %v2005 = vmul.f32 %v2004, 1.442695
        %v2006 = vpow.pop %v2005
        %v2007 = vadd.f32 %v2006, 1.0
        %v2008 = vrcp.pop %v2007
        %v2009 = vmul.f32 1.0, %v2008
        %v2010 = vmul.f32 %v2002, %v1990
        %v2011 = vmul.f32 %v1996, %v2003
        %v2012 = vadd.f32 %v2010, %v2011
        %v2013 = vtanh.pop %v2012
        %v2014 = vmul.f32 %v2009, %v2013
        %2015 = vst [vmem:[#allocation2] sm:$0xff] %v2014
        %2016 = vst [vmem:[#allocation3] sm:$0xff] %v2012
        %v2017 = vld [vmem:[%s930] sm:$0xff]
        %v2018 = vld [vmem:[#allocation9] sm:$0xff]
        %v2019 = vld [vmem:[#allocation9 + $0x8] sm:$0xff]
        %v2020 = vld [vmem:[#allocation9 + $0x10] sm:$0xff]
        %v2021 = vld [vmem:[#allocation9 + $0x18] sm:$0xff]
        %v2022 = vld [vmem:[#allocation9 + $0x20] sm:$0xff]
        %v2023 = vld [vmem:[#allocation9 + $0x28] sm:$0xff]
        %v2024 = vld [vmem:[#allocation9 + $0x30] sm:$0xff]
        %v2025 = vld [vmem:[#allocation9 + $0x38] sm:$0xff]
        %v2026 = vld [vmem:[#allocation9 + $0x40] sm:$0xff]
        %v2027 = vld [vmem:[#allocation9 + $0x48] sm:$0xff]
        %v2028 = vld [vmem:[#allocation9 + $0x50] sm:$0xff]
        %v2029 = vld [vmem:[#allocation9 + $0x58] sm:$0xff]
        %v2030 = vld [vmem:[#allocation9 + $0x60] sm:$0xff]
        %v2031 = vld [vmem:[#allocation9 + $0x68] sm:$0xff]
        %v2032 = vld [vmem:[#allocation9 + $0x70] sm:$0xff]
        %v2033 = vld [vmem:[#allocation9 + $0x78] sm:$0xff]
        %v2034 = vld [vmem:[#allocation9 + $0x80] sm:$0xff]
        %v2035 = vld [vmem:[#allocation9 + $0x88] sm:$0xff]
        %v2036 = vld [vmem:[#allocation9 + $0x90] sm:$0xff]
        %v2037 = vld [vmem:[#allocation9 + $0x98] sm:$0xff]
        %v2038 = vld [vmem:[#allocation9 + $0xa0] sm:$0xff]
        %v2039 = vld [vmem:[#allocation9 + $0xa8] sm:$0xff]
        %v2040 = vld [vmem:[#allocation9 + $0xb0] sm:$0xff]
        %v2041 = vld [vmem:[#allocation9 + $0xb8] sm:$0xff]
        %v2042 = vld [vmem:[#allocation9 + $0xc0] sm:$0xff]
        %v2043 = vld [vmem:[#allocation9 + $0xc8] sm:$0xff]
        %v2044 = vld [vmem:[#allocation9 + $0xd0] sm:$0xff]
        %v2045 = vld [vmem:[#allocation9 + $0xd8] sm:$0xff]
        %v2046 = vld [vmem:[#allocation9 + $0xe0] sm:$0xff]
        %v2047 = vld [vmem:[#allocation9 + $0xe8] sm:$0xff]
        %v2048 = vld [vmem:[#allocation9 + $0xf0] sm:$0xff]
        %v2049 = vld [vmem:[#allocation9 + $0xf8] sm:$0xff]
        %v2050 = vld [vmem:[#allocation9 + $0x100] sm:$0xff]
        %v2051 = vld [vmem:[#allocation9 + $0x108] sm:$0xff]
        %v2052 = vld [vmem:[#allocation9 + $0x110] sm:$0xff]
        %v2053 = vld [vmem:[#allocation9 + $0x118] sm:$0xff]
        %v2054 = vld [vmem:[#allocation9 + $0x120] sm:$0xff]
        %v2055 = vld [vmem:[#allocation9 + $0x128] sm:$0xff]
        %v2056 = vld [vmem:[#allocation9 + $0x130] sm:$0xff]
        %v2057 = vld [vmem:[#allocation9 + $0x138] sm:$0xff]
        %v2058 = vld [vmem:[#allocation9 + $0x140] sm:$0xff]
        %v2059 = vld [vmem:[#allocation9 + $0x148] sm:$0xff]
        %v2060 = vld [vmem:[#allocation9 + $0x150] sm:$0xff]
        %v2061 = vld [vmem:[#allocation9 + $0x158] sm:$0xff]
        %v2062 = vld [vmem:[#allocation9 + $0x160] sm:$0xff]
        %v2063 = vld [vmem:[#allocation9 + $0x168] sm:$0xff]
        %v2064 = vld [vmem:[#allocation9 + $0x170] sm:$0xff]
        %v2065 = vld [vmem:[#allocation9 + $0x178] sm:$0xff]
        %v2066 = vld [vmem:[#allocation9 + $0x180] sm:$0xff]
        %v2067 = vld [vmem:[#allocation9 + $0x188] sm:$0xff]
        %v2068 = vld [vmem:[#allocation9 + $0x190] sm:$0xff]
        %v2069 = vld [vmem:[#allocation9 + $0x198] sm:$0xff]
        %v2070 = vld [vmem:[#allocation9 + $0x1a0] sm:$0xff]
        %v2071 = vld [vmem:[#allocation9 + $0x1a8] sm:$0xff]
        %v2072 = vld [vmem:[#allocation9 + $0x1b0] sm:$0xff]
        %v2073 = vld [vmem:[#allocation9 + $0x1b8] sm:$0xff]
        %v2074 = vld [vmem:[#allocation9 + $0x1c0] sm:$0xff]
        %v2075 = vld [vmem:[#allocation9 + $0x1c8] sm:$0xff]
        %v2076 = vld [vmem:[#allocation9 + $0x1d0] sm:$0xff]
        %v2077 = vld [vmem:[#allocation9 + $0x1d8] sm:$0xff]
        %v2078 = vld [vmem:[#allocation9 + $0x1e0] sm:$0xff]
        %v2079 = vld [vmem:[#allocation9 + $0x1e8] sm:$0xff]
        %v2080 = vld [vmem:[#allocation9 + $0x1f0] sm:$0xff]
        %v2081 = vld [vmem:[#allocation9 + $0x1f8] sm:$0xff]
        %v2082 = vld [vmem:[#allocation9 + $0x200] sm:$0xff]
        %v2083 = vld [vmem:[#allocation9 + $0x208] sm:$0xff]
        %v2084 = vld [vmem:[#allocation9 + $0x210] sm:$0xff]
        %v2085 = vld [vmem:[#allocation9 + $0x218] sm:$0xff]
        %v2086 = vld [vmem:[#allocation9 + $0x220] sm:$0xff]
        %v2087 = vld [vmem:[#allocation9 + $0x228] sm:$0xff]
        %v2088 = vld [vmem:[#allocation9 + $0x230] sm:$0xff]
        %v2089 = vld [vmem:[#allocation9 + $0x238] sm:$0xff]
        %v2090 = vld [vmem:[#allocation9 + $0x240] sm:$0xff]
        %v2091 = vld [vmem:[#allocation9 + $0x248] sm:$0xff]
        %v2092 = vld [vmem:[#allocation9 + $0x250] sm:$0xff]
        %v2093 = vld [vmem:[#allocation9 + $0x258] sm:$0xff]
        %v2094 = vld [vmem:[#allocation9 + $0x260] sm:$0xff]
        %v2095 = vld [vmem:[#allocation9 + $0x268] sm:$0xff]
        %v2096 = vld [vmem:[#allocation9 + $0x270] sm:$0xff]
        %v2097 = vld [vmem:[#allocation9 + $0x278] sm:$0xff]
        %v2098 = vld [vmem:[#allocation9 + $0x280] sm:$0xff]
        %v2099 = vld [vmem:[#allocation9 + $0x288] sm:$0xff]
        %v2100 = vld [vmem:[#allocation9 + $0x290] sm:$0xff]
        %v2101 = vld [vmem:[#allocation9 + $0x298] sm:$0xff]
        %v2102 = vld [vmem:[#allocation9 + $0x2a0] sm:$0xff]
        %v2103 = vld [vmem:[#allocation9 + $0x2a8] sm:$0xff]
        %v2104 = vld [vmem:[#allocation9 + $0x2b0] sm:$0xff]
        %v2105 = vld [vmem:[#allocation9 + $0x2b8] sm:$0xff]
        %v2106 = vld [vmem:[#allocation9 + $0x2c0] sm:$0xff]
        %v2107 = vld [vmem:[#allocation9 + $0x2c8] sm:$0xff]
        %v2108 = vld [vmem:[#allocation9 + $0x2d0] sm:$0xff]
        %v2109 = vld [vmem:[#allocation9 + $0x2d8] sm:$0xff]
        %v2110 = vld [vmem:[#allocation9 + $0x2e0] sm:$0xff]
        %v2111 = vld [vmem:[#allocation9 + $0x2e8] sm:$0xff]
        %v2112 = vld [vmem:[#allocation9 + $0x2f0] sm:$0xff]
        %v2113 = vld [vmem:[#allocation9 + $0x2f8] sm:$0xff]
        %v2114 = vld [vmem:[#allocation9 + $0x300] sm:$0xff]
        %v2115 = vld [vmem:[#allocation9 + $0x308] sm:$0xff]
        %v2116 = vld [vmem:[#allocation9 + $0x310] sm:$0xff]
        %v2117 = vld [vmem:[#allocation9 + $0x318] sm:$0xff]
        %v2118 = vld [vmem:[#allocation9 + $0x320] sm:$0xff]
        %v2119 = vld [vmem:[#allocation9 + $0x328] sm:$0xff]
        %v2120 = vld [vmem:[#allocation9 + $0x330] sm:$0xff]
        %v2121 = vld [vmem:[#allocation9 + $0x338] sm:$0xff]
        %v2122 = vld [vmem:[#allocation9 + $0x340] sm:$0xff]
        %v2123 = vld [vmem:[#allocation9 + $0x348] sm:$0xff]
        %v2124 = vld [vmem:[#allocation9 + $0x350] sm:$0xff]
        %v2125 = vld [vmem:[#allocation9 + $0x358] sm:$0xff]
        %v2126 = vld [vmem:[#allocation9 + $0x360] sm:$0xff]
        %v2127 = vld [vmem:[#allocation9 + $0x368] sm:$0xff]
        %v2128 = vld [vmem:[#allocation9 + $0x370] sm:$0xff]
        %v2129 = vld [vmem:[#allocation9 + $0x378] sm:$0xff]
        %v2130 = vld [vmem:[#allocation9 + $0x380] sm:$0xff]
        %v2131 = vld [vmem:[#allocation9 + $0x388] sm:$0xff]
        %v2132 = vld [vmem:[#allocation9 + $0x390] sm:$0xff]
        %v2133 = vld [vmem:[#allocation9 + $0x398] sm:$0xff]
        %v2134 = vld [vmem:[#allocation9 + $0x3a0] sm:$0xff]
        %v2135 = vld [vmem:[#allocation9 + $0x3a8] sm:$0xff]
        %v2136 = vld [vmem:[#allocation9 + $0x3b0] sm:$0xff]
        %v2137 = vld [vmem:[#allocation9 + $0x3b8] sm:$0xff]
        %v2138 = vld [vmem:[#allocation9 + $0x3c0] sm:$0xff]
        %v2139 = vld [vmem:[#allocation9 + $0x3c8] sm:$0xff]
        %v2140 = vld [vmem:[#allocation9 + $0x3d0] sm:$0xff]
        %v2141 = vld [vmem:[#allocation9 + $0x3d8] sm:$0xff]
        %v2142 = vld [vmem:[#allocation9 + $0x3e0] sm:$0xff]
        %v2143 = vld [vmem:[#allocation9 + $0x3e8] sm:$0xff]
        %v2144 = vld [vmem:[#allocation9 + $0x3f0] sm:$0xff]
        %v2145 = vld [vmem:[#allocation9 + $0x3f8] sm:$0xff]
        %2146 = vmatprep.subr.mxu0 %v2019
        %2147 = vmatpush1.msra.mxu0 %v2018
        %2148 = vmatprep.subr.mxu0 %v2023
        %2149 = vmatpush1.msra.mxu0 %v2022
        %2150 = vmatprep.subr.mxu0 %v2027
        %2151 = vmatpush1.msra.mxu0 %v2026
        %2152 = vmatprep.subr.mxu0 %v2031
        %2153 = vmatpush1.msra.mxu0 %v2030
        %2154 = vmatprep.subr.mxu0 %v2035
        %2155 = vmatpush1.msra.mxu0 %v2034
        %2156 = vmatprep.subr.mxu0 %v2039
        %2157 = vmatpush1.msra.mxu0 %v2038
        %2158 = vmatprep.subr.mxu0 %v2043
        %2159 = vmatpush1.msra.mxu0 %v2042
        %2160 = vmatprep.subr.mxu0 %v2047
        %2161 = vmatpush1.msra.mxu0 %v2046
        %2162 = vmatprep.subr.mxu0 %v2051
        %2163 = vmatpush1.msra.mxu0 %v2050
        %2164 = vmatprep.subr.mxu0 %v2055
        %2165 = vmatpush1.msra.mxu0 %v2054
        %2166 = vmatprep.subr.mxu0 %v2059
        %2167 = vmatpush1.msra.mxu0 %v2058
        %2168 = vmatprep.subr.mxu0 %v2063
        %2169 = vmatpush1.msra.mxu0 %v2062
        %2170 = vmatprep.subr.mxu0 %v2067
        %2171 = vmatpush1.msra.mxu0 %v2066
        %2172 = vmatprep.subr.mxu0 %v2071
        %2173 = vmatpush1.msra.mxu0 %v2070
        %2174 = vmatprep.subr.mxu0 %v2075
        %2175 = vmatpush1.msra.mxu0 %v2074
        %2176 = vmatprep.subr.mxu0 %v2079
        %2177 = vmatpush1.msra.mxu0 %v2078
        %2178 = vmatprep.subr.mxu0 %v2083
        %2179 = vmatpush1.msra.mxu0 %v2082
        %2180 = vmatprep.subr.mxu0 %v2087
        %2181 = vmatpush1.msra.mxu0 %v2086
        %2182 = vmatprep.subr.mxu0 %v2091
        %2183 = vmatpush1.msra.mxu0 %v2090
        %2184 = vmatprep.subr.mxu0 %v2095
        %2185 = vmatpush1.msra.mxu0 %v2094
        %2186 = vmatprep.subr.mxu0 %v2099
        %2187 = vmatpush1.msra.mxu0 %v2098
        %2188 = vmatprep.subr.mxu0 %v2103
        %2189 = vmatpush1.msra.mxu0 %v2102
        %2190 = vmatprep.subr.mxu0 %v2107
        %2191 = vmatpush1.msra.mxu0 %v2106
        %2192 = vmatprep.subr.mxu0 %v2111
        %2193 = vmatpush1.msra.mxu0 %v2110
        %2194 = vmatprep.subr.mxu0 %v2115
        %2195 = vmatpush1.msra.mxu0 %v2114
        %2196 = vmatprep.subr.mxu0 %v2119
        %2197 = vmatpush1.msra.mxu0 %v2118
        %2198 = vmatprep.subr.mxu0 %v2123
        %2199 = vmatpush1.msra.mxu0 %v2122
        %2200 = vmatprep.subr.mxu0 %v2127
        %2201 = vmatpush1.msra.mxu0 %v2126
        %2202 = vmatprep.subr.mxu0 %v2131
        %2203 = vmatpush1.msra.mxu0 %v2130
        %2204 = vmatprep.subr.mxu0 %v2135
        %2205 = vmatpush1.msra.mxu0 %v2134
        %2206 = vmatprep.subr.mxu0 %v2139
        %2207 = vmatpush1.msra.mxu0 %v2138
        %2208 = vmatprep.subr.mxu0 %v2143
        %2209 = vmatpush1.msra.mxu0 %v2142
        %2210 = vmatprep.mubr.f32.mxu0 %v2017
        %2211 = vmatmul.mubr.f32.gmra.mrb[0].mxu0 %v2014
        %v2212 = vpop.f32.mrb[0].mxu0
        %v2213 = vadd.f32 %v671, %v2212
        %v2214 = vpop.f32.mrb[0].mxu0
        %v2215 = vadd.f32 %v675, %v2214
        %2216 = vdwg.mxu0
        %2217 = vmatprep.subr.mxu0 %v2021
        %2218 = vmatpush1.msra.mxu0 %v2020
        %2219 = vmatprep.subr.mxu0 %v2025
        %2220 = vmatpush1.msra.mxu0 %v2024
        %2221 = vmatprep.subr.mxu0 %v2029
        %2222 = vmatpush1.msra.mxu0 %v2028
        %2223 = vmatprep.subr.mxu0 %v2033
        %2224 = vmatpush1.msra.mxu0 %v2032
        %2225 = vmatprep.subr.mxu0 %v2037
        %2226 = vmatpush1.msra.mxu0 %v2036
        %2227 = vmatprep.subr.mxu0 %v2041
        %2228 = vmatpush1.msra.mxu0 %v2040
        %2229 = vmatprep.subr.mxu0 %v2045
        %2230 = vmatpush1.msra.mxu0 %v2044
        %2231 = vmatprep.subr.mxu0 %v2049
        %2232 = vmatpush1.msra.mxu0 %v2048
        %2233 = vmatprep.subr.mxu0 %v2053
        %2234 = vmatpush1.msra.mxu0 %v2052
        %2235 = vmatprep.subr.mxu0 %v2057
        %2236 = vmatpush1.msra.mxu0 %v2056
        %2237 = vmatprep.subr.mxu0 %v2061
        %2238 = vmatpush1.msra.mxu0 %v2060
        %2239 = vmatprep.subr.mxu0 %v2065
        %2240 = vmatpush1.msra.mxu0 %v2064
        %2241 = vmatprep.subr.mxu0 %v2069
        %2242 = vmatpush1.msra.mxu0 %v2068
        %2243 = vmatprep.subr.mxu0 %v2073
        %2244 = vmatpush1.msra.mxu0 %v2072
        %2245 = vmatprep.subr.mxu0 %v2077
        %2246 = vmatpush1.msra.mxu0 %v2076
        %2247 = vmatprep.subr.mxu0 %v2081
        %2248 = vmatpush1.msra.mxu0 %v2080
        %2249 = vmatprep.subr.mxu0 %v2085
        %2250 = vmatpush1.msra.mxu0 %v2084
        %2251 = vmatprep.subr.mxu0 %v2089
        %2252 = vmatpush1.msra.mxu0 %v2088
        %2253 = vmatprep.subr.mxu0 %v2093
        %2254 = vmatpush1.msra.mxu0 %v2092
        %2255 = vmatprep.subr.mxu0 %v2097
        %2256 = vmatpush1.msra.mxu0 %v2096
        %2257 = vmatprep.subr.mxu0 %v2101
        %2258 = vmatpush1.msra.mxu0 %v2100
        %2259 = vmatprep.subr.mxu0 %v2105
        %2260 = vmatpush1.msra.mxu0 %v2104
        %2261 = vmatprep.subr.mxu0 %v2109
        %2262 = vmatpush1.msra.mxu0 %v2108
        %2263 = vmatprep.subr.mxu0 %v2113
        %2264 = vmatpush1.msra.mxu0 %v2112
        %2265 = vmatprep.subr.mxu0 %v2117
        %2266 = vmatpush1.msra.mxu0 %v2116
        %2267 = vmatprep.subr.mxu0 %v2121
        %2268 = vmatpush1.msra.mxu0 %v2120
        %2269 = vmatprep.subr.mxu0 %v2125
        %2270 = vmatpush1.msra.mxu0 %v2124
        %2271 = vmatprep.subr.mxu0 %v2129
        %2272 = vmatpush1.msra.mxu0 %v2128
        %2273 = vmatprep.subr.mxu0 %v2133
        %2274 = vmatpush1.msra.mxu0 %v2132
        %2275 = vmatprep.subr.mxu0 %v2137
        %2276 = vmatpush1.msra.mxu0 %v2136
        %2277 = vmatprep.subr.mxu0 %v2141
        %2278 = vmatpush1.msra.mxu0 %v2140
        %2279 = vmatprep.subr.mxu0 %v2145
        %2280 = vmatpush1.msra.mxu0 %v2144
        %2281 = vmatprep.mubr.f32.mxu0 %v2017
        %2282 = vmatmul.mubr.f32.gmra.mrb[0].mxu0 %v2014
        %v2283 = vpop.f32.mrb[0].mxu0
        %v2284 = vadd.f32 %v679, %v2283
        %v2285 = vpop.f32.mrb[0].mxu0
        %v2286 = vadd.f32 %v683, %v2285
        %2287 = vdwg.mxu0
        %v2288 = vld [vmem:[%s1202] sm:$0xff]
        %v2289 = vxor.u32 %v2213, 2147483648
        %v2290 = vmul.f32 %v2289, 1.442695
        %v2291 = vpow.pop %v2290
        %v2292 = vadd.f32 %v2291, 1.0
        %v2293 = vrcp.pop %v2292
        %v2294 = vmul.f32 1.0, %v2293
        %v2295 = vxor.u32 %v2215, 2147483648
        %v2296 = vmul.f32 %v2295, 1.442695
        %v2297 = vpow.pop %v2296
        %v2298 = vadd.f32 %v2297, 1.0
        %v2299 = vrcp.pop %v2298
        %v2300 = vmul.f32 1.0, %v2299
        %v2301 = vtanh.pop %v2284
        %v2302 = vxor.u32 %v2286, 2147483648
        %v2303 = vmul.f32 %v2302, 1.442695
        %v2304 = vpow.pop %v2303
        %v2305 = vadd.f32 %v2304, 1.0
        %v2306 = vrcp.pop %v2305
        %v2307 = vmul.f32 1.0, %v2306
        %v2308 = vmul.f32 %v2300, %v2288
        %v2309 = vmul.f32 %v2294, %v2301
        %v2310 = vadd.f32 %v2308, %v2309
        %v2311 = vtanh.pop %v2310
        %v2312 = vmul.f32 %v2307, %v2311
        %2313 = vst [vmem:[%s930] sm:$0xff] %v2312
        %2314 = vst [vmem:[%s1202] sm:$0xff] %v2310
        %s2315 = scalar_lea.vmem [#allocation5], 16
        %2316 = vst [vmem:[%s2315] sm:$0xff] %v2312
        %v2317 = vld [vmem:[#allocation2] sm:$0xff]
        %s2318 = scalar_lea.vmem [#allocation4], 96
        %v2319 = vld [vmem:[%s2318] sm:$0xff]
        %v2320 = vld [vmem:[%s2318 + $0x8] sm:$0xff]
        %v2321 = vld [vmem:[%s2318 + $0x10] sm:$0xff]
        %v2322 = vld [vmem:[%s2318 + $0x18] sm:$0xff]
        %v2323 = vld [vmem:[#allocation6] sm:$0xff]
        %v2324 = vld [vmem:[#allocation6 + $0x8] sm:$0xff]
        %v2325 = vld [vmem:[#allocation6 + $0x10] sm:$0xff]
        %v2326 = vld [vmem:[#allocation6 + $0x18] sm:$0xff]
        %v2327 = vld [vmem:[#allocation6 + $0x20] sm:$0xff]
        %v2328 = vld [vmem:[#allocation6 + $0x28] sm:$0xff]
        %v2329 = vld [vmem:[#allocation6 + $0x30] sm:$0xff]
        %v2330 = vld [vmem:[#allocation6 + $0x38] sm:$0xff]
        %v2331 = vld [vmem:[#allocation6 + $0x40] sm:$0xff]
        %v2332 = vld [vmem:[#allocation6 + $0x48] sm:$0xff]
        %v2333 = vld [vmem:[#allocation6 + $0x50] sm:$0xff]
        %v2334 = vld [vmem:[#allocation6 + $0x58] sm:$0xff]
        %v2335 = vld [vmem:[#allocation6 + $0x60] sm:$0xff]
        %v2336 = vld [vmem:[#allocation6 + $0x68] sm:$0xff]
        %v2337 = vld [vmem:[#allocation6 + $0x70] sm:$0xff]
        %v2338 = vld [vmem:[#allocation6 + $0x78] sm:$0xff]
        %v2339 = vld [vmem:[#allocation6 + $0x80] sm:$0xff]
        %v2340 = vld [vmem:[#allocation6 + $0x88] sm:$0xff]
        %v2341 = vld [vmem:[#allocation6 + $0x90] sm:$0xff]
        %v2342 = vld [vmem:[#allocation6 + $0x98] sm:$0xff]
        %v2343 = vld [vmem:[#allocation6 + $0xa0] sm:$0xff]
        %v2344 = vld [vmem:[#allocation6 + $0xa8] sm:$0xff]
        %v2345 = vld [vmem:[#allocation6 + $0xb0] sm:$0xff]
        %v2346 = vld [vmem:[#allocation6 + $0xb8] sm:$0xff]
        %v2347 = vld [vmem:[#allocation6 + $0xc0] sm:$0xff]
        %v2348 = vld [vmem:[#allocation6 + $0xc8] sm:$0xff]
        %v2349 = vld [vmem:[#allocation6 + $0xd0] sm:$0xff]
        %v2350 = vld [vmem:[#allocation6 + $0xd8] sm:$0xff]
        %v2351 = vld [vmem:[#allocation6 + $0xe0] sm:$0xff]
        %v2352 = vld [vmem:[#allocation6 + $0xe8] sm:$0xff]
        %v2353 = vld [vmem:[#allocation6 + $0xf0] sm:$0xff]
        %v2354 = vld [vmem:[#allocation6 + $0xf8] sm:$0xff]
        %v2355 = vld [vmem:[#allocation6 + $0x100] sm:$0xff]
        %v2356 = vld [vmem:[#allocation6 + $0x108] sm:$0xff]
        %v2357 = vld [vmem:[#allocation6 + $0x110] sm:$0xff]
        %v2358 = vld [vmem:[#allocation6 + $0x118] sm:$0xff]
        %v2359 = vld [vmem:[#allocation6 + $0x120] sm:$0xff]
        %v2360 = vld [vmem:[#allocation6 + $0x128] sm:$0xff]
        %v2361 = vld [vmem:[#allocation6 + $0x130] sm:$0xff]
        %v2362 = vld [vmem:[#allocation6 + $0x138] sm:$0xff]
        %v2363 = vld [vmem:[#allocation6 + $0x140] sm:$0xff]
        %v2364 = vld [vmem:[#allocation6 + $0x148] sm:$0xff]
        %v2365 = vld [vmem:[#allocation6 + $0x150] sm:$0xff]
        %v2366 = vld [vmem:[#allocation6 + $0x158] sm:$0xff]
        %v2367 = vld [vmem:[#allocation6 + $0x160] sm:$0xff]
        %v2368 = vld [vmem:[#allocation6 + $0x168] sm:$0xff]
        %v2369 = vld [vmem:[#allocation6 + $0x170] sm:$0xff]
        %v2370 = vld [vmem:[#allocation6 + $0x178] sm:$0xff]
        %v2371 = vld [vmem:[#allocation6 + $0x180] sm:$0xff]
        %v2372 = vld [vmem:[#allocation6 + $0x188] sm:$0xff]
        %v2373 = vld [vmem:[#allocation6 + $0x190] sm:$0xff]
        %v2374 = vld [vmem:[#allocation6 + $0x198] sm:$0xff]
        %v2375 = vld [vmem:[#allocation6 + $0x1a0] sm:$0xff]
        %v2376 = vld [vmem:[#allocation6 + $0x1a8] sm:$0xff]
        %v2377 = vld [vmem:[#allocation6 + $0x1b0] sm:$0xff]
        %v2378 = vld [vmem:[#allocation6 + $0x1b8] sm:$0xff]
        %v2379 = vld [vmem:[#allocation6 + $0x1c0] sm:$0xff]
        %v2380 = vld [vmem:[#allocation6 + $0x1c8] sm:$0xff]
        %v2381 = vld [vmem:[#allocation6 + $0x1d0] sm:$0xff]
        %v2382 = vld [vmem:[#allocation6 + $0x1d8] sm:$0xff]
        %v2383 = vld [vmem:[#allocation6 + $0x1e0] sm:$0xff]
        %v2384 = vld [vmem:[#allocation6 + $0x1e8] sm:$0xff]
        %v2385 = vld [vmem:[#allocation6 + $0x1f0] sm:$0xff]
        %v2386 = vld [vmem:[#allocation6 + $0x1f8] sm:$0xff]
        %2387 = vmatprep.subr.mxu0 %v2324
        %2388 = vmatpush1.msra.mxu0 %v2323
        %2389 = vmatprep.subr.mxu0 %v2328
        %2390 = vmatpush1.msra.mxu0 %v2327
        %2391 = vmatprep.subr.mxu0 %v2332
        %2392 = vmatpush1.msra.mxu0 %v2331
        %2393 = vmatprep.subr.mxu0 %v2336
        %2394 = vmatpush1.msra.mxu0 %v2335
        %2395 = vmatprep.subr.mxu0 %v2340
        %2396 = vmatpush1.msra.mxu0 %v2339
        %2397 = vmatprep.subr.mxu0 %v2344
        %2398 = vmatpush1.msra.mxu0 %v2343
        %2399 = vmatprep.subr.mxu0 %v2348
        %2400 = vmatpush1.msra.mxu0 %v2347
        %2401 = vmatprep.subr.mxu0 %v2352
        %2402 = vmatpush1.msra.mxu0 %v2351
        %2403 = vmatprep.subr.mxu0 %v2356
        %2404 = vmatpush1.msra.mxu0 %v2355
        %2405 = vmatprep.subr.mxu0 %v2360
        %2406 = vmatpush1.msra.mxu0 %v2359
        %2407 = vmatprep.subr.mxu0 %v2364
        %2408 = vmatpush1.msra.mxu0 %v2363
        %2409 = vmatprep.subr.mxu0 %v2368
        %2410 = vmatpush1.msra.mxu0 %v2367
        %2411 = vmatprep.subr.mxu0 %v2372
        %2412 = vmatpush1.msra.mxu0 %v2371
        %2413 = vmatprep.subr.mxu0 %v2376
        %2414 = vmatpush1.msra.mxu0 %v2375
        %2415 = vmatprep.subr.mxu0 %v2380
        %2416 = vmatpush1.msra.mxu0 %v2379
        %2417 = vmatprep.subr.mxu0 %v2384
        %2418 = vmatpush1.msra.mxu0 %v2383
        %2419 = vmatprep.subr.mxu0 0.0
        %2420 = vmatpush1.msra.mxu0 0.0
        %2421 = vmatprep.subr.mxu0 0.0
        %2422 = vmatpush1.msra.mxu0 0.0
        %2423 = vmatprep.subr.mxu0 0.0
        %2424 = vmatpush1.msra.mxu0 0.0
        %2425 = vmatprep.subr.mxu0 0.0
        %2426 = vmatpush1.msra.mxu0 0.0
        %2427 = vmatprep.subr.mxu0 0.0
        %2428 = vmatpush1.msra.mxu0 0.0
        %2429 = vmatprep.subr.mxu0 0.0
        %2430 = vmatpush1.msra.mxu0 0.0
        %2431 = vmatprep.subr.mxu0 0.0
        %2432 = vmatpush1.msra.mxu0 0.0
        %2433 = vmatprep.subr.mxu0 0.0
        %2434 = vmatpush1.msra.mxu0 0.0
        %2435 = vmatprep.subr.mxu0 0.0
        %2436 = vmatpush1.msra.mxu0 0.0
        %2437 = vmatprep.subr.mxu0 0.0
        %2438 = vmatpush1.msra.mxu0 0.0
        %2439 = vmatprep.subr.mxu0 0.0
        %2440 = vmatpush1.msra.mxu0 0.0
        %2441 = vmatprep.subr.mxu0 0.0
        %2442 = vmatpush1.msra.mxu0 0.0
        %2443 = vmatprep.subr.mxu0 0.0
        %2444 = vmatpush1.msra.mxu0 0.0
        %2445 = vmatprep.subr.mxu0 0.0
        %2446 = vmatpush1.msra.mxu0 0.0
        %2447 = vmatprep.subr.mxu0 0.0
        %2448 = vmatpush1.msra.mxu0 0.0
        %2449 = vmatprep.subr.mxu0 0.0
        %2450 = vmatpush1.msra.mxu0 0.0
        %2451 = vmatprep.mubr.f32.mxu0 0.0
        %2452 = vmatmul.mubr.f32.gmra.mrb[0].mxu0 %v2317
        %v2453 = vpop.f32.mrb[0].mxu0
        %v2454 = vadd.f32 0.0, %v2453
        %v2455 = vpop.f32.mrb[0].mxu0
        %v2456 = vadd.f32 0.0, %v2455
        %2457 = vdwg.mxu0
        %2458 = vmatprep.subr.mxu0 %v2326
        %2459 = vmatpush1.msra.mxu0 %v2325
        %2460 = vmatprep.subr.mxu0 %v2330
        %2461 = vmatpush1.msra.mxu0 %v2329
        %2462 = vmatprep.subr.mxu0 %v2334
        %2463 = vmatpush1.msra.mxu0 %v2333
        %2464 = vmatprep.subr.mxu0 %v2338
        %2465 = vmatpush1.msra.mxu0 %v2337
        %2466 = vmatprep.subr.mxu0 %v2342
        %2467 = vmatpush1.msra.mxu0 %v2341
        %2468 = vmatprep.subr.mxu0 %v2346
        %2469 = vmatpush1.msra.mxu0 %v2345
        %2470 = vmatprep.subr.mxu0 %v2350
        %2471 = vmatpush1.msra.mxu0 %v2349
        %2472 = vmatprep.subr.mxu0 %v2354
        %2473 = vmatpush1.msra.mxu0 %v2353
        %2474 = vmatprep.subr.mxu0 %v2358
        %2475 = vmatpush1.msra.mxu0 %v2357
        %2476 = vmatprep.subr.mxu0 %v2362
        %2477 = vmatpush1.msra.mxu0 %v2361
        %2478 = vmatprep.subr.mxu0 %v2366
        %2479 = vmatpush1.msra.mxu0 %v2365
        %2480 = vmatprep.subr.mxu0 %v2370
        %2481 = vmatpush1.msra.mxu0 %v2369
        %2482 = vmatprep.subr.mxu0 %v2374
        %2483 = vmatpush1.msra.mxu0 %v2373
        %2484 = vmatprep.subr.mxu0 %v2378
        %2485 = vmatpush1.msra.mxu0 %v2377
        %2486 = vmatprep.subr.mxu0 %v2382
        %2487 = vmatpush1.msra.mxu0 %v2381
        %2488 = vmatprep.subr.mxu0 %v2386
        %2489 = vmatpush1.msra.mxu0 %v2385
        %2490 = vmatprep.subr.mxu0 0.0
        %2491 = vmatpush1.msra.mxu0 0.0
        %2492 = vmatprep.subr.mxu0 0.0
        %2493 = vmatpush1.msra.mxu0 0.0
        %2494 = vmatprep.subr.mxu0 0.0
        %2495 = vmatpush1.msra.mxu0 0.0
        %2496 = vmatprep.subr.mxu0 0.0
        %2497 = vmatpush1.msra.mxu0 0.0
        %2498 = vmatprep.subr.mxu0 0.0
        %2499 = vmatpush1.msra.mxu0 0.0
        %2500 = vmatprep.subr.mxu0 0.0
        %2501 = vmatpush1.msra.mxu0 0.0
        %2502 = vmatprep.subr.mxu0 0.0
        %2503 = vmatpush1.msra.mxu0 0.0
        %2504 = vmatprep.subr.mxu0 0.0
        %2505 = vmatpush1.msra.mxu0 0.0
        %2506 = vmatprep.subr.mxu0 0.0
        %2507 = vmatpush1.msra.mxu0 0.0
        %2508 = vmatprep.subr.mxu0 0.0
        %2509 = vmatpush1.msra.mxu0 0.0
        %2510 = vmatprep.subr.mxu0 0.0
        %2511 = vmatpush1.msra.mxu0 0.0
        %2512 = vmatprep.subr.mxu0 0.0
        %2513 = vmatpush1.msra.mxu0 0.0
        %2514 = vmatprep.subr.mxu0 0.0
        %2515 = vmatpush1.msra.mxu0 0.0
        %2516 = vmatprep.subr.mxu0 0.0
        %2517 = vmatpush1.msra.mxu0 0.0
        %2518 = vmatprep.subr.mxu0 0.0
        %2519 = vmatpush1.msra.mxu0 0.0
        %2520 = vmatprep.subr.mxu0 0.0
        %2521 = vmatpush1.msra.mxu0 0.0
        %2522 = vmatprep.mubr.f32.mxu0 0.0
        %2523 = vmatmul.mubr.f32.gmra.mrb[0].mxu0 %v2317
        %v2524 = vpop.f32.mrb[0].mxu0
        %v2525 = vadd.f32 0.0, %v2524
        %v2526 = vpop.f32.mrb[0].mxu0
        %v2527 = vadd.f32 0.0, %v2526
        %2528 = vdwg.mxu0
        %v2529 = vadd.f32 %v2319, %v2454
        %v2530 = vadd.f32 %v2320, %v2456
        %v2531 = vadd.f32 %v2321, %v2525
        %v2532 = vadd.f32 %v2322, %v2527
        %v2533 = vld [vmem:[#allocation3] sm:$0xff]
        %v2534 = vxor.u32 %v2529, 2147483648
        %v2535 = vmul.f32 %v2534, 1.442695
        %v2536 = vpow.pop %v2535
        %v2537 = vadd.f32 %v2536, 1.0
        %v2538 = vrcp.pop %v2537
        %v2539 = vmul.f32 1.0, %v2538
        %v2540 = vxor.u32 %v2530, 2147483648
        %v2541 = vmul.f32 %v2540, 1.442695
        %v2542 = vpow.pop %v2541
        %v2543 = vadd.f32 %v2542, 1.0
        %v2544 = vrcp.pop %v2543
        %v2545 = vmul.f32 1.0, %v2544
        %v2546 = vtanh.pop %v2531
        %v2547 = vxor.u32 %v2532, 2147483648
        %v2548 = vmul.f32 %v2547, 1.442695
        %v2549 = vpow.pop %v2548
        %v2550 = vadd.f32 %v2549, 1.0
        %v2551 = vrcp.pop %v2550
        %v2552 = vmul.f32 1.0, %v2551
        %v2553 = vmul.f32 %v2545, %v2533
        %v2554 = vmul.f32 %v2539, %v2546
        %v2555 = vadd.f32 %v2553, %v2554
        %v2556 = vtanh.pop %v2555
        %v2557 = vmul.f32 %v2552, %v2556
        %2558 = vst [vmem:[#allocation2] sm:$0xff] %v2557
        %2559 = vst [vmem:[#allocation3] sm:$0xff] %v2555
        %v2560 = vld [vmem:[%s930] sm:$0xff]
        %v2561 = vld [vmem:[#allocation9] sm:$0xff]
        %v2562 = vld [vmem:[#allocation9 + $0x8] sm:$0xff]
        %v2563 = vld [vmem:[#allocation9 + $0x10] sm:$0xff]
        %v2564 = vld [vmem:[#allocation9 + $0x18] sm:$0xff]
        %v2565 = vld [vmem:[#allocation9 + $0x20] sm:$0xff]
        %v2566 = vld [vmem:[#allocation9 + $0x28] sm:$0xff]
        %v2567 = vld [vmem:[#allocation9 + $0x30] sm:$0xff]
        %v2568 = vld [vmem:[#allocation9 + $0x38] sm:$0xff]
        %v2569 = vld [vmem:[#allocation9 + $0x40] sm:$0xff]
        %v2570 = vld [vmem:[#allocation9 + $0x48] sm:$0xff]
        %v2571 = vld [vmem:[#allocation9 + $0x50] sm:$0xff]
        %v2572 = vld [vmem:[#allocation9 + $0x58] sm:$0xff]
        %v2573 = vld [vmem:[#allocation9 + $0x60] sm:$0xff]
        %v2574 = vld [vmem:[#allocation9 + $0x68] sm:$0xff]
        %v2575 = vld [vmem:[#allocation9 + $0x70] sm:$0xff]
        %v2576 = vld [vmem:[#allocation9 + $0x78] sm:$0xff]
        %v2577 = vld [vmem:[#allocation9 + $0x80] sm:$0xff]
        %v2578 = vld [vmem:[#allocation9 + $0x88] sm:$0xff]
        %v2579 = vld [vmem:[#allocation9 + $0x90] sm:$0xff]
        %v2580 = vld [vmem:[#allocation9 + $0x98] sm:$0xff]
        %v2581 = vld [vmem:[#allocation9 + $0xa0] sm:$0xff]
        %v2582 = vld [vmem:[#allocation9 + $0xa8] sm:$0xff]
        %v2583 = vld [vmem:[#allocation9 + $0xb0] sm:$0xff]
        %v2584 = vld [vmem:[#allocation9 + $0xb8] sm:$0xff]
        %v2585 = vld [vmem:[#allocation9 + $0xc0] sm:$0xff]
        %v2586 = vld [vmem:[#allocation9 + $0xc8] sm:$0xff]
        %v2587 = vld [vmem:[#allocation9 + $0xd0] sm:$0xff]
        %v2588 = vld [vmem:[#allocation9 + $0xd8] sm:$0xff]
        %v2589 = vld [vmem:[#allocation9 + $0xe0] sm:$0xff]
        %v2590 = vld [vmem:[#allocation9 + $0xe8] sm:$0xff]
        %v2591 = vld [vmem:[#allocation9 + $0xf0] sm:$0xff]
        %v2592 = vld [vmem:[#allocation9 + $0xf8] sm:$0xff]
        %v2593 = vld [vmem:[#allocation9 + $0x100] sm:$0xff]
        %v2594 = vld [vmem:[#allocation9 + $0x108] sm:$0xff]
        %v2595 = vld [vmem:[#allocation9 + $0x110] sm:$0xff]
        %v2596 = vld [vmem:[#allocation9 + $0x118] sm:$0xff]
        %v2597 = vld [vmem:[#allocation9 + $0x120] sm:$0xff]
        %v2598 = vld [vmem:[#allocation9 + $0x128] sm:$0xff]
        %v2599 = vld [vmem:[#allocation9 + $0x130] sm:$0xff]
        %v2600 = vld [vmem:[#allocation9 + $0x138] sm:$0xff]
        %v2601 = vld [vmem:[#allocation9 + $0x140] sm:$0xff]
        %v2602 = vld [vmem:[#allocation9 + $0x148] sm:$0xff]
        %v2603 = vld [vmem:[#allocation9 + $0x150] sm:$0xff]
        %v2604 = vld [vmem:[#allocation9 + $0x158] sm:$0xff]
        %v2605 = vld [vmem:[#allocation9 + $0x160] sm:$0xff]
        %v2606 = vld [vmem:[#allocation9 + $0x168] sm:$0xff]
        %v2607 = vld [vmem:[#allocation9 + $0x170] sm:$0xff]
        %v2608 = vld [vmem:[#allocation9 + $0x178] sm:$0xff]
        %v2609 = vld [vmem:[#allocation9 + $0x180] sm:$0xff]
        %v2610 = vld [vmem:[#allocation9 + $0x188] sm:$0xff]
        %v2611 = vld [vmem:[#allocation9 + $0x190] sm:$0xff]
        %v2612 = vld [vmem:[#allocation9 + $0x198] sm:$0xff]
        %v2613 = vld [vmem:[#allocation9 + $0x1a0] sm:$0xff]
        %v2614 = vld [vmem:[#allocation9 + $0x1a8] sm:$0xff]
        %v2615 = vld [vmem:[#allocation9 + $0x1b0] sm:$0xff]
        %v2616 = vld [vmem:[#allocation9 + $0x1b8] sm:$0xff]
        %v2617 = vld [vmem:[#allocation9 + $0x1c0] sm:$0xff]
        %v2618 = vld [vmem:[#allocation9 + $0x1c8] sm:$0xff]
        %v2619 = vld [vmem:[#allocation9 + $0x1d0] sm:$0xff]
        %v2620 = vld [vmem:[#allocation9 + $0x1d8] sm:$0xff]
        %v2621 = vld [vmem:[#allocation9 + $0x1e0] sm:$0xff]
        %v2622 = vld [vmem:[#allocation9 + $0x1e8] sm:$0xff]
        %v2623 = vld [vmem:[#allocation9 + $0x1f0] sm:$0xff]
        %v2624 = vld [vmem:[#allocation9 + $0x1f8] sm:$0xff]
        %v2625 = vld [vmem:[#allocation9 + $0x200] sm:$0xff]
        %v2626 = vld [vmem:[#allocation9 + $0x208] sm:$0xff]
        %v2627 = vld [vmem:[#allocation9 + $0x210] sm:$0xff]
        %v2628 = vld [vmem:[#allocation9 + $0x218] sm:$0xff]
        %v2629 = vld [vmem:[#allocation9 + $0x220] sm:$0xff]
        %v2630 = vld [vmem:[#allocation9 + $0x228] sm:$0xff]
        %v2631 = vld [vmem:[#allocation9 + $0x230] sm:$0xff]
        %v2632 = vld [vmem:[#allocation9 + $0x238] sm:$0xff]
        %v2633 = vld [vmem:[#allocation9 + $0x240] sm:$0xff]
        %v2634 = vld [vmem:[#allocation9 + $0x248] sm:$0xff]
        %v2635 = vld [vmem:[#allocation9 + $0x250] sm:$0xff]
        %v2636 = vld [vmem:[#allocation9 + $0x258] sm:$0xff]
        %v2637 = vld [vmem:[#allocation9 + $0x260] sm:$0xff]
        %v2638 = vld [vmem:[#allocation9 + $0x268] sm:$0xff]
        %v2639 = vld [vmem:[#allocation9 + $0x270] sm:$0xff]
        %v2640 = vld [vmem:[#allocation9 + $0x278] sm:$0xff]
        %v2641 = vld [vmem:[#allocation9 + $0x280] sm:$0xff]
        %v2642 = vld [vmem:[#allocation9 + $0x288] sm:$0xff]
        %v2643 = vld [vmem:[#allocation9 + $0x290] sm:$0xff]
        %v2644 = vld [vmem:[#allocation9 + $0x298] sm:$0xff]
        %v2645 = vld [vmem:[#allocation9 + $0x2a0] sm:$0xff]
        %v2646 = vld [vmem:[#allocation9 + $0x2a8] sm:$0xff]
        %v2647 = vld [vmem:[#allocation9 + $0x2b0] sm:$0xff]
        %v2648 = vld [vmem:[#allocation9 + $0x2b8] sm:$0xff]
        %v2649 = vld [vmem:[#allocation9 + $0x2c0] sm:$0xff]
        %v2650 = vld [vmem:[#allocation9 + $0x2c8] sm:$0xff]
        %v2651 = vld [vmem:[#allocation9 + $0x2d0] sm:$0xff]
        %v2652 = vld [vmem:[#allocation9 + $0x2d8] sm:$0xff]
        %v2653 = vld [vmem:[#allocation9 + $0x2e0] sm:$0xff]
        %v2654 = vld [vmem:[#allocation9 + $0x2e8] sm:$0xff]
        %v2655 = vld [vmem:[#allocation9 + $0x2f0] sm:$0xff]
        %v2656 = vld [vmem:[#allocation9 + $0x2f8] sm:$0xff]
        %v2657 = vld [vmem:[#allocation9 + $0x300] sm:$0xff]
        %v2658 = vld [vmem:[#allocation9 + $0x308] sm:$0xff]
        %v2659 = vld [vmem:[#allocation9 + $0x310] sm:$0xff]
        %v2660 = vld [vmem:[#allocation9 + $0x318] sm:$0xff]
        %v2661 = vld [vmem:[#allocation9 + $0x320] sm:$0xff]
        %v2662 = vld [vmem:[#allocation9 + $0x328] sm:$0xff]
        %v2663 = vld [vmem:[#allocation9 + $0x330] sm:$0xff]
        %v2664 = vld [vmem:[#allocation9 + $0x338] sm:$0xff]
        %v2665 = vld [vmem:[#allocation9 + $0x340] sm:$0xff]
        %v2666 = vld [vmem:[#allocation9 + $0x348] sm:$0xff]
        %v2667 = vld [vmem:[#allocation9 + $0x350] sm:$0xff]
        %v2668 = vld [vmem:[#allocation9 + $0x358] sm:$0xff]
        %v2669 = vld [vmem:[#allocation9 + $0x360] sm:$0xff]
        %v2670 = vld [vmem:[#allocation9 + $0x368] sm:$0xff]
        %v2671 = vld [vmem:[#allocation9 + $0x370] sm:$0xff]
        %v2672 = vld [vmem:[#allocation9 + $0x378] sm:$0xff]
        %v2673 = vld [vmem:[#allocation9 + $0x380] sm:$0xff]
        %v2674 = vld [vmem:[#allocation9 + $0x388] sm:$0xff]
        %v2675 = vld [vmem:[#allocation9 + $0x390] sm:$0xff]
        %v2676 = vld [vmem:[#allocation9 + $0x398] sm:$0xff]
        %v2677 = vld [vmem:[#allocation9 + $0x3a0] sm:$0xff]
        %v2678 = vld [vmem:[#allocation9 + $0x3a8] sm:$0xff]
        %v2679 = vld [vmem:[#allocation9 + $0x3b0] sm:$0xff]
        %v2680 = vld [vmem:[#allocation9 + $0x3b8] sm:$0xff]
        %v2681 = vld [vmem:[#allocation9 + $0x3c0] sm:$0xff]
        %v2682 = vld [vmem:[#allocation9 + $0x3c8] sm:$0xff]
        %v2683 = vld [vmem:[#allocation9 + $0x3d0] sm:$0xff]
        %v2684 = vld [vmem:[#allocation9 + $0x3d8] sm:$0xff]
        %v2685 = vld [vmem:[#allocation9 + $0x3e0] sm:$0xff]
        %v2686 = vld [vmem:[#allocation9 + $0x3e8] sm:$0xff]
        %v2687 = vld [vmem:[#allocation9 + $0x3f0] sm:$0xff]
        %v2688 = vld [vmem:[#allocation9 + $0x3f8] sm:$0xff]
        %2689 = vmatprep.subr.mxu0 %v2562
        %2690 = vmatpush1.msra.mxu0 %v2561
        %2691 = vmatprep.subr.mxu0 %v2566
        %2692 = vmatpush1.msra.mxu0 %v2565
        %2693 = vmatprep.subr.mxu0 %v2570
        %2694 = vmatpush1.msra.mxu0 %v2569
        %2695 = vmatprep.subr.mxu0 %v2574
        %2696 = vmatpush1.msra.mxu0 %v2573
        %2697 = vmatprep.subr.mxu0 %v2578
        %2698 = vmatpush1.msra.mxu0 %v2577
        %2699 = vmatprep.subr.mxu0 %v2582
        %2700 = vmatpush1.msra.mxu0 %v2581
        %2701 = vmatprep.subr.mxu0 %v2586
        %2702 = vmatpush1.msra.mxu0 %v2585
        %2703 = vmatprep.subr.mxu0 %v2590
        %2704 = vmatpush1.msra.mxu0 %v2589
        %2705 = vmatprep.subr.mxu0 %v2594
        %2706 = vmatpush1.msra.mxu0 %v2593
        %2707 = vmatprep.subr.mxu0 %v2598
        %2708 = vmatpush1.msra.mxu0 %v2597
        %2709 = vmatprep.subr.mxu0 %v2602
        %2710 = vmatpush1.msra.mxu0 %v2601
        %2711 = vmatprep.subr.mxu0 %v2606
        %2712 = vmatpush1.msra.mxu0 %v2605
        %2713 = vmatprep.subr.mxu0 %v2610
        %2714 = vmatpush1.msra.mxu0 %v2609
        %2715 = vmatprep.subr.mxu0 %v2614
        %2716 = vmatpush1.msra.mxu0 %v2613
        %2717 = vmatprep.subr.mxu0 %v2618
        %2718 = vmatpush1.msra.mxu0 %v2617
        %2719 = vmatprep.subr.mxu0 %v2622
        %2720 = vmatpush1.msra.mxu0 %v2621
        %2721 = vmatprep.subr.mxu0 %v2626
        %2722 = vmatpush1.msra.mxu0 %v2625
        %2723 = vmatprep.subr.mxu0 %v2630
        %2724 = vmatpush1.msra.mxu0 %v2629
        %2725 = vmatprep.subr.mxu0 %v2634
        %2726 = vmatpush1.msra.mxu0 %v2633
        %2727 = vmatprep.subr.mxu0 %v2638
        %2728 = vmatpush1.msra.mxu0 %v2637
        %2729 = vmatprep.subr.mxu0 %v2642
        %2730 = vmatpush1.msra.mxu0 %v2641
        %2731 = vmatprep.subr.mxu0 %v2646
        %2732 = vmatpush1.msra.mxu0 %v2645
        %2733 = vmatprep.subr.mxu0 %v2650
        %2734 = vmatpush1.msra.mxu0 %v2649
        %2735 = vmatprep.subr.mxu0 %v2654
        %2736 = vmatpush1.msra.mxu0 %v2653
        %2737 = vmatprep.subr.mxu0 %v2658
        %2738 = vmatpush1.msra.mxu0 %v2657
        %2739 = vmatprep.subr.mxu0 %v2662
        %2740 = vmatpush1.msra.mxu0 %v2661
        %2741 = vmatprep.subr.mxu0 %v2666
        %2742 = vmatpush1.msra.mxu0 %v2665
        %2743 = vmatprep.subr.mxu0 %v2670
        %2744 = vmatpush1.msra.mxu0 %v2669
        %2745 = vmatprep.subr.mxu0 %v2674
        %2746 = vmatpush1.msra.mxu0 %v2673
        %2747 = vmatprep.subr.mxu0 %v2678
        %2748 = vmatpush1.msra.mxu0 %v2677
        %2749 = vmatprep.subr.mxu0 %v2682
        %2750 = vmatpush1.msra.mxu0 %v2681
        %2751 = vmatprep.subr.mxu0 %v2686
        %2752 = vmatpush1.msra.mxu0 %v2685
        %2753 = vmatprep.mubr.f32.mxu0 %v2560
        %2754 = vmatmul.mubr.f32.gmra.mrb[0].mxu0 %v2557
        %v2755 = vpop.f32.mrb[0].mxu0
        %v2756 = vadd.f32 %v671, %v2755
        %v2757 = vpop.f32.mrb[0].mxu0
        %v2758 = vadd.f32 %v675, %v2757
        %2759 = vdwg.mxu0
        %2760 = vmatprep.subr.mxu0 %v2564
        %2761 = vmatpush1.msra.mxu0 %v2563
        %2762 = vmatprep.subr.mxu0 %v2568
        %2763 = vmatpush1.msra.mxu0 %v2567
        %2764 = vmatprep.subr.mxu0 %v2572
        %2765 = vmatpush1.msra.mxu0 %v2571
        %2766 = vmatprep.subr.mxu0 %v2576
        %2767 = vmatpush1.msra.mxu0 %v2575
        %2768 = vmatprep.subr.mxu0 %v2580
        %2769 = vmatpush1.msra.mxu0 %v2579
        %2770 = vmatprep.subr.mxu0 %v2584
        %2771 = vmatpush1.msra.mxu0 %v2583
        %2772 = vmatprep.subr.mxu0 %v2588
        %2773 = vmatpush1.msra.mxu0 %v2587
        %2774 = vmatprep.subr.mxu0 %v2592
        %2775 = vmatpush1.msra.mxu0 %v2591
        %2776 = vmatprep.subr.mxu0 %v2596
        %2777 = vmatpush1.msra.mxu0 %v2595
        %2778 = vmatprep.subr.mxu0 %v2600
        %2779 = vmatpush1.msra.mxu0 %v2599
        %2780 = vmatprep.subr.mxu0 %v2604
        %2781 = vmatpush1.msra.mxu0 %v2603
        %2782 = vmatprep.subr.mxu0 %v2608
        %2783 = vmatpush1.msra.mxu0 %v2607
        %2784 = vmatprep.subr.mxu0 %v2612
        %2785 = vmatpush1.msra.mxu0 %v2611
        %2786 = vmatprep.subr.mxu0 %v2616
        %2787 = vmatpush1.msra.mxu0 %v2615
        %2788 = vmatprep.subr.mxu0 %v2620
        %2789 = vmatpush1.msra.mxu0 %v2619
        %2790 = vmatprep.subr.mxu0 %v2624
        %2791 = vmatpush1.msra.mxu0 %v2623
        %2792 = vmatprep.subr.mxu0 %v2628
        %2793 = vmatpush1.msra.mxu0 %v2627
        %2794 = vmatprep.subr.mxu0 %v2632
        %2795 = vmatpush1.msra.mxu0 %v2631
        %2796 = vmatprep.subr.mxu0 %v2636
        %2797 = vmatpush1.msra.mxu0 %v2635
        %2798 = vmatprep.subr.mxu0 %v2640
        %2799 = vmatpush1.msra.mxu0 %v2639
        %2800 = vmatprep.subr.mxu0 %v2644
        %2801 = vmatpush1.msra.mxu0 %v2643
        %2802 = vmatprep.subr.mxu0 %v2648
        %2803 = vmatpush1.msra.mxu0 %v2647
        %2804 = vmatprep.subr.mxu0 %v2652
        %2805 = vmatpush1.msra.mxu0 %v2651
        %2806 = vmatprep.subr.mxu0 %v2656
        %2807 = vmatpush1.msra.mxu0 %v2655
        %2808 = vmatprep.subr.mxu0 %v2660
        %2809 = vmatpush1.msra.mxu0 %v2659
        %2810 = vmatprep.subr.mxu0 %v2664
        %2811 = vmatpush1.msra.mxu0 %v2663
        %2812 = vmatprep.subr.mxu0 %v2668
        %2813 = vmatpush1.msra.mxu0 %v2667
        %2814 = vmatprep.subr.mxu0 %v2672
        %2815 = vmatpush1.msra.mxu0 %v2671
        %2816 = vmatprep.subr.mxu0 %v2676
        %2817 = vmatpush1.msra.mxu0 %v2675
        %2818 = vmatprep.subr.mxu0 %v2680
        %2819 = vmatpush1.msra.mxu0 %v2679
        %2820 = vmatprep.subr.mxu0 %v2684
        %2821 = vmatpush1.msra.mxu0 %v2683
        %2822 = vmatprep.subr.mxu0 %v2688
        %2823 = vmatpush1.msra.mxu0 %v2687
        %2824 = vmatprep.mubr.f32.mxu0 %v2560
        %2825 = vmatmul.mubr.f32.gmra.mrb[0].mxu0 %v2557
        %v2826 = vpop.f32.mrb[0].mxu0
        %v2827 = vadd.f32 %v679, %v2826
        %v2828 = vpop.f32.mrb[0].mxu0
        %v2829 = vadd.f32 %v683, %v2828
        %2830 = vdwg.mxu0
        %v2831 = vld [vmem:[%s1202] sm:$0xff]
        %v2832 = vxor.u32 %v2756, 2147483648
        %v2833 = vmul.f32 %v2832, 1.442695
        %v2834 = vpow.pop %v2833
        %v2835 = vadd.f32 %v2834, 1.0
        %v2836 = vrcp.pop %v2835
        %v2837 = vmul.f32 1.0, %v2836
        %v2838 = vxor.u32 %v2758, 2147483648
        %v2839 = vmul.f32 %v2838, 1.442695
        %v2840 = vpow.pop %v2839
        %v2841 = vadd.f32 %v2840, 1.0
        %v2842 = vrcp.pop %v2841
        %v2843 = vmul.f32 1.0, %v2842
        %v2844 = vtanh.pop %v2827
        %v2845 = vxor.u32 %v2829, 2147483648
        %v2846 = vmul.f32 %v2845, 1.442695
        %v2847 = vpow.pop %v2846
        %v2848 = vadd.f32 %v2847, 1.0
        %v2849 = vrcp.pop %v2848
        %v2850 = vmul.f32 1.0, %v2849
        %v2851 = vmul.f32 %v2843, %v2831
        %v2852 = vmul.f32 %v2837, %v2844
        %v2853 = vadd.f32 %v2851, %v2852
        %v2854 = vtanh.pop %v2853
        %v2855 = vmul.f32 %v2850, %v2854
        %2856 = vst [vmem:[%s930] sm:$0xff] %v2855
        %2857 = vst [vmem:[%s1202] sm:$0xff] %v2853
        %s2858 = scalar_lea.vmem [#allocation5], 24
        %2859 = vst [vmem:[%s2858] sm:$0xff] %v2855
        %v2860 = vld [vmem:[#allocation2] sm:$0xff]
        %s2861 = scalar_lea.vmem [#allocation4], 128
        %v2862 = vld [vmem:[%s2861] sm:$0xff]
        %v2863 = vld [vmem:[%s2861 + $0x8] sm:$0xff]
        %v2864 = vld [vmem:[%s2861 + $0x10] sm:$0xff]
        %v2865 = vld [vmem:[%s2861 + $0x18] sm:$0xff]
        %v2866 = vld [vmem:[#allocation6] sm:$0xff]
        %v2867 = vld [vmem:[#allocation6 + $0x8] sm:$0xff]
        %v2868 = vld [vmem:[#allocation6 + $0x10] sm:$0xff]
        %v2869 = vld [vmem:[#allocation6 + $0x18] sm:$0xff]
        %v2870 = vld [vmem:[#allocation6 + $0x20] sm:$0xff]
        %v2871 = vld [vmem:[#allocation6 + $0x28] sm:$0xff]
        %v2872 = vld [vmem:[#allocation6 + $0x30] sm:$0xff]
        %v2873 = vld [vmem:[#allocation6 + $0x38] sm:$0xff]
        %v2874 = vld [vmem:[#allocation6 + $0x40] sm:$0xff]
        %v2875 = vld [vmem:[#allocation6 + $0x48] sm:$0xff]
        %v2876 = vld [vmem:[#allocation6 + $0x50] sm:$0xff]
        %v2877 = vld [vmem:[#allocation6 + $0x58] sm:$0xff]
        %v2878 = vld [vmem:[#allocation6 + $0x60] sm:$0xff]
        %v2879 = vld [vmem:[#allocation6 + $0x68] sm:$0xff]
        %v2880 = vld [vmem:[#allocation6 + $0x70] sm:$0xff]
        %v2881 = vld [vmem:[#allocation6 + $0x78] sm:$0xff]
        %v2882 = vld [vmem:[#allocation6 + $0x80] sm:$0xff]
        %v2883 = vld [vmem:[#allocation6 + $0x88] sm:$0xff]
        %v2884 = vld [vmem:[#allocation6 + $0x90] sm:$0xff]
        %v2885 = vld [vmem:[#allocation6 + $0x98] sm:$0xff]
        %v2886 = vld [vmem:[#allocation6 + $0xa0] sm:$0xff]
        %v2887 = vld [vmem:[#allocation6 + $0xa8] sm:$0xff]
        %v2888 = vld [vmem:[#allocation6 + $0xb0] sm:$0xff]
        %v2889 = vld [vmem:[#allocation6 + $0xb8] sm:$0xff]
        %v2890 = vld [vmem:[#allocation6 + $0xc0] sm:$0xff]
        %v2891 = vld [vmem:[#allocation6 + $0xc8] sm:$0xff]
        %v2892 = vld [vmem:[#allocation6 + $0xd0] sm:$0xff]
        %v2893 = vld [vmem:[#allocation6 + $0xd8] sm:$0xff]
        %v2894 = vld [vmem:[#allocation6 + $0xe0] sm:$0xff]
        %v2895 = vld [vmem:[#allocation6 + $0xe8] sm:$0xff]
        %v2896 = vld [vmem:[#allocation6 + $0xf0] sm:$0xff]
        %v2897 = vld [vmem:[#allocation6 + $0xf8] sm:$0xff]
        %v2898 = vld [vmem:[#allocation6 + $0x100] sm:$0xff]
        %v2899 = vld [vmem:[#allocation6 + $0x108] sm:$0xff]
        %v2900 = vld [vmem:[#allocation6 + $0x110] sm:$0xff]
        %v2901 = vld [vmem:[#allocation6 + $0x118] sm:$0xff]
        %v2902 = vld [vmem:[#allocation6 + $0x120] sm:$0xff]
        %v2903 = vld [vmem:[#allocation6 + $0x128] sm:$0xff]
        %v2904 = vld [vmem:[#allocation6 + $0x130] sm:$0xff]
        %v2905 = vld [vmem:[#allocation6 + $0x138] sm:$0xff]
        %v2906 = vld [vmem:[#allocation6 + $0x140] sm:$0xff]
        %v2907 = vld [vmem:[#allocation6 + $0x148] sm:$0xff]
        %v2908 = vld [vmem:[#allocation6 + $0x150] sm:$0xff]
        %v2909 = vld [vmem:[#allocation6 + $0x158] sm:$0xff]
        %v2910 = vld [vmem:[#allocation6 + $0x160] sm:$0xff]
        %v2911 = vld [vmem:[#allocation6 + $0x168] sm:$0xff]
        %v2912 = vld [vmem:[#allocation6 + $0x170] sm:$0xff]
        %v2913 = vld [vmem:[#allocation6 + $0x178] sm:$0xff]
        %v2914 = vld [vmem:[#allocation6 + $0x180] sm:$0xff]
        %v2915 = vld [vmem:[#allocation6 + $0x188] sm:$0xff]
        %v2916 = vld [vmem:[#allocation6 + $0x190] sm:$0xff]
        %v2917 = vld [vmem:[#allocation6 + $0x198] sm:$0xff]
        %v2918 = vld [vmem:[#allocation6 + $0x1a0] sm:$0xff]
        %v2919 = vld [vmem:[#allocation6 + $0x1a8] sm:$0xff]
        %v2920 = vld [vmem:[#allocation6 + $0x1b0] sm:$0xff]
        %v2921 = vld [vmem:[#allocation6 + $0x1b8] sm:$0xff]
        %v2922 = vld [vmem:[#allocation6 + $0x1c0] sm:$0xff]
        %v2923 = vld [vmem:[#allocation6 + $0x1c8] sm:$0xff]
        %v2924 = vld [vmem:[#allocation6 + $0x1d0] sm:$0xff]
        %v2925 = vld [vmem:[#allocation6 + $0x1d8] sm:$0xff]
        %v2926 = vld [vmem:[#allocation6 + $0x1e0] sm:$0xff]
        %v2927 = vld [vmem:[#allocation6 + $0x1e8] sm:$0xff]
        %v2928 = vld [vmem:[#allocation6 + $0x1f0] sm:$0xff]
        %v2929 = vld [vmem:[#allocation6 + $0x1f8] sm:$0xff]
        %2930 = vmatprep.subr.mxu0 %v2867
        %2931 = vmatpush1.msra.mxu0 %v2866
        %2932 = vmatprep.subr.mxu0 %v2871
        %2933 = vmatpush1.msra.mxu0 %v2870
        %2934 = vmatprep.subr.mxu0 %v2875
        %2935 = vmatpush1.msra.mxu0 %v2874
        %2936 = vmatprep.subr.mxu0 %v2879
        %2937 = vmatpush1.msra.mxu0 %v2878
        %2938 = vmatprep.subr.mxu0 %v2883
        %2939 = vmatpush1.msra.mxu0 %v2882
        %2940 = vmatprep.subr.mxu0 %v2887
        %2941 = vmatpush1.msra.mxu0 %v2886
        %2942 = vmatprep.subr.mxu0 %v2891
        %2943 = vmatpush1.msra.mxu0 %v2890
        %2944 = vmatprep.subr.mxu0 %v2895
        %2945 = vmatpush1.msra.mxu0 %v2894
        %2946 = vmatprep.subr.mxu0 %v2899
        %2947 = vmatpush1.msra.mxu0 %v2898
        %2948 = vmatprep.subr.mxu0 %v2903
        %2949 = vmatpush1.msra.mxu0 %v2902
        %2950 = vmatprep.subr.mxu0 %v2907
        %2951 = vmatpush1.msra.mxu0 %v2906
        %2952 = vmatprep.subr.mxu0 %v2911
        %2953 = vmatpush1.msra.mxu0 %v2910
        %2954 = vmatprep.subr.mxu0 %v2915
        %2955 = vmatpush1.msra.mxu0 %v2914
        %2956 = vmatprep.subr.mxu0 %v2919
        %2957 = vmatpush1.msra.mxu0 %v2918
        %2958 = vmatprep.subr.mxu0 %v2923
        %2959 = vmatpush1.msra.mxu0 %v2922
        %2960 = vmatprep.subr.mxu0 %v2927
        %2961 = vmatpush1.msra.mxu0 %v2926
        %2962 = vmatprep.subr.mxu0 0.0
        %2963 = vmatpush1.msra.mxu0 0.0
        %2964 = vmatprep.subr.mxu0 0.0
        %2965 = vmatpush1.msra.mxu0 0.0
        %2966 = vmatprep.subr.mxu0 0.0
        %2967 = vmatpush1.msra.mxu0 0.0
        %2968 = vmatprep.subr.mxu0 0.0
        %2969 = vmatpush1.msra.mxu0 0.0
        %2970 = vmatprep.subr.mxu0 0.0
        %2971 = vmatpush1.msra.mxu0 0.0
        %2972 = vmatprep.subr.mxu0 0.0
        %2973 = vmatpush1.msra.mxu0 0.0
        %2974 = vmatprep.subr.mxu0 0.0
        %2975 = vmatpush1.msra.mxu0 0.0
        %2976 = vmatprep.subr.mxu0 0.0
        %2977 = vmatpush1.msra.mxu0 0.0
        %2978 = vmatprep.subr.mxu0 0.0
        %2979 = vmatpush1.msra.mxu0 0.0
        %2980 = vmatprep.subr.mxu0 0.0
        %2981 = vmatpush1.msra.mxu0 0.0
        %2982 = vmatprep.subr.mxu0 0.0
        %2983 = vmatpush1.msra.mxu0 0.0
        %2984 = vmatprep.subr.mxu0 0.0
        %2985 = vmatpush1.msra.mxu0 0.0
        %2986 = vmatprep.subr.mxu0 0.0
        %2987 = vmatpush1.msra.mxu0 0.0
        %2988 = vmatprep.subr.mxu0 0.0
        %2989 = vmatpush1.msra.mxu0 0.0
        %2990 = vmatprep.subr.mxu0 0.0
        %2991 = vmatpush1.msra.mxu0 0.0
        %2992 = vmatprep.subr.mxu0 0.0
        %2993 = vmatpush1.msra.mxu0 0.0
        %2994 = vmatprep.mubr.f32.mxu0 0.0
        %2995 = vmatmul.mubr.f32.gmra.mrb[0].mxu0 %v2860
        %v2996 = vpop.f32.mrb[0].mxu0
        %v2997 = vadd.f32 0.0, %v2996
        %v2998 = vpop.f32.mrb[0].mxu0
        %v2999 = vadd.f32 0.0, %v2998
        %3000 = vdwg.mxu0
        %3001 = vmatprep.subr.mxu0 %v2869
        %3002 = vmatpush1.msra.mxu0 %v2868
        %3003 = vmatprep.subr.mxu0 %v2873
        %3004 = vmatpush1.msra.mxu0 %v2872
        %3005 = vmatprep.subr.mxu0 %v2877
        %3006 = vmatpush1.msra.mxu0 %v2876
        %3007 = vmatprep.subr.mxu0 %v2881
        %3008 = vmatpush1.msra.mxu0 %v2880
        %3009 = vmatprep.subr.mxu0 %v2885
        %3010 = vmatpush1.msra.mxu0 %v2884
        %3011 = vmatprep.subr.mxu0 %v2889
        %3012 = vmatpush1.msra.mxu0 %v2888
        %3013 = vmatprep.subr.mxu0 %v2893
        %3014 = vmatpush1.msra.mxu0 %v2892
        %3015 = vmatprep.subr.mxu0 %v2897
        %3016 = vmatpush1.msra.mxu0 %v2896
        %3017 = vmatprep.subr.mxu0 %v2901
        %3018 = vmatpush1.msra.mxu0 %v2900
        %3019 = vmatprep.subr.mxu0 %v2905
        %3020 = vmatpush1.msra.mxu0 %v2904
        %3021 = vmatprep.subr.mxu0 %v2909
        %3022 = vmatpush1.msra.mxu0 %v2908
        %3023 = vmatprep.subr.mxu0 %v2913
        %3024 = vmatpush1.msra.mxu0 %v2912
        %3025 = vmatprep.subr.mxu0 %v2917
        %3026 = vmatpush1.msra.mxu0 %v2916
        %3027 = vmatprep.subr.mxu0 %v2921
        %3028 = vmatpush1.msra.mxu0 %v2920
        %3029 = vmatprep.subr.mxu0 %v2925
        %3030 = vmatpush1.msra.mxu0 %v2924
        %3031 = vmatprep.subr.mxu0 %v2929
        %3032 = vmatpush1.msra.mxu0 %v2928
        %3033 = vmatprep.subr.mxu0 0.0
        %3034 = vmatpush1.msra.mxu0 0.0
        %3035 = vmatprep.subr.mxu0 0.0
        %3036 = vmatpush1.msra.mxu0 0.0
        %3037 = vmatprep.subr.mxu0 0.0
        %3038 = vmatpush1.msra.mxu0 0.0
        %3039 = vmatprep.subr.mxu0 0.0
        %3040 = vmatpush1.msra.mxu0 0.0
        %3041 = vmatprep.subr.mxu0 0.0
        %3042 = vmatpush1.msra.mxu0 0.0
        %3043 = vmatprep.subr.mxu0 0.0
        %3044 = vmatpush1.msra.mxu0 0.0
        %3045 = vmatprep.subr.mxu0 0.0
        %3046 = vmatpush1.msra.mxu0 0.0
        %3047 = vmatprep.subr.mxu0 0.0
        %3048 = vmatpush1.msra.mxu0 0.0
        %3049 = vmatprep.subr.mxu0 0.0
        %3050 = vmatpush1.msra.mxu0 0.0
        %3051 = vmatprep.subr.mxu0 0.0
        %3052 = vmatpush1.msra.mxu0 0.0
        %3053 = vmatprep.subr.mxu0 0.0
        %3054 = vmatpush1.msra.mxu0 0.0
        %3055 = vmatprep.subr.mxu0 0.0
        %3056 = vmatpush1.msra.mxu0 0.0
        %3057 = vmatprep.subr.mxu0 0.0
        %3058 = vmatpush1.msra.mxu0 0.0
        %3059 = vmatprep.subr.mxu0 0.0
        %3060 = vmatpush1.msra.mxu0 0.0
        %3061 = vmatprep.subr.mxu0 0.0
        %3062 = vmatpush1.msra.mxu0 0.0
        %3063 = vmatprep.subr.mxu0 0.0
        %3064 = vmatpush1.msra.mxu0 0.0
        %3065 = vmatprep.mubr.f32.mxu0 0.0
        %3066 = vmatmul.mubr.f32.gmra.mrb[0].mxu0 %v2860
        %v3067 = vpop.f32.mrb[0].mxu0
        %v3068 = vadd.f32 0.0, %v3067
        %v3069 = vpop.f32.mrb[0].mxu0
        %v3070 = vadd.f32 0.0, %v3069
        %3071 = vdwg.mxu0
        %v3072 = vadd.f32 %v2862, %v2997
        %v3073 = vadd.f32 %v2863, %v2999
        %v3074 = vadd.f32 %v2864, %v3068
        %v3075 = vadd.f32 %v2865, %v3070
        %v3076 = vld [vmem:[#allocation3] sm:$0xff]
        %v3077 = vxor.u32 %v3072, 2147483648
        %v3078 = vmul.f32 %v3077, 1.442695
        %v3079 = vpow.pop %v3078
        %v3080 = vadd.f32 %v3079, 1.0
        %v3081 = vrcp.pop %v3080
        %v3082 = vmul.f32 1.0, %v3081
        %v3083 = vxor.u32 %v3073, 2147483648
        %v3084 = vmul.f32 %v3083, 1.442695
        %v3085 = vpow.pop %v3084
        %v3086 = vadd.f32 %v3085, 1.0
        %v3087 = vrcp.pop %v3086
        %v3088 = vmul.f32 1.0, %v3087
        %v3089 = vtanh.pop %v3074
        %v3090 = vxor.u32 %v3075, 2147483648
        %v3091 = vmul.f32 %v3090, 1.442695
        %v3092 = vpow.pop %v3091
        %v3093 = vadd.f32 %v3092, 1.0
        %v3094 = vrcp.pop %v3093
        %v3095 = vmul.f32 1.0, %v3094
        %v3096 = vmul.f32 %v3088, %v3076
        %v3097 = vmul.f32 %v3082, %v3089
        %v3098 = vadd.f32 %v3096, %v3097
        %v3099 = vtanh.pop %v3098
        %v3100 = vmul.f32 %v3095, %v3099
        %3101 = vst [vmem:[#allocation2] sm:$0xff] %v3100
        %3102 = vst [vmem:[#allocation3] sm:$0xff] %v3098
        %v3103 = vld [vmem:[%s930] sm:$0xff]
        %v3104 = vld [vmem:[#allocation9] sm:$0xff]
        %v3105 = vld [vmem:[#allocation9 + $0x8] sm:$0xff]
        %v3106 = vld [vmem:[#allocation9 + $0x10] sm:$0xff]
        %v3107 = vld [vmem:[#allocation9 + $0x18] sm:$0xff]
        %v3108 = vld [vmem:[#allocation9 + $0x20] sm:$0xff]
        %v3109 = vld [vmem:[#allocation9 + $0x28] sm:$0xff]
        %v3110 = vld [vmem:[#allocation9 + $0x30] sm:$0xff]
        %v3111 = vld [vmem:[#allocation9 + $0x38] sm:$0xff]
        %v3112 = vld [vmem:[#allocation9 + $0x40] sm:$0xff]
        %v3113 = vld [vmem:[#allocation9 + $0x48] sm:$0xff]
        %v3114 = vld [vmem:[#allocation9 + $0x50] sm:$0xff]
        %v3115 = vld [vmem:[#allocation9 + $0x58] sm:$0xff]
        %v3116 = vld [vmem:[#allocation9 + $0x60] sm:$0xff]
        %v3117 = vld [vmem:[#allocation9 + $0x68] sm:$0xff]
        %v3118 = vld [vmem:[#allocation9 + $0x70] sm:$0xff]
        %v3119 = vld [vmem:[#allocation9 + $0x78] sm:$0xff]
        %v3120 = vld [vmem:[#allocation9 + $0x80] sm:$0xff]
        %v3121 = vld [vmem:[#allocation9 + $0x88] sm:$0xff]
        %v3122 = vld [vmem:[#allocation9 + $0x90] sm:$0xff]
        %v3123 = vld [vmem:[#allocation9 + $0x98] sm:$0xff]
        %v3124 = vld [vmem:[#allocation9 + $0xa0] sm:$0xff]
        %v3125 = vld [vmem:[#allocation9 + $0xa8] sm:$0xff]
        %v3126 = vld [vmem:[#allocation9 + $0xb0] sm:$0xff]
        %v3127 = vld [vmem:[#allocation9 + $0xb8] sm:$0xff]
        %v3128 = vld [vmem:[#allocation9 + $0xc0] sm:$0xff]
        %v3129 = vld [vmem:[#allocation9 + $0xc8] sm:$0xff]
        %v3130 = vld [vmem:[#allocation9 + $0xd0] sm:$0xff]
        %v3131 = vld [vmem:[#allocation9 + $0xd8] sm:$0xff]
        %v3132 = vld [vmem:[#allocation9 + $0xe0] sm:$0xff]
        %v3133 = vld [vmem:[#allocation9 + $0xe8] sm:$0xff]
        %v3134 = vld [vmem:[#allocation9 + $0xf0] sm:$0xff]
        %v3135 = vld [vmem:[#allocation9 + $0xf8] sm:$0xff]
        %v3136 = vld [vmem:[#allocation9 + $0x100] sm:$0xff]
        %v3137 = vld [vmem:[#allocation9 + $0x108] sm:$0xff]
        %v3138 = vld [vmem:[#allocation9 + $0x110] sm:$0xff]
        %v3139 = vld [vmem:[#allocation9 + $0x118] sm:$0xff]
        %v3140 = vld [vmem:[#allocation9 + $0x120] sm:$0xff]
        %v3141 = vld [vmem:[#allocation9 + $0x128] sm:$0xff]
        %v3142 = vld [vmem:[#allocation9 + $0x130] sm:$0xff]
        %v3143 = vld [vmem:[#allocation9 + $0x138] sm:$0xff]
        %v3144 = vld [vmem:[#allocation9 + $0x140] sm:$0xff]
        %v3145 = vld [vmem:[#allocation9 + $0x148] sm:$0xff]
        %v3146 = vld [vmem:[#allocation9 + $0x150] sm:$0xff]
        %v3147 = vld [vmem:[#allocation9 + $0x158] sm:$0xff]
        %v3148 = vld [vmem:[#allocation9 + $0x160] sm:$0xff]
        %v3149 = vld [vmem:[#allocation9 + $0x168] sm:$0xff]
        %v3150 = vld [vmem:[#allocation9 + $0x170] sm:$0xff]
        %v3151 = vld [vmem:[#allocation9 + $0x178] sm:$0xff]
        %v3152 = vld [vmem:[#allocation9 + $0x180] sm:$0xff]
        %v3153 = vld [vmem:[#allocation9 + $0x188] sm:$0xff]
        %v3154 = vld [vmem:[#allocation9 + $0x190] sm:$0xff]
        %v3155 = vld [vmem:[#allocation9 + $0x198] sm:$0xff]
        %v3156 = vld [vmem:[#allocation9 + $0x1a0] sm:$0xff]
        %v3157 = vld [vmem:[#allocation9 + $0x1a8] sm:$0xff]
        %v3158 = vld [vmem:[#allocation9 + $0x1b0] sm:$0xff]
        %v3159 = vld [vmem:[#allocation9 + $0x1b8] sm:$0xff]
        %v3160 = vld [vmem:[#allocation9 + $0x1c0] sm:$0xff]
        %v3161 = vld [vmem:[#allocation9 + $0x1c8] sm:$0xff]
        %v3162 = vld [vmem:[#allocation9 + $0x1d0] sm:$0xff]
        %v3163 = vld [vmem:[#allocation9 + $0x1d8] sm:$0xff]
        %v3164 = vld [vmem:[#allocation9 + $0x1e0] sm:$0xff]
        %v3165 = vld [vmem:[#allocation9 + $0x1e8] sm:$0xff]
        %v3166 = vld [vmem:[#allocation9 + $0x1f0] sm:$0xff]
        %v3167 = vld [vmem:[#allocation9 + $0x1f8] sm:$0xff]
        %v3168 = vld [vmem:[#allocation9 + $0x200] sm:$0xff]
        %v3169 = vld [vmem:[#allocation9 + $0x208] sm:$0xff]
        %v3170 = vld [vmem:[#allocation9 + $0x210] sm:$0xff]
        %v3171 = vld [vmem:[#allocation9 + $0x218] sm:$0xff]
        %v3172 = vld [vmem:[#allocation9 + $0x220] sm:$0xff]
        %v3173 = vld [vmem:[#allocation9 + $0x228] sm:$0xff]
        %v3174 = vld [vmem:[#allocation9 + $0x230] sm:$0xff]
        %v3175 = vld [vmem:[#allocation9 + $0x238] sm:$0xff]
        %v3176 = vld [vmem:[#allocation9 + $0x240] sm:$0xff]
        %v3177 = vld [vmem:[#allocation9 + $0x248] sm:$0xff]
        %v3178 = vld [vmem:[#allocation9 + $0x250] sm:$0xff]
        %v3179 = vld [vmem:[#allocation9 + $0x258] sm:$0xff]
        %v3180 = vld [vmem:[#allocation9 + $0x260] sm:$0xff]
        %v3181 = vld [vmem:[#allocation9 + $0x268] sm:$0xff]
        %v3182 = vld [vmem:[#allocation9 + $0x270] sm:$0xff]
        %v3183 = vld [vmem:[#allocation9 + $0x278] sm:$0xff]
        %v3184 = vld [vmem:[#allocation9 + $0x280] sm:$0xff]
        %v3185 = vld [vmem:[#allocation9 + $0x288] sm:$0xff]
        %v3186 = vld [vmem:[#allocation9 + $0x290] sm:$0xff]
        %v3187 = vld [vmem:[#allocation9 + $0x298] sm:$0xff]
        %v3188 = vld [vmem:[#allocation9 + $0x2a0] sm:$0xff]
        %v3189 = vld [vmem:[#allocation9 + $0x2a8] sm:$0xff]
        %v3190 = vld [vmem:[#allocation9 + $0x2b0] sm:$0xff]
        %v3191 = vld [vmem:[#allocation9 + $0x2b8] sm:$0xff]
        %v3192 = vld [vmem:[#allocation9 + $0x2c0] sm:$0xff]
        %v3193 = vld [vmem:[#allocation9 + $0x2c8] sm:$0xff]
        %v3194 = vld [vmem:[#allocation9 + $0x2d0] sm:$0xff]
        %v3195 = vld [vmem:[#allocation9 + $0x2d8] sm:$0xff]
        %v3196 = vld [vmem:[#allocation9 + $0x2e0] sm:$0xff]
        %v3197 = vld [vmem:[#allocation9 + $0x2e8] sm:$0xff]
        %v3198 = vld [vmem:[#allocation9 + $0x2f0] sm:$0xff]
        %v3199 = vld [vmem:[#allocation9 + $0x2f8] sm:$0xff]
        %v3200 = vld [vmem:[#allocation9 + $0x300] sm:$0xff]
        %v3201 = vld [vmem:[#allocation9 + $0x308] sm:$0xff]
        %v3202 = vld [vmem:[#allocation9 + $0x310] sm:$0xff]
        %v3203 = vld [vmem:[#allocation9 + $0x318] sm:$0xff]
        %v3204 = vld [vmem:[#allocation9 + $0x320] sm:$0xff]
        %v3205 = vld [vmem:[#allocation9 + $0x328] sm:$0xff]
        %v3206 = vld [vmem:[#allocation9 + $0x330] sm:$0xff]
        %v3207 = vld [vmem:[#allocation9 + $0x338] sm:$0xff]
        %v3208 = vld [vmem:[#allocation9 + $0x340] sm:$0xff]
        %v3209 = vld [vmem:[#allocation9 + $0x348] sm:$0xff]
        %v3210 = vld [vmem:[#allocation9 + $0x350] sm:$0xff]
        %v3211 = vld [vmem:[#allocation9 + $0x358] sm:$0xff]
        %v3212 = vld [vmem:[#allocation9 + $0x360] sm:$0xff]
        %v3213 = vld [vmem:[#allocation9 + $0x368] sm:$0xff]
        %v3214 = vld [vmem:[#allocation9 + $0x370] sm:$0xff]
        %v3215 = vld [vmem:[#allocation9 + $0x378] sm:$0xff]
        %v3216 = vld [vmem:[#allocation9 + $0x380] sm:$0xff]
        %v3217 = vld [vmem:[#allocation9 + $0x388] sm:$0xff]
        %v3218 = vld [vmem:[#allocation9 + $0x390] sm:$0xff]
        %v3219 = vld [vmem:[#allocation9 + $0x398] sm:$0xff]
        %v3220 = vld [vmem:[#allocation9 + $0x3a0] sm:$0xff]
        %v3221 = vld [vmem:[#allocation9 + $0x3a8] sm:$0xff]
        %v3222 = vld [vmem:[#allocation9 + $0x3b0] sm:$0xff]
        %v3223 = vld [vmem:[#allocation9 + $0x3b8] sm:$0xff]
        %v3224 = vld [vmem:[#allocation9 + $0x3c0] sm:$0xff]
        %v3225 = vld [vmem:[#allocation9 + $0x3c8] sm:$0xff]
        %v3226 = vld [vmem:[#allocation9 + $0x3d0] sm:$0xff]
        %v3227 = vld [vmem:[#allocation9 + $0x3d8] sm:$0xff]
        %v3228 = vld [vmem:[#allocation9 + $0x3e0] sm:$0xff]
        %v3229 = vld [vmem:[#allocation9 + $0x3e8] sm:$0xff]
        %v3230 = vld [vmem:[#allocation9 + $0x3f0] sm:$0xff]
        %v3231 = vld [vmem:[#allocation9 + $0x3f8] sm:$0xff]
        %3232 = vmatprep.subr.mxu0 %v3105
        %3233 = vmatpush1.msra.mxu0 %v3104
        %3234 = vmatprep.subr.mxu0 %v3109
        %3235 = vmatpush1.msra.mxu0 %v3108
        %3236 = vmatprep.subr.mxu0 %v3113
        %3237 = vmatpush1.msra.mxu0 %v3112
        %3238 = vmatprep.subr.mxu0 %v3117
        %3239 = vmatpush1.msra.mxu0 %v3116
        %3240 = vmatprep.subr.mxu0 %v3121
        %3241 = vmatpush1.msra.mxu0 %v3120
        %3242 = vmatprep.subr.mxu0 %v3125
        %3243 = vmatpush1.msra.mxu0 %v3124
        %3244 = vmatprep.subr.mxu0 %v3129
        %3245 = vmatpush1.msra.mxu0 %v3128
        %3246 = vmatprep.subr.mxu0 %v3133
        %3247 = vmatpush1.msra.mxu0 %v3132
        %3248 = vmatprep.subr.mxu0 %v3137
        %3249 = vmatpush1.msra.mxu0 %v3136
        %3250 = vmatprep.subr.mxu0 %v3141
        %3251 = vmatpush1.msra.mxu0 %v3140
        %3252 = vmatprep.subr.mxu0 %v3145
        %3253 = vmatpush1.msra.mxu0 %v3144
        %3254 = vmatprep.subr.mxu0 %v3149
        %3255 = vmatpush1.msra.mxu0 %v3148
        %3256 = vmatprep.subr.mxu0 %v3153
        %3257 = vmatpush1.msra.mxu0 %v3152
        %3258 = vmatprep.subr.mxu0 %v3157
        %3259 = vmatpush1.msra.mxu0 %v3156
        %3260 = vmatprep.subr.mxu0 %v3161
        %3261 = vmatpush1.msra.mxu0 %v3160
        %3262 = vmatprep.subr.mxu0 %v3165
        %3263 = vmatpush1.msra.mxu0 %v3164
        %3264 = vmatprep.subr.mxu0 %v3169
        %3265 = vmatpush1.msra.mxu0 %v3168
        %3266 = vmatprep.subr.mxu0 %v3173
        %3267 = vmatpush1.msra.mxu0 %v3172
        %3268 = vmatprep.subr.mxu0 %v3177
        %3269 = vmatpush1.msra.mxu0 %v3176
        %3270 = vmatprep.subr.mxu0 %v3181
        %3271 = vmatpush1.msra.mxu0 %v3180
        %3272 = vmatprep.subr.mxu0 %v3185
        %3273 = vmatpush1.msra.mxu0 %v3184
        %3274 = vmatprep.subr.mxu0 %v3189
        %3275 = vmatpush1.msra.mxu0 %v3188
        %3276 = vmatprep.subr.mxu0 %v3193
        %3277 = vmatpush1.msra.mxu0 %v3192
        %3278 = vmatprep.subr.mxu0 %v3197
        %3279 = vmatpush1.msra.mxu0 %v3196
        %3280 = vmatprep.subr.mxu0 %v3201
        %3281 = vmatpush1.msra.mxu0 %v3200
        %3282 = vmatprep.subr.mxu0 %v3205
        %3283 = vmatpush1.msra.mxu0 %v3204
        %3284 = vmatprep.subr.mxu0 %v3209
        %3285 = vmatpush1.msra.mxu0 %v3208
        %3286 = vmatprep.subr.mxu0 %v3213
        %3287 = vmatpush1.msra.mxu0 %v3212
        %3288 = vmatprep.subr.mxu0 %v3217
        %3289 = vmatpush1.msra.mxu0 %v3216
        %3290 = vmatprep.subr.mxu0 %v3221
        %3291 = vmatpush1.msra.mxu0 %v3220
        %3292 = vmatprep.subr.mxu0 %v3225
        %3293 = vmatpush1.msra.mxu0 %v3224
        %3294 = vmatprep.subr.mxu0 %v3229
        %3295 = vmatpush1.msra.mxu0 %v3228
        %3296 = vmatprep.mubr.f32.mxu0 %v3103
        %3297 = vmatmul.mubr.f32.gmra.mrb[0].mxu0 %v3100
        %v3298 = vpop.f32.mrb[0].mxu0
        %v3299 = vadd.f32 %v671, %v3298
        %v3300 = vpop.f32.mrb[0].mxu0
        %v3301 = vadd.f32 %v675, %v3300
        %3302 = vdwg.mxu0
        %3303 = vmatprep.subr.mxu0 %v3107
        %3304 = vmatpush1.msra.mxu0 %v3106
        %3305 = vmatprep.subr.mxu0 %v3111
        %3306 = vmatpush1.msra.mxu0 %v3110
        %3307 = vmatprep.subr.mxu0 %v3115
        %3308 = vmatpush1.msra.mxu0 %v3114
        %3309 = vmatprep.subr.mxu0 %v3119
        %3310 = vmatpush1.msra.mxu0 %v3118
        %3311 = vmatprep.subr.mxu0 %v3123
        %3312 = vmatpush1.msra.mxu0 %v3122
        %3313 = vmatprep.subr.mxu0 %v3127
        %3314 = vmatpush1.msra.mxu0 %v3126
        %3315 = vmatprep.subr.mxu0 %v3131
        %3316 = vmatpush1.msra.mxu0 %v3130
        %3317 = vmatprep.subr.mxu0 %v3135
        %3318 = vmatpush1.msra.mxu0 %v3134
        %3319 = vmatprep.subr.mxu0 %v3139
        %3320 = vmatpush1.msra.mxu0 %v3138
        %3321 = vmatprep.subr.mxu0 %v3143
        %3322 = vmatpush1.msra.mxu0 %v3142
        %3323 = vmatprep.subr.mxu0 %v3147
        %3324 = vmatpush1.msra.mxu0 %v3146
        %3325 = vmatprep.subr.mxu0 %v3151
        %3326 = vmatpush1.msra.mxu0 %v3150
        %3327 = vmatprep.subr.mxu0 %v3155
        %3328 = vmatpush1.msra.mxu0 %v3154
        %3329 = vmatprep.subr.mxu0 %v3159
        %3330 = vmatpush1.msra.mxu0 %v3158
        %3331 = vmatprep.subr.mxu0 %v3163
        %3332 = vmatpush1.msra.mxu0 %v3162
        %3333 = vmatprep.subr.mxu0 %v3167
        %3334 = vmatpush1.msra.mxu0 %v3166
        %3335 = vmatprep.subr.mxu0 %v3171
        %3336 = vmatpush1.msra.mxu0 %v3170
        %3337 = vmatprep.subr.mxu0 %v3175
        %3338 = vmatpush1.msra.mxu0 %v3174
        %3339 = vmatprep.subr.mxu0 %v3179
        %3340 = vmatpush1.msra.mxu0 %v3178
        %3341 = vmatprep.subr.mxu0 %v3183
        %3342 = vmatpush1.msra.mxu0 %v3182
        %3343 = vmatprep.subr.mxu0 %v3187
        %3344 = vmatpush1.msra.mxu0 %v3186
        %3345 = vmatprep.subr.mxu0 %v3191
        %3346 = vmatpush1.msra.mxu0 %v3190
        %3347 = vmatprep.subr.mxu0 %v3195
        %3348 = vmatpush1.msra.mxu0 %v3194
        %3349 = vmatprep.subr.mxu0 %v3199
        %3350 = vmatpush1.msra.mxu0 %v3198
        %3351 = vmatprep.subr.mxu0 %v3203
        %3352 = vmatpush1.msra.mxu0 %v3202
        %3353 = vmatprep.subr.mxu0 %v3207
        %3354 = vmatpush1.msra.mxu0 %v3206
        %3355 = vmatprep.subr.mxu0 %v3211
        %3356 = vmatpush1.msra.mxu0 %v3210
        %3357 = vmatprep.subr.mxu0 %v3215
        %3358 = vmatpush1.msra.mxu0 %v3214
        %3359 = vmatprep.subr.mxu0 %v3219
        %3360 = vmatpush1.msra.mxu0 %v3218
        %3361 = vmatprep.subr.mxu0 %v3223
        %3362 = vmatpush1.msra.mxu0 %v3222
        %3363 = vmatprep.subr.mxu0 %v3227
        %3364 = vmatpush1.msra.mxu0 %v3226
        %3365 = vmatprep.subr.mxu0 %v3231
        %3366 = vmatpush1.msra.mxu0 %v3230
        %3367 = vmatprep.mubr.f32.mxu0 %v3103
        %3368 = vmatmul.mubr.f32.gmra.mrb[0].mxu0 %v3100
        %v3369 = vpop.f32.mrb[0].mxu0
        %v3370 = vadd.f32 %v679, %v3369
        %v3371 = vpop.f32.mrb[0].mxu0
        %v3372 = vadd.f32 %v683, %v3371
        %3373 = vdwg.mxu0
        %v3374 = vld [vmem:[%s1202] sm:$0xff]
        %v3375 = vxor.u32 %v3299, 2147483648
        %v3376 = vmul.f32 %v3375, 1.442695
        %v3377 = vpow.pop %v3376
        %v3378 = vadd.f32 %v3377, 1.0
        %v3379 = vrcp.pop %v3378
        %v3380 = vmul.f32 1.0, %v3379
        %v3381 = vxor.u32 %v3301, 2147483648
        %v3382 = vmul.f32 %v3381, 1.442695
        %v3383 = vpow.pop %v3382
        %v3384 = vadd.f32 %v3383, 1.0
        %v3385 = vrcp.pop %v3384
        %v3386 = vmul.f32 1.0, %v3385
        %v3387 = vtanh.pop %v3370
        %v3388 = vxor.u32 %v3372, 2147483648
        %v3389 = vmul.f32 %v3388, 1.442695
        %v3390 = vpow.pop %v3389
        %v3391 = vadd.f32 %v3390, 1.0
        %v3392 = vrcp.pop %v3391
        %v3393 = vmul.f32 1.0, %v3392
        %v3394 = vmul.f32 %v3386, %v3374
        %v3395 = vmul.f32 %v3380, %v3387
        %v3396 = vadd.f32 %v3394, %v3395
        %v3397 = vtanh.pop %v3396
        %v3398 = vmul.f32 %v3393, %v3397
        %3399 = vst [vmem:[%s930] sm:$0xff] %v3398
        %3400 = vst [vmem:[%s1202] sm:$0xff] %v3396
        %s3401 = scalar_lea.vmem [#allocation5], 32
        %3402 = vst [vmem:[%s3401] sm:$0xff] %v3398
        %v3403 = vld [vmem:[#allocation2] sm:$0xff]
        %s3404 = scalar_lea.vmem [#allocation4], 160
        %v3405 = vld [vmem:[%s3404] sm:$0xff]
        %v3406 = vld [vmem:[%s3404 + $0x8] sm:$0xff]
        %v3407 = vld [vmem:[%s3404 + $0x10] sm:$0xff]
        %v3408 = vld [vmem:[%s3404 + $0x18] sm:$0xff]
        %v3409 = vld [vmem:[#allocation6] sm:$0xff]
        %v3410 = vld [vmem:[#allocation6 + $0x8] sm:$0xff]
        %v3411 = vld [vmem:[#allocation6 + $0x10] sm:$0xff]
        %v3412 = vld [vmem:[#allocation6 + $0x18] sm:$0xff]
        %v3413 = vld [vmem:[#allocation6 + $0x20] sm:$0xff]
        %v3414 = vld [vmem:[#allocation6 + $0x28] sm:$0xff]
        %v3415 = vld [vmem:[#allocation6 + $0x30] sm:$0xff]
        %v3416 = vld [vmem:[#allocation6 + $0x38] sm:$0xff]
        %v3417 = vld [vmem:[#allocation6 + $0x40] sm:$0xff]
        %v3418 = vld [vmem:[#allocation6 + $0x48] sm:$0xff]
        %v3419 = vld [vmem:[#allocation6 + $0x50] sm:$0xff]
        %v3420 = vld [vmem:[#allocation6 + $0x58] sm:$0xff]
        %v3421 = vld [vmem:[#allocation6 + $0x60] sm:$0xff]
        %v3422 = vld [vmem:[#allocation6 + $0x68] sm:$0xff]
        %v3423 = vld [vmem:[#allocation6 + $0x70] sm:$0xff]
        %v3424 = vld [vmem:[#allocation6 + $0x78] sm:$0xff]
        %v3425 = vld [vmem:[#allocation6 + $0x80] sm:$0xff]
        %v3426 = vld [vmem:[#allocation6 + $0x88] sm:$0xff]
        %v3427 = vld [vmem:[#allocation6 + $0x90] sm:$0xff]
        %v3428 = vld [vmem:[#allocation6 + $0x98] sm:$0xff]
        %v3429 = vld [vmem:[#allocation6 + $0xa0] sm:$0xff]
        %v3430 = vld [vmem:[#allocation6 + $0xa8] sm:$0xff]
        %v3431 = vld [vmem:[#allocation6 + $0xb0] sm:$0xff]
        %v3432 = vld [vmem:[#allocation6 + $0xb8] sm:$0xff]
        %v3433 = vld [vmem:[#allocation6 + $0xc0] sm:$0xff]
        %v3434 = vld [vmem:[#allocation6 + $0xc8] sm:$0xff]
        %v3435 = vld [vmem:[#allocation6 + $0xd0] sm:$0xff]
        %v3436 = vld [vmem:[#allocation6 + $0xd8] sm:$0xff]
        %v3437 = vld [vmem:[#allocation6 + $0xe0] sm:$0xff]
        %v3438 = vld [vmem:[#allocation6 + $0xe8] sm:$0xff]
        %v3439 = vld [vmem:[#allocation6 + $0xf0] sm:$0xff]
        %v3440 = vld [vmem:[#allocation6 + $0xf8] sm:$0xff]
        %v3441 = vld [vmem:[#allocation6 + $0x100] sm:$0xff]
        %v3442 = vld [vmem:[#allocation6 + $0x108] sm:$0xff]
        %v3443 = vld [vmem:[#allocation6 + $0x110] sm:$0xff]
        %v3444 = vld [vmem:[#allocation6 + $0x118] sm:$0xff]
        %v3445 = vld [vmem:[#allocation6 + $0x120] sm:$0xff]
        %v3446 = vld [vmem:[#allocation6 + $0x128] sm:$0xff]
        %v3447 = vld [vmem:[#allocation6 + $0x130] sm:$0xff]
        %v3448 = vld [vmem:[#allocation6 + $0x138] sm:$0xff]
        %v3449 = vld [vmem:[#allocation6 + $0x140] sm:$0xff]
        %v3450 = vld [vmem:[#allocation6 + $0x148] sm:$0xff]
        %v3451 = vld [vmem:[#allocation6 + $0x150] sm:$0xff]
        %v3452 = vld [vmem:[#allocation6 + $0x158] sm:$0xff]
        %v3453 = vld [vmem:[#allocation6 + $0x160] sm:$0xff]
        %v3454 = vld [vmem:[#allocation6 + $0x168] sm:$0xff]
        %v3455 = vld [vmem:[#allocation6 + $0x170] sm:$0xff]
        %v3456 = vld [vmem:[#allocation6 + $0x178] sm:$0xff]
        %v3457 = vld [vmem:[#allocation6 + $0x180] sm:$0xff]
        %v3458 = vld [vmem:[#allocation6 + $0x188] sm:$0xff]
        %v3459 = vld [vmem:[#allocation6 + $0x190] sm:$0xff]
        %v3460 = vld [vmem:[#allocation6 + $0x198] sm:$0xff]
        %v3461 = vld [vmem:[#allocation6 + $0x1a0] sm:$0xff]
        %v3462 = vld [vmem:[#allocation6 + $0x1a8] sm:$0xff]
        %v3463 = vld [vmem:[#allocation6 + $0x1b0] sm:$0xff]
        %v3464 = vld [vmem:[#allocation6 + $0x1b8] sm:$0xff]
        %v3465 = vld [vmem:[#allocation6 + $0x1c0] sm:$0xff]
        %v3466 = vld [vmem:[#allocation6 + $0x1c8] sm:$0xff]
        %v3467 = vld [vmem:[#allocation6 + $0x1d0] sm:$0xff]
        %v3468 = vld [vmem:[#allocation6 + $0x1d8] sm:$0xff]
        %v3469 = vld [vmem:[#allocation6 + $0x1e0] sm:$0xff]
        %v3470 = vld [vmem:[#allocation6 + $0x1e8] sm:$0xff]
        %v3471 = vld [vmem:[#allocation6 + $0x1f0] sm:$0xff]
        %v3472 = vld [vmem:[#allocation6 + $0x1f8] sm:$0xff]
        %3473 = vmatprep.subr.mxu0 %v3410
        %3474 = vmatpush1.msra.mxu0 %v3409
        %3475 = vmatprep.subr.mxu0 %v3414
        %3476 = vmatpush1.msra.mxu0 %v3413
        %3477 = vmatprep.subr.mxu0 %v3418
        %3478 = vmatpush1.msra.mxu0 %v3417
        %3479 = vmatprep.subr.mxu0 %v3422
        %3480 = vmatpush1.msra.mxu0 %v3421
        %3481 = vmatprep.subr.mxu0 %v3426
        %3482 = vmatpush1.msra.mxu0 %v3425
        %3483 = vmatprep.subr.mxu0 %v3430
        %3484 = vmatpush1.msra.mxu0 %v3429
        %3485 = vmatprep.subr.mxu0 %v3434
        %3486 = vmatpush1.msra.mxu0 %v3433
        %3487 = vmatprep.subr.mxu0 %v3438
        %3488 = vmatpush1.msra.mxu0 %v3437
        %3489 = vmatprep.subr.mxu0 %v3442
        %3490 = vmatpush1.msra.mxu0 %v3441
        %3491 = vmatprep.subr.mxu0 %v3446
        %3492 = vmatpush1.msra.mxu0 %v3445
        %3493 = vmatprep.subr.mxu0 %v3450
        %3494 = vmatpush1.msra.mxu0 %v3449
        %3495 = vmatprep.subr.mxu0 %v3454
        %3496 = vmatpush1.msra.mxu0 %v3453
        %3497 = vmatprep.subr.mxu0 %v3458
        %3498 = vmatpush1.msra.mxu0 %v3457
        %3499 = vmatprep.subr.mxu0 %v3462
        %3500 = vmatpush1.msra.mxu0 %v3461
        %3501 = vmatprep.subr.mxu0 %v3466
        %3502 = vmatpush1.msra.mxu0 %v3465
        %3503 = vmatprep.subr.mxu0 %v3470
        %3504 = vmatpush1.msra.mxu0 %v3469
        %3505 = vmatprep.subr.mxu0 0.0
        %3506 = vmatpush1.msra.mxu0 0.0
        %3507 = vmatprep.subr.mxu0 0.0
        %3508 = vmatpush1.msra.mxu0 0.0
        %3509 = vmatprep.subr.mxu0 0.0
        %3510 = vmatpush1.msra.mxu0 0.0
        %3511 = vmatprep.subr.mxu0 0.0
        %3512 = vmatpush1.msra.mxu0 0.0
        %3513 = vmatprep.subr.mxu0 0.0
        %3514 = vmatpush1.msra.mxu0 0.0
        %3515 = vmatprep.subr.mxu0 0.0
        %3516 = vmatpush1.msra.mxu0 0.0
        %3517 = vmatprep.subr.mxu0 0.0
        %3518 = vmatpush1.msra.mxu0 0.0
        %3519 = vmatprep.subr.mxu0 0.0
        %3520 = vmatpush1.msra.mxu0 0.0
        %3521 = vmatprep.subr.mxu0 0.0
        %3522 = vmatpush1.msra.mxu0 0.0
        %3523 = vmatprep.subr.mxu0 0.0
        %3524 = vmatpush1.msra.mxu0 0.0
        %3525 = vmatprep.subr.mxu0 0.0
        %3526 = vmatpush1.msra.mxu0 0.0
        %3527 = vmatprep.subr.mxu0 0.0
        %3528 = vmatpush1.msra.mxu0 0.0
        %3529 = vmatprep.subr.mxu0 0.0
        %3530 = vmatpush1.msra.mxu0 0.0
        %3531 = vmatprep.subr.mxu0 0.0
        %3532 = vmatpush1.msra.mxu0 0.0
        %3533 = vmatprep.subr.mxu0 0.0
        %3534 = vmatpush1.msra.mxu0 0.0
        %3535 = vmatprep.subr.mxu0 0.0
        %3536 = vmatpush1.msra.mxu0 0.0
        %3537 = vmatprep.mubr.f32.mxu0 0.0
        %3538 = vmatmul.mubr.f32.gmra.mrb[0].mxu0 %v3403
        %v3539 = vpop.f32.mrb[0].mxu0
        %v3540 = vadd.f32 0.0, %v3539
        %v3541 = vpop.f32.mrb[0].mxu0
        %v3542 = vadd.f32 0.0, %v3541
        %3543 = vdwg.mxu0
        %3544 = vmatprep.subr.mxu0 %v3412
        %3545 = vmatpush1.msra.mxu0 %v3411
        %3546 = vmatprep.subr.mxu0 %v3416
        %3547 = vmatpush1.msra.mxu0 %v3415
        %3548 = vmatprep.subr.mxu0 %v3420
        %3549 = vmatpush1.msra.mxu0 %v3419
        %3550 = vmatprep.subr.mxu0 %v3424
        %3551 = vmatpush1.msra.mxu0 %v3423
        %3552 = vmatprep.subr.mxu0 %v3428
        %3553 = vmatpush1.msra.mxu0 %v3427
        %3554 = vmatprep.subr.mxu0 %v3432
        %3555 = vmatpush1.msra.mxu0 %v3431
        %3556 = vmatprep.subr.mxu0 %v3436
        %3557 = vmatpush1.msra.mxu0 %v3435
        %3558 = vmatprep.subr.mxu0 %v3440
        %3559 = vmatpush1.msra.mxu0 %v3439
        %3560 = vmatprep.subr.mxu0 %v3444
        %3561 = vmatpush1.msra.mxu0 %v3443
        %3562 = vmatprep.subr.mxu0 %v3448
        %3563 = vmatpush1.msra.mxu0 %v3447
        %3564 = vmatprep.subr.mxu0 %v3452
        %3565 = vmatpush1.msra.mxu0 %v3451
        %3566 = vmatprep.subr.mxu0 %v3456
        %3567 = vmatpush1.msra.mxu0 %v3455
        %3568 = vmatprep.subr.mxu0 %v3460
        %3569 = vmatpush1.msra.mxu0 %v3459
        %3570 = vmatprep.subr.mxu0 %v3464
        %3571 = vmatpush1.msra.mxu0 %v3463
        %3572 = vmatprep.subr.mxu0 %v3468
        %3573 = vmatpush1.msra.mxu0 %v3467
        %3574 = vmatprep.subr.mxu0 %v3472
        %3575 = vmatpush1.msra.mxu0 %v3471
        %3576 = vmatprep.subr.mxu0 0.0
        %3577 = vmatpush1.msra.mxu0 0.0
        %3578 = vmatprep.subr.mxu0 0.0
        %3579 = vmatpush1.msra.mxu0 0.0
        %3580 = vmatprep.subr.mxu0 0.0
        %3581 = vmatpush1.msra.mxu0 0.0
        %3582 = vmatprep.subr.mxu0 0.0
        %3583 = vmatpush1.msra.mxu0 0.0
        %3584 = vmatprep.subr.mxu0 0.0
        %3585 = vmatpush1.msra.mxu0 0.0
        %3586 = vmatprep.subr.mxu0 0.0
        %3587 = vmatpush1.msra.mxu0 0.0
        %3588 = vmatprep.subr.mxu0 0.0
        %3589 = vmatpush1.msra.mxu0 0.0
        %3590 = vmatprep.subr.mxu0 0.0
        %3591 = vmatpush1.msra.mxu0 0.0
        %3592 = vmatprep.subr.mxu0 0.0
        %3593 = vmatpush1.msra.mxu0 0.0
        %3594 = vmatprep.subr.mxu0 0.0
        %3595 = vmatpush1.msra.mxu0 0.0
        %3596 = vmatprep.subr.mxu0 0.0
        %3597 = vmatpush1.msra.mxu0 0.0
        %3598 = vmatprep.subr.mxu0 0.0
        %3599 = vmatpush1.msra.mxu0 0.0
        %3600 = vmatprep.subr.mxu0 0.0
        %3601 = vmatpush1.msra.mxu0 0.0
        %3602 = vmatprep.subr.mxu0 0.0
        %3603 = vmatpush1.msra.mxu0 0.0
        %3604 = vmatprep.subr.mxu0 0.0
        %3605 = vmatpush1.msra.mxu0 0.0
        %3606 = vmatprep.subr.mxu0 0.0
        %3607 = vmatpush1.msra.mxu0 0.0
        %3608 = vmatprep.mubr.f32.mxu0 0.0
        %3609 = vmatmul.mubr.f32.gmra.mrb[0].mxu0 %v3403
        %v3610 = vpop.f32.mrb[0].mxu0
        %v3611 = vadd.f32 0.0, %v3610
        %v3612 = vpop.f32.mrb[0].mxu0
        %v3613 = vadd.f32 0.0, %v3612
        %3614 = vdwg.mxu0
        %v3615 = vadd.f32 %v3405, %v3540
        %v3616 = vadd.f32 %v3406, %v3542
        %v3617 = vadd.f32 %v3407, %v3611
        %v3618 = vadd.f32 %v3408, %v3613
        %v3619 = vld [vmem:[#allocation3] sm:$0xff]
        %v3620 = vxor.u32 %v3615, 2147483648
        %v3621 = vmul.f32 %v3620, 1.442695
        %v3622 = vpow.pop %v3621
        %v3623 = vadd.f32 %v3622, 1.0
        %v3624 = vrcp.pop %v3623
        %v3625 = vmul.f32 1.0, %v3624
        %v3626 = vxor.u32 %v3616, 2147483648
        %v3627 = vmul.f32 %v3626, 1.442695
        %v3628 = vpow.pop %v3627
        %v3629 = vadd.f32 %v3628, 1.0
        %v3630 = vrcp.pop %v3629
        %v3631 = vmul.f32 1.0, %v3630
        %v3632 = vtanh.pop %v3617
        %v3633 = vxor.u32 %v3618, 2147483648
        %v3634 = vmul.f32 %v3633, 1.442695
        %v3635 = vpow.pop %v3634
        %v3636 = vadd.f32 %v3635, 1.0
        %v3637 = vrcp.pop %v3636
        %v3638 = vmul.f32 1.0, %v3637
        %v3639 = vmul.f32 %v3631, %v3619
        %v3640 = vmul.f32 %v3625, %v3632
        %v3641 = vadd.f32 %v3639, %v3640
        %v3642 = vtanh.pop %v3641
        %v3643 = vmul.f32 %v3638, %v3642
        %3644 = vst [vmem:[#allocation2] sm:$0xff] %v3643
        %3645 = vst [vmem:[#allocation3] sm:$0xff] %v3641
        %v3646 = vld [vmem:[%s930] sm:$0xff]
        %v3647 = vld [vmem:[#allocation9] sm:$0xff]
        %v3648 = vld [vmem:[#allocation9 + $0x8] sm:$0xff]
        %v3649 = vld [vmem:[#allocation9 + $0x10] sm:$0xff]
        %v3650 = vld [vmem:[#allocation9 + $0x18] sm:$0xff]
        %v3651 = vld [vmem:[#allocation9 + $0x20] sm:$0xff]
        %v3652 = vld [vmem:[#allocation9 + $0x28] sm:$0xff]
        %v3653 = vld [vmem:[#allocation9 + $0x30] sm:$0xff]
        %v3654 = vld [vmem:[#allocation9 + $0x38] sm:$0xff]
        %v3655 = vld [vmem:[#allocation9 + $0x40] sm:$0xff]
        %v3656 = vld [vmem:[#allocation9 + $0x48] sm:$0xff]
        %v3657 = vld [vmem:[#allocation9 + $0x50] sm:$0xff]
        %v3658 = vld [vmem:[#allocation9 + $0x58] sm:$0xff]
        %v3659 = vld [vmem:[#allocation9 + $0x60] sm:$0xff]
        %v3660 = vld [vmem:[#allocation9 + $0x68] sm:$0xff]
        %v3661 = vld [vmem:[#allocation9 + $0x70] sm:$0xff]
        %v3662 = vld [vmem:[#allocation9 + $0x78] sm:$0xff]
        %v3663 = vld [vmem:[#allocation9 + $0x80] sm:$0xff]
        %v3664 = vld [vmem:[#allocation9 + $0x88] sm:$0xff]
        %v3665 = vld [vmem:[#allocation9 + $0x90] sm:$0xff]
        %v3666 = vld [vmem:[#allocation9 + $0x98] sm:$0xff]
        %v3667 = vld [vmem:[#allocation9 + $0xa0] sm:$0xff]
        %v3668 = vld [vmem:[#allocation9 + $0xa8] sm:$0xff]
        %v3669 = vld [vmem:[#allocation9 + $0xb0] sm:$0xff]
        %v3670 = vld [vmem:[#allocation9 + $0xb8] sm:$0xff]
        %v3671 = vld [vmem:[#allocation9 + $0xc0] sm:$0xff]
        %v3672 = vld [vmem:[#allocation9 + $0xc8] sm:$0xff]
        %v3673 = vld [vmem:[#allocation9 + $0xd0] sm:$0xff]
        %v3674 = vld [vmem:[#allocation9 + $0xd8] sm:$0xff]
        %v3675 = vld [vmem:[#allocation9 + $0xe0] sm:$0xff]
        %v3676 = vld [vmem:[#allocation9 + $0xe8] sm:$0xff]
        %v3677 = vld [vmem:[#allocation9 + $0xf0] sm:$0xff]
        %v3678 = vld [vmem:[#allocation9 + $0xf8] sm:$0xff]
        %v3679 = vld [vmem:[#allocation9 + $0x100] sm:$0xff]
        %v3680 = vld [vmem:[#allocation9 + $0x108] sm:$0xff]
        %v3681 = vld [vmem:[#allocation9 + $0x110] sm:$0xff]
        %v3682 = vld [vmem:[#allocation9 + $0x118] sm:$0xff]
        %v3683 = vld [vmem:[#allocation9 + $0x120] sm:$0xff]
        %v3684 = vld [vmem:[#allocation9 + $0x128] sm:$0xff]
        %v3685 = vld [vmem:[#allocation9 + $0x130] sm:$0xff]
        %v3686 = vld [vmem:[#allocation9 + $0x138] sm:$0xff]
        %v3687 = vld [vmem:[#allocation9 + $0x140] sm:$0xff]
        %v3688 = vld [vmem:[#allocation9 + $0x148] sm:$0xff]
        %v3689 = vld [vmem:[#allocation9 + $0x150] sm:$0xff]
        %v3690 = vld [vmem:[#allocation9 + $0x158] sm:$0xff]
        %v3691 = vld [vmem:[#allocation9 + $0x160] sm:$0xff]
        %v3692 = vld [vmem:[#allocation9 + $0x168] sm:$0xff]
        %v3693 = vld [vmem:[#allocation9 + $0x170] sm:$0xff]
        %v3694 = vld [vmem:[#allocation9 + $0x178] sm:$0xff]
        %v3695 = vld [vmem:[#allocation9 + $0x180] sm:$0xff]
        %v3696 = vld [vmem:[#allocation9 + $0x188] sm:$0xff]
        %v3697 = vld [vmem:[#allocation9 + $0x190] sm:$0xff]
        %v3698 = vld [vmem:[#allocation9 + $0x198] sm:$0xff]
        %v3699 = vld [vmem:[#allocation9 + $0x1a0] sm:$0xff]
        %v3700 = vld [vmem:[#allocation9 + $0x1a8] sm:$0xff]
        %v3701 = vld [vmem:[#allocation9 + $0x1b0] sm:$0xff]
        %v3702 = vld [vmem:[#allocation9 + $0x1b8] sm:$0xff]
        %v3703 = vld [vmem:[#allocation9 + $0x1c0] sm:$0xff]
        %v3704 = vld [vmem:[#allocation9 + $0x1c8] sm:$0xff]
        %v3705 = vld [vmem:[#allocation9 + $0x1d0] sm:$0xff]
        %v3706 = vld [vmem:[#allocation9 + $0x1d8] sm:$0xff]
        %v3707 = vld [vmem:[#allocation9 + $0x1e0] sm:$0xff]
        %v3708 = vld [vmem:[#allocation9 + $0x1e8] sm:$0xff]
        %v3709 = vld [vmem:[#allocation9 + $0x1f0] sm:$0xff]
        %v3710 = vld [vmem:[#allocation9 + $0x1f8] sm:$0xff]
        %v3711 = vld [vmem:[#allocation9 + $0x200] sm:$0xff]
        %v3712 = vld [vmem:[#allocation9 + $0x208] sm:$0xff]
        %v3713 = vld [vmem:[#allocation9 + $0x210] sm:$0xff]
        %v3714 = vld [vmem:[#allocation9 + $0x218] sm:$0xff]
        %v3715 = vld [vmem:[#allocation9 + $0x220] sm:$0xff]
        %v3716 = vld [vmem:[#allocation9 + $0x228] sm:$0xff]
        %v3717 = vld [vmem:[#allocation9 + $0x230] sm:$0xff]
        %v3718 = vld [vmem:[#allocation9 + $0x238] sm:$0xff]
        %v3719 = vld [vmem:[#allocation9 + $0x240] sm:$0xff]
        %v3720 = vld [vmem:[#allocation9 + $0x248] sm:$0xff]
        %v3721 = vld [vmem:[#allocation9 + $0x250] sm:$0xff]
        %v3722 = vld [vmem:[#allocation9 + $0x258] sm:$0xff]
        %v3723 = vld [vmem:[#allocation9 + $0x260] sm:$0xff]
        %v3724 = vld [vmem:[#allocation9 + $0x268] sm:$0xff]
        %v3725 = vld [vmem:[#allocation9 + $0x270] sm:$0xff]
        %v3726 = vld [vmem:[#allocation9 + $0x278] sm:$0xff]
        %v3727 = vld [vmem:[#allocation9 + $0x280] sm:$0xff]
        %v3728 = vld [vmem:[#allocation9 + $0x288] sm:$0xff]
        %v3729 = vld [vmem:[#allocation9 + $0x290] sm:$0xff]
        %v3730 = vld [vmem:[#allocation9 + $0x298] sm:$0xff]
        %v3731 = vld [vmem:[#allocation9 + $0x2a0] sm:$0xff]
        %v3732 = vld [vmem:[#allocation9 + $0x2a8] sm:$0xff]
        %v3733 = vld [vmem:[#allocation9 + $0x2b0] sm:$0xff]
        %v3734 = vld [vmem:[#allocation9 + $0x2b8] sm:$0xff]
        %v3735 = vld [vmem:[#allocation9 + $0x2c0] sm:$0xff]
        %v3736 = vld [vmem:[#allocation9 + $0x2c8] sm:$0xff]
        %v3737 = vld [vmem:[#allocation9 + $0x2d0] sm:$0xff]
        %v3738 = vld [vmem:[#allocation9 + $0x2d8] sm:$0xff]
        %v3739 = vld [vmem:[#allocation9 + $0x2e0] sm:$0xff]
        %v3740 = vld [vmem:[#allocation9 + $0x2e8] sm:$0xff]
        %v3741 = vld [vmem:[#allocation9 + $0x2f0] sm:$0xff]
        %v3742 = vld [vmem:[#allocation9 + $0x2f8] sm:$0xff]
        %v3743 = vld [vmem:[#allocation9 + $0x300] sm:$0xff]
        %v3744 = vld [vmem:[#allocation9 + $0x308] sm:$0xff]
        %v3745 = vld [vmem:[#allocation9 + $0x310] sm:$0xff]
        %v3746 = vld [vmem:[#allocation9 + $0x318] sm:$0xff]
        %v3747 = vld [vmem:[#allocation9 + $0x320] sm:$0xff]
        %v3748 = vld [vmem:[#allocation9 + $0x328] sm:$0xff]
        %v3749 = vld [vmem:[#allocation9 + $0x330] sm:$0xff]
        %v3750 = vld [vmem:[#allocation9 + $0x338] sm:$0xff]
        %v3751 = vld [vmem:[#allocation9 + $0x340] sm:$0xff]
        %v3752 = vld [vmem:[#allocation9 + $0x348] sm:$0xff]
        %v3753 = vld [vmem:[#allocation9 + $0x350] sm:$0xff]
        %v3754 = vld [vmem:[#allocation9 + $0x358] sm:$0xff]
        %v3755 = vld [vmem:[#allocation9 + $0x360] sm:$0xff]
        %v3756 = vld [vmem:[#allocation9 + $0x368] sm:$0xff]
        %v3757 = vld [vmem:[#allocation9 + $0x370] sm:$0xff]
        %v3758 = vld [vmem:[#allocation9 + $0x378] sm:$0xff]
        %v3759 = vld [vmem:[#allocation9 + $0x380] sm:$0xff]
        %v3760 = vld [vmem:[#allocation9 + $0x388] sm:$0xff]
        %v3761 = vld [vmem:[#allocation9 + $0x390] sm:$0xff]
        %v3762 = vld [vmem:[#allocation9 + $0x398] sm:$0xff]
        %v3763 = vld [vmem:[#allocation9 + $0x3a0] sm:$0xff]
        %v3764 = vld [vmem:[#allocation9 + $0x3a8] sm:$0xff]
        %v3765 = vld [vmem:[#allocation9 + $0x3b0] sm:$0xff]
        %v3766 = vld [vmem:[#allocation9 + $0x3b8] sm:$0xff]
        %v3767 = vld [vmem:[#allocation9 + $0x3c0] sm:$0xff]
        %v3768 = vld [vmem:[#allocation9 + $0x3c8] sm:$0xff]
        %v3769 = vld [vmem:[#allocation9 + $0x3d0] sm:$0xff]
        %v3770 = vld [vmem:[#allocation9 + $0x3d8] sm:$0xff]
        %v3771 = vld [vmem:[#allocation9 + $0x3e0] sm:$0xff]
        %v3772 = vld [vmem:[#allocation9 + $0x3e8] sm:$0xff]
        %v3773 = vld [vmem:[#allocation9 + $0x3f0] sm:$0xff]
        %v3774 = vld [vmem:[#allocation9 + $0x3f8] sm:$0xff]
        %3775 = vmatprep.subr.mxu0 %v3648
        %3776 = vmatpush1.msra.mxu0 %v3647
        %3777 = vmatprep.subr.mxu0 %v3652
        %3778 = vmatpush1.msra.mxu0 %v3651
        %3779 = vmatprep.subr.mxu0 %v3656
        %3780 = vmatpush1.msra.mxu0 %v3655
        %3781 = vmatprep.subr.mxu0 %v3660
        %3782 = vmatpush1.msra.mxu0 %v3659
        %3783 = vmatprep.subr.mxu0 %v3664
        %3784 = vmatpush1.msra.mxu0 %v3663
        %3785 = vmatprep.subr.mxu0 %v3668
        %3786 = vmatpush1.msra.mxu0 %v3667
        %3787 = vmatprep.subr.mxu0 %v3672
        %3788 = vmatpush1.msra.mxu0 %v3671
        %3789 = vmatprep.subr.mxu0 %v3676
        %3790 = vmatpush1.msra.mxu0 %v3675
        %3791 = vmatprep.subr.mxu0 %v3680
        %3792 = vmatpush1.msra.mxu0 %v3679
        %3793 = vmatprep.subr.mxu0 %v3684
        %3794 = vmatpush1.msra.mxu0 %v3683
        %3795 = vmatprep.subr.mxu0 %v3688
        %3796 = vmatpush1.msra.mxu0 %v3687
        %3797 = vmatprep.subr.mxu0 %v3692
        %3798 = vmatpush1.msra.mxu0 %v3691
        %3799 = vmatprep.subr.mxu0 %v3696
        %3800 = vmatpush1.msra.mxu0 %v3695
        %3801 = vmatprep.subr.mxu0 %v3700
        %3802 = vmatpush1.msra.mxu0 %v3699
        %3803 = vmatprep.subr.mxu0 %v3704
        %3804 = vmatpush1.msra.mxu0 %v3703
        %3805 = vmatprep.subr.mxu0 %v3708
        %3806 = vmatpush1.msra.mxu0 %v3707
        %3807 = vmatprep.subr.mxu0 %v3712
        %3808 = vmatpush1.msra.mxu0 %v3711
        %3809 = vmatprep.subr.mxu0 %v3716
        %3810 = vmatpush1.msra.mxu0 %v3715
        %3811 = vmatprep.subr.mxu0 %v3720
        %3812 = vmatpush1.msra.mxu0 %v3719
        %3813 = vmatprep.subr.mxu0 %v3724
        %3814 = vmatpush1.msra.mxu0 %v3723
        %3815 = vmatprep.subr.mxu0 %v3728
        %3816 = vmatpush1.msra.mxu0 %v3727
        %3817 = vmatprep.subr.mxu0 %v3732
        %3818 = vmatpush1.msra.mxu0 %v3731
        %3819 = vmatprep.subr.mxu0 %v3736
        %3820 = vmatpush1.msra.mxu0 %v3735
        %3821 = vmatprep.subr.mxu0 %v3740
        %3822 = vmatpush1.msra.mxu0 %v3739
        %3823 = vmatprep.subr.mxu0 %v3744
        %3824 = vmatpush1.msra.mxu0 %v3743
        %3825 = vmatprep.subr.mxu0 %v3748
        %3826 = vmatpush1.msra.mxu0 %v3747
        %3827 = vmatprep.subr.mxu0 %v3752
        %3828 = vmatpush1.msra.mxu0 %v3751
        %3829 = vmatprep.subr.mxu0 %v3756
        %3830 = vmatpush1.msra.mxu0 %v3755
        %3831 = vmatprep.subr.mxu0 %v3760
        %3832 = vmatpush1.msra.mxu0 %v3759
        %3833 = vmatprep.subr.mxu0 %v3764
        %3834 = vmatpush1.msra.mxu0 %v3763
        %3835 = vmatprep.subr.mxu0 %v3768
        %3836 = vmatpush1.msra.mxu0 %v3767
        %3837 = vmatprep.subr.mxu0 %v3772
        %3838 = vmatpush1.msra.mxu0 %v3771
        %3839 = vmatprep.mubr.f32.mxu0 %v3646
        %3840 = vmatmul.mubr.f32.gmra.mrb[0].mxu0 %v3643
        %v3841 = vpop.f32.mrb[0].mxu0
        %v3842 = vadd.f32 %v671, %v3841
        %v3843 = vpop.f32.mrb[0].mxu0
        %v3844 = vadd.f32 %v675, %v3843
        %3845 = vdwg.mxu0
        %3846 = vmatprep.subr.mxu0 %v3650
        %3847 = vmatpush1.msra.mxu0 %v3649
        %3848 = vmatprep.subr.mxu0 %v3654
        %3849 = vmatpush1.msra.mxu0 %v3653
        %3850 = vmatprep.subr.mxu0 %v3658
        %3851 = vmatpush1.msra.mxu0 %v3657
        %3852 = vmatprep.subr.mxu0 %v3662
        %3853 = vmatpush1.msra.mxu0 %v3661
        %3854 = vmatprep.subr.mxu0 %v3666
        %3855 = vmatpush1.msra.mxu0 %v3665
        %3856 = vmatprep.subr.mxu0 %v3670
        %3857 = vmatpush1.msra.mxu0 %v3669
        %3858 = vmatprep.subr.mxu0 %v3674
        %3859 = vmatpush1.msra.mxu0 %v3673
        %3860 = vmatprep.subr.mxu0 %v3678
        %3861 = vmatpush1.msra.mxu0 %v3677
        %3862 = vmatprep.subr.mxu0 %v3682
        %3863 = vmatpush1.msra.mxu0 %v3681
        %3864 = vmatprep.subr.mxu0 %v3686
        %3865 = vmatpush1.msra.mxu0 %v3685
        %3866 = vmatprep.subr.mxu0 %v3690
        %3867 = vmatpush1.msra.mxu0 %v3689
        %3868 = vmatprep.subr.mxu0 %v3694
        %3869 = vmatpush1.msra.mxu0 %v3693
        %3870 = vmatprep.subr.mxu0 %v3698
        %3871 = vmatpush1.msra.mxu0 %v3697
        %3872 = vmatprep.subr.mxu0 %v3702
        %3873 = vmatpush1.msra.mxu0 %v3701
        %3874 = vmatprep.subr.mxu0 %v3706
        %3875 = vmatpush1.msra.mxu0 %v3705
        %3876 = vmatprep.subr.mxu0 %v3710
        %3877 = vmatpush1.msra.mxu0 %v3709
        %3878 = vmatprep.subr.mxu0 %v3714
        %3879 = vmatpush1.msra.mxu0 %v3713
        %3880 = vmatprep.subr.mxu0 %v3718
        %3881 = vmatpush1.msra.mxu0 %v3717
        %3882 = vmatprep.subr.mxu0 %v3722
        %3883 = vmatpush1.msra.mxu0 %v3721
        %3884 = vmatprep.subr.mxu0 %v3726
        %3885 = vmatpush1.msra.mxu0 %v3725
        %3886 = vmatprep.subr.mxu0 %v3730
        %3887 = vmatpush1.msra.mxu0 %v3729
        %3888 = vmatprep.subr.mxu0 %v3734
        %3889 = vmatpush1.msra.mxu0 %v3733
        %3890 = vmatprep.subr.mxu0 %v3738
        %3891 = vmatpush1.msra.mxu0 %v3737
        %3892 = vmatprep.subr.mxu0 %v3742
        %3893 = vmatpush1.msra.mxu0 %v3741
        %3894 = vmatprep.subr.mxu0 %v3746
        %3895 = vmatpush1.msra.mxu0 %v3745
        %3896 = vmatprep.subr.mxu0 %v3750
        %3897 = vmatpush1.msra.mxu0 %v3749
        %3898 = vmatprep.subr.mxu0 %v3754
        %3899 = vmatpush1.msra.mxu0 %v3753
        %3900 = vmatprep.subr.mxu0 %v3758
        %3901 = vmatpush1.msra.mxu0 %v3757
        %3902 = vmatprep.subr.mxu0 %v3762
        %3903 = vmatpush1.msra.mxu0 %v3761
        %3904 = vmatprep.subr.mxu0 %v3766
        %3905 = vmatpush1.msra.mxu0 %v3765
        %3906 = vmatprep.subr.mxu0 %v3770
        %3907 = vmatpush1.msra.mxu0 %v3769
        %3908 = vmatprep.subr.mxu0 %v3774
        %3909 = vmatpush1.msra.mxu0 %v3773
        %3910 = vmatprep.mubr.f32.mxu0 %v3646
        %3911 = vmatmul.mubr.f32.gmra.mrb[0].mxu0 %v3643
        %v3912 = vpop.f32.mrb[0].mxu0
        %v3913 = vadd.f32 %v679, %v3912
        %v3914 = vpop.f32.mrb[0].mxu0
        %v3915 = vadd.f32 %v683, %v3914
        %3916 = vdwg.mxu0
        %v3917 = vld [vmem:[%s1202] sm:$0xff]
        %v3918 = vxor.u32 %v3842, 2147483648
        %v3919 = vmul.f32 %v3918, 1.442695
        %v3920 = vpow.pop %v3919
        %v3921 = vadd.f32 %v3920, 1.0
        %v3922 = vrcp.pop %v3921
        %v3923 = vmul.f32 1.0, %v3922
        %v3924 = vxor.u32 %v3844, 2147483648
        %v3925 = vmul.f32 %v3924, 1.442695
        %v3926 = vpow.pop %v3925
        %v3927 = vadd.f32 %v3926, 1.0
        %v3928 = vrcp.pop %v3927
        %v3929 = vmul.f32 1.0, %v3928
        %v3930 = vtanh.pop %v3913
        %v3931 = vxor.u32 %v3915, 2147483648
        %v3932 = vmul.f32 %v3931, 1.442695
        %v3933 = vpow.pop %v3932
        %v3934 = vadd.f32 %v3933, 1.0
        %v3935 = vrcp.pop %v3934
        %v3936 = vmul.f32 1.0, %v3935
        %v3937 = vmul.f32 %v3929, %v3917
        %v3938 = vmul.f32 %v3923, %v3930
        %v3939 = vadd.f32 %v3937, %v3938
        %v3940 = vtanh.pop %v3939
        %v3941 = vmul.f32 %v3936, %v3940
        %3942 = vst [vmem:[%s930] sm:$0xff] %v3941
        %3943 = vst [vmem:[%s1202] sm:$0xff] %v3939
        %s3944 = scalar_lea.vmem [#allocation5], 40
        %3945 = vst [vmem:[%s3944] sm:$0xff] %v3941
        %v3946 = vld [vmem:[#allocation2] sm:$0xff]
        %s3947 = scalar_lea.vmem [#allocation4], 192
        %v3948 = vld [vmem:[%s3947] sm:$0xff]
        %v3949 = vld [vmem:[%s3947 + $0x8] sm:$0xff]
        %v3950 = vld [vmem:[%s3947 + $0x10] sm:$0xff]
        %v3951 = vld [vmem:[%s3947 + $0x18] sm:$0xff]
        %v3952 = vld [vmem:[#allocation6] sm:$0xff]
        %v3953 = vld [vmem:[#allocation6 + $0x8] sm:$0xff]
        %v3954 = vld [vmem:[#allocation6 + $0x10] sm:$0xff]
        %v3955 = vld [vmem:[#allocation6 + $0x18] sm:$0xff]
        %v3956 = vld [vmem:[#allocation6 + $0x20] sm:$0xff]
        %v3957 = vld [vmem:[#allocation6 + $0x28] sm:$0xff]
        %v3958 = vld [vmem:[#allocation6 + $0x30] sm:$0xff]
        %v3959 = vld [vmem:[#allocation6 + $0x38] sm:$0xff]
        %v3960 = vld [vmem:[#allocation6 + $0x40] sm:$0xff]
        %v3961 = vld [vmem:[#allocation6 + $0x48] sm:$0xff]
        %v3962 = vld [vmem:[#allocation6 + $0x50] sm:$0xff]
        %v3963 = vld [vmem:[#allocation6 + $0x58] sm:$0xff]
        %v3964 = vld [vmem:[#allocation6 + $0x60] sm:$0xff]
        %v3965 = vld [vmem:[#allocation6 + $0x68] sm:$0xff]
        %v3966 = vld [vmem:[#allocation6 + $0x70] sm:$0xff]
        %v3967 = vld [vmem:[#allocation6 + $0x78] sm:$0xff]
        %v3968 = vld [vmem:[#allocation6 + $0x80] sm:$0xff]
        %v3969 = vld [vmem:[#allocation6 + $0x88] sm:$0xff]
        %v3970 = vld [vmem:[#allocation6 + $0x90] sm:$0xff]
        %v3971 = vld [vmem:[#allocation6 + $0x98] sm:$0xff]
        %v3972 = vld [vmem:[#allocation6 + $0xa0] sm:$0xff]
        %v3973 = vld [vmem:[#allocation6 + $0xa8] sm:$0xff]
        %v3974 = vld [vmem:[#allocation6 + $0xb0] sm:$0xff]
        %v3975 = vld [vmem:[#allocation6 + $0xb8] sm:$0xff]
        %v3976 = vld [vmem:[#allocation6 + $0xc0] sm:$0xff]
        %v3977 = vld [vmem:[#allocation6 + $0xc8] sm:$0xff]
        %v3978 = vld [vmem:[#allocation6 + $0xd0] sm:$0xff]
        %v3979 = vld [vmem:[#allocation6 + $0xd8] sm:$0xff]
        %v3980 = vld [vmem:[#allocation6 + $0xe0] sm:$0xff]
        %v3981 = vld [vmem:[#allocation6 + $0xe8] sm:$0xff]
        %v3982 = vld [vmem:[#allocation6 + $0xf0] sm:$0xff]
        %v3983 = vld [vmem:[#allocation6 + $0xf8] sm:$0xff]
        %v3984 = vld [vmem:[#allocation6 + $0x100] sm:$0xff]
        %v3985 = vld [vmem:[#allocation6 + $0x108] sm:$0xff]
        %v3986 = vld [vmem:[#allocation6 + $0x110] sm:$0xff]
        %v3987 = vld [vmem:[#allocation6 + $0x118] sm:$0xff]
        %v3988 = vld [vmem:[#allocation6 + $0x120] sm:$0xff]
        %v3989 = vld [vmem:[#allocation6 + $0x128] sm:$0xff]
        %v3990 = vld [vmem:[#allocation6 + $0x130] sm:$0xff]
        %v3991 = vld [vmem:[#allocation6 + $0x138] sm:$0xff]
        %v3992 = vld [vmem:[#allocation6 + $0x140] sm:$0xff]
        %v3993 = vld [vmem:[#allocation6 + $0x148] sm:$0xff]
        %v3994 = vld [vmem:[#allocation6 + $0x150] sm:$0xff]
        %v3995 = vld [vmem:[#allocation6 + $0x158] sm:$0xff]
        %v3996 = vld [vmem:[#allocation6 + $0x160] sm:$0xff]
        %v3997 = vld [vmem:[#allocation6 + $0x168] sm:$0xff]
        %v3998 = vld [vmem:[#allocation6 + $0x170] sm:$0xff]
        %v3999 = vld [vmem:[#allocation6 + $0x178] sm:$0xff]
        %v4000 = vld [vmem:[#allocation6 + $0x180] sm:$0xff]
        %v4001 = vld [vmem:[#allocation6 + $0x188] sm:$0xff]
        %v4002 = vld [vmem:[#allocation6 + $0x190] sm:$0xff]
        %v4003 = vld [vmem:[#allocation6 + $0x198] sm:$0xff]
        %v4004 = vld [vmem:[#allocation6 + $0x1a0] sm:$0xff]
        %v4005 = vld [vmem:[#allocation6 + $0x1a8] sm:$0xff]
        %v4006 = vld [vmem:[#allocation6 + $0x1b0] sm:$0xff]
        %v4007 = vld [vmem:[#allocation6 + $0x1b8] sm:$0xff]
        %v4008 = vld [vmem:[#allocation6 + $0x1c0] sm:$0xff]
        %v4009 = vld [vmem:[#allocation6 + $0x1c8] sm:$0xff]
        %v4010 = vld [vmem:[#allocation6 + $0x1d0] sm:$0xff]
        %v4011 = vld [vmem:[#allocation6 + $0x1d8] sm:$0xff]
        %v4012 = vld [vmem:[#allocation6 + $0x1e0] sm:$0xff]
        %v4013 = vld [vmem:[#allocation6 + $0x1e8] sm:$0xff]
        %v4014 = vld [vmem:[#allocation6 + $0x1f0] sm:$0xff]
        %v4015 = vld [vmem:[#allocation6 + $0x1f8] sm:$0xff]
        %4016 = vmatprep.subr.mxu0 %v3953
        %4017 = vmatpush1.msra.mxu0 %v3952
        %4018 = vmatprep.subr.mxu0 %v3957
        %4019 = vmatpush1.msra.mxu0 %v3956
        %4020 = vmatprep.subr.mxu0 %v3961
        %4021 = vmatpush1.msra.mxu0 %v3960
        %4022 = vmatprep.subr.mxu0 %v3965
        %4023 = vmatpush1.msra.mxu0 %v3964
        %4024 = vmatprep.subr.mxu0 %v3969
        %4025 = vmatpush1.msra.mxu0 %v3968
        %4026 = vmatprep.subr.mxu0 %v3973
        %4027 = vmatpush1.msra.mxu0 %v3972
        %4028 = vmatprep.subr.mxu0 %v3977
        %4029 = vmatpush1.msra.mxu0 %v3976
        %4030 = vmatprep.subr.mxu0 %v3981
        %4031 = vmatpush1.msra.mxu0 %v3980
        %4032 = vmatprep.subr.mxu0 %v3985
        %4033 = vmatpush1.msra.mxu0 %v3984
        %4034 = vmatprep.subr.mxu0 %v3989
        %4035 = vmatpush1.msra.mxu0 %v3988
        %4036 = vmatprep.subr.mxu0 %v3993
        %4037 = vmatpush1.msra.mxu0 %v3992
        %4038 = vmatprep.subr.mxu0 %v3997
        %4039 = vmatpush1.msra.mxu0 %v3996
        %4040 = vmatprep.subr.mxu0 %v4001
        %4041 = vmatpush1.msra.mxu0 %v4000
        %4042 = vmatprep.subr.mxu0 %v4005
        %4043 = vmatpush1.msra.mxu0 %v4004
        %4044 = vmatprep.subr.mxu0 %v4009
        %4045 = vmatpush1.msra.mxu0 %v4008
        %4046 = vmatprep.subr.mxu0 %v4013
        %4047 = vmatpush1.msra.mxu0 %v4012
        %4048 = vmatprep.subr.mxu0 0.0
        %4049 = vmatpush1.msra.mxu0 0.0
        %4050 = vmatprep.subr.mxu0 0.0
        %4051 = vmatpush1.msra.mxu0 0.0
        %4052 = vmatprep.subr.mxu0 0.0
        %4053 = vmatpush1.msra.mxu0 0.0
        %4054 = vmatprep.subr.mxu0 0.0
        %4055 = vmatpush1.msra.mxu0 0.0
        %4056 = vmatprep.subr.mxu0 0.0
        %4057 = vmatpush1.msra.mxu0 0.0
        %4058 = vmatprep.subr.mxu0 0.0
        %4059 = vmatpush1.msra.mxu0 0.0
        %4060 = vmatprep.subr.mxu0 0.0
        %4061 = vmatpush1.msra.mxu0 0.0
        %4062 = vmatprep.subr.mxu0 0.0
        %4063 = vmatpush1.msra.mxu0 0.0
        %4064 = vmatprep.subr.mxu0 0.0
        %4065 = vmatpush1.msra.mxu0 0.0
        %4066 = vmatprep.subr.mxu0 0.0
        %4067 = vmatpush1.msra.mxu0 0.0
        %4068 = vmatprep.subr.mxu0 0.0
        %4069 = vmatpush1.msra.mxu0 0.0
        %4070 = vmatprep.subr.mxu0 0.0
        %4071 = vmatpush1.msra.mxu0 0.0
        %4072 = vmatprep.subr.mxu0 0.0
        %4073 = vmatpush1.msra.mxu0 0.0
        %4074 = vmatprep.subr.mxu0 0.0
        %4075 = vmatpush1.msra.mxu0 0.0
        %4076 = vmatprep.subr.mxu0 0.0
        %4077 = vmatpush1.msra.mxu0 0.0
        %4078 = vmatprep.subr.mxu0 0.0
        %4079 = vmatpush1.msra.mxu0 0.0
        %4080 = vmatprep.mubr.f32.mxu0 0.0
        %4081 = vmatmul.mubr.f32.gmra.mrb[0].mxu0 %v3946
        %v4082 = vpop.f32.mrb[0].mxu0
        %v4083 = vadd.f32 0.0, %v4082
        %v4084 = vpop.f32.mrb[0].mxu0
        %v4085 = vadd.f32 0.0, %v4084
        %4086 = vdwg.mxu0
        %4087 = vmatprep.subr.mxu0 %v3955
        %4088 = vmatpush1.msra.mxu0 %v3954
        %4089 = vmatprep.subr.mxu0 %v3959
        %4090 = vmatpush1.msra.mxu0 %v3958
        %4091 = vmatprep.subr.mxu0 %v3963
        %4092 = vmatpush1.msra.mxu0 %v3962
        %4093 = vmatprep.subr.mxu0 %v3967
        %4094 = vmatpush1.msra.mxu0 %v3966
        %4095 = vmatprep.subr.mxu0 %v3971
        %4096 = vmatpush1.msra.mxu0 %v3970
        %4097 = vmatprep.subr.mxu0 %v3975
        %4098 = vmatpush1.msra.mxu0 %v3974
        %4099 = vmatprep.subr.mxu0 %v3979
        %4100 = vmatpush1.msra.mxu0 %v3978
        %4101 = vmatprep.subr.mxu0 %v3983
        %4102 = vmatpush1.msra.mxu0 %v3982
        %4103 = vmatprep.subr.mxu0 %v3987
        %4104 = vmatpush1.msra.mxu0 %v3986
        %4105 = vmatprep.subr.mxu0 %v3991
        %4106 = vmatpush1.msra.mxu0 %v3990
        %4107 = vmatprep.subr.mxu0 %v3995
        %4108 = vmatpush1.msra.mxu0 %v3994
        %4109 = vmatprep.subr.mxu0 %v3999
        %4110 = vmatpush1.msra.mxu0 %v3998
        %4111 = vmatprep.subr.mxu0 %v4003
        %4112 = vmatpush1.msra.mxu0 %v4002
        %4113 = vmatprep.subr.mxu0 %v4007
        %4114 = vmatpush1.msra.mxu0 %v4006
        %4115 = vmatprep.subr.mxu0 %v4011
        %4116 = vmatpush1.msra.mxu0 %v4010
        %4117 = vmatprep.subr.mxu0 %v4015
        %4118 = vmatpush1.msra.mxu0 %v4014
        %4119 = vmatprep.subr.mxu0 0.0
        %4120 = vmatpush1.msra.mxu0 0.0
        %4121 = vmatprep.subr.mxu0 0.0
        %4122 = vmatpush1.msra.mxu0 0.0
        %4123 = vmatprep.subr.mxu0 0.0
        %4124 = vmatpush1.msra.mxu0 0.0
        %4125 = vmatprep.subr.mxu0 0.0
        %4126 = vmatpush1.msra.mxu0 0.0
        %4127 = vmatprep.subr.mxu0 0.0
        %4128 = vmatpush1.msra.mxu0 0.0
        %4129 = vmatprep.subr.mxu0 0.0
        %4130 = vmatpush1.msra.mxu0 0.0
        %4131 = vmatprep.subr.mxu0 0.0
        %4132 = vmatpush1.msra.mxu0 0.0
        %4133 = vmatprep.subr.mxu0 0.0
        %4134 = vmatpush1.msra.mxu0 0.0
        %4135 = vmatprep.subr.mxu0 0.0
        %4136 = vmatpush1.msra.mxu0 0.0
        %4137 = vmatprep.subr.mxu0 0.0
        %4138 = vmatpush1.msra.mxu0 0.0
        %4139 = vmatprep.subr.mxu0 0.0
        %4140 = vmatpush1.msra.mxu0 0.0
        %4141 = vmatprep.subr.mxu0 0.0
        %4142 = vmatpush1.msra.mxu0 0.0
        %4143 = vmatprep.subr.mxu0 0.0
        %4144 = vmatpush1.msra.mxu0 0.0
        %4145 = vmatprep.subr.mxu0 0.0
        %4146 = vmatpush1.msra.mxu0 0.0
        %4147 = vmatprep.subr.mxu0 0.0
        %4148 = vmatpush1.msra.mxu0 0.0
        %4149 = vmatprep.subr.mxu0 0.0
        %4150 = vmatpush1.msra.mxu0 0.0
        %4151 = vmatprep.mubr.f32.mxu0 0.0
        %4152 = vmatmul.mubr.f32.gmra.mrb[0].mxu0 %v3946
        %v4153 = vpop.f32.mrb[0].mxu0
        %v4154 = vadd.f32 0.0, %v4153
        %v4155 = vpop.f32.mrb[0].mxu0
        %v4156 = vadd.f32 0.0, %v4155
        %4157 = vdwg.mxu0
        %v4158 = vadd.f32 %v3948, %v4083
        %v4159 = vadd.f32 %v3949, %v4085
        %v4160 = vadd.f32 %v3950, %v4154
        %v4161 = vadd.f32 %v3951, %v4156
        %v4162 = vld [vmem:[#allocation3] sm:$0xff]
        %v4163 = vxor.u32 %v4158, 2147483648
        %v4164 = vmul.f32 %v4163, 1.442695
        %v4165 = vpow.pop %v4164
        %v4166 = vadd.f32 %v4165, 1.0
        %v4167 = vrcp.pop %v4166
        %v4168 = vmul.f32 1.0, %v4167
        %v4169 = vxor.u32 %v4159, 2147483648
        %v4170 = vmul.f32 %v4169, 1.442695
        %v4171 = vpow.pop %v4170
        %v4172 = vadd.f32 %v4171, 1.0
        %v4173 = vrcp.pop %v4172
        %v4174 = vmul.f32 1.0, %v4173
        %v4175 = vtanh.pop %v4160
        %v4176 = vxor.u32 %v4161, 2147483648
        %v4177 = vmul.f32 %v4176, 1.442695
        %v4178 = vpow.pop %v4177
        %v4179 = vadd.f32 %v4178, 1.0
        %v4180 = vrcp.pop %v4179
        %v4181 = vmul.f32 1.0, %v4180
        %v4182 = vmul.f32 %v4174, %v4162
        %v4183 = vmul.f32 %v4168, %v4175
        %v4184 = vadd.f32 %v4182, %v4183
        %v4185 = vtanh.pop %v4184
        %v4186 = vmul.f32 %v4181, %v4185
        %4187 = vst [vmem:[#allocation2] sm:$0xff] %v4186
        %4188 = vst [vmem:[#allocation3] sm:$0xff] %v4184
        %v4189 = vld [vmem:[%s930] sm:$0xff]
        %v4190 = vld [vmem:[#allocation9] sm:$0xff]
        %v4191 = vld [vmem:[#allocation9 + $0x8] sm:$0xff]
        %v4192 = vld [vmem:[#allocation9 + $0x10] sm:$0xff]
        %v4193 = vld [vmem:[#allocation9 + $0x18] sm:$0xff]
        %v4194 = vld [vmem:[#allocation9 + $0x20] sm:$0xff]
        %v4195 = vld [vmem:[#allocation9 + $0x28] sm:$0xff]
        %v4196 = vld [vmem:[#allocation9 + $0x30] sm:$0xff]
        %v4197 = vld [vmem:[#allocation9 + $0x38] sm:$0xff]
        %v4198 = vld [vmem:[#allocation9 + $0x40] sm:$0xff]
        %v4199 = vld [vmem:[#allocation9 + $0x48] sm:$0xff]
        %v4200 = vld [vmem:[#allocation9 + $0x50] sm:$0xff]
        %v4201 = vld [vmem:[#allocation9 + $0x58] sm:$0xff]
        %v4202 = vld [vmem:[#allocation9 + $0x60] sm:$0xff]
        %v4203 = vld [vmem:[#allocation9 + $0x68] sm:$0xff]
        %v4204 = vld [vmem:[#allocation9 + $0x70] sm:$0xff]
        %v4205 = vld [vmem:[#allocation9 + $0x78] sm:$0xff]
        %v4206 = vld [vmem:[#allocation9 + $0x80] sm:$0xff]
        %v4207 = vld [vmem:[#allocation9 + $0x88] sm:$0xff]
        %v4208 = vld [vmem:[#allocation9 + $0x90] sm:$0xff]
        %v4209 = vld [vmem:[#allocation9 + $0x98] sm:$0xff]
        %v4210 = vld [vmem:[#allocation9 + $0xa0] sm:$0xff]
        %v4211 = vld [vmem:[#allocation9 + $0xa8] sm:$0xff]
        %v4212 = vld [vmem:[#allocation9 + $0xb0] sm:$0xff]
        %v4213 = vld [vmem:[#allocation9 + $0xb8] sm:$0xff]
        %v4214 = vld [vmem:[#allocation9 + $0xc0] sm:$0xff]
        %v4215 = vld [vmem:[#allocation9 + $0xc8] sm:$0xff]
        %v4216 = vld [vmem:[#allocation9 + $0xd0] sm:$0xff]
        %v4217 = vld [vmem:[#allocation9 + $0xd8] sm:$0xff]
        %v4218 = vld [vmem:[#allocation9 + $0xe0] sm:$0xff]
        %v4219 = vld [vmem:[#allocation9 + $0xe8] sm:$0xff]
        %v4220 = vld [vmem:[#allocation9 + $0xf0] sm:$0xff]
        %v4221 = vld [vmem:[#allocation9 + $0xf8] sm:$0xff]
        %v4222 = vld [vmem:[#allocation9 + $0x100] sm:$0xff]
        %v4223 = vld [vmem:[#allocation9 + $0x108] sm:$0xff]
        %v4224 = vld [vmem:[#allocation9 + $0x110] sm:$0xff]
        %v4225 = vld [vmem:[#allocation9 + $0x118] sm:$0xff]
        %v4226 = vld [vmem:[#allocation9 + $0x120] sm:$0xff]
        %v4227 = vld [vmem:[#allocation9 + $0x128] sm:$0xff]
        %v4228 = vld [vmem:[#allocation9 + $0x130] sm:$0xff]
        %v4229 = vld [vmem:[#allocation9 + $0x138] sm:$0xff]
        %v4230 = vld [vmem:[#allocation9 + $0x140] sm:$0xff]
        %v4231 = vld [vmem:[#allocation9 + $0x148] sm:$0xff]
        %v4232 = vld [vmem:[#allocation9 + $0x150] sm:$0xff]
        %v4233 = vld [vmem:[#allocation9 + $0x158] sm:$0xff]
        %v4234 = vld [vmem:[#allocation9 + $0x160] sm:$0xff]
        %v4235 = vld [vmem:[#allocation9 + $0x168] sm:$0xff]
        %v4236 = vld [vmem:[#allocation9 + $0x170] sm:$0xff]
        %v4237 = vld [vmem:[#allocation9 + $0x178] sm:$0xff]
        %v4238 = vld [vmem:[#allocation9 + $0x180] sm:$0xff]
        %v4239 = vld [vmem:[#allocation9 + $0x188] sm:$0xff]
        %v4240 = vld [vmem:[#allocation9 + $0x190] sm:$0xff]
        %v4241 = vld [vmem:[#allocation9 + $0x198] sm:$0xff]
        %v4242 = vld [vmem:[#allocation9 + $0x1a0] sm:$0xff]
        %v4243 = vld [vmem:[#allocation9 + $0x1a8] sm:$0xff]
        %v4244 = vld [vmem:[#allocation9 + $0x1b0] sm:$0xff]
        %v4245 = vld [vmem:[#allocation9 + $0x1b8] sm:$0xff]
        %v4246 = vld [vmem:[#allocation9 + $0x1c0] sm:$0xff]
        %v4247 = vld [vmem:[#allocation9 + $0x1c8] sm:$0xff]
        %v4248 = vld [vmem:[#allocation9 + $0x1d0] sm:$0xff]
        %v4249 = vld [vmem:[#allocation9 + $0x1d8] sm:$0xff]
        %v4250 = vld [vmem:[#allocation9 + $0x1e0] sm:$0xff]
        %v4251 = vld [vmem:[#allocation9 + $0x1e8] sm:$0xff]
        %v4252 = vld [vmem:[#allocation9 + $0x1f0] sm:$0xff]
        %v4253 = vld [vmem:[#allocation9 + $0x1f8] sm:$0xff]
        %v4254 = vld [vmem:[#allocation9 + $0x200] sm:$0xff]
        %v4255 = vld [vmem:[#allocation9 + $0x208] sm:$0xff]
        %v4256 = vld [vmem:[#allocation9 + $0x210] sm:$0xff]
        %v4257 = vld [vmem:[#allocation9 + $0x218] sm:$0xff]
        %v4258 = vld [vmem:[#allocation9 + $0x220] sm:$0xff]
        %v4259 = vld [vmem:[#allocation9 + $0x228] sm:$0xff]
        %v4260 = vld [vmem:[#allocation9 + $0x230] sm:$0xff]
        %v4261 = vld [vmem:[#allocation9 + $0x238] sm:$0xff]
        %v4262 = vld [vmem:[#allocation9 + $0x240] sm:$0xff]
        %v4263 = vld [vmem:[#allocation9 + $0x248] sm:$0xff]
        %v4264 = vld [vmem:[#allocation9 + $0x250] sm:$0xff]
        %v4265 = vld [vmem:[#allocation9 + $0x258] sm:$0xff]
        %v4266 = vld [vmem:[#allocation9 + $0x260] sm:$0xff]
        %v4267 = vld [vmem:[#allocation9 + $0x268] sm:$0xff]
        %v4268 = vld [vmem:[#allocation9 + $0x270] sm:$0xff]
        %v4269 = vld [vmem:[#allocation9 + $0x278] sm:$0xff]
        %v4270 = vld [vmem:[#allocation9 + $0x280] sm:$0xff]
        %v4271 = vld [vmem:[#allocation9 + $0x288] sm:$0xff]
        %v4272 = vld [vmem:[#allocation9 + $0x290] sm:$0xff]
        %v4273 = vld [vmem:[#allocation9 + $0x298] sm:$0xff]
        %v4274 = vld [vmem:[#allocation9 + $0x2a0] sm:$0xff]
        %v4275 = vld [vmem:[#allocation9 + $0x2a8] sm:$0xff]
        %v4276 = vld [vmem:[#allocation9 + $0x2b0] sm:$0xff]
        %v4277 = vld [vmem:[#allocation9 + $0x2b8] sm:$0xff]
        %v4278 = vld [vmem:[#allocation9 + $0x2c0] sm:$0xff]
        %v4279 = vld [vmem:[#allocation9 + $0x2c8] sm:$0xff]
        %v4280 = vld [vmem:[#allocation9 + $0x2d0] sm:$0xff]
        %v4281 = vld [vmem:[#allocation9 + $0x2d8] sm:$0xff]
        %v4282 = vld [vmem:[#allocation9 + $0x2e0] sm:$0xff]
        %v4283 = vld [vmem:[#allocation9 + $0x2e8] sm:$0xff]
        %v4284 = vld [vmem:[#allocation9 + $0x2f0] sm:$0xff]
        %v4285 = vld [vmem:[#allocation9 + $0x2f8] sm:$0xff]
        %v4286 = vld [vmem:[#allocation9 + $0x300] sm:$0xff]
        %v4287 = vld [vmem:[#allocation9 + $0x308] sm:$0xff]
        %v4288 = vld [vmem:[#allocation9 + $0x310] sm:$0xff]
        %v4289 = vld [vmem:[#allocation9 + $0x318] sm:$0xff]
        %v4290 = vld [vmem:[#allocation9 + $0x320] sm:$0xff]
        %v4291 = vld [vmem:[#allocation9 + $0x328] sm:$0xff]
        %v4292 = vld [vmem:[#allocation9 + $0x330] sm:$0xff]
        %v4293 = vld [vmem:[#allocation9 + $0x338] sm:$0xff]
        %v4294 = vld [vmem:[#allocation9 + $0x340] sm:$0xff]
        %v4295 = vld [vmem:[#allocation9 + $0x348] sm:$0xff]
        %v4296 = vld [vmem:[#allocation9 + $0x350] sm:$0xff]
        %v4297 = vld [vmem:[#allocation9 + $0x358] sm:$0xff]
        %v4298 = vld [vmem:[#allocation9 + $0x360] sm:$0xff]
        %v4299 = vld [vmem:[#allocation9 + $0x368] sm:$0xff]
        %v4300 = vld [vmem:[#allocation9 + $0x370] sm:$0xff]
        %v4301 = vld [vmem:[#allocation9 + $0x378] sm:$0xff]
        %v4302 = vld [vmem:[#allocation9 + $0x380] sm:$0xff]
        %v4303 = vld [vmem:[#allocation9 + $0x388] sm:$0xff]
        %v4304 = vld [vmem:[#allocation9 + $0x390] sm:$0xff]
        %v4305 = vld [vmem:[#allocation9 + $0x398] sm:$0xff]
        %v4306 = vld [vmem:[#allocation9 + $0x3a0] sm:$0xff]
        %v4307 = vld [vmem:[#allocation9 + $0x3a8] sm:$0xff]
        %v4308 = vld [vmem:[#allocation9 + $0x3b0] sm:$0xff]
        %v4309 = vld [vmem:[#allocation9 + $0x3b8] sm:$0xff]
        %v4310 = vld [vmem:[#allocation9 + $0x3c0] sm:$0xff]
        %v4311 = vld [vmem:[#allocation9 + $0x3c8] sm:$0xff]
        %v4312 = vld [vmem:[#allocation9 + $0x3d0] sm:$0xff]
        %v4313 = vld [vmem:[#allocation9 + $0x3d8] sm:$0xff]
        %v4314 = vld [vmem:[#allocation9 + $0x3e0] sm:$0xff]
        %v4315 = vld [vmem:[#allocation9 + $0x3e8] sm:$0xff]
        %v4316 = vld [vmem:[#allocation9 + $0x3f0] sm:$0xff]
        %v4317 = vld [vmem:[#allocation9 + $0x3f8] sm:$0xff]
        %4318 = vmatprep.subr.mxu0 %v4191
        %4319 = vmatpush1.msra.mxu0 %v4190
        %4320 = vmatprep.subr.mxu0 %v4195
        %4321 = vmatpush1.msra.mxu0 %v4194
        %4322 = vmatprep.subr.mxu0 %v4199
        %4323 = vmatpush1.msra.mxu0 %v4198
        %4324 = vmatprep.subr.mxu0 %v4203
        %4325 = vmatpush1.msra.mxu0 %v4202
        %4326 = vmatprep.subr.mxu0 %v4207
        %4327 = vmatpush1.msra.mxu0 %v4206
        %4328 = vmatprep.subr.mxu0 %v4211
        %4329 = vmatpush1.msra.mxu0 %v4210
        %4330 = vmatprep.subr.mxu0 %v4215
        %4331 = vmatpush1.msra.mxu0 %v4214
        %4332 = vmatprep.subr.mxu0 %v4219
        %4333 = vmatpush1.msra.mxu0 %v4218
        %4334 = vmatprep.subr.mxu0 %v4223
        %4335 = vmatpush1.msra.mxu0 %v4222
        %4336 = vmatprep.subr.mxu0 %v4227
        %4337 = vmatpush1.msra.mxu0 %v4226
        %4338 = vmatprep.subr.mxu0 %v4231
        %4339 = vmatpush1.msra.mxu0 %v4230
        %4340 = vmatprep.subr.mxu0 %v4235
        %4341 = vmatpush1.msra.mxu0 %v4234
        %4342 = vmatprep.subr.mxu0 %v4239
        %4343 = vmatpush1.msra.mxu0 %v4238
        %4344 = vmatprep.subr.mxu0 %v4243
        %4345 = vmatpush1.msra.mxu0 %v4242
        %4346 = vmatprep.subr.mxu0 %v4247
        %4347 = vmatpush1.msra.mxu0 %v4246
        %4348 = vmatprep.subr.mxu0 %v4251
        %4349 = vmatpush1.msra.mxu0 %v4250
        %4350 = vmatprep.subr.mxu0 %v4255
        %4351 = vmatpush1.msra.mxu0 %v4254
        %4352 = vmatprep.subr.mxu0 %v4259
        %4353 = vmatpush1.msra.mxu0 %v4258
        %4354 = vmatprep.subr.mxu0 %v4263
        %4355 = vmatpush1.msra.mxu0 %v4262
        %4356 = vmatprep.subr.mxu0 %v4267
        %4357 = vmatpush1.msra.mxu0 %v4266
        %4358 = vmatprep.subr.mxu0 %v4271
        %4359 = vmatpush1.msra.mxu0 %v4270
        %4360 = vmatprep.subr.mxu0 %v4275
        %4361 = vmatpush1.msra.mxu0 %v4274
        %4362 = vmatprep.subr.mxu0 %v4279
        %4363 = vmatpush1.msra.mxu0 %v4278
        %4364 = vmatprep.subr.mxu0 %v4283
        %4365 = vmatpush1.msra.mxu0 %v4282
        %4366 = vmatprep.subr.mxu0 %v4287
        %4367 = vmatpush1.msra.mxu0 %v4286
        %4368 = vmatprep.subr.mxu0 %v4291
        %4369 = vmatpush1.msra.mxu0 %v4290
        %4370 = vmatprep.subr.mxu0 %v4295
        %4371 = vmatpush1.msra.mxu0 %v4294
        %4372 = vmatprep.subr.mxu0 %v4299
        %4373 = vmatpush1.msra.mxu0 %v4298
        %4374 = vmatprep.subr.mxu0 %v4303
        %4375 = vmatpush1.msra.mxu0 %v4302
        %4376 = vmatprep.subr.mxu0 %v4307
        %4377 = vmatpush1.msra.mxu0 %v4306
        %4378 = vmatprep.subr.mxu0 %v4311
        %4379 = vmatpush1.msra.mxu0 %v4310
        %4380 = vmatprep.subr.mxu0 %v4315
        %4381 = vmatpush1.msra.mxu0 %v4314
        %4382 = vmatprep.mubr.f32.mxu0 %v4189
        %4383 = vmatmul.mubr.f32.gmra.mrb[0].mxu0 %v4186
        %v4384 = vpop.f32.mrb[0].mxu0
        %v4385 = vadd.f32 %v671, %v4384
        %v4386 = vpop.f32.mrb[0].mxu0
        %v4387 = vadd.f32 %v675, %v4386
        %4388 = vdwg.mxu0
        %4389 = vmatprep.subr.mxu0 %v4193
        %4390 = vmatpush1.msra.mxu0 %v4192
        %4391 = vmatprep.subr.mxu0 %v4197
        %4392 = vmatpush1.msra.mxu0 %v4196
        %4393 = vmatprep.subr.mxu0 %v4201
        %4394 = vmatpush1.msra.mxu0 %v4200
        %4395 = vmatprep.subr.mxu0 %v4205
        %4396 = vmatpush1.msra.mxu0 %v4204
        %4397 = vmatprep.subr.mxu0 %v4209
        %4398 = vmatpush1.msra.mxu0 %v4208
        %4399 = vmatprep.subr.mxu0 %v4213
        %4400 = vmatpush1.msra.mxu0 %v4212
        %4401 = vmatprep.subr.mxu0 %v4217
        %4402 = vmatpush1.msra.mxu0 %v4216
        %4403 = vmatprep.subr.mxu0 %v4221
        %4404 = vmatpush1.msra.mxu0 %v4220
        %4405 = vmatprep.subr.mxu0 %v4225
        %4406 = vmatpush1.msra.mxu0 %v4224
        %4407 = vmatprep.subr.mxu0 %v4229
        %4408 = vmatpush1.msra.mxu0 %v4228
        %4409 = vmatprep.subr.mxu0 %v4233
        %4410 = vmatpush1.msra.mxu0 %v4232
        %4411 = vmatprep.subr.mxu0 %v4237
        %4412 = vmatpush1.msra.mxu0 %v4236
        %4413 = vmatprep.subr.mxu0 %v4241
        %4414 = vmatpush1.msra.mxu0 %v4240
        %4415 = vmatprep.subr.mxu0 %v4245
        %4416 = vmatpush1.msra.mxu0 %v4244
        %4417 = vmatprep.subr.mxu0 %v4249
        %4418 = vmatpush1.msra.mxu0 %v4248
        %4419 = vmatprep.subr.mxu0 %v4253
        %4420 = vmatpush1.msra.mxu0 %v4252
        %4421 = vmatprep.subr.mxu0 %v4257
        %4422 = vmatpush1.msra.mxu0 %v4256
        %4423 = vmatprep.subr.mxu0 %v4261
        %4424 = vmatpush1.msra.mxu0 %v4260
        %4425 = vmatprep.subr.mxu0 %v4265
        %4426 = vmatpush1.msra.mxu0 %v4264
        %4427 = vmatprep.subr.mxu0 %v4269
        %4428 = vmatpush1.msra.mxu0 %v4268
        %4429 = vmatprep.subr.mxu0 %v4273
        %4430 = vmatpush1.msra.mxu0 %v4272
        %4431 = vmatprep.subr.mxu0 %v4277
        %4432 = vmatpush1.msra.mxu0 %v4276
        %4433 = vmatprep.subr.mxu0 %v4281
        %4434 = vmatpush1.msra.mxu0 %v4280
        %4435 = vmatprep.subr.mxu0 %v4285
        %4436 = vmatpush1.msra.mxu0 %v4284
        %4437 = vmatprep.subr.mxu0 %v4289
        %4438 = vmatpush1.msra.mxu0 %v4288
        %4439 = vmatprep.subr.mxu0 %v4293
        %4440 = vmatpush1.msra.mxu0 %v4292
        %4441 = vmatprep.subr.mxu0 %v4297
        %4442 = vmatpush1.msra.mxu0 %v4296
        %4443 = vmatprep.subr.mxu0 %v4301
        %4444 = vmatpush1.msra.mxu0 %v4300
        %4445 = vmatprep.subr.mxu0 %v4305
        %4446 = vmatpush1.msra.mxu0 %v4304
        %4447 = vmatprep.subr.mxu0 %v4309
        %4448 = vmatpush1.msra.mxu0 %v4308
        %4449 = vmatprep.subr.mxu0 %v4313
        %4450 = vmatpush1.msra.mxu0 %v4312
        %4451 = vmatprep.subr.mxu0 %v4317
        %4452 = vmatpush1.msra.mxu0 %v4316
        %4453 = vmatprep.mubr.f32.mxu0 %v4189
        %4454 = vmatmul.mubr.f32.gmra.mrb[0].mxu0 %v4186
        %v4455 = vpop.f32.mrb[0].mxu0
        %v4456 = vadd.f32 %v679, %v4455
        %v4457 = vpop.f32.mrb[0].mxu0
        %v4458 = vadd.f32 %v683, %v4457
        %4459 = vdwg.mxu0
        %v4460 = vld [vmem:[%s1202] sm:$0xff]
        %v4461 = vxor.u32 %v4385, 2147483648
        %v4462 = vmul.f32 %v4461, 1.442695
        %v4463 = vpow.pop %v4462
        %v4464 = vadd.f32 %v4463, 1.0
        %v4465 = vrcp.pop %v4464
        %v4466 = vmul.f32 1.0, %v4465
        %v4467 = vxor.u32 %v4387, 2147483648
        %v4468 = vmul.f32 %v4467, 1.442695
        %v4469 = vpow.pop %v4468
        %v4470 = vadd.f32 %v4469, 1.0
        %v4471 = vrcp.pop %v4470
        %v4472 = vmul.f32 1.0, %v4471
        %v4473 = vtanh.pop %v4456
        %v4474 = vxor.u32 %v4458, 2147483648
        %v4475 = vmul.f32 %v4474, 1.442695
        %v4476 = vpow.pop %v4475
        %v4477 = vadd.f32 %v4476, 1.0
        %v4478 = vrcp.pop %v4477
        %v4479 = vmul.f32 1.0, %v4478
        %v4480 = vmul.f32 %v4472, %v4460
        %v4481 = vmul.f32 %v4466, %v4473
        %v4482 = vadd.f32 %v4480, %v4481
        %v4483 = vtanh.pop %v4482
        %v4484 = vmul.f32 %v4479, %v4483
        %4485 = vst [vmem:[%s930] sm:$0xff] %v4484
        %4486 = vst [vmem:[%s1202] sm:$0xff] %v4482
        %s4487 = scalar_lea.vmem [#allocation5], 48
        %4488 = vst [vmem:[%s4487] sm:$0xff] %v4484
        %v4489 = vld [vmem:[#allocation2] sm:$0xff]
        %s4490 = scalar_lea.vmem [#allocation4], 224
        %v4491 = vld [vmem:[%s4490] sm:$0xff]
        %v4492 = vld [vmem:[%s4490 + $0x8] sm:$0xff]
        %v4493 = vld [vmem:[%s4490 + $0x10] sm:$0xff]
        %v4494 = vld [vmem:[%s4490 + $0x18] sm:$0xff]
        %v4495 = vld [vmem:[#allocation6] sm:$0xff]
        %v4496 = vld [vmem:[#allocation6 + $0x8] sm:$0xff]
        %v4497 = vld [vmem:[#allocation6 + $0x10] sm:$0xff]
        %v4498 = vld [vmem:[#allocation6 + $0x18] sm:$0xff]
        %v4499 = vld [vmem:[#allocation6 + $0x20] sm:$0xff]
        %v4500 = vld [vmem:[#allocation6 + $0x28] sm:$0xff]
        %v4501 = vld [vmem:[#allocation6 + $0x30] sm:$0xff]
        %v4502 = vld [vmem:[#allocation6 + $0x38] sm:$0xff]
        %v4503 = vld [vmem:[#allocation6 + $0x40] sm:$0xff]
        %v4504 = vld [vmem:[#allocation6 + $0x48] sm:$0xff]
        %v4505 = vld [vmem:[#allocation6 + $0x50] sm:$0xff]
        %v4506 = vld [vmem:[#allocation6 + $0x58] sm:$0xff]
        %v4507 = vld [vmem:[#allocation6 + $0x60] sm:$0xff]
        %v4508 = vld [vmem:[#allocation6 + $0x68] sm:$0xff]
        %v4509 = vld [vmem:[#allocation6 + $0x70] sm:$0xff]
        %v4510 = vld [vmem:[#allocation6 + $0x78] sm:$0xff]
        %v4511 = vld [vmem:[#allocation6 + $0x80] sm:$0xff]
        %v4512 = vld [vmem:[#allocation6 + $0x88] sm:$0xff]
        %v4513 = vld [vmem:[#allocation6 + $0x90] sm:$0xff]
        %v4514 = vld [vmem:[#allocation6 + $0x98] sm:$0xff]
        %v4515 = vld [vmem:[#allocation6 + $0xa0] sm:$0xff]
        %v4516 = vld [vmem:[#allocation6 + $0xa8] sm:$0xff]
        %v4517 = vld [vmem:[#allocation6 + $0xb0] sm:$0xff]
        %v4518 = vld [vmem:[#allocation6 + $0xb8] sm:$0xff]
        %v4519 = vld [vmem:[#allocation6 + $0xc0] sm:$0xff]
        %v4520 = vld [vmem:[#allocation6 + $0xc8] sm:$0xff]
        %v4521 = vld [vmem:[#allocation6 + $0xd0] sm:$0xff]
        %v4522 = vld [vmem:[#allocation6 + $0xd8] sm:$0xff]
        %v4523 = vld [vmem:[#allocation6 + $0xe0] sm:$0xff]
        %v4524 = vld [vmem:[#allocation6 + $0xe8] sm:$0xff]
        %v4525 = vld [vmem:[#allocation6 + $0xf0] sm:$0xff]
        %v4526 = vld [vmem:[#allocation6 + $0xf8] sm:$0xff]
        %v4527 = vld [vmem:[#allocation6 + $0x100] sm:$0xff]
        %v4528 = vld [vmem:[#allocation6 + $0x108] sm:$0xff]
        %v4529 = vld [vmem:[#allocation6 + $0x110] sm:$0xff]
        %v4530 = vld [vmem:[#allocation6 + $0x118] sm:$0xff]
        %v4531 = vld [vmem:[#allocation6 + $0x120] sm:$0xff]
        %v4532 = vld [vmem:[#allocation6 + $0x128] sm:$0xff]
        %v4533 = vld [vmem:[#allocation6 + $0x130] sm:$0xff]
        %v4534 = vld [vmem:[#allocation6 + $0x138] sm:$0xff]
        %v4535 = vld [vmem:[#allocation6 + $0x140] sm:$0xff]
        %v4536 = vld [vmem:[#allocation6 + $0x148] sm:$0xff]
        %v4537 = vld [vmem:[#allocation6 + $0x150] sm:$0xff]
        %v4538 = vld [vmem:[#allocation6 + $0x158] sm:$0xff]
        %v4539 = vld [vmem:[#allocation6 + $0x160] sm:$0xff]
        %v4540 = vld [vmem:[#allocation6 + $0x168] sm:$0xff]
        %v4541 = vld [vmem:[#allocation6 + $0x170] sm:$0xff]
        %v4542 = vld [vmem:[#allocation6 + $0x178] sm:$0xff]
        %v4543 = vld [vmem:[#allocation6 + $0x180] sm:$0xff]
        %v4544 = vld [vmem:[#allocation6 + $0x188] sm:$0xff]
        %v4545 = vld [vmem:[#allocation6 + $0x190] sm:$0xff]
        %v4546 = vld [vmem:[#allocation6 + $0x198] sm:$0xff]
        %v4547 = vld [vmem:[#allocation6 + $0x1a0] sm:$0xff]
        %v4548 = vld [vmem:[#allocation6 + $0x1a8] sm:$0xff]
        %v4549 = vld [vmem:[#allocation6 + $0x1b0] sm:$0xff]
        %v4550 = vld [vmem:[#allocation6 + $0x1b8] sm:$0xff]
        %v4551 = vld [vmem:[#allocation6 + $0x1c0] sm:$0xff]
        %v4552 = vld [vmem:[#allocation6 + $0x1c8] sm:$0xff]
        %v4553 = vld [vmem:[#allocation6 + $0x1d0] sm:$0xff]
        %v4554 = vld [vmem:[#allocation6 + $0x1d8] sm:$0xff]
        %v4555 = vld [vmem:[#allocation6 + $0x1e0] sm:$0xff]
        %v4556 = vld [vmem:[#allocation6 + $0x1e8] sm:$0xff]
        %v4557 = vld [vmem:[#allocation6 + $0x1f0] sm:$0xff]
        %v4558 = vld [vmem:[#allocation6 + $0x1f8] sm:$0xff]
        %4559 = vmatprep.subr.mxu0 %v4496
        %4560 = vmatpush1.msra.mxu0 %v4495
        %4561 = vmatprep.subr.mxu0 %v4500
        %4562 = vmatpush1.msra.mxu0 %v4499
        %4563 = vmatprep.subr.mxu0 %v4504
        %4564 = vmatpush1.msra.mxu0 %v4503
        %4565 = vmatprep.subr.mxu0 %v4508
        %4566 = vmatpush1.msra.mxu0 %v4507
        %4567 = vmatprep.subr.mxu0 %v4512
        %4568 = vmatpush1.msra.mxu0 %v4511
        %4569 = vmatprep.subr.mxu0 %v4516
        %4570 = vmatpush1.msra.mxu0 %v4515
        %4571 = vmatprep.subr.mxu0 %v4520
        %4572 = vmatpush1.msra.mxu0 %v4519
        %4573 = vmatprep.subr.mxu0 %v4524
        %4574 = vmatpush1.msra.mxu0 %v4523
        %4575 = vmatprep.subr.mxu0 %v4528
        %4576 = vmatpush1.msra.mxu0 %v4527
        %4577 = vmatprep.subr.mxu0 %v4532
        %4578 = vmatpush1.msra.mxu0 %v4531
        %4579 = vmatprep.subr.mxu0 %v4536
        %4580 = vmatpush1.msra.mxu0 %v4535
        %4581 = vmatprep.subr.mxu0 %v4540
        %4582 = vmatpush1.msra.mxu0 %v4539
        %4583 = vmatprep.subr.mxu0 %v4544
        %4584 = vmatpush1.msra.mxu0 %v4543
        %4585 = vmatprep.subr.mxu0 %v4548
        %4586 = vmatpush1.msra.mxu0 %v4547
        %4587 = vmatprep.subr.mxu0 %v4552
        %4588 = vmatpush1.msra.mxu0 %v4551
        %4589 = vmatprep.subr.mxu0 %v4556
        %4590 = vmatpush1.msra.mxu0 %v4555
        %4591 = vmatprep.subr.mxu0 0.0
        %4592 = vmatpush1.msra.mxu0 0.0
        %4593 = vmatprep.subr.mxu0 0.0
        %4594 = vmatpush1.msra.mxu0 0.0
        %4595 = vmatprep.subr.mxu0 0.0
        %4596 = vmatpush1.msra.mxu0 0.0
        %4597 = vmatprep.subr.mxu0 0.0
        %4598 = vmatpush1.msra.mxu0 0.0
        %4599 = vmatprep.subr.mxu0 0.0
        %4600 = vmatpush1.msra.mxu0 0.0
        %4601 = vmatprep.subr.mxu0 0.0
        %4602 = vmatpush1.msra.mxu0 0.0
        %4603 = vmatprep.subr.mxu0 0.0
        %4604 = vmatpush1.msra.mxu0 0.0
        %4605 = vmatprep.subr.mxu0 0.0
        %4606 = vmatpush1.msra.mxu0 0.0
        %4607 = vmatprep.subr.mxu0 0.0
        %4608 = vmatpush1.msra.mxu0 0.0
        %4609 = vmatprep.subr.mxu0 0.0
        %4610 = vmatpush1.msra.mxu0 0.0
        %4611 = vmatprep.subr.mxu0 0.0
        %4612 = vmatpush1.msra.mxu0 0.0
        %4613 = vmatprep.subr.mxu0 0.0
        %4614 = vmatpush1.msra.mxu0 0.0
        %4615 = vmatprep.subr.mxu0 0.0
        %4616 = vmatpush1.msra.mxu0 0.0
        %4617 = vmatprep.subr.mxu0 0.0
        %4618 = vmatpush1.msra.mxu0 0.0
        %4619 = vmatprep.subr.mxu0 0.0
        %4620 = vmatpush1.msra.mxu0 0.0
        %4621 = vmatprep.subr.mxu0 0.0
        %4622 = vmatpush1.msra.mxu0 0.0
        %4623 = vmatprep.mubr.f32.mxu0 0.0
        %4624 = vmatmul.mubr.f32.gmra.mrb[0].mxu0 %v4489
        %v4625 = vpop.f32.mrb[0].mxu0
        %v4626 = vadd.f32 0.0, %v4625
        %v4627 = vpop.f32.mrb[0].mxu0
        %v4628 = vadd.f32 0.0, %v4627
        %4629 = vdwg.mxu0
        %4630 = vmatprep.subr.mxu0 %v4498
        %4631 = vmatpush1.msra.mxu0 %v4497
        %4632 = vmatprep.subr.mxu0 %v4502
        %4633 = vmatpush1.msra.mxu0 %v4501
        %4634 = vmatprep.subr.mxu0 %v4506
        %4635 = vmatpush1.msra.mxu0 %v4505
        %4636 = vmatprep.subr.mxu0 %v4510
        %4637 = vmatpush1.msra.mxu0 %v4509
        %4638 = vmatprep.subr.mxu0 %v4514
        %4639 = vmatpush1.msra.mxu0 %v4513
        %4640 = vmatprep.subr.mxu0 %v4518
        %4641 = vmatpush1.msra.mxu0 %v4517
        %4642 = vmatprep.subr.mxu0 %v4522
        %4643 = vmatpush1.msra.mxu0 %v4521
        %4644 = vmatprep.subr.mxu0 %v4526
        %4645 = vmatpush1.msra.mxu0 %v4525
        %4646 = vmatprep.subr.mxu0 %v4530
        %4647 = vmatpush1.msra.mxu0 %v4529
        %4648 = vmatprep.subr.mxu0 %v4534
        %4649 = vmatpush1.msra.mxu0 %v4533
        %4650 = vmatprep.subr.mxu0 %v4538
        %4651 = vmatpush1.msra.mxu0 %v4537
        %4652 = vmatprep.subr.mxu0 %v4542
        %4653 = vmatpush1.msra.mxu0 %v4541
        %4654 = vmatprep.subr.mxu0 %v4546
        %4655 = vmatpush1.msra.mxu0 %v4545
        %4656 = vmatprep.subr.mxu0 %v4550
        %4657 = vmatpush1.msra.mxu0 %v4549
        %4658 = vmatprep.subr.mxu0 %v4554
        %4659 = vmatpush1.msra.mxu0 %v4553
        %4660 = vmatprep.subr.mxu0 %v4558
        %4661 = vmatpush1.msra.mxu0 %v4557
        %4662 = vmatprep.subr.mxu0 0.0
        %4663 = vmatpush1.msra.mxu0 0.0
        %4664 = vmatprep.subr.mxu0 0.0
        %4665 = vmatpush1.msra.mxu0 0.0
        %4666 = vmatprep.subr.mxu0 0.0
        %4667 = vmatpush1.msra.mxu0 0.0
        %4668 = vmatprep.subr.mxu0 0.0
        %4669 = vmatpush1.msra.mxu0 0.0
        %4670 = vmatprep.subr.mxu0 0.0
        %4671 = vmatpush1.msra.mxu0 0.0
        %4672 = vmatprep.subr.mxu0 0.0
        %4673 = vmatpush1.msra.mxu0 0.0
        %4674 = vmatprep.subr.mxu0 0.0
        %4675 = vmatpush1.msra.mxu0 0.0
        %4676 = vmatprep.subr.mxu0 0.0
        %4677 = vmatpush1.msra.mxu0 0.0
        %4678 = vmatprep.subr.mxu0 0.0
        %4679 = vmatpush1.msra.mxu0 0.0
        %4680 = vmatprep.subr.mxu0 0.0
        %4681 = vmatpush1.msra.mxu0 0.0
        %4682 = vmatprep.subr.mxu0 0.0
        %4683 = vmatpush1.msra.mxu0 0.0
        %4684 = vmatprep.subr.mxu0 0.0
        %4685 = vmatpush1.msra.mxu0 0.0
        %4686 = vmatprep.subr.mxu0 0.0
        %4687 = vmatpush1.msra.mxu0 0.0
        %4688 = vmatprep.subr.mxu0 0.0
        %4689 = vmatpush1.msra.mxu0 0.0
        %4690 = vmatprep.subr.mxu0 0.0
        %4691 = vmatpush1.msra.mxu0 0.0
        %4692 = vmatprep.subr.mxu0 0.0
        %4693 = vmatpush1.msra.mxu0 0.0
        %4694 = vmatprep.mubr.f32.mxu0 0.0
        %4695 = vmatmul.mubr.f32.gmra.mrb[0].mxu0 %v4489
        %v4696 = vpop.f32.mrb[0].mxu0
        %v4697 = vadd.f32 0.0, %v4696
        %v4698 = vpop.f32.mrb[0].mxu0
        %v4699 = vadd.f32 0.0, %v4698
        %4700 = vdwg.mxu0
        %v4701 = vadd.f32 %v4491, %v4626
        %v4702 = vadd.f32 %v4492, %v4628
        %v4703 = vadd.f32 %v4493, %v4697
        %v4704 = vadd.f32 %v4494, %v4699
        %v4705 = vld [vmem:[#allocation3] sm:$0xff]
        %v4706 = vxor.u32 %v4701, 2147483648
        %v4707 = vmul.f32 %v4706, 1.442695
        %v4708 = vpow.pop %v4707
        %v4709 = vadd.f32 %v4708, 1.0
        %v4710 = vrcp.pop %v4709
        %v4711 = vmul.f32 1.0, %v4710
        %v4712 = vxor.u32 %v4702, 2147483648
        %v4713 = vmul.f32 %v4712, 1.442695
        %v4714 = vpow.pop %v4713
        %v4715 = vadd.f32 %v4714, 1.0
        %v4716 = vrcp.pop %v4715
        %v4717 = vmul.f32 1.0, %v4716
        %v4718 = vtanh.pop %v4703
        %v4719 = vxor.u32 %v4704, 2147483648
        %v4720 = vmul.f32 %v4719, 1.442695
        %v4721 = vpow.pop %v4720
        %v4722 = vadd.f32 %v4721, 1.0
        %v4723 = vrcp.pop %v4722
        %v4724 = vmul.f32 1.0, %v4723
        %v4725 = vmul.f32 %v4717, %v4705
        %v4726 = vmul.f32 %v4711, %v4718
        %v4727 = vadd.f32 %v4725, %v4726
        %v4728 = vtanh.pop %v4727
        %v4729 = vmul.f32 %v4724, %v4728
        %4730 = vst [vmem:[#allocation2] sm:$0xff] %v4729
        %4731 = vst [vmem:[#allocation3] sm:$0xff] %v4727
        %v4732 = vld [vmem:[%s930] sm:$0xff]
        %v4733 = vld [vmem:[#allocation9] sm:$0xff]
        %v4734 = vld [vmem:[#allocation9 + $0x8] sm:$0xff]
        %v4735 = vld [vmem:[#allocation9 + $0x10] sm:$0xff]
        %v4736 = vld [vmem:[#allocation9 + $0x18] sm:$0xff]
        %v4737 = vld [vmem:[#allocation9 + $0x20] sm:$0xff]
        %v4738 = vld [vmem:[#allocation9 + $0x28] sm:$0xff]
        %v4739 = vld [vmem:[#allocation9 + $0x30] sm:$0xff]
        %v4740 = vld [vmem:[#allocation9 + $0x38] sm:$0xff]
        %v4741 = vld [vmem:[#allocation9 + $0x40] sm:$0xff]
        %v4742 = vld [vmem:[#allocation9 + $0x48] sm:$0xff]
        %v4743 = vld [vmem:[#allocation9 + $0x50] sm:$0xff]
        %v4744 = vld [vmem:[#allocation9 + $0x58] sm:$0xff]
        %v4745 = vld [vmem:[#allocation9 + $0x60] sm:$0xff]
        %v4746 = vld [vmem:[#allocation9 + $0x68] sm:$0xff]
        %v4747 = vld [vmem:[#allocation9 + $0x70] sm:$0xff]
        %v4748 = vld [vmem:[#allocation9 + $0x78] sm:$0xff]
        %v4749 = vld [vmem:[#allocation9 + $0x80] sm:$0xff]
        %v4750 = vld [vmem:[#allocation9 + $0x88] sm:$0xff]
        %v4751 = vld [vmem:[#allocation9 + $0x90] sm:$0xff]
        %v4752 = vld [vmem:[#allocation9 + $0x98] sm:$0xff]
        %v4753 = vld [vmem:[#allocation9 + $0xa0] sm:$0xff]
        %v4754 = vld [vmem:[#allocation9 + $0xa8] sm:$0xff]
        %v4755 = vld [vmem:[#allocation9 + $0xb0] sm:$0xff]
        %v4756 = vld [vmem:[#allocation9 + $0xb8] sm:$0xff]
        %v4757 = vld [vmem:[#allocation9 + $0xc0] sm:$0xff]
        %v4758 = vld [vmem:[#allocation9 + $0xc8] sm:$0xff]
        %v4759 = vld [vmem:[#allocation9 + $0xd0] sm:$0xff]
        %v4760 = vld [vmem:[#allocation9 + $0xd8] sm:$0xff]
        %v4761 = vld [vmem:[#allocation9 + $0xe0] sm:$0xff]
        %v4762 = vld [vmem:[#allocation9 + $0xe8] sm:$0xff]
        %v4763 = vld [vmem:[#allocation9 + $0xf0] sm:$0xff]
        %v4764 = vld [vmem:[#allocation9 + $0xf8] sm:$0xff]
        %v4765 = vld [vmem:[#allocation9 + $0x100] sm:$0xff]
        %v4766 = vld [vmem:[#allocation9 + $0x108] sm:$0xff]
        %v4767 = vld [vmem:[#allocation9 + $0x110] sm:$0xff]
        %v4768 = vld [vmem:[#allocation9 + $0x118] sm:$0xff]
        %v4769 = vld [vmem:[#allocation9 + $0x120] sm:$0xff]
        %v4770 = vld [vmem:[#allocation9 + $0x128] sm:$0xff]
        %v4771 = vld [vmem:[#allocation9 + $0x130] sm:$0xff]
        %v4772 = vld [vmem:[#allocation9 + $0x138] sm:$0xff]
        %v4773 = vld [vmem:[#allocation9 + $0x140] sm:$0xff]
        %v4774 = vld [vmem:[#allocation9 + $0x148] sm:$0xff]
        %v4775 = vld [vmem:[#allocation9 + $0x150] sm:$0xff]
        %v4776 = vld [vmem:[#allocation9 + $0x158] sm:$0xff]
        %v4777 = vld [vmem:[#allocation9 + $0x160] sm:$0xff]
        %v4778 = vld [vmem:[#allocation9 + $0x168] sm:$0xff]
        %v4779 = vld [vmem:[#allocation9 + $0x170] sm:$0xff]
        %v4780 = vld [vmem:[#allocation9 + $0x178] sm:$0xff]
        %v4781 = vld [vmem:[#allocation9 + $0x180] sm:$0xff]
        %v4782 = vld [vmem:[#allocation9 + $0x188] sm:$0xff]
        %v4783 = vld [vmem:[#allocation9 + $0x190] sm:$0xff]
        %v4784 = vld [vmem:[#allocation9 + $0x198] sm:$0xff]
        %v4785 = vld [vmem:[#allocation9 + $0x1a0] sm:$0xff]
        %v4786 = vld [vmem:[#allocation9 + $0x1a8] sm:$0xff]
        %v4787 = vld [vmem:[#allocation9 + $0x1b0] sm:$0xff]
        %v4788 = vld [vmem:[#allocation9 + $0x1b8] sm:$0xff]
        %v4789 = vld [vmem:[#allocation9 + $0x1c0] sm:$0xff]
        %v4790 = vld [vmem:[#allocation9 + $0x1c8] sm:$0xff]
        %v4791 = vld [vmem:[#allocation9 + $0x1d0] sm:$0xff]
        %v4792 = vld [vmem:[#allocation9 + $0x1d8] sm:$0xff]
        %v4793 = vld [vmem:[#allocation9 + $0x1e0] sm:$0xff]
        %v4794 = vld [vmem:[#allocation9 + $0x1e8] sm:$0xff]
        %v4795 = vld [vmem:[#allocation9 + $0x1f0] sm:$0xff]
        %v4796 = vld [vmem:[#allocation9 + $0x1f8] sm:$0xff]
        %v4797 = vld [vmem:[#allocation9 + $0x200] sm:$0xff]
        %v4798 = vld [vmem:[#allocation9 + $0x208] sm:$0xff]
        %v4799 = vld [vmem:[#allocation9 + $0x210] sm:$0xff]
        %v4800 = vld [vmem:[#allocation9 + $0x218] sm:$0xff]
        %v4801 = vld [vmem:[#allocation9 + $0x220] sm:$0xff]
        %v4802 = vld [vmem:[#allocation9 + $0x228] sm:$0xff]
        %v4803 = vld [vmem:[#allocation9 + $0x230] sm:$0xff]
        %v4804 = vld [vmem:[#allocation9 + $0x238] sm:$0xff]
        %v4805 = vld [vmem:[#allocation9 + $0x240] sm:$0xff]
        %v4806 = vld [vmem:[#allocation9 + $0x248] sm:$0xff]
        %v4807 = vld [vmem:[#allocation9 + $0x250] sm:$0xff]
        %v4808 = vld [vmem:[#allocation9 + $0x258] sm:$0xff]
        %v4809 = vld [vmem:[#allocation9 + $0x260] sm:$0xff]
        %v4810 = vld [vmem:[#allocation9 + $0x268] sm:$0xff]
        %v4811 = vld [vmem:[#allocation9 + $0x270] sm:$0xff]
        %v4812 = vld [vmem:[#allocation9 + $0x278] sm:$0xff]
        %v4813 = vld [vmem:[#allocation9 + $0x280] sm:$0xff]
        %v4814 = vld [vmem:[#allocation9 + $0x288] sm:$0xff]
        %v4815 = vld [vmem:[#allocation9 + $0x290] sm:$0xff]
        %v4816 = vld [vmem:[#allocation9 + $0x298] sm:$0xff]
        %v4817 = vld [vmem:[#allocation9 + $0x2a0] sm:$0xff]
        %v4818 = vld [vmem:[#allocation9 + $0x2a8] sm:$0xff]
        %v4819 = vld [vmem:[#allocation9 + $0x2b0] sm:$0xff]
        %v4820 = vld [vmem:[#allocation9 + $0x2b8] sm:$0xff]
        %v4821 = vld [vmem:[#allocation9 + $0x2c0] sm:$0xff]
        %v4822 = vld [vmem:[#allocation9 + $0x2c8] sm:$0xff]
        %v4823 = vld [vmem:[#allocation9 + $0x2d0] sm:$0xff]
        %v4824 = vld [vmem:[#allocation9 + $0x2d8] sm:$0xff]
        %v4825 = vld [vmem:[#allocation9 + $0x2e0] sm:$0xff]
        %v4826 = vld [vmem:[#allocation9 + $0x2e8] sm:$0xff]
        %v4827 = vld [vmem:[#allocation9 + $0x2f0] sm:$0xff]
        %v4828 = vld [vmem:[#allocation9 + $0x2f8] sm:$0xff]
        %v4829 = vld [vmem:[#allocation9 + $0x300] sm:$0xff]
        %v4830 = vld [vmem:[#allocation9 + $0x308] sm:$0xff]
        %v4831 = vld [vmem:[#allocation9 + $0x310] sm:$0xff]
        %v4832 = vld [vmem:[#allocation9 + $0x318] sm:$0xff]
        %v4833 = vld [vmem:[#allocation9 + $0x320] sm:$0xff]
        %v4834 = vld [vmem:[#allocation9 + $0x328] sm:$0xff]
        %v4835 = vld [vmem:[#allocation9 + $0x330] sm:$0xff]
        %v4836 = vld [vmem:[#allocation9 + $0x338] sm:$0xff]
        %v4837 = vld [vmem:[#allocation9 + $0x340] sm:$0xff]
        %v4838 = vld [vmem:[#allocation9 + $0x348] sm:$0xff]
        %v4839 = vld [vmem:[#allocation9 + $0x350] sm:$0xff]
        %v4840 = vld [vmem:[#allocation9 + $0x358] sm:$0xff]
        %v4841 = vld [vmem:[#allocation9 + $0x360] sm:$0xff]
        %v4842 = vld [vmem:[#allocation9 + $0x368] sm:$0xff]
        %v4843 = vld [vmem:[#allocation9 + $0x370] sm:$0xff]
        %v4844 = vld [vmem:[#allocation9 + $0x378] sm:$0xff]
        %v4845 = vld [vmem:[#allocation9 + $0x380] sm:$0xff]
        %v4846 = vld [vmem:[#allocation9 + $0x388] sm:$0xff]
        %v4847 = vld [vmem:[#allocation9 + $0x390] sm:$0xff]
        %v4848 = vld [vmem:[#allocation9 + $0x398] sm:$0xff]
        %v4849 = vld [vmem:[#allocation9 + $0x3a0] sm:$0xff]
        %v4850 = vld [vmem:[#allocation9 + $0x3a8] sm:$0xff]
        %v4851 = vld [vmem:[#allocation9 + $0x3b0] sm:$0xff]
        %v4852 = vld [vmem:[#allocation9 + $0x3b8] sm:$0xff]
        %v4853 = vld [vmem:[#allocation9 + $0x3c0] sm:$0xff]
        %v4854 = vld [vmem:[#allocation9 + $0x3c8] sm:$0xff]
        %v4855 = vld [vmem:[#allocation9 + $0x3d0] sm:$0xff]
        %v4856 = vld [vmem:[#allocation9 + $0x3d8] sm:$0xff]
        %v4857 = vld [vmem:[#allocation9 + $0x3e0] sm:$0xff]
        %v4858 = vld [vmem:[#allocation9 + $0x3e8] sm:$0xff]
        %v4859 = vld [vmem:[#allocation9 + $0x3f0] sm:$0xff]
        %v4860 = vld [vmem:[#allocation9 + $0x3f8] sm:$0xff]
        %4861 = vmatprep.subr.mxu0 %v4734
        %4862 = vmatpush1.msra.mxu0 %v4733
        %4863 = vmatprep.subr.mxu0 %v4738
        %4864 = vmatpush1.msra.mxu0 %v4737
        %4865 = vmatprep.subr.mxu0 %v4742
        %4866 = vmatpush1.msra.mxu0 %v4741
        %4867 = vmatprep.subr.mxu0 %v4746
        %4868 = vmatpush1.msra.mxu0 %v4745
        %4869 = vmatprep.subr.mxu0 %v4750
        %4870 = vmatpush1.msra.mxu0 %v4749
        %4871 = vmatprep.subr.mxu0 %v4754
        %4872 = vmatpush1.msra.mxu0 %v4753
        %4873 = vmatprep.subr.mxu0 %v4758
        %4874 = vmatpush1.msra.mxu0 %v4757
        %4875 = vmatprep.subr.mxu0 %v4762
        %4876 = vmatpush1.msra.mxu0 %v4761
        %4877 = vmatprep.subr.mxu0 %v4766
        %4878 = vmatpush1.msra.mxu0 %v4765
        %4879 = vmatprep.subr.mxu0 %v4770
        %4880 = vmatpush1.msra.mxu0 %v4769
        %4881 = vmatprep.subr.mxu0 %v4774
        %4882 = vmatpush1.msra.mxu0 %v4773
        %4883 = vmatprep.subr.mxu0 %v4778
        %4884 = vmatpush1.msra.mxu0 %v4777
        %4885 = vmatprep.subr.mxu0 %v4782
        %4886 = vmatpush1.msra.mxu0 %v4781
        %4887 = vmatprep.subr.mxu0 %v4786
        %4888 = vmatpush1.msra.mxu0 %v4785
        %4889 = vmatprep.subr.mxu0 %v4790
        %4890 = vmatpush1.msra.mxu0 %v4789
        %4891 = vmatprep.subr.mxu0 %v4794
        %4892 = vmatpush1.msra.mxu0 %v4793
        %4893 = vmatprep.subr.mxu0 %v4798
        %4894 = vmatpush1.msra.mxu0 %v4797
        %4895 = vmatprep.subr.mxu0 %v4802
        %4896 = vmatpush1.msra.mxu0 %v4801
        %4897 = vmatprep.subr.mxu0 %v4806
        %4898 = vmatpush1.msra.mxu0 %v4805
        %4899 = vmatprep.subr.mxu0 %v4810
        %4900 = vmatpush1.msra.mxu0 %v4809
        %4901 = vmatprep.subr.mxu0 %v4814
        %4902 = vmatpush1.msra.mxu0 %v4813
        %4903 = vmatprep.subr.mxu0 %v4818
        %4904 = vmatpush1.msra.mxu0 %v4817
        %4905 = vmatprep.subr.mxu0 %v4822
        %4906 = vmatpush1.msra.mxu0 %v4821
        %4907 = vmatprep.subr.mxu0 %v4826
        %4908 = vmatpush1.msra.mxu0 %v4825
        %4909 = vmatprep.subr.mxu0 %v4830
        %4910 = vmatpush1.msra.mxu0 %v4829
        %4911 = vmatprep.subr.mxu0 %v4834
        %4912 = vmatpush1.msra.mxu0 %v4833
        %4913 = vmatprep.subr.mxu0 %v4838
        %4914 = vmatpush1.msra.mxu0 %v4837
        %4915 = vmatprep.subr.mxu0 %v4842
        %4916 = vmatpush1.msra.mxu0 %v4841
        %4917 = vmatprep.subr.mxu0 %v4846
        %4918 = vmatpush1.msra.mxu0 %v4845
        %4919 = vmatprep.subr.mxu0 %v4850
        %4920 = vmatpush1.msra.mxu0 %v4849
        %4921 = vmatprep.subr.mxu0 %v4854
        %4922 = vmatpush1.msra.mxu0 %v4853
        %4923 = vmatprep.subr.mxu0 %v4858
        %4924 = vmatpush1.msra.mxu0 %v4857
        %4925 = vmatprep.mubr.f32.mxu0 %v4732
        %4926 = vmatmul.mubr.f32.gmra.mrb[0].mxu0 %v4729
        %v4927 = vpop.f32.mrb[0].mxu0
        %v4928 = vadd.f32 %v671, %v4927
        %v4929 = vpop.f32.mrb[0].mxu0
        %v4930 = vadd.f32 %v675, %v4929
        %4931 = vdwg.mxu0
        %4932 = vmatprep.subr.mxu0 %v4736
        %4933 = vmatpush1.msra.mxu0 %v4735
        %4934 = vmatprep.subr.mxu0 %v4740
        %4935 = vmatpush1.msra.mxu0 %v4739
        %4936 = vmatprep.subr.mxu0 %v4744
        %4937 = vmatpush1.msra.mxu0 %v4743
        %4938 = vmatprep.subr.mxu0 %v4748
        %4939 = vmatpush1.msra.mxu0 %v4747
        %4940 = vmatprep.subr.mxu0 %v4752
        %4941 = vmatpush1.msra.mxu0 %v4751
        %4942 = vmatprep.subr.mxu0 %v4756
        %4943 = vmatpush1.msra.mxu0 %v4755
        %4944 = vmatprep.subr.mxu0 %v4760
        %4945 = vmatpush1.msra.mxu0 %v4759
        %4946 = vmatprep.subr.mxu0 %v4764
        %4947 = vmatpush1.msra.mxu0 %v4763
        %4948 = vmatprep.subr.mxu0 %v4768
        %4949 = vmatpush1.msra.mxu0 %v4767
        %4950 = vmatprep.subr.mxu0 %v4772
        %4951 = vmatpush1.msra.mxu0 %v4771
        %4952 = vmatprep.subr.mxu0 %v4776
        %4953 = vmatpush1.msra.mxu0 %v4775
        %4954 = vmatprep.subr.mxu0 %v4780
        %4955 = vmatpush1.msra.mxu0 %v4779
        %4956 = vmatprep.subr.mxu0 %v4784
        %4957 = vmatpush1.msra.mxu0 %v4783
        %4958 = vmatprep.subr.mxu0 %v4788
        %4959 = vmatpush1.msra.mxu0 %v4787
        %4960 = vmatprep.subr.mxu0 %v4792
        %4961 = vmatpush1.msra.mxu0 %v4791
        %4962 = vmatprep.subr.mxu0 %v4796
        %4963 = vmatpush1.msra.mxu0 %v4795
        %4964 = vmatprep.subr.mxu0 %v4800
        %4965 = vmatpush1.msra.mxu0 %v4799
        %4966 = vmatprep.subr.mxu0 %v4804
        %4967 = vmatpush1.msra.mxu0 %v4803
        %4968 = vmatprep.subr.mxu0 %v4808
        %4969 = vmatpush1.msra.mxu0 %v4807
        %4970 = vmatprep.subr.mxu0 %v4812
        %4971 = vmatpush1.msra.mxu0 %v4811
        %4972 = vmatprep.subr.mxu0 %v4816
        %4973 = vmatpush1.msra.mxu0 %v4815
        %4974 = vmatprep.subr.mxu0 %v4820
        %4975 = vmatpush1.msra.mxu0 %v4819
        %4976 = vmatprep.subr.mxu0 %v4824
        %4977 = vmatpush1.msra.mxu0 %v4823
        %4978 = vmatprep.subr.mxu0 %v4828
        %4979 = vmatpush1.msra.mxu0 %v4827
        %4980 = vmatprep.subr.mxu0 %v4832
        %4981 = vmatpush1.msra.mxu0 %v4831
        %4982 = vmatprep.subr.mxu0 %v4836
        %4983 = vmatpush1.msra.mxu0 %v4835
        %4984 = vmatprep.subr.mxu0 %v4840
        %4985 = vmatpush1.msra.mxu0 %v4839
        %4986 = vmatprep.subr.mxu0 %v4844
        %4987 = vmatpush1.msra.mxu0 %v4843
        %4988 = vmatprep.subr.mxu0 %v4848
        %4989 = vmatpush1.msra.mxu0 %v4847
        %4990 = vmatprep.subr.mxu0 %v4852
        %4991 = vmatpush1.msra.mxu0 %v4851
        %4992 = vmatprep.subr.mxu0 %v4856
        %4993 = vmatpush1.msra.mxu0 %v4855
        %4994 = vmatprep.subr.mxu0 %v4860
        %4995 = vmatpush1.msra.mxu0 %v4859
        %4996 = vmatprep.mubr.f32.mxu0 %v4732
        %4997 = vmatmul.mubr.f32.gmra.mrb[0].mxu0 %v4729
        %v4998 = vpop.f32.mrb[0].mxu0
        %v4999 = vadd.f32 %v679, %v4998
        %v5000 = vpop.f32.mrb[0].mxu0
        %v5001 = vadd.f32 %v683, %v5000
        %5002 = vdwg.mxu0
        %v5003 = vld [vmem:[%s1202] sm:$0xff]
        %v5004 = vxor.u32 %v4928, 2147483648
        %v5005 = vmul.f32 %v5004, 1.442695
        %v5006 = vpow.pop %v5005
        %v5007 = vadd.f32 %v5006, 1.0
        %v5008 = vrcp.pop %v5007
        %v5009 = vmul.f32 1.0, %v5008
        %v5010 = vxor.u32 %v4930, 2147483648
        %v5011 = vmul.f32 %v5010, 1.442695
        %v5012 = vpow.pop %v5011
        %v5013 = vadd.f32 %v5012, 1.0
        %v5014 = vrcp.pop %v5013
        %v5015 = vmul.f32 1.0, %v5014
        %v5016 = vtanh.pop %v4999
        %v5017 = vxor.u32 %v5001, 2147483648
        %v5018 = vmul.f32 %v5017, 1.442695
        %v5019 = vpow.pop %v5018
        %v5020 = vadd.f32 %v5019, 1.0
        %v5021 = vrcp.pop %v5020
        %v5022 = vmul.f32 1.0, %v5021
        %v5023 = vmul.f32 %v5015, %v5003
        %v5024 = vmul.f32 %v5009, %v5016
        %v5025 = vadd.f32 %v5023, %v5024
        %v5026 = vtanh.pop %v5025
        %v5027 = vmul.f32 %v5022, %v5026
        %5028 = vst [vmem:[%s930] sm:$0xff] %v5027
        %5029 = vst [vmem:[%s1202] sm:$0xff] %v5025
        %s5030 = scalar_lea.vmem [#allocation5], 56
        %5031 = vst [vmem:[%s5030] sm:$0xff] %v5027
        %v5032 = vld [vmem:[#allocation5] sm:$0xff]
        %v5033 = vld [vmem:[#allocation5 + $0x8] sm:$0xff]
        %v5034 = vld [vmem:[#allocation5 + $0x10] sm:$0xff]
        %v5035 = vld [vmem:[#allocation5 + $0x18] sm:$0xff]
        %v5036 = vld [vmem:[#allocation5 + $0x20] sm:$0xff]
        %v5037 = vld [vmem:[#allocation5 + $0x28] sm:$0xff]
        %v5038 = vld [vmem:[#allocation5 + $0x30] sm:$0xff]
        %v5039 = vld [vmem:[#allocation5 + $0x38] sm:$0xff]
        %v5040 = vld [vmem:[%s6] sm:$0xff]
        %v5041 = vld [vmem:[%s6 + $0x8] sm:$0xff]
        %v5042 = vld [vmem:[%s6 + $0x10] sm:$0xff]
        %v5043 = vld [vmem:[%s6 + $0x18] sm:$0xff]
        %v5044 = vld [vmem:[%s6 + $0x20] sm:$0xff]
        %v5045 = vld [vmem:[%s6 + $0x28] sm:$0xff]
        %v5046 = vld [vmem:[%s6 + $0x30] sm:$0xff]
        %v5047 = vld [vmem:[%s6 + $0x38] sm:$0xff]
        %v5048 = vld [vmem:[%s6 + $0x40] sm:$0xff]
        %v5049 = vld [vmem:[%s6 + $0x48] sm:$0xff]
        %v5050 = vld [vmem:[%s6 + $0x50] sm:$0xff]
        %v5051 = vld [vmem:[%s6 + $0x58] sm:$0xff]
        %v5052 = vld [vmem:[%s6 + $0x60] sm:$0xff]
        %v5053 = vld [vmem:[%s6 + $0x68] sm:$0xff]
        %v5054 = vld [vmem:[%s6 + $0x70] sm:$0xff]
        %v5055 = vld [vmem:[%s6 + $0x78] sm:$0xff]
        %v5056 = vld [vmem:[%s7] sm:$0x1]
        %v5058 = vlaneseq
        %v5059 = vshrl.u32 %v5058, 7
        %v5060 = vsub.s32 0, %v5059
        %v5061 = vrot.slane %v5056, %v5060
        %5063 = vmatprep.subr.mxu0 0.0
        %5064 = vmatpush1.msra.mxu0 %v5040
        %5065 = vmatprep.subr.mxu0 0.0
        %5066 = vmatpush1.msra.mxu0 %v5041
        %5067 = vmatprep.subr.mxu0 0.0
        %5068 = vmatpush1.msra.mxu0 %v5042
        %5069 = vmatprep.subr.mxu0 0.0
        %5070 = vmatpush1.msra.mxu0 %v5043
        %5071 = vmatprep.subr.mxu0 0.0
        %5072 = vmatpush1.msra.mxu0 %v5044
        %5073 = vmatprep.subr.mxu0 0.0
        %5074 = vmatpush1.msra.mxu0 %v5045
        %5075 = vmatprep.subr.mxu0 0.0
        %5076 = vmatpush1.msra.mxu0 %v5046
        %5077 = vmatprep.subr.mxu0 0.0
        %5078 = vmatpush1.msra.mxu0 %v5047
        %5079 = vmatprep.subr.mxu0 0.0
        %5080 = vmatpush1.msra.mxu0 %v5048
        %5081 = vmatprep.subr.mxu0 0.0
        %5082 = vmatpush1.msra.mxu0 %v5049
        %5083 = vmatprep.subr.mxu0 0.0
        %5084 = vmatpush1.msra.mxu0 %v5050
        %5085 = vmatprep.subr.mxu0 0.0
        %5086 = vmatpush1.msra.mxu0 %v5051
        %5087 = vmatprep.subr.mxu0 0.0
        %5088 = vmatpush1.msra.mxu0 %v5052
        %5089 = vmatprep.subr.mxu0 0.0
        %5090 = vmatpush1.msra.mxu0 %v5053
        %5091 = vmatprep.subr.mxu0 0.0
        %5092 = vmatpush1.msra.mxu0 %v5054
        %5093 = vmatprep.subr.mxu0 0.0
        %5094 = vmatpush1.msra.mxu0 %v5055
        %5095 = vmatprep.subr.mxu0 0.0
        %5096 = vmatpush1.msra.mxu0 0.0
        %5097 = vmatprep.subr.mxu0 0.0
        %5098 = vmatpush1.msra.mxu0 0.0
        %5099 = vmatprep.subr.mxu0 0.0
        %5100 = vmatpush1.msra.mxu0 0.0
        %5101 = vmatprep.subr.mxu0 0.0
        %5102 = vmatpush1.msra.mxu0 0.0
        %5103 = vmatprep.subr.mxu0 0.0
        %5104 = vmatpush1.msra.mxu0 0.0
        %5105 = vmatprep.subr.mxu0 0.0
        %5106 = vmatpush1.msra.mxu0 0.0
        %5107 = vmatprep.subr.mxu0 0.0
        %5108 = vmatpush1.msra.mxu0 0.0
        %5109 = vmatprep.subr.mxu0 0.0
        %5110 = vmatpush1.msra.mxu0 0.0
        %5111 = vmatprep.subr.mxu0 0.0
        %5112 = vmatpush1.msra.mxu0 0.0
        %5113 = vmatprep.subr.mxu0 0.0
        %5114 = vmatpush1.msra.mxu0 0.0
        %5115 = vmatprep.subr.mxu0 0.0
        %5116 = vmatpush1.msra.mxu0 0.0
        %5117 = vmatprep.subr.mxu0 0.0
        %5118 = vmatpush1.msra.mxu0 0.0
        %5119 = vmatprep.subr.mxu0 0.0
        %5120 = vmatpush1.msra.mxu0 0.0
        %5121 = vmatprep.subr.mxu0 0.0
        %5122 = vmatpush1.msra.mxu0 0.0
        %5123 = vmatprep.subr.mxu0 0.0
        %5124 = vmatpush1.msra.mxu0 0.0
        %5125 = vmatprep.subr.mxu0 0.0
        %5126 = vmatpush1.msra.mxu0 0.0
        %5127 = vmatprep.mubr.f32.mxu0 0.0
        %5128 = vmatmul.mubr.f32.gmra.mrb[0].mxu0 %v5032
        %v5129 = vpop.f32.mrb[0].mxu0
        %v5130 = vadd.f32 %v5061, %v5129
        %v5131 = vpop.f32.mrb[0].mxu0
        %5132 = vmatprep.mubr.f32.mxu0 0.0
        %5133 = vmatmul.mubr.f32.gmra.mrb[0].mxu0 %v5033
        %v5134 = vpop.f32.mrb[0].mxu0
        %v5135 = vadd.f32 %v5061, %v5134
        %v5136 = vpop.f32.mrb[0].mxu0
        %5137 = vmatprep.mubr.f32.mxu0 0.0
        %5138 = vmatmul.mubr.f32.gmra.mrb[0].mxu0 %v5034
        %v5139 = vpop.f32.mrb[0].mxu0
        %v5140 = vadd.f32 %v5061, %v5139
        %v5141 = vpop.f32.mrb[0].mxu0
        %5142 = vmatprep.mubr.f32.mxu0 0.0
        %5143 = vmatmul.mubr.f32.gmra.mrb[0].mxu0 %v5035
        %v5144 = vpop.f32.mrb[0].mxu0
        %v5145 = vadd.f32 %v5061, %v5144
        %v5146 = vpop.f32.mrb[0].mxu0
        %5147 = vmatprep.mubr.f32.mxu0 0.0
        %5148 = vmatmul.mubr.f32.gmra.mrb[0].mxu0 %v5036
        %v5149 = vpop.f32.mrb[0].mxu0
        %v5150 = vadd.f32 %v5061, %v5149
        %v5151 = vpop.f32.mrb[0].mxu0
        %5152 = vmatprep.mubr.f32.mxu0 0.0
        %5153 = vmatmul.mubr.f32.gmra.mrb[0].mxu0 %v5037
        %v5154 = vpop.f32.mrb[0].mxu0
        %v5155 = vadd.f32 %v5061, %v5154
        %v5156 = vpop.f32.mrb[0].mxu0
        %5157 = vmatprep.mubr.f32.mxu0 0.0
        %5158 = vmatmul.mubr.f32.gmra.mrb[0].mxu0 %v5038
        %v5159 = vpop.f32.mrb[0].mxu0
        %v5160 = vadd.f32 %v5061, %v5159
        %v5161 = vpop.f32.mrb[0].mxu0
        %5162 = vmatprep.mubr.f32.mxu0 0.0
        %5163 = vmatmul.mubr.f32.gmra.mrb[0].mxu0 %v5039
        %v5164 = vpop.f32.mrb[0].mxu0
        %v5165 = vadd.f32 %v5061, %v5164
        %v5166 = vpop.f32.mrb[0].mxu0
        %5167 = vdwg.mxu0
        %5168 = vst [vmem:[%s329] sm:$0xff] %v5130
        %5169 = vst [vmem:[%s329 + $0x8] sm:$0xff] %v5135
        %5170 = vst [vmem:[%s329 + $0x10] sm:$0xff] %v5140
        %5171 = vst [vmem:[%s329 + $0x18] sm:$0xff] %v5145
        %5172 = vst [vmem:[%s329 + $0x20] sm:$0xff] %v5150
        %5173 = vst [vmem:[%s329 + $0x28] sm:$0xff] %v5155
        %5174 = vst [vmem:[%s329 + $0x30] sm:$0xff] %v5160
        %5175 = vst [vmem:[%s329 + $0x38] sm:$0xff] %v5165
        %s5176 = sand.u32 %s205, 1
        %s5177 = scalar_lea.sflag [#allocation8], %s5176
        %s5178 = sand.u32 %s205, 1
        %s5179 = smul.addr %s5178, 64
        %s5180 = scalar_lea.vmem [#allocation11], %s5179
        // Predicated region
        $region65: #{tpu_custom_call.1} parent=51 // pred_check
          %p5181 = pneg %p215
        $region66: #{tpu_custom_call.1} parent=51 // pred_check_branch
          %5183 = sbr.rel (%p5181) target = $region68
        $region67: #{tpu_custom_call.1} parent=51 // pred_region
          %s5184 = smul.u32 8, %s24
          %s5186 = ssub.s32 1024, 1024
          %5187 = vsyncadd %s5177, %s5186
          %s5188 = smul.addr %s5184, 128
          %s5189 = scalar_lea.hbm %s8, %s5188
          %s5190 = sshll.u32 %s5180, 4
          %s5191 = int_to_ptr.vmem [resolvable:$true] %s5190
          %5196 = dma.vmem_to_hbm [thread:$0]  %s5191, 1024, %s5189, %s5177, 128, 128, 8
        $region68: #{tpu_custom_call.1} parent=51 // pred_fallthru
          _
      $region52: #{tpu_custom_call.1} parent=5 // pred_fallthru
        _
      %p5197 = scmp.le.s32.totalorder 2, %s19
      // Predicated region
      $region69: #{tpu_custom_call.1} parent=5 // pred_check
        %p5198 = pneg %p5197
      $region70: #{tpu_custom_call.1} parent=5 // pred_check_branch
        %5200 = sbr.rel (%p5198) target = $region72
      $region71: #{tpu_custom_call.1} parent=5 // pred_region
        %s5201 = ssub.s32 %s19, 2
        // Predicated region
        $region73: #{tpu_custom_call.1} parent=71 // pred_check
          %p5202 = pneg %p221
        $region74: #{tpu_custom_call.1} parent=71 // pred_check_branch
          %5204 = sbr.rel (%p5202) target = $region76
        $region75: #{tpu_custom_call.1} parent=71 // pred_region
          %s5205 = sand.u32 %s206, 1
          %s5206 = scalar_lea.sflag [#allocation8], %s5205
          %s5207 = sand.u32 %s206, 1
          %s5208 = smul.addr %s5207, 64
          %s5209 = scalar_lea.vmem [#allocation11], %s5208
          %5210 = dma.done %s5206, 1024
        $region76: #{tpu_custom_call.1} parent=71 // pred_fallthru
          _
      $region72: #{tpu_custom_call.1} parent=5 // pred_fallthru
        _
    $region6: #{tpu_custom_call.1} parent=1 // loop_footer
      %s23 = sadd.s32 1, %s19
    $region7: #{tpu_custom_call.1} parent=1 // loop_footer_branch
      %18 = sbr.rel target = $region3
    $region8: #{tpu_custom_call.1} parent=1 // loop_exit
      _
    %5211 = vsyncpa [#allocation7], 1
    %s5212 = scalar_lea.sflag [#allocation7], 1
    %5213 = vsyncpa %s5212, 1
    %5214 = vsyncpa [#allocation10], 1
    %5215 = vsyncpa [#allocation8], 1
    %s5216 = scalar_lea.sflag [#allocation8], 1
    %5217 = vsyncpa %s5216, 1

</llo_original>
